<compile_context>
chip_gen: v7x
topology: tpu7x:2x2x1
jax: 0.10.0
libtpu: 0.0.40
codegen_flags: <defaults>
</compile_context>

<pallas_src>
import jax
import jax.numpy as jnp
from jax.experimental import pallas as pl
from jax.experimental.pallas import tpu as pltpu

# MXU input dtype for the conv dots.  f32 keeps the strict 1e-2 self-check against the f32
# XLA reference; flip to jnp.bfloat16 on v5e/v6e/v7x for the fast MXU path (then loosen the
# tolerance to ~3e-2).  The kernel is layout/VPU-bound at these sizes, not MXU-bound.
MXU_DTYPE = jnp.float32


# ----------------------------------------------------------------------------
# Small-parameter packing layout (GCB channel_add + conv_last)
# ----------------------------------------------------------------------------
def _sp_offsets(Nh, Cr):
    assert Cr <= 8
    o_ca2 = 8
    o_last = o_ca2 + 2 * Nh
    o_vec = o_last + Nh
    rows = ((o_vec + Cr + 7) // 8) * 8
    return o_ca2, o_last, o_vec, rows


def _pack_small(P, Nh, Cr):
    """All tiny GCB / channel_add / conv_last params packed into ONE small VMEM operand.
    Weights are stored in PyTorch (out, in) orientation so the kernel's column-vector math
    uses them un-transposed."""
    C2 = 2 * Nh
    o_ca2, o_last, o_vec, rows = _sp_offsets(Nh, Cr)
    sp = jnp.zeros((rows, C2), jnp.float32)
    sp = sp.at[0:Cr, 0:C2].set(P['w_ca1'])                    # (Cr, 2Nh)
    sp = sp.at[o_ca2:o_ca2 + C2, 0:Cr].set(P['w_ca2'])        # (2Nh, Cr)
    sp = sp.at[o_ca2:o_ca2 + C2, Cr:Cr + 1].set(P['b_ca2'][:, None])
    sp = sp.at[o_last:o_last + Nh, 0:C2].set(P['w_last'])     # (Nh, 2Nh)
    sp = sp.at[o_vec:o_vec + Cr, 0].set(P['b_ca1'])
    sp = sp.at[o_vec:o_vec + Cr, 1].set(P['ln_g'])
    sp = sp.at[o_vec:o_vec + Cr, 2].set(P['ln_b'])
    sp = sp.at[o_vec, 3].set(P['prelu_a'])
    return sp


# ----------------------------------------------------------------------------
# Fused conv weights (built once per call in the wrapper, tiny)
# ----------------------------------------------------------------------------
def _build_gate_weight(P, C, Nh, K, cin_pad, dtype):
    """Per-tap block weight for the fused stage-1 conv over [x | h | m | const] channels.
    Output-row layout (NG = 9*Nh + 1):
      [0:Nh)   i        = i_x + i_h
      [Nh:2Nh) f_pre    = f_x + f_h + 1.0          (bias via const channel, center tap)
      [2Nh:3Nh)lag_pre  = LAG_conv(x)              (1x1 -> center tap only)
      [3Nh:4Nh)g        = g_x + g_h
      [4Nh:5Nh)o        = o_x + o_h
      [5Nh:6Nh)x'
      [6Nh:7Nh)m'
      [7Nh:9Nh)g1       = conv_1x1(x'||m') + b_1x1 (folded through x'/m' weights)
      [9Nh]    logits   = conv_mask(g1)  + b_mask  (folded)
    """
    KK = K * K
    ctr = (K // 2) * K + (K // 2)
    NG = 9 * Nh + 1
    w1x_x = P['w_1x1'][:, :Nh]          # rows of conv_1x1 acting on x'
    w1x_m = P['w_1x1'][:, Nh:]          # rows of conv_1x1 acting on m'
    wmask = P['w_mask']                 # (1, 2Nh)
    cc = C + 2 * Nh                     # constant-channel index
    taps = []
    for t in range(KK):
        ky, kx = t // K, t % K
        xt = P['w_x'][:, :, ky, kx]     # (5Nh, C)
        ht = P['w_h'][:, :, ky, kx]     # (4Nh, Nh)
        mt = P['w_m'][:, :, ky, kx]     # (Nh, Nh)
        g1x = w1x_x @ xt[3 * Nh:4 * Nh]                       # (2Nh, C)
        g1m = w1x_m @ mt                                      # (2Nh, Nh)
        blk = jnp.zeros((NG, cin_pad), jnp.float32)
        # x channels [0:C)
        blk = blk.at[0 * Nh:1 * Nh, 0:C].set(xt[0 * Nh:1 * Nh])    # i_x
        blk = blk.at[1 * Nh:2 * Nh, 0:C].set(xt[1 * Nh:2 * Nh])    # f_x
        blk = blk.at[3 * Nh:4 * Nh, 0:C].set(xt[2 * Nh:3 * Nh])    # g_x
        blk = blk.at[4 * Nh:5 * Nh, 0:C].set(xt[4 * Nh:5 * Nh])    # o_x
        blk = blk.at[5 * Nh:6 * Nh, 0:C].set(xt[3 * Nh:4 * Nh])    # x'
        blk = blk.at[7 * Nh:9 * Nh, 0:C].set(g1x)                  # g1 (x path)
        blk = blk.at[9 * Nh:9 * Nh + 1, 0:C].set(wmask @ g1x)      # logits (x path)
        # h channels [C:C+Nh)
        blk = blk.at[0 * Nh:1 * Nh, C:C + Nh].set(ht[0 * Nh:1 * Nh])   # i_h
        blk = blk.at[1 * Nh:2 * Nh, C:C + Nh].set(ht[1 * Nh:2 * Nh])   # f_h
        blk = blk.at[3 * Nh:4 * Nh, C:C + Nh].set(ht[2 * Nh:3 * Nh])   # g_h
        blk = blk.at[4 * Nh:5 * Nh, C:C + Nh].set(ht[3 * Nh:4 * Nh])   # o_h
        # m channels [C+Nh:C+2Nh)
        blk = blk.at[6 * Nh:7 * Nh, C + Nh:C + 2 * Nh].set(mt)         # m'
        blk = blk.at[7 * Nh:9 * Nh, C + Nh:C + 2 * Nh].set(g1m)        # g1 (m path)
        blk = blk.at[9 * Nh:9 * Nh + 1, C + Nh:C + 2 * Nh].set(wmask @ g1m)
        if t == ctr:  # 1x1 pieces + biases ride on the centre tap (const channel == 1 there)
            blk = blk.at[2 * Nh:3 * Nh, 0:C].set(P['w_lag'])           # LAG (1x1)
            blk = blk.at[1 * Nh:2 * Nh, cc].set(1.0)                   # _forget_bias
            blk = blk.at[7 * Nh:9 * Nh, cc].set(P['b_1x1'])
            blk = blk.at[9 * Nh, cc].set(P['b_mask'][0] + (wmask @ P['b_1x1'])[0])
        taps.append(blk)
    return jnp.stack(taps, axis=0).astype(dtype)              # (KK, NG, cin_pad)


def _build_mem_weight(P, Nh, K, dtype):
    """Per-tap weight for the fused stage-4 conv over mem = c_new || m_new.
    Rows [0:Nh) = conv_o, rows [Nh:2Nh) = conv_last (1x1 -> center tap only)."""
    KK = K * K
    ctr = (K // 2) * K + (K // 2)
    taps = []
    for t in range(KK):
        ky, kx = t // K, t % K
        blk = jnp.zeros((2 * Nh, 2 * Nh), jnp.float32)
        blk = blk.at[0:Nh, :].set(P['w_o'][:, :, ky, kx])
        if t == ctr:
            blk = blk.at[Nh:, :].set(P['w_last'])
        taps.append(blk)
    return jnp.stack(taps, axis=0).astype(dtype)               # (KK, 2Nh, 2Nh)


# ----------------------------------------------------------------------------
# The fused kernel (one grid step == one batch item; everything stays in VMEM)
# ----------------------------------------------------------------------------
def _make_kernel(K, C, Nh, Cr, Wp, S_out, OFF, SRC_W):
    p = K // 2
    KK = K * K
    C2 = 2 * Nh
    MASK_CH = C + 2 * Nh
    o_ca2, o_last, o_vec, _ = _sp_offsets(Nh, Cr)
    # per-tap lane offset of the (ky,kx) window within the padded-flat source slab
    deltas = [(ky - p) * Wp + (kx - p) for ky in range(K) for kx in range(K)]

    def kernel(xhm_ref, c_ref, wg_ref, w2_ref, sp_ref,
               h_out, c_out, m_out, mem_scr):
        f32 = jnp.float32

        # ---- stage 1: fused conv_x/conv_h/conv_m (+LAG, conv_1x1, conv_mask, biases) ----
        # 9 accumulating MXU dots over lane-shifted windows; no im2col scratch.
        gates = None
        for t in range(KK):
            s0 = OFF + deltas[t]
            src = xhm_ref[0, :, s0:s0 + S_out].astype(MXU_DTYPE)      # (cin_pad, S_out)
            part = jnp.dot(wg_ref[t], src, preferred_element_type=f32)
            gates = part if gates is None else gates + part           # (9*Nh+1, S_out)

        mask = xhm_ref[0, MASK_CH:MASK_CH + 1, OFF:OFF + S_out]       # 1.0 at interior pixels
        m_t = xhm_ref[0, C + Nh:C + 2 * Nh, OFF:OFF + S_out]          # (Nh, S_out)
        c_t = c_ref[0]                                                # (Nh, S_out)

        # ---- stage 2: LSTM-style gates with LAG attenuation (grouped sigmoid) -----------
        sig = jax.nn.sigmoid(gates[0:3 * Nh, :])                      # [i | f_pre | lag]
        i_t = sig[0:Nh]
        f_pre = sig[Nh:2 * Nh]
        alpha = jnp.exp(sig[2 * Nh:3 * Nh])
        f_t = jax.nn.sigmoid(f_pre - alpha * i_t)
        g_t = jnp.tanh(gates[3 * Nh:4 * Nh, :])
        c_new = (f_t * c_t + i_t * g_t) * mask                        # zero padded border
        c_out[0] = c_new.astype(c_out.dtype)

        # ---- stage 3: GCB (att pool + channel_add) + residual + conv_last ---------------
        gcb_in = gates[5 * Nh:7 * Nh, :]                              # x' || m'   (2Nh, S)
        g1 = gates[7 * Nh:9 * Nh, :]                                  # conv_1x1 + b_1x1
        logits = gates[9 * Nh:9 * Nh + 1, :] + (mask - 1.0) * 1e9     # off-interior -> -inf
        lmax = jnp.max(logits, axis=-1, keepdims=True)
        e = jnp.exp(logits - lmax)                                    # 0 off-interior
        denom = jnp.sum(e, axis=-1, keepdims=True)
        ctx = jnp.sum(g1 * e, axis=-1, keepdims=True) * pl.reciprocal(denom, approx=True)

        # channel_add_conv: 1x1 -> LayerNorm(Cr) -> PReLU -> 1x1   (column-vector math)
        tt = jnp.dot(sp_ref[0:Cr, 0:C2], ctx,
                     preferred_element_type=f32) + sp_ref[o_vec:o_vec + Cr, 0:1]
        mu = jnp.mean(tt, axis=0, keepdims=True)
        var = jnp.mean((tt - mu) ** 2, axis=0, keepdims=True)
        tt = (tt - mu) * jax.lax.rsqrt(var + 1e-5)
        tt = tt * sp_ref[o_vec:o_vec + Cr, 1:2] + sp_ref[o_vec:o_vec + Cr, 2:3]
        a_pr = sp_ref[o_vec:o_vec + 1, 3:4]
        tt = jnp.maximum(tt, 0.0) + a_pr * jnp.minimum(tt, 0.0)       # PReLU
        add_term = jnp.dot(sp_ref[o_ca2:o_ca2 + C2, 0:Cr], tt,
                           preferred_element_type=f32) + sp_ref[o_ca2:o_ca2 + C2, Cr:Cr + 1]

        gcb = g1 + add_term + gcb_in
        gcb_out = jnp.dot(sp_ref[o_last:o_last + Nh, 0:C2], gcb,
                          preferred_element_type=f32)                 # conv_last (1x1)
        ip = jax.nn.sigmoid(gcb_out)                                  # i_t' == f_t'
        m_new = (ip * (m_t + jnp.tanh(gcb_out))) * mask
        m_out[0] = m_new.astype(m_out.dtype)

        # ---- stage 4: conv_o(mem) + conv_last(mem), same shifted-window dots ------------
        mem_scr[:, 0:OFF] = jnp.zeros((C2, OFF), f32)                 # margins (only read for
        mem_scr[:, OFF + S_out:SRC_W] = jnp.zeros((C2, SRC_W - OFF - S_out), f32)  # discarded cols)
        mem_scr[0:Nh, OFF:OFF + S_out] = c_new                        # sliced, aligned stores
        mem_scr[Nh:C2, OFF:OFF + S_out] = m_new
        out2 = None
        for t in range(KK):
            s0 = OFF + deltas[t]
            src = mem_scr[:, s0:s0 + S_out].astype(MXU_DTYPE)
            part = jnp.dot(w2_ref[t], src, preferred_element_type=f32)
            out2 = part if out2 is None else out2 + part              # (2Nh, S_out)

        o_t = jax.nn.sigmoid(gates[4 * Nh:5 * Nh, :] + out2[0:Nh])
        h_out[0] = (o_t * jnp.tanh(out2[Nh:C2])).astype(h_out.dtype)

    return kernel


# ----------------------------------------------------------------------------
# Full forward: one pallas_call, grid=(B,)
# ----------------------------------------------------------------------------
@jax.jit
def nam_forward(x_t, h_t, c_t, m_t, P):
    """Inputs/outputs in PyTorch NCHW layout: (B, C, H, W)."""
    B, C, H, W = x_t.shape
    Nh = c_t.shape[1]
    K = P['w_x'].shape[-1]
    Cr = P['w_ca1'].shape[0]
    assert C == Nh, "module is only shape-consistent when input_size == hidden_size"

    p = K // 2
    Hp, Wp = H + 2 * p, W + 2 * p
    HWp = Hp * Wp
    S_out = ((HWp + 127) // 128) * 128        # lane-dense padded-flat spatial extent
    OFF = 128                                 # image offset inside the margined source slab
    SRC_W = OFF + S_out + 128                 # left/right margins cover all tap windows
    cin_pad = ((C + 2 * Nh + 1 + 7) // 8) * 8 # x | h | m | const, padded to sublane multiple
    C2 = 2 * Nh
    f32 = jnp.float32

    wg = _build_gate_weight(P, C, Nh, K, cin_pad, MXU_DTYPE)   # (KK, 9Nh+1, cin_pad)
    w2 = _build_mem_weight(P, Nh, K, MXU_DTYPE)                # (KK, 2Nh, 2Nh)
    sp = _pack_small(P, Nh, Cr)

    # Padded-flat, channels-on-sublanes activation slabs (wrapper-side layout plumbing).
    xhm = jnp.zeros((B, cin_pad, Hp, Wp), f32)
    xhm = xhm.at[:, 0:C, p:p + H, p:p + W].set(x_t)
    xhm = xhm.at[:, C:C + Nh, p:p + H, p:p + W].set(h_t)
    xhm = xhm.at[:, C + Nh:C + 2 * Nh, p:p + H, p:p + W].set(m_t)
    xhm = xhm.at[:, C + 2 * Nh, p:p + H, p:p + W].set(1.0)     # const / interior-mask channel
    xhm = jnp.pad(xhm.reshape(B, cin_pad, HWp),
                  ((0, 0), (0, 0), (OFF, SRC_W - OFF - HWp)))

    c_pad = jnp.zeros((B, Nh, Hp, Wp), f32).at[:, :, p:p + H, p:p + W].set(c_t)
    c_pad = jnp.pad(c_pad.reshape(B, Nh, HWp), ((0, 0), (0, 0), (0, S_out - HWp)))

    kernel = _make_kernel(K, C, Nh, Cr, Wp, S_out, OFF, SRC_W)
    out_sds = jax.ShapeDtypeStruct((B, Nh, S_out), f32)
    full = lambda a: pl.BlockSpec(a.shape, lambda b: (0,) * a.ndim)
    act_out = pl.BlockSpec((1, Nh, S_out), lambda b: (b, 0, 0))

    h_pad, c_new_pad, m_new_pad = pl.pallas_call(
        kernel,
        out_shape=(out_sds, out_sds, out_sds),                 # h_new, c_new, m_new
        grid=(B,),
        in_specs=[pl.BlockSpec((1, cin_pad, SRC_W), lambda b: (b, 0, 0)),
                  pl.BlockSpec((1, Nh, S_out), lambda b: (b, 0, 0)),
                  full(wg), full(w2), full(sp)],
        out_specs=(act_out, act_out, act_out),
        scratch_shapes=[pltpu.VMEM((C2, SRC_W), f32)],         # stage-4 conv source (mem)
        compiler_params=pltpu.CompilerParams(
            dimension_semantics=("parallel",)),                # v7x: one batch item per TC
    )(xhm, c_pad, wg, w2, sp)

    def extract(o):   # padded-flat (B, Nh, S_out) -> NCHW (B, Nh, H, W)
        return o[:, :, :HWp].reshape(B, Nh, Hp, Wp)[:, :, p:p + H, p:p + W]

    return extract(h_pad), extract(c_new_pad), extract(m_new_pad)


# ----------------------------------------------------------------------------
# Pure-JAX reference (NCHW, direct port of the PyTorch forward; correctness only)
# ----------------------------------------------------------------------------
def ref_forward(x_t, h_t, c_t, m_t, P):
    dn = ('NCHW', 'OIHW', 'NCHW')
    conv = lambda x, w: jax.lax.conv_general_dilated(x, w, (1, 1), 'SAME',
                                                     dimension_numbers=dn)
    c1 = lambda x, w: conv(x, w[:, :, None, None])
    Nh = c_t.shape[1]
    xc = conv(x_t, P['w_x']); hc = conv(h_t, P['w_h']); mc = conv(m_t, P['w_m'])
    i_x, f_x, g_x, x_prime, o_x = jnp.split(xc, 5, axis=1)
    i_h, f_h, g_h, o_h = jnp.split(hc, 4, axis=1)
    i_t = jax.nn.sigmoid(i_x + i_h)
    f_t = jax.nn.sigmoid(f_x + f_h + 1.0)
    alpha = jnp.exp(jax.nn.sigmoid(c1(x_t, P['w_lag'])))
    f_t = jax.nn.sigmoid(f_t - alpha * i_t)
    g_t = jnp.tanh(g_x + g_h)
    c_new = f_t * c_t + i_t * g_t
    gcb_in = jnp.concatenate([x_prime, mc], axis=1)
    g1 = c1(gcb_in, P['w_1x1']) + P['b_1x1'][None, :, None, None]
    B, C2, H, W = g1.shape
    logits = (c1(g1, P['w_mask']) + P['b_mask'][None, :, None, None]).reshape(B, H * W)
    pm = jax.nn.softmax(logits, axis=-1)
    context = jnp.einsum('bn,bcn->bc', pm, g1.reshape(B, C2, H * W))
    t = context @ P['w_ca1'].T + P['b_ca1']
    mu = t.mean(-1, keepdims=True)
    var = ((t - mu) ** 2).mean(-1, keepdims=True)
    t = (t - mu) / jnp.sqrt(var + 1e-5) * P['ln_g'] + P['ln_b']
    t = jnp.maximum(t, 0.0) + P['prelu_a'] * jnp.minimum(t, 0.0)
    add_term = t @ P['w_ca2'].T + P['b_ca2']
    gcb = g1 + add_term[:, :, None, None] + gcb_in
    gcb_out = c1(gcb, P['w_last'])
    ip = jax.nn.sigmoid(gcb_out)
    m_new = ip * m_t + ip * jnp.tanh(gcb_out)
    mem = jnp.concatenate([c_new, m_new], axis=1)
    o_t = jax.nn.sigmoid(o_x + o_h + conv(mem, P['w_o']))
    h_new = o_t * jnp.tanh(c1(mem, P['w_last']))
    return h_new, c_new, m_new


# ----------------------------------------------------------------------------
# Deterministic parameter init (PyTorch OIHW / (out,in) layouts, shapes per __init__)
# ----------------------------------------------------------------------------
def init_params(key, C, Nh, K, ratio=4):
    Cr = (2 * C) // ratio
    ks = jax.random.split(key, 14)
    nrm = lambda k, shape, s=0.15: jax.random.normal(k, shape, jnp.float32) * s
    return dict(
        w_x=nrm(ks[0], (5 * Nh, C, K, K)),          # conv_x (no bias)
        w_h=nrm(ks[1], (4 * Nh, Nh, K, K)),         # conv_h
        w_m=nrm(ks[2], (Nh, Nh, K, K)),             # conv_m
        w_o=nrm(ks[3], (Nh, 2 * Nh, K, K)),         # conv_o
        w_last=nrm(ks[4], (Nh, 2 * Nh)),            # conv_last (1x1, shared, no bias)
        w_lag=nrm(ks[5], (C, C)),                   # LAG_conv (1x1, no bias)
        w_1x1=nrm(ks[6], (2 * C, 2 * C)),           # conv_1x1
        b_1x1=nrm(ks[7], (2 * C,), 0.05),
        w_mask=nrm(ks[8], (1, 2 * C)),              # GCB conv_mask
        b_mask=nrm(ks[9], (1,), 0.05),
        w_ca1=nrm(ks[10], (Cr, 2 * C)),             # GCB channel_add conv 1
        b_ca1=nrm(ks[11], (Cr,), 0.05),
        ln_g=jnp.ones((Cr,), jnp.float32),          # LayerNorm weight
        ln_b=jnp.zeros((Cr,), jnp.float32),         # LayerNorm bias
        prelu_a=jnp.array(0.25, jnp.float32),       # PReLU (default init)
        w_ca2=nrm(ks[12], (2 * C, Cr)),             # GCB channel_add conv 2
        b_ca2=nrm(ks[13], (2 * C,), 0.05),
    )


if __name__ == "__main__":
    # input_size = hidden_size = 8 (required for shape consistency), kernel_size = 3
    B, C, H, W, K = 2, 8, 16, 16, 3
    Nh = C

    key = jax.random.PRNGKey(0)
    kx, kh, kc, km, kp = jax.random.split(key, 5)
    x_t = jax.random.normal(kx, (B, C, H, W), jnp.float32)
    h_t = jax.random.normal(kh, (B, Nh, H, W), jnp.float32)
    c_t = jax.random.normal(kc, (B, Nh, H, W), jnp.float32)
    m_t = jax.random.normal(km, (B, Nh, H, W), jnp.float32)
    P = init_params(kp, C, Nh, K)

    h_new, c_new, m_new = nam_forward(x_t, h_t, c_t, m_t, P)
    jax.block_until_ready((h_new, c_new, m_new))

    h_ref, c_ref, m_ref = ref_forward(x_t, h_t, c_t, m_t, P)
    assert h_new.shape == (B, Nh, H, W) and c_new.shape == (B, Nh, H, W) and m_new.shape == (B, Nh, H, W)
    assert jnp.allclose(h_new, h_ref, atol=1e-2, rtol=1e-2), "h_new mismatch"
    assert jnp.allclose(c_new, c_ref, atol=1e-2, rtol=1e-2), "c_new mismatch"
    assert jnp.allclose(m_new, m_ref, atol=1e-2, rtol=1e-2), "m_new mismatch"

    print("KERNEL_OK")
</pallas_src>

<mosaic_0001>
module attributes {stable_mosaic.version = 11 : i64} {
  func.func @kernel(%arg0: i32, %arg1: memref<1x32x640xf32, #tpu.memory_space<vmem>>, %arg2: memref<1x8x384xf32, #tpu.memory_space<vmem>>, %arg3: memref<9x73x32xf32, #tpu.memory_space<vmem>>, %arg4: memref<9x16x16xf32, #tpu.memory_space<vmem>>, %arg5: memref<40x16xf32, #tpu.memory_space<vmem>>, %arg6: memref<1x8x384xf32, #tpu.memory_space<vmem>>, %arg7: memref<1x8x384xf32, #tpu.memory_space<vmem>>, %arg8: memref<1x8x384xf32, #tpu.memory_space<vmem>>, %arg9: memref<16x640xf32, #tpu.memory_space<vmem>>) attributes {dimension_semantics = [#tpu.dimension_semantics<parallel>], iteration_bounds = array<i64: 2>, scalar_prefetch = 0 : i64, scratch_operands = 1 : i64, tpu.core_type = #tpu.core_type<tc>, window_params = [{transform_indices = @transform_0, window_bounds = array<i64: 1, 32, 640>}, {transform_indices = @transform_1, window_bounds = array<i64: 1, 8, 384>}, {pipeline_mode = #tpu.pipeline_mode<synchronous>, transform_indices = @transform_2, window_bounds = array<i64: 9, 73, 32>}, {pipeline_mode = #tpu.pipeline_mode<synchronous>, transform_indices = @transform_3, window_bounds = array<i64: 9, 16, 16>}, {pipeline_mode = #tpu.pipeline_mode<synchronous>, transform_indices = @transform_4, window_bounds = array<i64: 40, 16>}, {transform_indices = @transform_5, window_bounds = array<i64: 1, 8, 384>}, {transform_indices = @transform_6, window_bounds = array<i64: 1, 8, 384>}, {transform_indices = @transform_7, window_bounds = array<i64: 1, 8, 384>}]} {
    %c0 = arith.constant 0 : index
    %c0_0 = arith.constant 0 : index
    %c109 = arith.constant 109 : index
    %0 = vector.load %arg1[%c0, %c0_0, %c109] : memref<1x32x640xf32, #tpu.memory_space<vmem>>, vector<1x32x384xf32>
    %1 = vector.shape_cast %0 : vector<1x32x384xf32> to vector<32x384xf32>
    %c0_1 = arith.constant 0 : index
    %c0_2 = arith.constant 0 : index
    %c0_3 = arith.constant 0 : index
    %2 = vector.load %arg3[%c0_1, %c0_2, %c0_3] : memref<9x73x32xf32, #tpu.memory_space<vmem>>, vector<1x73x32xf32>
    %3 = vector.shape_cast %2 : vector<1x73x32xf32> to vector<73x32xf32>
    %cst = arith.constant dense<0.000000e+00> : vector<73x384xf32>
    %4 = tpu.matmul %3, %1, %cst {dimension_numbers = #tpu.dot_dimension_numbers<[1], [0], [0], [1], [0, 0, 1, 1], [], []>} : vector<73x32xf32>, vector<32x384xf32>, vector<73x384xf32> -> vector<73x384xf32>
    %c0_4 = arith.constant 0 : index
    %c0_5 = arith.constant 0 : index
    %c110 = arith.constant 110 : index
    %5 = vector.load %arg1[%c0_4, %c0_5, %c110] : memref<1x32x640xf32, #tpu.memory_space<vmem>>, vector<1x32x384xf32>
    %6 = vector.shape_cast %5 : vector<1x32x384xf32> to vector<32x384xf32>
    %c1 = arith.constant 1 : index
    %c0_6 = arith.constant 0 : index
    %c0_7 = arith.constant 0 : index
    %7 = vector.load %arg3[%c1, %c0_6, %c0_7] : memref<9x73x32xf32, #tpu.memory_space<vmem>>, vector<1x73x32xf32>
    %8 = vector.shape_cast %7 : vector<1x73x32xf32> to vector<73x32xf32>
    %cst_8 = arith.constant dense<0.000000e+00> : vector<73x384xf32>
    %9 = tpu.matmul %8, %6, %cst_8 {dimension_numbers = #tpu.dot_dimension_numbers<[1], [0], [0], [1], [0, 0, 1, 1], [], []>} : vector<73x32xf32>, vector<32x384xf32>, vector<73x384xf32> -> vector<73x384xf32>
    %10 = arith.addf %4, %9 : vector<73x384xf32>
    %c0_9 = arith.constant 0 : index
    %c0_10 = arith.constant 0 : index
    %c111 = arith.constant 111 : index
    %11 = vector.load %arg1[%c0_9, %c0_10, %c111] : memref<1x32x640xf32, #tpu.memory_space<vmem>>, vector<1x32x384xf32>
    %12 = vector.shape_cast %11 : vector<1x32x384xf32> to vector<32x384xf32>
    %c2 = arith.constant 2 : index
    %c0_11 = arith.constant 0 : index
    %c0_12 = arith.constant 0 : index
    %13 = vector.load %arg3[%c2, %c0_11, %c0_12] : memref<9x73x32xf32, #tpu.memory_space<vmem>>, vector<1x73x32xf32>
    %14 = vector.shape_cast %13 : vector<1x73x32xf32> to vector<73x32xf32>
    %cst_13 = arith.constant dense<0.000000e+00> : vector<73x384xf32>
    %15 = tpu.matmul %14, %12, %cst_13 {dimension_numbers = #tpu.dot_dimension_numbers<[1], [0], [0], [1], [0, 0, 1, 1], [], []>} : vector<73x32xf32>, vector<32x384xf32>, vector<73x384xf32> -> vector<73x384xf32>
    %16 = arith.addf %10, %15 : vector<73x384xf32>
    %c0_14 = arith.constant 0 : index
    %c0_15 = arith.constant 0 : index
    %c127 = arith.constant 127 : index
    %17 = vector.load %arg1[%c0_14, %c0_15, %c127] : memref<1x32x640xf32, #tpu.memory_space<vmem>>, vector<1x32x384xf32>
    %18 = vector.shape_cast %17 : vector<1x32x384xf32> to vector<32x384xf32>
    %c3 = arith.constant 3 : index
    %c0_16 = arith.constant 0 : index
    %c0_17 = arith.constant 0 : index
    %19 = vector.load %arg3[%c3, %c0_16, %c0_17] : memref<9x73x32xf32, #tpu.memory_space<vmem>>, vector<1x73x32xf32>
    %20 = vector.shape_cast %19 : vector<1x73x32xf32> to vector<73x32xf32>
    %cst_18 = arith.constant dense<0.000000e+00> : vector<73x384xf32>
    %21 = tpu.matmul %20, %18, %cst_18 {dimension_numbers = #tpu.dot_dimension_numbers<[1], [0], [0], [1], [0, 0, 1, 1], [], []>} : vector<73x32xf32>, vector<32x384xf32>, vector<73x384xf32> -> vector<73x384xf32>
    %22 = arith.addf %16, %21 : vector<73x384xf32>
    %c0_19 = arith.constant 0 : index
    %c0_20 = arith.constant 0 : index
    %c128 = arith.constant 128 : index
    %23 = vector.load %arg1[%c0_19, %c0_20, %c128] : memref<1x32x640xf32, #tpu.memory_space<vmem>>, vector<1x32x384xf32>
    %24 = vector.shape_cast %23 : vector<1x32x384xf32> to vector<32x384xf32>
    %c4 = arith.constant 4 : index
    %c0_21 = arith.constant 0 : index
    %c0_22 = arith.constant 0 : index
    %25 = vector.load %arg3[%c4, %c0_21, %c0_22] : memref<9x73x32xf32, #tpu.memory_space<vmem>>, vector<1x73x32xf32>
    %26 = vector.shape_cast %25 : vector<1x73x32xf32> to vector<73x32xf32>
    %cst_23 = arith.constant dense<0.000000e+00> : vector<73x384xf32>
    %27 = tpu.matmul %26, %24, %cst_23 {dimension_numbers = #tpu.dot_dimension_numbers<[1], [0], [0], [1], [0, 0, 1, 1], [], []>} : vector<73x32xf32>, vector<32x384xf32>, vector<73x384xf32> -> vector<73x384xf32>
    %28 = arith.addf %22, %27 : vector<73x384xf32>
    %c0_24 = arith.constant 0 : index
    %c0_25 = arith.constant 0 : index
    %c129 = arith.constant 129 : index
    %29 = vector.load %arg1[%c0_24, %c0_25, %c129] : memref<1x32x640xf32, #tpu.memory_space<vmem>>, vector<1x32x384xf32>
    %30 = vector.shape_cast %29 : vector<1x32x384xf32> to vector<32x384xf32>
    %c5 = arith.constant 5 : index
    %c0_26 = arith.constant 0 : index
    %c0_27 = arith.constant 0 : index
    %31 = vector.load %arg3[%c5, %c0_26, %c0_27] : memref<9x73x32xf32, #tpu.memory_space<vmem>>, vector<1x73x32xf32>
    %32 = vector.shape_cast %31 : vector<1x73x32xf32> to vector<73x32xf32>
    %cst_28 = arith.constant dense<0.000000e+00> : vector<73x384xf32>
    %33 = tpu.matmul %32, %30, %cst_28 {dimension_numbers = #tpu.dot_dimension_numbers<[1], [0], [0], [1], [0, 0, 1, 1], [], []>} : vector<73x32xf32>, vector<32x384xf32>, vector<73x384xf32> -> vector<73x384xf32>
    %34 = arith.addf %28, %33 : vector<73x384xf32>
    %c0_29 = arith.constant 0 : index
    %c0_30 = arith.constant 0 : index
    %c145 = arith.constant 145 : index
    %35 = vector.load %arg1[%c0_29, %c0_30, %c145] : memref<1x32x640xf32, #tpu.memory_space<vmem>>, vector<1x32x384xf32>
    %36 = vector.shape_cast %35 : vector<1x32x384xf32> to vector<32x384xf32>
    %c6 = arith.constant 6 : index
    %c0_31 = arith.constant 0 : index
    %c0_32 = arith.constant 0 : index
    %37 = vector.load %arg3[%c6, %c0_31, %c0_32] : memref<9x73x32xf32, #tpu.memory_space<vmem>>, vector<1x73x32xf32>
    %38 = vector.shape_cast %37 : vector<1x73x32xf32> to vector<73x32xf32>
    %cst_33 = arith.constant dense<0.000000e+00> : vector<73x384xf32>
    %39 = tpu.matmul %38, %36, %cst_33 {dimension_numbers = #tpu.dot_dimension_numbers<[1], [0], [0], [1], [0, 0, 1, 1], [], []>} : vector<73x32xf32>, vector<32x384xf32>, vector<73x384xf32> -> vector<73x384xf32>
    %40 = arith.addf %34, %39 : vector<73x384xf32>
    %c0_34 = arith.constant 0 : index
    %c0_35 = arith.constant 0 : index
    %c146 = arith.constant 146 : index
    %41 = vector.load %arg1[%c0_34, %c0_35, %c146] : memref<1x32x640xf32, #tpu.memory_space<vmem>>, vector<1x32x384xf32>
    %42 = vector.shape_cast %41 : vector<1x32x384xf32> to vector<32x384xf32>
    %c7 = arith.constant 7 : index
    %c0_36 = arith.constant 0 : index
    %c0_37 = arith.constant 0 : index
    %43 = vector.load %arg3[%c7, %c0_36, %c0_37] : memref<9x73x32xf32, #tpu.memory_space<vmem>>, vector<1x73x32xf32>
    %44 = vector.shape_cast %43 : vector<1x73x32xf32> to vector<73x32xf32>
    %cst_38 = arith.constant dense<0.000000e+00> : vector<73x384xf32>
    %45 = tpu.matmul %44, %42, %cst_38 {dimension_numbers = #tpu.dot_dimension_numbers<[1], [0], [0], [1], [0, 0, 1, 1], [], []>} : vector<73x32xf32>, vector<32x384xf32>, vector<73x384xf32> -> vector<73x384xf32>
    %46 = arith.addf %40, %45 : vector<73x384xf32>
    %c0_39 = arith.constant 0 : index
    %c0_40 = arith.constant 0 : index
    %c147 = arith.constant 147 : index
    %47 = vector.load %arg1[%c0_39, %c0_40, %c147] : memref<1x32x640xf32, #tpu.memory_space<vmem>>, vector<1x32x384xf32>
    %48 = vector.shape_cast %47 : vector<1x32x384xf32> to vector<32x384xf32>
    %c8 = arith.constant 8 : index
    %c0_41 = arith.constant 0 : index
    %c0_42 = arith.constant 0 : index
    %49 = vector.load %arg3[%c8, %c0_41, %c0_42] : memref<9x73x32xf32, #tpu.memory_space<vmem>>, vector<1x73x32xf32>
    %50 = vector.shape_cast %49 : vector<1x73x32xf32> to vector<73x32xf32>
    %cst_43 = arith.constant dense<0.000000e+00> : vector<73x384xf32>
    %51 = tpu.matmul %50, %48, %cst_43 {dimension_numbers = #tpu.dot_dimension_numbers<[1], [0], [0], [1], [0, 0, 1, 1], [], []>} : vector<73x32xf32>, vector<32x384xf32>, vector<73x384xf32> -> vector<73x384xf32>
    %52 = arith.addf %46, %51 : vector<73x384xf32>
    %c0_44 = arith.constant 0 : index
    %c24 = arith.constant 24 : index
    %c128_45 = arith.constant 128 : index
    %53 = vector.load %arg1[%c0_44, %c24, %c128_45] : memref<1x32x640xf32, #tpu.memory_space<vmem>>, vector<1x1x384xf32>
    %54 = vector.shape_cast %53 : vector<1x1x384xf32> to vector<1x384xf32>
    %c0_46 = arith.constant 0 : index
    %c16 = arith.constant 16 : index
    %c128_47 = arith.constant 128 : index
    %55 = vector.load %arg1[%c0_46, %c16, %c128_47] : memref<1x32x640xf32, #tpu.memory_space<vmem>>, vector<1x8x384xf32>
    %56 = vector.shape_cast %55 : vector<1x8x384xf32> to vector<8x384xf32>
    %c0_48 = arith.constant 0 : index
    %c0_49 = arith.constant 0 : index
    %c0_50 = arith.constant 0 : index
    %57 = vector.load %arg2[%c0_48, %c0_49, %c0_50] : memref<1x8x384xf32, #tpu.memory_space<vmem>>, vector<1x8x384xf32>
    %58 = vector.shape_cast %57 : vector<1x8x384xf32> to vector<8x384xf32>
    %59 = vector.extract_strided_slice %52 {offsets = [0, 0], sizes = [24, 384], strides = [1, 1]} : vector<73x384xf32> to vector<24x384xf32>
    %60 = arith.negf %59 : vector<24x384xf32>
    %61 = math.exp %60 : vector<24x384xf32>
    %cst_51 = arith.constant 1.000000e+00 : f32
    %62 = vector.broadcast %cst_51 : f32 to vector<24x384xf32>
    %63 = arith.addf %62, %61 : vector<24x384xf32>
    %64 = arith.divf %62, %63 : vector<24x384xf32>
    %65 = vector.extract_strided_slice %64 {offsets = [0, 0], sizes = [8, 384], strides = [1, 1]} : vector<24x384xf32> to vector<8x384xf32>
    %66 = vector.extract_strided_slice %64 {offsets = [8, 0], sizes = [8, 384], strides = [1, 1]} : vector<24x384xf32> to vector<8x384xf32>
    %67 = vector.extract_strided_slice %64 {offsets = [16, 0], sizes = [8, 384], strides = [1, 1]} : vector<24x384xf32> to vector<8x384xf32>
    %68 = math.exp %67 : vector<8x384xf32>
    %69 = arith.mulf %68, %65 : vector<8x384xf32>
    %70 = arith.subf %66, %69 : vector<8x384xf32>
    %71 = arith.negf %70 : vector<8x384xf32>
    %72 = math.exp %71 : vector<8x384xf32>
    %cst_52 = arith.constant 1.000000e+00 : f32
    %73 = vector.broadcast %cst_52 : f32 to vector<8x384xf32>
    %74 = arith.addf %73, %72 : vector<8x384xf32>
    %75 = arith.divf %73, %74 : vector<8x384xf32>
    %76 = vector.extract_strided_slice %52 {offsets = [24, 0], sizes = [8, 384], strides = [1, 1]} : vector<73x384xf32> to vector<8x384xf32>
    %77 = math.tanh %76 : vector<8x384xf32>
    %78 = arith.mulf %75, %58 : vector<8x384xf32>
    %79 = arith.mulf %65, %77 : vector<8x384xf32>
    %80 = arith.addf %78, %79 : vector<8x384xf32>
    %81 = vector.broadcast %54 : vector<1x384xf32> to vector<8x384xf32>
    %82 = arith.mulf %80, %81 : vector<8x384xf32>
    %c0_53 = arith.constant 0 : index
    %c0_54 = arith.constant 0 : index
    %c0_55 = arith.constant 0 : index
    %83 = vector.load %arg7[%c0_53, %c0_54, %c0_55] : memref<1x8x384xf32, #tpu.memory_space<vmem>>, vector<1x8x384xf32>
    %84 = vector.shape_cast %83 : vector<1x8x384xf32> to vector<8x384xf32>
    %85 = vector.shape_cast %82 : vector<8x384xf32> to vector<1x8x384xf32>
    tpu.vector_store %arg7[%c0_53, %c0_54, %c0_55], %85 {strides = array<i32>} : memref<1x8x384xf32, #tpu.memory_space<vmem>>, vector<1x8x384xf32>,
    %86 = vector.extract_strided_slice %52 {offsets = [40, 0], sizes = [16, 384], strides = [1, 1]} : vector<73x384xf32> to vector<16x384xf32>
    %87 = vector.extract_strided_slice %52 {offsets = [56, 0], sizes = [16, 384], strides = [1, 1]} : vector<73x384xf32> to vector<16x384xf32>
    %88 = vector.extract_strided_slice %52 {offsets = [72, 0], sizes = [1, 384], strides = [1, 1]} : vector<73x384xf32> to vector<1x384xf32>
    %cst_56 = arith.constant 1.000000e+00 : f32
    %89 = vector.broadcast %cst_56 : f32 to vector<1x384xf32>
    %90 = arith.subf %54, %89 : vector<1x384xf32>
    %cst_57 = arith.constant 1.000000e+09 : f32
    %91 = vector.broadcast %cst_57 : f32 to vector<1x384xf32>
    %92 = arith.mulf %90, %91 : vector<1x384xf32>
    %93 = arith.addf %88, %92 : vector<1x384xf32>
    %cst_58 = arith.constant dense<0xFF800000> : vector<1xf32>
    %94 = vector.multi_reduction <maximumf>, %93, %cst_58 [1] : vector<1x384xf32> to vector<1xf32>
    %95 = vector.shape_cast %94 : vector<1xf32> to vector<1x1xf32>
    %96 = vector.broadcast %95 : vector<1x1xf32> to vector<1x384xf32>
    %97 = arith.subf %93, %96 : vector<1x384xf32>
    %98 = math.exp %97 : vector<1x384xf32>
    %cst_59 = arith.constant dense<0.000000e+00> : vector<1xf32>
    %99 = vector.multi_reduction <add>, %98, %cst_59 [1] : vector<1x384xf32> to vector<1xf32>
    %100 = vector.shape_cast %99 : vector<1xf32> to vector<1x1xf32>
    %101 = vector.broadcast %98 : vector<1x384xf32> to vector<16x384xf32>
    %102 = arith.mulf %87, %101 : vector<16x384xf32>
    %cst_60 = arith.constant dense<0.000000e+00> : vector<16xf32>
    %103 = vector.multi_reduction <add>, %102, %cst_60 [1] : vector<16x384xf32> to vector<16xf32>
    %104 = vector.shape_cast %103 : vector<16xf32> to vector<16x1xf32>
    %105 = tpu.reciprocal %100 {approx = true} : vector<1x1xf32> -> vector<1x1xf32>
    %106 = vector.broadcast %105 : vector<1x1xf32> to vector<16x1xf32>
    %107 = arith.mulf %104, %106 : vector<16x1xf32>
    %c0_61 = arith.constant 0 : index
    %c0_62 = arith.constant 0 : index
    %108 = vector.load %arg5[%c0_61, %c0_62] : memref<40x16xf32, #tpu.memory_space<vmem>>, vector<4x16xf32>
    %cst_63 = arith.constant dense<0.000000e+00> : vector<4x1xf32>
    %109 = tpu.matmul %108, %107, %cst_63 {dimension_numbers = #tpu.dot_dimension_numbers<[1], [0], [0], [1], [0, 0, 1, 1], [], []>} : vector<4x16xf32>, vector<16x1xf32>, vector<4x1xf32> -> vector<4x1xf32>
    %c32 = arith.constant 32 : index
    %c0_64 = arith.constant 0 : index
    %110 = vector.load %arg5[%c32, %c0_64] : memref<40x16xf32, #tpu.memory_space<vmem>>, vector<4x1xf32>
    %111 = arith.addf %109, %110 : vector<4x1xf32>
    %cst_65 = arith.constant dense<0.000000e+00> : vector<1xf32>
    %112 = vector.multi_reduction <add>, %111, %cst_65 [0] : vector<4x1xf32> to vector<1xf32>
    %113 = vector.shape_cast %112 : vector<1xf32> to vector<1x1xf32>
    %cst_66 = arith.constant 4.000000e+00 : f32
    %114 = vector.broadcast %cst_66 : f32 to vector<1x1xf32>
    %115 = arith.divf %113, %114 : vector<1x1xf32>
    %116 = vector.broadcast %115 : vector<1x1xf32> to vector<4x1xf32>
    %117 = arith.subf %111, %116 : vector<4x1xf32>
    %118 = arith.mulf %117, %117 : vector<4x1xf32>
    %cst_67 = arith.constant dense<0.000000e+00> : vector<1xf32>
    %119 = vector.multi_reduction <add>, %118, %cst_67 [0] : vector<4x1xf32> to vector<1xf32>
    %120 = vector.shape_cast %119 : vector<1xf32> to vector<1x1xf32>
    %cst_68 = arith.constant 4.000000e+00 : f32
    %121 = vector.broadcast %cst_68 : f32 to vector<1x1xf32>
    %122 = arith.divf %120, %121 : vector<1x1xf32>
    %123 = vector.broadcast %115 : vector<1x1xf32> to vector<4x1xf32>
    %124 = arith.subf %111, %123 : vector<4x1xf32>
    %cst_69 = arith.constant 9.99999974E-6 : f32
    %125 = vector.broadcast %cst_69 : f32 to vector<1x1xf32>
    %126 = arith.addf %122, %125 : vector<1x1xf32>
    %127 = math.rsqrt %126 : vector<1x1xf32>
    %128 = vector.broadcast %127 : vector<1x1xf32> to vector<4x1xf32>
    %129 = arith.mulf %124, %128 : vector<4x1xf32>
    %c32_70 = arith.constant 32 : index
    %c1_71 = arith.constant 1 : index
    %130 = vector.load %arg5[%c32_70, %c1_71] : memref<40x16xf32, #tpu.memory_space<vmem>>, vector<4x1xf32>
    %131 = arith.mulf %129, %130 : vector<4x1xf32>
    %c32_72 = arith.constant 32 : index
    %c2_73 = arith.constant 2 : index
    %132 = vector.load %arg5[%c32_72, %c2_73] : memref<40x16xf32, #tpu.memory_space<vmem>>, vector<4x1xf32>
    %133 = arith.addf %131, %132 : vector<4x1xf32>
    %c32_74 = arith.constant 32 : index
    %c3_75 = arith.constant 3 : index
    %134 = vector.load %arg5[%c32_74, %c3_75] : memref<40x16xf32, #tpu.memory_space<vmem>>, vector<1x1xf32>
    %cst_76 = arith.constant 0.000000e+00 : f32
    %135 = vector.broadcast %cst_76 : f32 to vector<4x1xf32>
    %136 = arith.maximumf %133, %135 : vector<4x1xf32>
    %cst_77 = arith.constant 0.000000e+00 : f32
    %137 = vector.broadcast %cst_77 : f32 to vector<4x1xf32>
    %138 = arith.minimumf %133, %137 : vector<4x1xf32>
    %139 = vector.broadcast %134 : vector<1x1xf32> to vector<4x1xf32>
    %140 = arith.mulf %139, %138 : vector<4x1xf32>
    %141 = arith.addf %136, %140 : vector<4x1xf32>
    %c8_78 = arith.constant 8 : index
    %c0_79 = arith.constant 0 : index
    %142 = vector.load %arg5[%c8_78, %c0_79] : memref<40x16xf32, #tpu.memory_space<vmem>>, vector<16x4xf32>
    %cst_80 = arith.constant dense<0.000000e+00> : vector<16x1xf32>
    %143 = tpu.matmul %142, %141, %cst_80 {dimension_numbers = #tpu.dot_dimension_numbers<[1], [0], [0], [1], [0, 0, 1, 1], [], []>} : vector<16x4xf32>, vector<4x1xf32>, vector<16x1xf32> -> vector<16x1xf32>
    %c8_81 = arith.constant 8 : index
    %c4_82 = arith.constant 4 : index
    %144 = vector.load %arg5[%c8_81, %c4_82] : memref<40x16xf32, #tpu.memory_space<vmem>>, vector<16x1xf32>
    %145 = arith.addf %143, %144 : vector<16x1xf32>
    %146 = vector.broadcast %145 : vector<16x1xf32> to vector<16x384xf32>
    %147 = arith.addf %87, %146 : vector<16x384xf32>
    %148 = arith.addf %147, %86 : vector<16x384xf32>
    %c24_83 = arith.constant 24 : index
    %c0_84 = arith.constant 0 : index
    %149 = vector.load %arg5[%c24_83, %c0_84] : memref<40x16xf32, #tpu.memory_space<vmem>>, vector<8x16xf32>
    %cst_85 = arith.constant dense<0.000000e+00> : vector<8x384xf32>
    %150 = tpu.matmul %149, %148, %cst_85 {dimension_numbers = #tpu.dot_dimension_numbers<[1], [0], [0], [1], [0, 0, 1, 1], [], []>} : vector<8x16xf32>, vector<16x384xf32>, vector<8x384xf32> -> vector<8x384xf32>
    %151 = arith.negf %150 : vector<8x384xf32>
    %152 = math.exp %151 : vector<8x384xf32>
    %cst_86 = arith.constant 1.000000e+00 : f32
    %153 = vector.broadcast %cst_86 : f32 to vector<8x384xf32>
    %154 = arith.addf %153, %152 : vector<8x384xf32>
    %155 = arith.divf %153, %154 : vector<8x384xf32>
    %156 = math.tanh %150 : vector<8x384xf32>
    %157 = arith.addf %56, %156 : vector<8x384xf32>
    %158 = arith.mulf %155, %157 : vector<8x384xf32>
    %159 = vector.broadcast %54 : vector<1x384xf32> to vector<8x384xf32>
    %160 = arith.mulf %158, %159 : vector<8x384xf32>
    %c0_87 = arith.constant 0 : index
    %c0_88 = arith.constant 0 : index
    %c0_89 = arith.constant 0 : index
    %161 = vector.load %arg8[%c0_87, %c0_88, %c0_89] : memref<1x8x384xf32, #tpu.memory_space<vmem>>, vector<1x8x384xf32>
    %162 = vector.shape_cast %161 : vector<1x8x384xf32> to vector<8x384xf32>
    %163 = vector.shape_cast %160 : vector<8x384xf32> to vector<1x8x384xf32>
    tpu.vector_store %arg8[%c0_87, %c0_88, %c0_89], %163 {strides = array<i32>} : memref<1x8x384xf32, #tpu.memory_space<vmem>>, vector<1x8x384xf32>,
    %cst_90 = arith.constant 0.000000e+00 : f32
    %164 = vector.broadcast %cst_90 : f32 to vector<16x128xf32>
    %c0_91 = arith.constant 0 : index
    %c0_92 = arith.constant 0 : index
    %165 = vector.load %arg9[%c0_91, %c0_92] : memref<16x640xf32, #tpu.memory_space<vmem>>, vector<16x128xf32>
    tpu.vector_store %arg9[%c0_91, %c0_92], %164 {strides = array<i32>} : memref<16x640xf32, #tpu.memory_space<vmem>>, vector<16x128xf32>,
    %cst_93 = arith.constant 0.000000e+00 : f32
    %166 = vector.broadcast %cst_93 : f32 to vector<16x128xf32>
    %c0_94 = arith.constant 0 : index
    %c512 = arith.constant 512 : index
    %167 = vector.load %arg9[%c0_94, %c512] : memref<16x640xf32, #tpu.memory_space<vmem>>, vector<16x128xf32>
    tpu.vector_store %arg9[%c0_94, %c512], %166 {strides = array<i32>} : memref<16x640xf32, #tpu.memory_space<vmem>>, vector<16x128xf32>,
    %c0_95 = arith.constant 0 : index
    %c128_96 = arith.constant 128 : index
    %168 = vector.load %arg9[%c0_95, %c128_96] : memref<16x640xf32, #tpu.memory_space<vmem>>, vector<8x384xf32>
    tpu.vector_store %arg9[%c0_95, %c128_96], %82 {strides = array<i32>} : memref<16x640xf32, #tpu.memory_space<vmem>>, vector<8x384xf32>,
    %c8_97 = arith.constant 8 : index
    %c128_98 = arith.constant 128 : index
    %169 = vector.load %arg9[%c8_97, %c128_98] : memref<16x640xf32, #tpu.memory_space<vmem>>, vector<8x384xf32>
    tpu.vector_store %arg9[%c8_97, %c128_98], %160 {strides = array<i32>} : memref<16x640xf32, #tpu.memory_space<vmem>>, vector<8x384xf32>,
    %c0_99 = arith.constant 0 : index
    %c109_100 = arith.constant 109 : index
    %170 = vector.load %arg9[%c0_99, %c109_100] : memref<16x640xf32, #tpu.memory_space<vmem>>, vector<16x384xf32>
    %c0_101 = arith.constant 0 : index
    %c0_102 = arith.constant 0 : index
    %c0_103 = arith.constant 0 : index
    %171 = vector.load %arg4[%c0_101, %c0_102, %c0_103] : memref<9x16x16xf32, #tpu.memory_space<vmem>>, vector<1x16x16xf32>
    %172 = vector.shape_cast %171 : vector<1x16x16xf32> to vector<16x16xf32>
    %cst_104 = arith.constant dense<0.000000e+00> : vector<16x384xf32>
    %173 = tpu.matmul %172, %170, %cst_104 {dimension_numbers = #tpu.dot_dimension_numbers<[1], [0], [0], [1], [0, 0, 1, 1], [], []>} : vector<16x16xf32>, vector<16x384xf32>, vector<16x384xf32> -> vector<16x384xf32>
    %c0_105 = arith.constant 0 : index
    %c110_106 = arith.constant 110 : index
    %174 = vector.load %arg9[%c0_105, %c110_106] : memref<16x640xf32, #tpu.memory_space<vmem>>, vector<16x384xf32>
    %c1_107 = arith.constant 1 : index
    %c0_108 = arith.constant 0 : index
    %c0_109 = arith.constant 0 : index
    %175 = vector.load %arg4[%c1_107, %c0_108, %c0_109] : memref<9x16x16xf32, #tpu.memory_space<vmem>>, vector<1x16x16xf32>
    %176 = vector.shape_cast %175 : vector<1x16x16xf32> to vector<16x16xf32>
    %cst_110 = arith.constant dense<0.000000e+00> : vector<16x384xf32>
    %177 = tpu.matmul %176, %174, %cst_110 {dimension_numbers = #tpu.dot_dimension_numbers<[1], [0], [0], [1], [0, 0, 1, 1], [], []>} : vector<16x16xf32>, vector<16x384xf32>, vector<16x384xf32> -> vector<16x384xf32>
    %178 = arith.addf %173, %177 : vector<16x384xf32>
    %c0_111 = arith.constant 0 : index
    %c111_112 = arith.constant 111 : index
    %179 = vector.load %arg9[%c0_111, %c111_112] : memref<16x640xf32, #tpu.memory_space<vmem>>, vector<16x384xf32>
    %c2_113 = arith.constant 2 : index
    %c0_114 = arith.constant 0 : index
    %c0_115 = arith.constant 0 : index
    %180 = vector.load %arg4[%c2_113, %c0_114, %c0_115] : memref<9x16x16xf32, #tpu.memory_space<vmem>>, vector<1x16x16xf32>
    %181 = vector.shape_cast %180 : vector<1x16x16xf32> to vector<16x16xf32>
    %cst_116 = arith.constant dense<0.000000e+00> : vector<16x384xf32>
    %182 = tpu.matmul %181, %179, %cst_116 {dimension_numbers = #tpu.dot_dimension_numbers<[1], [0], [0], [1], [0, 0, 1, 1], [], []>} : vector<16x16xf32>, vector<16x384xf32>, vector<16x384xf32> -> vector<16x384xf32>
    %183 = arith.addf %178, %182 : vector<16x384xf32>
    %c0_117 = arith.constant 0 : index
    %c127_118 = arith.constant 127 : index
    %184 = vector.load %arg9[%c0_117, %c127_118] : memref<16x640xf32, #tpu.memory_space<vmem>>, vector<16x384xf32>
    %c3_119 = arith.constant 3 : index
    %c0_120 = arith.constant 0 : index
    %c0_121 = arith.constant 0 : index
    %185 = vector.load %arg4[%c3_119, %c0_120, %c0_121] : memref<9x16x16xf32, #tpu.memory_space<vmem>>, vector<1x16x16xf32>
    %186 = vector.shape_cast %185 : vector<1x16x16xf32> to vector<16x16xf32>
    %cst_122 = arith.constant dense<0.000000e+00> : vector<16x384xf32>
    %187 = tpu.matmul %186, %184, %cst_122 {dimension_numbers = #tpu.dot_dimension_numbers<[1], [0], [0], [1], [0, 0, 1, 1], [], []>} : vector<16x16xf32>, vector<16x384xf32>, vector<16x384xf32> -> vector<16x384xf32>
    %188 = arith.addf %183, %187 : vector<16x384xf32>
    %c0_123 = arith.constant 0 : index
    %c128_124 = arith.constant 128 : index
    %189 = vector.load %arg9[%c0_123, %c128_124] : memref<16x640xf32, #tpu.memory_space<vmem>>, vector<16x384xf32>
    %c4_125 = arith.constant 4 : index
    %c0_126 = arith.constant 0 : index
    %c0_127 = arith.constant 0 : index
    %190 = vector.load %arg4[%c4_125, %c0_126, %c0_127] : memref<9x16x16xf32, #tpu.memory_space<vmem>>, vector<1x16x16xf32>
    %191 = vector.shape_cast %190 : vector<1x16x16xf32> to vector<16x16xf32>
    %cst_128 = arith.constant dense<0.000000e+00> : vector<16x384xf32>
    %192 = tpu.matmul %191, %189, %cst_128 {dimension_numbers = #tpu.dot_dimension_numbers<[1], [0], [0], [1], [0, 0, 1, 1], [], []>} : vector<16x16xf32>, vector<16x384xf32>, vector<16x384xf32> -> vector<16x384xf32>
    %193 = arith.addf %188, %192 : vector<16x384xf32>
    %c0_129 = arith.constant 0 : index
    %c129_130 = arith.constant 129 : index
    %194 = vector.load %arg9[%c0_129, %c129_130] : memref<16x640xf32, #tpu.memory_space<vmem>>, vector<16x384xf32>
    %c5_131 = arith.constant 5 : index
    %c0_132 = arith.constant 0 : index
    %c0_133 = arith.constant 0 : index
    %195 = vector.load %arg4[%c5_131, %c0_132, %c0_133] : memref<9x16x16xf32, #tpu.memory_space<vmem>>, vector<1x16x16xf32>
    %196 = vector.shape_cast %195 : vector<1x16x16xf32> to vector<16x16xf32>
    %cst_134 = arith.constant dense<0.000000e+00> : vector<16x384xf32>
    %197 = tpu.matmul %196, %194, %cst_134 {dimension_numbers = #tpu.dot_dimension_numbers<[1], [0], [0], [1], [0, 0, 1, 1], [], []>} : vector<16x16xf32>, vector<16x384xf32>, vector<16x384xf32> -> vector<16x384xf32>
    %198 = arith.addf %193, %197 : vector<16x384xf32>
    %c0_135 = arith.constant 0 : index
    %c145_136 = arith.constant 145 : index
    %199 = vector.load %arg9[%c0_135, %c145_136] : memref<16x640xf32, #tpu.memory_space<vmem>>, vector<16x384xf32>
    %c6_137 = arith.constant 6 : index
    %c0_138 = arith.constant 0 : index
    %c0_139 = arith.constant 0 : index
    %200 = vector.load %arg4[%c6_137, %c0_138, %c0_139] : memref<9x16x16xf32, #tpu.memory_space<vmem>>, vector<1x16x16xf32>
    %201 = vector.shape_cast %200 : vector<1x16x16xf32> to vector<16x16xf32>
    %cst_140 = arith.constant dense<0.000000e+00> : vector<16x384xf32>
    %202 = tpu.matmul %201, %199, %cst_140 {dimension_numbers = #tpu.dot_dimension_numbers<[1], [0], [0], [1], [0, 0, 1, 1], [], []>} : vector<16x16xf32>, vector<16x384xf32>, vector<16x384xf32> -> vector<16x384xf32>
    %203 = arith.addf %198, %202 : vector<16x384xf32>
    %c0_141 = arith.constant 0 : index
    %c146_142 = arith.constant 146 : index
    %204 = vector.load %arg9[%c0_141, %c146_142] : memref<16x640xf32, #tpu.memory_space<vmem>>, vector<16x384xf32>
    %c7_143 = arith.constant 7 : index
    %c0_144 = arith.constant 0 : index
    %c0_145 = arith.constant 0 : index
    %205 = vector.load %arg4[%c7_143, %c0_144, %c0_145] : memref<9x16x16xf32, #tpu.memory_space<vmem>>, vector<1x16x16xf32>
    %206 = vector.shape_cast %205 : vector<1x16x16xf32> to vector<16x16xf32>
    %cst_146 = arith.constant dense<0.000000e+00> : vector<16x384xf32>
    %207 = tpu.matmul %206, %204, %cst_146 {dimension_numbers = #tpu.dot_dimension_numbers<[1], [0], [0], [1], [0, 0, 1, 1], [], []>} : vector<16x16xf32>, vector<16x384xf32>, vector<16x384xf32> -> vector<16x384xf32>
    %208 = arith.addf %203, %207 : vector<16x384xf32>
    %c0_147 = arith.constant 0 : index
    %c147_148 = arith.constant 147 : index
    %209 = vector.load %arg9[%c0_147, %c147_148] : memref<16x640xf32, #tpu.memory_space<vmem>>, vector<16x384xf32>
    %c8_149 = arith.constant 8 : index
    %c0_150 = arith.constant 0 : index
    %c0_151 = arith.constant 0 : index
    %210 = vector.load %arg4[%c8_149, %c0_150, %c0_151] : memref<9x16x16xf32, #tpu.memory_space<vmem>>, vector<1x16x16xf32>
    %211 = vector.shape_cast %210 : vector<1x16x16xf32> to vector<16x16xf32>
    %cst_152 = arith.constant dense<0.000000e+00> : vector<16x384xf32>
    %212 = tpu.matmul %211, %209, %cst_152 {dimension_numbers = #tpu.dot_dimension_numbers<[1], [0], [0], [1], [0, 0, 1, 1], [], []>} : vector<16x16xf32>, vector<16x384xf32>, vector<16x384xf32> -> vector<16x384xf32>
    %213 = arith.addf %208, %212 : vector<16x384xf32>
    %214 = vector.extract_strided_slice %52 {offsets = [32, 0], sizes = [8, 384], strides = [1, 1]} : vector<73x384xf32> to vector<8x384xf32>
    %215 = vector.extract_strided_slice %213 {offsets = [0, 0], sizes = [8, 384], strides = [1, 1]} : vector<16x384xf32> to vector<8x384xf32>
    %216 = arith.addf %214, %215 : vector<8x384xf32>
    %217 = arith.negf %216 : vector<8x384xf32>
    %218 = math.exp %217 : vector<8x384xf32>
    %cst_153 = arith.constant 1.000000e+00 : f32
    %219 = vector.broadcast %cst_153 : f32 to vector<8x384xf32>
    %220 = arith.addf %219, %218 : vector<8x384xf32>
    %221 = arith.divf %219, %220 : vector<8x384xf32>
    %222 = vector.extract_strided_slice %213 {offsets = [8, 0], sizes = [8, 384], strides = [1, 1]} : vector<16x384xf32> to vector<8x384xf32>
    %223 = math.tanh %222 : vector<8x384xf32>
    %224 = arith.mulf %221, %223 : vector<8x384xf32>
    %c0_154 = arith.constant 0 : index
    %c0_155 = arith.constant 0 : index
    %c0_156 = arith.constant 0 : index
    %225 = vector.load %arg6[%c0_154, %c0_155, %c0_156] : memref<1x8x384xf32, #tpu.memory_space<vmem>>, vector<1x8x384xf32>
    %226 = vector.shape_cast %225 : vector<1x8x384xf32> to vector<8x384xf32>
    %227 = vector.shape_cast %224 : vector<8x384xf32> to vector<1x8x384xf32>
    tpu.vector_store %arg6[%c0_154, %c0_155, %c0_156], %227 {strides = array<i32>} : memref<1x8x384xf32, #tpu.memory_space<vmem>>, vector<1x8x384xf32>,
    return
  }
  func.func @transform_0(%arg0: i32) -> (i32, i32, i32) {
    %c0_i32 = arith.constant 0 : i32
    %c0_i32_0 = arith.constant 0 : i32
    %c0_i32_1 = arith.constant 0 : i32
    return %arg0, %c0_i32, %c0_i32_0 : i32, i32, i32
  }
  func.func @transform_1(%arg0: i32) -> (i32, i32, i32) {
    %c0_i32 = arith.constant 0 : i32
    %c0_i32_0 = arith.constant 0 : i32
    %c0_i32_1 = arith.constant 0 : i32
    return %arg0, %c0_i32, %c0_i32_0 : i32, i32, i32
  }
  func.func @transform_2(%arg0: i32) -> (i32, i32, i32) {
    %c0_i32 = arith.constant 0 : i32
    %c0_i32_0 = arith.constant 0 : i32
    %c0_i32_1 = arith.constant 0 : i32
    %c0_i32_2 = arith.constant 0 : i32
    return %c0_i32, %c0_i32_0, %c0_i32_1 : i32, i32, i32
  }
  func.func @transform_3(%arg0: i32) -> (i32, i32, i32) {
    %c0_i32 = arith.constant 0 : i32
    %c0_i32_0 = arith.constant 0 : i32
    %c0_i32_1 = arith.constant 0 : i32
    %c0_i32_2 = arith.constant 0 : i32
    return %c0_i32, %c0_i32_0, %c0_i32_1 : i32, i32, i32
  }
  func.func @transform_4(%arg0: i32) -> (i32, i32) {
    %c0_i32 = arith.constant 0 : i32
    %c0_i32_0 = arith.constant 0 : i32
    %c0_i32_1 = arith.constant 0 : i32
    return %c0_i32, %c0_i32_0 : i32, i32
  }
  func.func @transform_5(%arg0: i32) -> (i32, i32, i32) {
    %c0_i32 = arith.constant 0 : i32
    %c0_i32_0 = arith.constant 0 : i32
    %c0_i32_1 = arith.constant 0 : i32
    return %arg0, %c0_i32, %c0_i32_0 : i32, i32, i32
  }
  func.func @transform_6(%arg0: i32) -> (i32, i32, i32) {
    %c0_i32 = arith.constant 0 : i32
    %c0_i32_0 = arith.constant 0 : i32
    %c0_i32_1 = arith.constant 0 : i32
    return %arg0, %c0_i32, %c0_i32_0 : i32, i32, i32
  }
  func.func @transform_7(%arg0: i32) -> (i32, i32, i32) {
    %c0_i32 = arith.constant 0 : i32
    %c0_i32_0 = arith.constant 0 : i32
    %c0_i32_1 = arith.constant 0 : i32
    return %arg0, %c0_i32, %c0_i32_0 : i32, i32, i32
  }
}

</mosaic_0001>

<llo_original>
// kernel: nam_forward.1
$region0: #{nam_forward.1}
  #allocation0 [shape = 'u32[]', space=smem, size = 0x4, offset = 0x4, fixed_abs, tag = 'smem constant byte address 0x4 - core index']
  #allocation1 [shape = 'u32[144,128]{1,0:T(1,128)}', space=vmem, size = 0x12000, scoped, tag = 'internal scratch']
  #allocation2 [shape = 'f32[16,640]{1,0:T(8,128)}', space=vmem, size = 0xa000, scoped, tag = 'scratch operand']
  %s0 = inlined_call_operand.vmem [shape: f32[2,32,640], index: 0, kind: input, shape index: {}]
  %s1 = inlined_call_operand.vmem [shape: f32[2,8,384], index: 1, kind: input, shape index: {}]
  %s2 = inlined_call_operand.vmem [shape: f32[9,73,32], index: 2, kind: input, shape index: {}]
  %s3 = inlined_call_operand.vmem [shape: f32[9,16,16], index: 3, kind: input, shape index: {}]
  %s4 = inlined_call_operand.vmem [shape: f32[40,16], index: 4, kind: input, shape index: {}]
  %s5 = inlined_call_operand.vmem [shape: f32[2,8,384], index: 5, kind: output, shape index: {0}]
  %s6 = inlined_call_operand.vmem [shape: f32[2,8,384], index: 6, kind: output, shape index: {1}]
  %s7 = inlined_call_operand.vmem [shape: f32[2,8,384], index: 7, kind: output, shape index: {2}]
  %8 = xla_tuple %s5, %s6, %s7
  %s9 = sld [smem:[#allocation0]]
  $region69: #{nam_forward.1} parent=0
    _
  %s11 = ssub.s32 1, %s9
  %s12 = scalar_select 0, %s11, %s9
  loop: start=0, step=1, limit=4
  $region2: #{nam_forward.1} parent=0 // loop_pre_header
    _
  $region3: #{nam_forward.1} parent=0 // loop_header
    %s14 = sphi 0, %s18
    %p15 = scmp.ge.s32.totalorder %s14, 4
    %s24 = sphi 0, %s26
    %s27 = sphi 0, %s24
    %s28 = sphi 0, %s27
    %s44 = sphi 0, %s28
    %s50 = sphi 0, %s52
    %s53 = sphi 0, %s50
    %s54 = sphi 0, %s53
    %s70 = sphi 0, %s54
    %s74 = sphi 0, %s74
    %s76 = sphi 0, %s74
    %s77 = sphi 0, %s76
    %s91 = sphi 0, %s77
    %s95 = sphi 0, %s95
    %s97 = sphi 0, %s95
    %s98 = sphi 0, %s97
    %s112 = sphi 0, %s98
    %s116 = sphi 0, %s116
    %s118 = sphi 0, %s116
    %s119 = sphi 0, %s118
    %s133 = sphi 0, %s119
    %s139 = sphi 0, %s141
    %s142 = sphi 0, %s139
    %s143 = sphi 0, %s142
    %s159 = sphi 0, %s143
    %s165 = sphi 0, %s167
    %s168 = sphi 0, %s165
    %s169 = sphi 0, %s168
    %s185 = sphi 0, %s169
    %s191 = sphi 0, %s193
    %s194 = sphi 0, %s191
    %s195 = sphi 0, %s194
    %s211 = sphi 0, %s195
  $region4: #{nam_forward.1} parent=0 // loop_header_branch
    %17 = sbr.rel (%p15) target = $region8
  $region5: #{nam_forward.1} parent=0 // loop_body
    %s19 = ssub.s32 %s14, 1
    %s20 = ssub.s32 %s14, 2
    %s21 = sadd.s32 %s14, 1
    %s22 = ssub.s32 %s14, %s21
    %p23 = scmp.eq.s32.totalorder %s22, 0
    %s25 = sadd.s32 %s24, 1
    %s26 = scalar_select %p23, %s24, %s25
    %p29 = pneg %p23
    %p30 = scmp.eq.s32.totalorder %s14, 1
    %p31 = por %p29, %p30
    %p32 = scmp.ne.s32.totalorder %s24, %s27
    %p33 = scmp.eq.s32.totalorder %s14, 0
    %p34 = por %p32, %p33
    %p35 = scmp.ne.s32.totalorder %s24, %s27
    %p36 = scmp.eq.s32.totalorder %s19, 1
    %p37 = por %p35, %p36
    %p38 = scmp.ne.s32.totalorder %s27, %s28
    %p39 = scmp.eq.s32.totalorder %s19, 0
    %p40 = por %p38, %p39
    %p41 = scmp.ne.s32.totalorder %s27, %s28
    %p42 = scmp.eq.s32.totalorder %s20, 1
    %p43 = por %p41, %p42
    %p45 = scmp.ne.s32.totalorder %s28, %s44
    %p46 = scmp.eq.s32.totalorder %s20, 0
    %p47 = por %p45, %p46
    %s48 = ssub.s32 %s14, %s21
    %p49 = scmp.eq.s32.totalorder %s48, 0
    %s51 = sadd.s32 %s50, 1
    %s52 = scalar_select %p49, %s50, %s51
    %p55 = pneg %p49
    %p56 = scmp.eq.s32.totalorder %s14, 1
    %p57 = por %p55, %p56
    %p58 = scmp.ne.s32.totalorder %s50, %s53
    %p59 = scmp.eq.s32.totalorder %s14, 0
    %p60 = por %p58, %p59
    %p61 = scmp.ne.s32.totalorder %s50, %s53
    %p62 = scmp.eq.s32.totalorder %s19, 1
    %p63 = por %p61, %p62
    %p64 = scmp.ne.s32.totalorder %s53, %s54
    %p65 = scmp.eq.s32.totalorder %s19, 0
    %p66 = por %p64, %p65
    %p67 = scmp.ne.s32.totalorder %s53, %s54
    %p68 = scmp.eq.s32.totalorder %s20, 1
    %p69 = por %p67, %p68
    %p71 = scmp.ne.s32.totalorder %s54, %s70
    %p72 = scmp.eq.s32.totalorder %s20, 0
    %p73 = por %p71, %p72
    %s75 = sadd.s32 %s74, 1
    %p78 = scmp.eq.s32.totalorder %s14, 1
    %p79 = scmp.ne.s32.totalorder %s74, %s76
    %p80 = scmp.eq.s32.totalorder %s14, 0
    %p81 = por %p79, %p80
    %p82 = scmp.ne.s32.totalorder %s74, %s76
    %p83 = scmp.eq.s32.totalorder %s19, 1
    %p84 = por %p82, %p83
    %p85 = scmp.ne.s32.totalorder %s76, %s77
    %p86 = scmp.eq.s32.totalorder %s19, 0
    %p87 = por %p85, %p86
    %p88 = scmp.ne.s32.totalorder %s76, %s77
    %p89 = scmp.eq.s32.totalorder %s20, 1
    %p90 = por %p88, %p89
    %p92 = scmp.ne.s32.totalorder %s77, %s91
    %p93 = scmp.eq.s32.totalorder %s20, 0
    %p94 = por %p92, %p93
    %s96 = sadd.s32 %s95, 1
    %p99 = scmp.eq.s32.totalorder %s14, 1
    %p100 = scmp.ne.s32.totalorder %s95, %s97
    %p101 = scmp.eq.s32.totalorder %s14, 0
    %p102 = por %p100, %p101
    %p103 = scmp.ne.s32.totalorder %s95, %s97
    %p104 = scmp.eq.s32.totalorder %s19, 1
    %p105 = por %p103, %p104
    %p106 = scmp.ne.s32.totalorder %s97, %s98
    %p107 = scmp.eq.s32.totalorder %s19, 0
    %p108 = por %p106, %p107
    %p109 = scmp.ne.s32.totalorder %s97, %s98
    %p110 = scmp.eq.s32.totalorder %s20, 1
    %p111 = por %p109, %p110
    %p113 = scmp.ne.s32.totalorder %s98, %s112
    %p114 = scmp.eq.s32.totalorder %s20, 0
    %p115 = por %p113, %p114
    %s117 = sadd.s32 %s116, 1
    %p120 = scmp.eq.s32.totalorder %s14, 1
    %p121 = scmp.ne.s32.totalorder %s116, %s118
    %p122 = scmp.eq.s32.totalorder %s14, 0
    %p123 = por %p121, %p122
    %p124 = scmp.ne.s32.totalorder %s116, %s118
    %p125 = scmp.eq.s32.totalorder %s19, 1
    %p126 = por %p124, %p125
    %p127 = scmp.ne.s32.totalorder %s118, %s119
    %p128 = scmp.eq.s32.totalorder %s19, 0
    %p129 = por %p127, %p128
    %p130 = scmp.ne.s32.totalorder %s118, %s119
    %p131 = scmp.eq.s32.totalorder %s20, 1
    %p132 = por %p130, %p131
    %p134 = scmp.ne.s32.totalorder %s119, %s133
    %p135 = scmp.eq.s32.totalorder %s20, 0
    %p136 = por %p134, %p135
    %s137 = ssub.s32 %s14, %s21
    %p138 = scmp.eq.s32.totalorder %s137, 0
    %s140 = sadd.s32 %s139, 1
    %s141 = scalar_select %p138, %s139, %s140
    %p144 = pneg %p138
    %p145 = scmp.eq.s32.totalorder %s14, 1
    %p146 = por %p144, %p145
    %p147 = scmp.ne.s32.totalorder %s139, %s142
    %p148 = scmp.eq.s32.totalorder %s14, 0
    %p149 = por %p147, %p148
    %p150 = scmp.ne.s32.totalorder %s139, %s142
    %p151 = scmp.eq.s32.totalorder %s19, 1
    %p152 = por %p150, %p151
    %p153 = scmp.ne.s32.totalorder %s142, %s143
    %p154 = scmp.eq.s32.totalorder %s19, 0
    %p155 = por %p153, %p154
    %p156 = scmp.ne.s32.totalorder %s142, %s143
    %p157 = scmp.eq.s32.totalorder %s20, 1
    %p158 = por %p156, %p157
    %p160 = scmp.ne.s32.totalorder %s143, %s159
    %p161 = scmp.eq.s32.totalorder %s20, 0
    %p162 = por %p160, %p161
    %s163 = ssub.s32 %s14, %s21
    %p164 = scmp.eq.s32.totalorder %s163, 0
    %s166 = sadd.s32 %s165, 1
    %s167 = scalar_select %p164, %s165, %s166
    %p170 = pneg %p164
    %p171 = scmp.eq.s32.totalorder %s14, 1
    %p172 = por %p170, %p171
    %p173 = scmp.ne.s32.totalorder %s165, %s168
    %p174 = scmp.eq.s32.totalorder %s14, 0
    %p175 = por %p173, %p174
    %p176 = scmp.ne.s32.totalorder %s165, %s168
    %p177 = scmp.eq.s32.totalorder %s19, 1
    %p178 = por %p176, %p177
    %p179 = scmp.ne.s32.totalorder %s168, %s169
    %p180 = scmp.eq.s32.totalorder %s19, 0
    %p181 = por %p179, %p180
    %p182 = scmp.ne.s32.totalorder %s168, %s169
    %p183 = scmp.eq.s32.totalorder %s20, 1
    %p184 = por %p182, %p183
    %p186 = scmp.ne.s32.totalorder %s169, %s185
    %p187 = scmp.eq.s32.totalorder %s20, 0
    %p188 = por %p186, %p187
    %s189 = ssub.s32 %s14, %s21
    %p190 = scmp.eq.s32.totalorder %s189, 0
    %s192 = sadd.s32 %s191, 1
    %s193 = scalar_select %p190, %s191, %s192
    %p196 = pneg %p190
    %p197 = scmp.eq.s32.totalorder %s14, 1
    %p198 = por %p196, %p197
    %p199 = scmp.ne.s32.totalorder %s191, %s194
    %p200 = scmp.eq.s32.totalorder %s14, 0
    %p201 = por %p199, %p200
    %p202 = scmp.ne.s32.totalorder %s191, %s194
    %p203 = scmp.eq.s32.totalorder %s19, 1
    %p204 = por %p202, %p203
    %p205 = scmp.ne.s32.totalorder %s194, %s195
    %p206 = scmp.eq.s32.totalorder %s19, 0
    %p207 = por %p205, %p206
    %p208 = scmp.ne.s32.totalorder %s194, %s195
    %p209 = scmp.eq.s32.totalorder %s20, 1
    %p210 = por %p208, %p209
    %p212 = scmp.ne.s32.totalorder %s195, %s211
    %p213 = scmp.eq.s32.totalorder %s20, 0
    %p214 = por %p212, %p213
    %p215 = scmp.le.s32.totalorder 1, %s14
    %p216 = scmp.lt.s32.totalorder %s14, 3
    %p217 = pnand %p215, %p216
    %p218 = pneg %p217
    // Predicated region
    $region9: #{nam_forward.1} parent=5 // pred_check
      _
    $region10: #{nam_forward.1} parent=5 // pred_check_branch
      %220 = sbr.rel (%p217) target = $region12
    $region11: #{nam_forward.1} parent=5 // pred_region
      %s221 = ssub.s32 %s14, 1
      // Predicated region
      $region13: #{nam_forward.1} parent=11 // pred_check
        %p222 = pneg %p87
      $region14: #{nam_forward.1} parent=11 // pred_check_branch
        %224 = sbr.rel (%p222) target = $region16
      $region15: #{nam_forward.1} parent=11 // pred_region
        _
      $region16: #{nam_forward.1} parent=11 // pred_fallthru
        _
      // Predicated region
      $region17: #{nam_forward.1} parent=11 // pred_check
        %p225 = pneg %p108
      $region18: #{nam_forward.1} parent=11 // pred_check_branch
        %227 = sbr.rel (%p225) target = $region20
      $region19: #{nam_forward.1} parent=11 // pred_region
        _
      $region20: #{nam_forward.1} parent=11 // pred_fallthru
        _
      // Predicated region
      $region21: #{nam_forward.1} parent=11 // pred_check
        %p228 = pneg %p129
      $region22: #{nam_forward.1} parent=11 // pred_check_branch
        %230 = sbr.rel (%p228) target = $region24
      $region23: #{nam_forward.1} parent=11 // pred_region
        _
      $region24: #{nam_forward.1} parent=11 // pred_fallthru
        _
    $region12: #{nam_forward.1} parent=5 // pred_fallthru
      _
    %p231 = scmp.lt.s32.totalorder %s14, 2
    // Predicated region
    $region25: #{nam_forward.1} parent=5 // pred_check
      %p232 = pneg %p231
    $region26: #{nam_forward.1} parent=5 // pred_check_branch
      %234 = sbr.rel (%p232) target = $region28
    $region27: #{nam_forward.1} parent=5 // pred_region
      // Predicated region
      $region29: #{nam_forward.1} parent=27 // pred_check
        %p235 = pneg %p34
      $region30: #{nam_forward.1} parent=27 // pred_check_branch
        %237 = sbr.rel (%p235) target = $region32
      $region31: #{nam_forward.1} parent=27 // pred_region
        %p238 = scmp.lt.s32.totalorder %s14, 1
        %s239 = scalar_select %p238, %s14, 1
        %s240 = smul.addr %s239, 20
        %s241 = smul.addr %s240, 8
        %s242 = scalar_lea.vmem %s0, %s241
      $region32: #{nam_forward.1} parent=27 // pred_fallthru
        _
      // Predicated region
      $region33: #{nam_forward.1} parent=27 // pred_check
        %p243 = pneg %p60
      $region34: #{nam_forward.1} parent=27 // pred_check_branch
        %245 = sbr.rel (%p243) target = $region36
      $region35: #{nam_forward.1} parent=27 // pred_region
        %p246 = scmp.lt.s32.totalorder %s14, 1
        %s247 = scalar_select %p246, %s14, 1
        %s248 = smul.addr %s247, 3
        %s249 = smul.addr %s248, 8
        %s250 = scalar_lea.vmem %s1, %s249
      $region36: #{nam_forward.1} parent=27 // pred_fallthru
        _
    $region28: #{nam_forward.1} parent=5 // pred_fallthru
      _
    %p251 = scmp.le.s32.totalorder 1, %s14
    %p252 = scmp.lt.s32.totalorder %s14, 3
    %p253 = pnand %p251, %p252
    %p254 = pneg %p253
    // Predicated region
    $region37: #{nam_forward.1} parent=5 // pred_check
      _
    $region38: #{nam_forward.1} parent=5 // pred_check_branch
      %256 = sbr.rel (%p253) target = $region40
    $region39: #{nam_forward.1} parent=5 // pred_region
      %s257 = ssub.s32 %s14, 1
      %p258 = scmp.lt.s32.totalorder %s19, 1
      %s259 = scalar_select %p258, %s19, 1
      %s260 = smul.addr %s259, 20
      %s261 = smul.addr %s260, 8
      %s262 = scalar_lea.vmem %s0, %s261
      %p263 = pneg %p40
      %p264 = pneg %p37
      %p265 = scmp.lt.s32.totalorder %s19, 1
      %s266 = scalar_select %p265, %s19, 1
      %s267 = smul.addr %s266, 3
      %s268 = smul.addr %s267, 8
      %s269 = scalar_lea.vmem %s1, %s268
      %p270 = pneg %p66
      %p271 = pneg %p63
      %p272 = pneg %p87
      %p273 = pneg %p84
      %p274 = pneg %p108
      %p275 = pneg %p105
      %p276 = pneg %p129
      %p277 = pneg %p126
      %p278 = pneg %p155
      %p279 = pneg %p152
      %p280 = scmp.lt.s32.totalorder %s19, 1
      %s281 = scalar_select %p280, %s19, 1
      %s282 = smul.addr %s281, 3
      %s283 = smul.addr %s282, 8
      %s284 = scalar_lea.vmem %s5, %s283
      %p285 = pneg %p181
      %p286 = pneg %p178
      %p287 = scmp.lt.s32.totalorder %s19, 1
      %s288 = scalar_select %p287, %s19, 1
      %s289 = smul.addr %s288, 3
      %s290 = smul.addr %s289, 8
      %s291 = scalar_lea.vmem %s6, %s290
      %p292 = pneg %p207
      %p293 = pneg %p204
      %p294 = scmp.lt.s32.totalorder %s19, 1
      %s295 = scalar_select %p294, %s19, 1
      %s296 = smul.addr %s295, 3
      %s297 = smul.addr %s296, 8
      %s298 = scalar_lea.vmem %s7, %s297
      %p299 = scmp.lt.s32.totalorder %s19, 1
      %s300 = scalar_select %p299, %s19, 1
      %s301 = smul.addr %s300, 20
      %s302 = smul.addr %s301, 8
      %s303 = scalar_lea.vmem %s0, %s302
      %p304 = scmp.lt.s32.totalorder %s19, 1
      %s305 = scalar_select %p304, %s19, 1
      %s306 = smul.addr %s305, 3
      %s307 = smul.addr %s306, 8
      %s308 = scalar_lea.vmem %s1, %s307
      %p309 = scmp.lt.s32.totalorder %s19, 1
      %s310 = scalar_select %p309, %s19, 1
      %s311 = smul.addr %s310, 3
      %s312 = smul.addr %s311, 8
      %s313 = scalar_lea.vmem %s5, %s312
      %p314 = scmp.lt.s32.totalorder %s19, 1
      %s315 = scalar_select %p314, %s19, 1
      %s316 = smul.addr %s315, 3
      %s317 = smul.addr %s316, 8
      %s318 = scalar_lea.vmem %s6, %s317
      %p319 = scmp.lt.s32.totalorder %s19, 1
      %s320 = scalar_select %p319, %s19, 1
      %s321 = smul.addr %s320, 3
      %s322 = smul.addr %s321, 8
      %s323 = scalar_lea.vmem %s7, %s322
      %v324 = vld [vmem:[%s303] sm:$0xff]
      %v325 = vld [vmem:[%s303 + $0x8] sm:$0xff]
      %v326 = vld [vmem:[%s303 + $0x10] sm:$0xff]
      %v327 = vld [vmem:[%s303 + $0x18] sm:$0xff]
      %v328 = vld [vmem:[%s303 + $0x28] sm:$0xff]
      %v329 = vld [vmem:[%s303 + $0x30] sm:$0xff]
      %v330 = vld [vmem:[%s303 + $0x38] sm:$0xff]
      %v331 = vld [vmem:[%s303 + $0x40] sm:$0xff]
      %v332 = vld [vmem:[%s303 + $0x50] sm:$0xff]
      %v333 = vld [vmem:[%s303 + $0x58] sm:$0xff]
      %v334 = vld [vmem:[%s303 + $0x60] sm:$0xff]
      %v335 = vld [vmem:[%s303 + $0x68] sm:$0xff]
      %v336 = vld [vmem:[%s303 + $0x78] sm:$0xff]
      %v337 = vld [vmem:[%s303 + $0x80] sm:$0xff]
      %v338 = vld [vmem:[%s303 + $0x88] sm:$0xff]
      %v339 = vld [vmem:[%s303 + $0x90] sm:$0xff]
      %v340 = vld [vmem:[%s2] sm:$0xff]
      %v341 = vld [vmem:[%s2 + $0x8] sm:$0xff]
      %v342 = vld [vmem:[%s2 + $0x10] sm:$0xff]
      %v343 = vld [vmem:[%s2 + $0x18] sm:$0xff]
      %v344 = vld [vmem:[%s2 + $0x20] sm:$0xff]
      %v345 = vld [vmem:[%s2 + $0x28] sm:$0xff]
      %v346 = vld [vmem:[%s2 + $0x30] sm:$0xff]
      %v347 = vld [vmem:[%s2 + $0x38] sm:$0xff]
      %v348 = vld [vmem:[%s2 + $0x40] sm:$0xff]
      %v349 = vld [vmem:[%s2 + $0x48] sm:$0x1]
      %s350 = scalar_lea.vmem %s2, 80
      %v351 = vld [vmem:[%s350] sm:$0xff]
      %v352 = vld [vmem:[%s350 + $0x8] sm:$0xff]
      %v353 = vld [vmem:[%s350 + $0x10] sm:$0xff]
      %v354 = vld [vmem:[%s350 + $0x18] sm:$0xff]
      %v355 = vld [vmem:[%s350 + $0x20] sm:$0xff]
      %v356 = vld [vmem:[%s350 + $0x28] sm:$0xff]
      %v357 = vld [vmem:[%s350 + $0x30] sm:$0xff]
      %v358 = vld [vmem:[%s350 + $0x38] sm:$0xff]
      %v359 = vld [vmem:[%s350 + $0x40] sm:$0xff]
      %v360 = vld [vmem:[%s350 + $0x48] sm:$0x1]
      %377 = vrot.lane.b32.xlu0 %v324, 18
      %v378 = vpop.permute.xlu0 %377
      %379 = vrot.lane.b32.xlu0 %v325, 18
      %v380 = vpop.permute.xlu0 %379
      %381 = vrot.lane.b32.xlu0 %v326, 18
      %v382 = vpop.permute.xlu0 %381
      %383 = vrot.lane.b32.xlu0 %v327, 18
      %v384 = vpop.permute.xlu0 %383
      %385 = vrot.lane.b32.xlu0 %v328, 18
      %v386 = vpop.permute.xlu0 %385
      %387 = vrot.lane.b32.xlu0 %v329, 18
      %v388 = vpop.permute.xlu0 %387
      %389 = vrot.lane.b32.xlu0 %v330, 18
      %v390 = vpop.permute.xlu0 %389
      %391 = vrot.lane.b32.xlu0 %v331, 18
      %v392 = vpop.permute.xlu0 %391
      %393 = vrot.lane.b32.xlu0 %v332, 18
      %v394 = vpop.permute.xlu0 %393
      %395 = vrot.lane.b32.xlu0 %v333, 18
      %v396 = vpop.permute.xlu0 %395
      %397 = vrot.lane.b32.xlu0 %v334, 18
      %v398 = vpop.permute.xlu0 %397
      %399 = vrot.lane.b32.xlu0 %v335, 18
      %v400 = vpop.permute.xlu0 %399
      %401 = vrot.lane.b32.xlu0 %v336, 18
      %v402 = vpop.permute.xlu0 %401
      %403 = vrot.lane.b32.xlu0 %v337, 18
      %v404 = vpop.permute.xlu0 %403
      %405 = vrot.lane.b32.xlu0 %v338, 18
      %v406 = vpop.permute.xlu0 %405
      %407 = vrot.lane.b32.xlu0 %v339, 18
      %v408 = vpop.permute.xlu0 %407
      %vm409 = vcmask 146432
      %v410 = vsel %vm409, %v378, %v380
      %v411 = vsel %vm409, %v380, %v382
      %v412 = vsel %vm409, %v382, %v384
      %v413 = vsel %vm409, %v386, %v388
      %v414 = vsel %vm409, %v388, %v390
      %v415 = vsel %vm409, %v390, %v392
      %v416 = vsel %vm409, %v394, %v396
      %v417 = vsel %vm409, %v396, %v398
      %v418 = vsel %vm409, %v398, %v400
      %v419 = vsel %vm409, %v402, %v404
      %v420 = vsel %vm409, %v404, %v406
      %v421 = vsel %vm409, %v406, %v408
      %vm434 = vcmask 261120
      %v436 = vsel %vm434, %v351, 0
      %v439 = vsel %vm434, %v352, 0
      %v442 = vsel %vm434, %v353, 0
      %v445 = vsel %vm434, %v354, 0
      %v448 = vsel %vm434, %v355, 0
      %v451 = vsel %vm434, %v356, 0
      %v454 = vsel %vm434, %v357, 0
      %v457 = vsel %vm434, %v358, 0
      %v460 = vsel %vm434, %v359, 0
      %v463 = vsel %vm434, %v360, 0
      %465 = vmatprep.subr.mxu0 %v411
      %466 = vmatpush1.msra.mxu0 %v410
      %467 = vmatprep.subr.mxu0 %v414
      %468 = vmatpush1.msra.mxu0 %v413
      %469 = vmatprep.subr.mxu0 %v417
      %470 = vmatpush1.msra.mxu0 %v416
      %471 = vmatprep.subr.mxu0 %v420
      %472 = vmatpush1.msra.mxu0 %v419
      %473 = vmatprep.subr.mxu0 0.0
      %474 = vmatpush1.msra.mxu0 0.0
      %475 = vmatprep.subr.mxu0 0.0
      %476 = vmatpush1.msra.mxu0 0.0
      %477 = vmatprep.subr.mxu0 0.0
      %478 = vmatpush1.msra.mxu0 0.0
      %479 = vmatprep.subr.mxu0 0.0
      %480 = vmatpush1.msra.mxu0 0.0
      %481 = vmatprep.subr.mxu0 0.0
      %482 = vmatpush1.msra.mxu0 0.0
      %483 = vmatprep.subr.mxu0 0.0
      %484 = vmatpush1.msra.mxu0 0.0
      %485 = vmatprep.subr.mxu0 0.0
      %486 = vmatpush1.msra.mxu0 0.0
      %487 = vmatprep.subr.mxu0 0.0
      %488 = vmatpush1.msra.mxu0 0.0
      %489 = vmatprep.subr.mxu0 0.0
      %490 = vmatpush1.msra.mxu0 0.0
      %491 = vmatprep.subr.mxu0 0.0
      %492 = vmatpush1.msra.mxu0 0.0
      %493 = vmatprep.subr.mxu0 0.0
      %494 = vmatpush1.msra.mxu0 0.0
      %495 = vmatprep.subr.mxu0 0.0
      %496 = vmatpush1.msra.mxu0 0.0
      %497 = vmatprep.subr.mxu0 0.0
      %498 = vmatpush1.msra.mxu0 0.0
      %499 = vmatprep.subr.mxu0 0.0
      %500 = vmatpush1.msra.mxu0 0.0
      %501 = vmatprep.subr.mxu0 0.0
      %502 = vmatpush1.msra.mxu0 0.0
      %503 = vmatprep.subr.mxu0 0.0
      %504 = vmatpush1.msra.mxu0 0.0
      %505 = vmatprep.subr.mxu0 0.0
      %506 = vmatpush1.msra.mxu0 0.0
      %507 = vmatprep.subr.mxu0 0.0
      %508 = vmatpush1.msra.mxu0 0.0
      %509 = vmatprep.subr.mxu0 0.0
      %510 = vmatpush1.msra.mxu0 0.0
      %511 = vmatprep.subr.mxu0 0.0
      %512 = vmatpush1.msra.mxu0 0.0
      %513 = vmatprep.subr.mxu0 0.0
      %514 = vmatpush1.msra.mxu0 0.0
      %515 = vmatprep.subr.mxu0 0.0
      %516 = vmatpush1.msra.mxu0 0.0
      %517 = vmatprep.subr.mxu0 0.0
      %518 = vmatpush1.msra.mxu0 0.0
      %519 = vmatprep.subr.mxu0 0.0
      %520 = vmatpush1.msra.mxu0 0.0
      %521 = vmatprep.subr.mxu0 0.0
      %522 = vmatpush1.msra.mxu0 0.0
      %523 = vmatprep.subr.mxu0 0.0
      %524 = vmatpush1.msra.mxu0 0.0
      %525 = vmatprep.subr.mxu0 0.0
      %526 = vmatpush1.msra.mxu0 0.0
      %527 = vmatprep.subr.mxu0 0.0
      %528 = vmatpush1.msra.mxu0 0.0
      %529 = vmatprep.mubr.f32.mxu0 0.0
      %530 = vmatmul.mubr.f32.gmra.mrb[0].mxu0 %v436
      %v531 = vpop.f32.mrb[0].mxu0
      %v532 = vadd.f32 0.0, %v531
      %v533 = vpop.f32.mrb[0].mxu0
      %v534 = vadd.f32 0.0, %v533
      %535 = vmatprep.mubr.f32.mxu0 0.0
      %536 = vmatmul.mubr.f32.gmra.mrb[0].mxu0 %v439
      %v537 = vpop.f32.mrb[0].mxu0
      %v538 = vadd.f32 0.0, %v537
      %v539 = vpop.f32.mrb[0].mxu0
      %v540 = vadd.f32 0.0, %v539
      %541 = vmatprep.mubr.f32.mxu0 0.0
      %542 = vmatmul.mubr.f32.gmra.mrb[0].mxu0 %v442
      %v543 = vpop.f32.mrb[0].mxu0
      %v544 = vadd.f32 0.0, %v543
      %v545 = vpop.f32.mrb[0].mxu0
      %v546 = vadd.f32 0.0, %v545
      %547 = vmatprep.mubr.f32.mxu0 0.0
      %548 = vmatmul.mubr.f32.gmra.mrb[0].mxu0 %v445
      %v549 = vpop.f32.mrb[0].mxu0
      %v550 = vadd.f32 0.0, %v549
      %v551 = vpop.f32.mrb[0].mxu0
      %v552 = vadd.f32 0.0, %v551
      %553 = vmatprep.mubr.f32.mxu0 0.0
      %554 = vmatmul.mubr.f32.gmra.mrb[0].mxu0 %v448
      %v555 = vpop.f32.mrb[0].mxu0
      %v556 = vadd.f32 0.0, %v555
      %v557 = vpop.f32.mrb[0].mxu0
      %v558 = vadd.f32 0.0, %v557
      %559 = vmatprep.mubr.f32.mxu0 0.0
      %560 = vmatmul.mubr.f32.gmra.mrb[0].mxu0 %v451
      %v561 = vpop.f32.mrb[0].mxu0
      %v562 = vadd.f32 0.0, %v561
      %v563 = vpop.f32.mrb[0].mxu0
      %v564 = vadd.f32 0.0, %v563
      %565 = vmatprep.mubr.f32.mxu0 0.0
      %566 = vmatmul.mubr.f32.gmra.mrb[0].mxu0 %v454
      %v567 = vpop.f32.mrb[0].mxu0
      %v568 = vadd.f32 0.0, %v567
      %v569 = vpop.f32.mrb[0].mxu0
      %v570 = vadd.f32 0.0, %v569
      %571 = vmatprep.mubr.f32.mxu0 0.0
      %572 = vmatmul.mubr.f32.gmra.mrb[0].mxu0 %v457
      %v573 = vpop.f32.mrb[0].mxu0
      %v574 = vadd.f32 0.0, %v573
      %v575 = vpop.f32.mrb[0].mxu0
      %v576 = vadd.f32 0.0, %v575
      %577 = vmatprep.mubr.f32.mxu0 0.0
      %578 = vmatmul.mubr.f32.gmra.mrb[0].mxu0 %v460
      %v579 = vpop.f32.mrb[0].mxu0
      %v580 = vadd.f32 0.0, %v579
      %v581 = vpop.f32.mrb[0].mxu0
      %v582 = vadd.f32 0.0, %v581
      %583 = vmatprep.mubr.f32.mxu0 0.0
      %584 = vmatmul.mubr.f32.gmra.mrb[0].mxu0 %v463
      %v585 = vpop.f32.mrb[0].mxu0
      %v586 = vadd.f32 0.0, %v585
      %v587 = vpop.f32.mrb[0].mxu0
      %v588 = vadd.f32 0.0, %v587
      %589 = vdwg.mxu0
      %590 = vmatprep.subr.mxu0 0.0
      %591 = vmatpush1.msra.mxu0 %v412
      %592 = vmatprep.subr.mxu0 0.0
      %593 = vmatpush1.msra.mxu0 %v415
      %594 = vmatprep.subr.mxu0 0.0
      %595 = vmatpush1.msra.mxu0 %v418
      %596 = vmatprep.subr.mxu0 0.0
      %597 = vmatpush1.msra.mxu0 %v421
      %598 = vmatprep.subr.mxu0 0.0
      %599 = vmatpush1.msra.mxu0 0.0
      %600 = vmatprep.subr.mxu0 0.0
      %601 = vmatpush1.msra.mxu0 0.0
      %602 = vmatprep.subr.mxu0 0.0
      %603 = vmatpush1.msra.mxu0 0.0
      %604 = vmatprep.subr.mxu0 0.0
      %605 = vmatpush1.msra.mxu0 0.0
      %606 = vmatprep.subr.mxu0 0.0
      %607 = vmatpush1.msra.mxu0 0.0
      %608 = vmatprep.subr.mxu0 0.0
      %609 = vmatpush1.msra.mxu0 0.0
      %610 = vmatprep.subr.mxu0 0.0
      %611 = vmatpush1.msra.mxu0 0.0
      %612 = vmatprep.subr.mxu0 0.0
      %613 = vmatpush1.msra.mxu0 0.0
      %614 = vmatprep.subr.mxu0 0.0
      %615 = vmatpush1.msra.mxu0 0.0
      %616 = vmatprep.subr.mxu0 0.0
      %617 = vmatpush1.msra.mxu0 0.0
      %618 = vmatprep.subr.mxu0 0.0
      %619 = vmatpush1.msra.mxu0 0.0
      %620 = vmatprep.subr.mxu0 0.0
      %621 = vmatpush1.msra.mxu0 0.0
      %622 = vmatprep.subr.mxu0 0.0
      %623 = vmatpush1.msra.mxu0 0.0
      %624 = vmatprep.subr.mxu0 0.0
      %625 = vmatpush1.msra.mxu0 0.0
      %626 = vmatprep.subr.mxu0 0.0
      %627 = vmatpush1.msra.mxu0 0.0
      %628 = vmatprep.subr.mxu0 0.0
      %629 = vmatpush1.msra.mxu0 0.0
      %630 = vmatprep.subr.mxu0 0.0
      %631 = vmatpush1.msra.mxu0 0.0
      %632 = vmatprep.subr.mxu0 0.0
      %633 = vmatpush1.msra.mxu0 0.0
      %634 = vmatprep.subr.mxu0 0.0
      %635 = vmatpush1.msra.mxu0 0.0
      %636 = vmatprep.subr.mxu0 0.0
      %637 = vmatpush1.msra.mxu0 0.0
      %638 = vmatprep.subr.mxu0 0.0
      %639 = vmatpush1.msra.mxu0 0.0
      %640 = vmatprep.subr.mxu0 0.0
      %641 = vmatpush1.msra.mxu0 0.0
      %642 = vmatprep.subr.mxu0 0.0
      %643 = vmatpush1.msra.mxu0 0.0
      %644 = vmatprep.subr.mxu0 0.0
      %645 = vmatpush1.msra.mxu0 0.0
      %646 = vmatprep.subr.mxu0 0.0
      %647 = vmatpush1.msra.mxu0 0.0
      %648 = vmatprep.subr.mxu0 0.0
      %649 = vmatpush1.msra.mxu0 0.0
      %650 = vmatprep.subr.mxu0 0.0
      %651 = vmatpush1.msra.mxu0 0.0
      %652 = vmatprep.subr.mxu0 0.0
      %653 = vmatpush1.msra.mxu0 0.0
      %654 = vmatprep.mubr.f32.mxu0 0.0
      %655 = vmatmul.mubr.f32.gmra.mrb[0].mxu0 %v436
      %v656 = vpop.f32.mrb[0].mxu0
      %v657 = vadd.f32 0.0, %v656
      %v658 = vpop.f32.mrb[0].mxu0
      %659 = vmatprep.mubr.f32.mxu0 0.0
      %660 = vmatmul.mubr.f32.gmra.mrb[0].mxu0 %v439
      %v661 = vpop.f32.mrb[0].mxu0
      %v662 = vadd.f32 0.0, %v661
      %v663 = vpop.f32.mrb[0].mxu0
      %664 = vmatprep.mubr.f32.mxu0 0.0
      %665 = vmatmul.mubr.f32.gmra.mrb[0].mxu0 %v442
      %v666 = vpop.f32.mrb[0].mxu0
      %v667 = vadd.f32 0.0, %v666
      %v668 = vpop.f32.mrb[0].mxu0
      %669 = vmatprep.mubr.f32.mxu0 0.0
      %670 = vmatmul.mubr.f32.gmra.mrb[0].mxu0 %v445
      %v671 = vpop.f32.mrb[0].mxu0
      %v672 = vadd.f32 0.0, %v671
      %v673 = vpop.f32.mrb[0].mxu0
      %674 = vmatprep.mubr.f32.mxu0 0.0
      %675 = vmatmul.mubr.f32.gmra.mrb[0].mxu0 %v448
      %v676 = vpop.f32.mrb[0].mxu0
      %v677 = vadd.f32 0.0, %v676
      %v678 = vpop.f32.mrb[0].mxu0
      %679 = vmatprep.mubr.f32.mxu0 0.0
      %680 = vmatmul.mubr.f32.gmra.mrb[0].mxu0 %v451
      %v681 = vpop.f32.mrb[0].mxu0
      %v682 = vadd.f32 0.0, %v681
      %v683 = vpop.f32.mrb[0].mxu0
      %684 = vmatprep.mubr.f32.mxu0 0.0
      %685 = vmatmul.mubr.f32.gmra.mrb[0].mxu0 %v454
      %v686 = vpop.f32.mrb[0].mxu0
      %v687 = vadd.f32 0.0, %v686
      %v688 = vpop.f32.mrb[0].mxu0
      %689 = vmatprep.mubr.f32.mxu0 0.0
      %690 = vmatmul.mubr.f32.gmra.mrb[0].mxu0 %v457
      %v691 = vpop.f32.mrb[0].mxu0
      %v692 = vadd.f32 0.0, %v691
      %v693 = vpop.f32.mrb[0].mxu0
      %694 = vmatprep.mubr.f32.mxu0 0.0
      %695 = vmatmul.mubr.f32.gmra.mrb[0].mxu0 %v460
      %v696 = vpop.f32.mrb[0].mxu0
      %v697 = vadd.f32 0.0, %v696
      %v698 = vpop.f32.mrb[0].mxu0
      %699 = vmatprep.mubr.f32.mxu0 0.0
      %700 = vmatmul.mubr.f32.gmra.mrb[0].mxu0 %v463
      %v701 = vpop.f32.mrb[0].mxu0
      %v702 = vadd.f32 0.0, %v701
      %v703 = vpop.f32.mrb[0].mxu0
      %704 = vdwg.mxu0
      %705 = vrot.lane.b32.xlu0 %v324, 19
      %v706 = vpop.permute.xlu0 %705
      %707 = vrot.lane.b32.xlu0 %v325, 19
      %v708 = vpop.permute.xlu0 %707
      %709 = vrot.lane.b32.xlu0 %v326, 19
      %v710 = vpop.permute.xlu0 %709
      %711 = vrot.lane.b32.xlu0 %v327, 19
      %v712 = vpop.permute.xlu0 %711
      %713 = vrot.lane.b32.xlu0 %v328, 19
      %v714 = vpop.permute.xlu0 %713
      %715 = vrot.lane.b32.xlu0 %v329, 19
      %v716 = vpop.permute.xlu0 %715
      %717 = vrot.lane.b32.xlu0 %v330, 19
      %v718 = vpop.permute.xlu0 %717
      %719 = vrot.lane.b32.xlu0 %v331, 19
      %v720 = vpop.permute.xlu0 %719
      %721 = vrot.lane.b32.xlu0 %v332, 19
      %v722 = vpop.permute.xlu0 %721
      %723 = vrot.lane.b32.xlu0 %v333, 19
      %v724 = vpop.permute.xlu0 %723
      %725 = vrot.lane.b32.xlu0 %v334, 19
      %v726 = vpop.permute.xlu0 %725
      %727 = vrot.lane.b32.xlu0 %v335, 19
      %v728 = vpop.permute.xlu0 %727
      %729 = vrot.lane.b32.xlu0 %v336, 19
      %v730 = vpop.permute.xlu0 %729
      %731 = vrot.lane.b32.xlu0 %v337, 19
      %v732 = vpop.permute.xlu0 %731
      %733 = vrot.lane.b32.xlu0 %v338, 19
      %v734 = vpop.permute.xlu0 %733
      %735 = vrot.lane.b32.xlu0 %v339, 19
      %v736 = vpop.permute.xlu0 %735
      %vm737 = vcmask 154624
      %v738 = vsel %vm737, %v706, %v708
      %v739 = vsel %vm737, %v708, %v710
      %v740 = vsel %vm737, %v710, %v712
      %v741 = vsel %vm737, %v714, %v716
      %v742 = vsel %vm737, %v716, %v718
      %v743 = vsel %vm737, %v718, %v720
      %v744 = vsel %vm737, %v722, %v724
      %v745 = vsel %vm737, %v724, %v726
      %v746 = vsel %vm737, %v726, %v728
      %v747 = vsel %vm737, %v730, %v732
      %v748 = vsel %vm737, %v732, %v734
      %v749 = vsel %vm737, %v734, %v736
      %v763 = vsel %vm434, %v340, 0
      %v766 = vsel %vm434, %v341, 0
      %v769 = vsel %vm434, %v342, 0
      %v772 = vsel %vm434, %v343, 0
      %v775 = vsel %vm434, %v344, 0
      %v778 = vsel %vm434, %v345, 0
      %v781 = vsel %vm434, %v346, 0
      %v784 = vsel %vm434, %v347, 0
      %v787 = vsel %vm434, %v348, 0
      %v790 = vsel %vm434, %v349, 0
      %792 = vmatprep.subr.mxu0 %v739
      %793 = vmatpush1.msra.mxu0 %v738
      %794 = vmatprep.subr.mxu0 %v742
      %795 = vmatpush1.msra.mxu0 %v741
      %796 = vmatprep.subr.mxu0 %v745
      %797 = vmatpush1.msra.mxu0 %v744
      %798 = vmatprep.subr.mxu0 %v748
      %799 = vmatpush1.msra.mxu0 %v747
      %800 = vmatprep.subr.mxu0 0.0
      %801 = vmatpush1.msra.mxu0 0.0
      %802 = vmatprep.subr.mxu0 0.0
      %803 = vmatpush1.msra.mxu0 0.0
      %804 = vmatprep.subr.mxu0 0.0
      %805 = vmatpush1.msra.mxu0 0.0
      %806 = vmatprep.subr.mxu0 0.0
      %807 = vmatpush1.msra.mxu0 0.0
      %808 = vmatprep.subr.mxu0 0.0
      %809 = vmatpush1.msra.mxu0 0.0
      %810 = vmatprep.subr.mxu0 0.0
      %811 = vmatpush1.msra.mxu0 0.0
      %812 = vmatprep.subr.mxu0 0.0
      %813 = vmatpush1.msra.mxu0 0.0
      %814 = vmatprep.subr.mxu0 0.0
      %815 = vmatpush1.msra.mxu0 0.0
      %816 = vmatprep.subr.mxu0 0.0
      %817 = vmatpush1.msra.mxu0 0.0
      %818 = vmatprep.subr.mxu0 0.0
      %819 = vmatpush1.msra.mxu0 0.0
      %820 = vmatprep.subr.mxu0 0.0
      %821 = vmatpush1.msra.mxu0 0.0
      %822 = vmatprep.subr.mxu0 0.0
      %823 = vmatpush1.msra.mxu0 0.0
      %824 = vmatprep.subr.mxu0 0.0
      %825 = vmatpush1.msra.mxu0 0.0
      %826 = vmatprep.subr.mxu0 0.0
      %827 = vmatpush1.msra.mxu0 0.0
      %828 = vmatprep.subr.mxu0 0.0
      %829 = vmatpush1.msra.mxu0 0.0
      %830 = vmatprep.subr.mxu0 0.0
      %831 = vmatpush1.msra.mxu0 0.0
      %832 = vmatprep.subr.mxu0 0.0
      %833 = vmatpush1.msra.mxu0 0.0
      %834 = vmatprep.subr.mxu0 0.0
      %835 = vmatpush1.msra.mxu0 0.0
      %836 = vmatprep.subr.mxu0 0.0
      %837 = vmatpush1.msra.mxu0 0.0
      %838 = vmatprep.subr.mxu0 0.0
      %839 = vmatpush1.msra.mxu0 0.0
      %840 = vmatprep.subr.mxu0 0.0
      %841 = vmatpush1.msra.mxu0 0.0
      %842 = vmatprep.subr.mxu0 0.0
      %843 = vmatpush1.msra.mxu0 0.0
      %844 = vmatprep.subr.mxu0 0.0
      %845 = vmatpush1.msra.mxu0 0.0
      %846 = vmatprep.subr.mxu0 0.0
      %847 = vmatpush1.msra.mxu0 0.0
      %848 = vmatprep.subr.mxu0 0.0
      %849 = vmatpush1.msra.mxu0 0.0
      %850 = vmatprep.subr.mxu0 0.0
      %851 = vmatpush1.msra.mxu0 0.0
      %852 = vmatprep.subr.mxu0 0.0
      %853 = vmatpush1.msra.mxu0 0.0
      %854 = vmatprep.subr.mxu0 0.0
      %855 = vmatpush1.msra.mxu0 0.0
      %856 = vmatprep.mubr.f32.mxu0 0.0
      %857 = vmatmul.mubr.f32.gmra.mrb[0].mxu0 %v763
      %v858 = vpop.f32.mrb[0].mxu0
      %v859 = vadd.f32 %v532, %v858
      %v860 = vpop.f32.mrb[0].mxu0
      %v861 = vadd.f32 %v534, %v860
      %862 = vmatprep.mubr.f32.mxu0 0.0
      %863 = vmatmul.mubr.f32.gmra.mrb[0].mxu0 %v766
      %v864 = vpop.f32.mrb[0].mxu0
      %v865 = vadd.f32 %v538, %v864
      %v866 = vpop.f32.mrb[0].mxu0
      %v867 = vadd.f32 %v540, %v866
      %868 = vmatprep.mubr.f32.mxu0 0.0
      %869 = vmatmul.mubr.f32.gmra.mrb[0].mxu0 %v769
      %v870 = vpop.f32.mrb[0].mxu0
      %v871 = vadd.f32 %v544, %v870
      %v872 = vpop.f32.mrb[0].mxu0
      %v873 = vadd.f32 %v546, %v872
      %874 = vmatprep.mubr.f32.mxu0 0.0
      %875 = vmatmul.mubr.f32.gmra.mrb[0].mxu0 %v772
      %v876 = vpop.f32.mrb[0].mxu0
      %v877 = vadd.f32 %v550, %v876
      %v878 = vpop.f32.mrb[0].mxu0
      %v879 = vadd.f32 %v552, %v878
      %880 = vmatprep.mubr.f32.mxu0 0.0
      %881 = vmatmul.mubr.f32.gmra.mrb[0].mxu0 %v775
      %v882 = vpop.f32.mrb[0].mxu0
      %v883 = vadd.f32 %v556, %v882
      %v884 = vpop.f32.mrb[0].mxu0
      %v885 = vadd.f32 %v558, %v884
      %886 = vmatprep.mubr.f32.mxu0 0.0
      %887 = vmatmul.mubr.f32.gmra.mrb[0].mxu0 %v778
      %v888 = vpop.f32.mrb[0].mxu0
      %v889 = vadd.f32 %v562, %v888
      %v890 = vpop.f32.mrb[0].mxu0
      %v891 = vadd.f32 %v564, %v890
      %892 = vmatprep.mubr.f32.mxu0 0.0
      %893 = vmatmul.mubr.f32.gmra.mrb[0].mxu0 %v781
      %v894 = vpop.f32.mrb[0].mxu0
      %v895 = vadd.f32 %v568, %v894
      %v896 = vpop.f32.mrb[0].mxu0
      %v897 = vadd.f32 %v570, %v896
      %898 = vmatprep.mubr.f32.mxu0 0.0
      %899 = vmatmul.mubr.f32.gmra.mrb[0].mxu0 %v784
      %v900 = vpop.f32.mrb[0].mxu0
      %v901 = vadd.f32 %v574, %v900
      %v902 = vpop.f32.mrb[0].mxu0
      %v903 = vadd.f32 %v576, %v902
      %904 = vmatprep.mubr.f32.mxu0 0.0
      %905 = vmatmul.mubr.f32.gmra.mrb[0].mxu0 %v787
      %v906 = vpop.f32.mrb[0].mxu0
      %v907 = vadd.f32 %v580, %v906
      %v908 = vpop.f32.mrb[0].mxu0
      %v909 = vadd.f32 %v582, %v908
      %910 = vmatprep.mubr.f32.mxu0 0.0
      %911 = vmatmul.mubr.f32.gmra.mrb[0].mxu0 %v790
      %v912 = vpop.f32.mrb[0].mxu0
      %v913 = vadd.f32 %v586, %v912
      %v914 = vpop.f32.mrb[0].mxu0
      %v915 = vadd.f32 %v588, %v914
      %916 = vdwg.mxu0
      %917 = vmatprep.subr.mxu0 0.0
      %918 = vmatpush1.msra.mxu0 %v740
      %919 = vmatprep.subr.mxu0 0.0
      %920 = vmatpush1.msra.mxu0 %v743
      %921 = vmatprep.subr.mxu0 0.0
      %922 = vmatpush1.msra.mxu0 %v746
      %923 = vmatprep.subr.mxu0 0.0
      %924 = vmatpush1.msra.mxu0 %v749
      %925 = vmatprep.subr.mxu0 0.0
      %926 = vmatpush1.msra.mxu0 0.0
      %927 = vmatprep.subr.mxu0 0.0
      %928 = vmatpush1.msra.mxu0 0.0
      %929 = vmatprep.subr.mxu0 0.0
      %930 = vmatpush1.msra.mxu0 0.0
      %931 = vmatprep.subr.mxu0 0.0
      %932 = vmatpush1.msra.mxu0 0.0
      %933 = vmatprep.subr.mxu0 0.0
      %934 = vmatpush1.msra.mxu0 0.0
      %935 = vmatprep.subr.mxu0 0.0
      %936 = vmatpush1.msra.mxu0 0.0
      %937 = vmatprep.subr.mxu0 0.0
      %938 = vmatpush1.msra.mxu0 0.0
      %939 = vmatprep.subr.mxu0 0.0
      %940 = vmatpush1.msra.mxu0 0.0
      %941 = vmatprep.subr.mxu0 0.0
      %942 = vmatpush1.msra.mxu0 0.0
      %943 = vmatprep.subr.mxu0 0.0
      %944 = vmatpush1.msra.mxu0 0.0
      %945 = vmatprep.subr.mxu0 0.0
      %946 = vmatpush1.msra.mxu0 0.0
      %947 = vmatprep.subr.mxu0 0.0
      %948 = vmatpush1.msra.mxu0 0.0
      %949 = vmatprep.subr.mxu0 0.0
      %950 = vmatpush1.msra.mxu0 0.0
      %951 = vmatprep.subr.mxu0 0.0
      %952 = vmatpush1.msra.mxu0 0.0
      %953 = vmatprep.subr.mxu0 0.0
      %954 = vmatpush1.msra.mxu0 0.0
      %955 = vmatprep.subr.mxu0 0.0
      %956 = vmatpush1.msra.mxu0 0.0
      %957 = vmatprep.subr.mxu0 0.0
      %958 = vmatpush1.msra.mxu0 0.0
      %959 = vmatprep.subr.mxu0 0.0
      %960 = vmatpush1.msra.mxu0 0.0
      %961 = vmatprep.subr.mxu0 0.0
      %962 = vmatpush1.msra.mxu0 0.0
      %963 = vmatprep.subr.mxu0 0.0
      %964 = vmatpush1.msra.mxu0 0.0
      %965 = vmatprep.subr.mxu0 0.0
      %966 = vmatpush1.msra.mxu0 0.0
      %967 = vmatprep.subr.mxu0 0.0
      %968 = vmatpush1.msra.mxu0 0.0
      %969 = vmatprep.subr.mxu0 0.0
      %970 = vmatpush1.msra.mxu0 0.0
      %971 = vmatprep.subr.mxu0 0.0
      %972 = vmatpush1.msra.mxu0 0.0
      %973 = vmatprep.subr.mxu0 0.0
      %974 = vmatpush1.msra.mxu0 0.0
      %975 = vmatprep.subr.mxu0 0.0
      %976 = vmatpush1.msra.mxu0 0.0
      %977 = vmatprep.subr.mxu0 0.0
      %978 = vmatpush1.msra.mxu0 0.0
      %979 = vmatprep.subr.mxu0 0.0
      %980 = vmatpush1.msra.mxu0 0.0
      %981 = vmatprep.mubr.f32.mxu0 0.0
      %982 = vmatmul.mubr.f32.gmra.mrb[0].mxu0 %v763
      %v983 = vpop.f32.mrb[0].mxu0
      %v984 = vadd.f32 %v657, %v983
      %v985 = vpop.f32.mrb[0].mxu0
      %986 = vmatprep.mubr.f32.mxu0 0.0
      %987 = vmatmul.mubr.f32.gmra.mrb[0].mxu0 %v766
      %v988 = vpop.f32.mrb[0].mxu0
      %v989 = vadd.f32 %v662, %v988
      %v990 = vpop.f32.mrb[0].mxu0
      %991 = vmatprep.mubr.f32.mxu0 0.0
      %992 = vmatmul.mubr.f32.gmra.mrb[0].mxu0 %v769
      %v993 = vpop.f32.mrb[0].mxu0
      %v994 = vadd.f32 %v667, %v993
      %v995 = vpop.f32.mrb[0].mxu0
      %996 = vmatprep.mubr.f32.mxu0 0.0
      %997 = vmatmul.mubr.f32.gmra.mrb[0].mxu0 %v772
      %v998 = vpop.f32.mrb[0].mxu0
      %v999 = vadd.f32 %v672, %v998
      %v1000 = vpop.f32.mrb[0].mxu0
      %1001 = vmatprep.mubr.f32.mxu0 0.0
      %1002 = vmatmul.mubr.f32.gmra.mrb[0].mxu0 %v775
      %v1003 = vpop.f32.mrb[0].mxu0
      %v1004 = vadd.f32 %v677, %v1003
      %v1005 = vpop.f32.mrb[0].mxu0
      %1006 = vmatprep.mubr.f32.mxu0 0.0
      %1007 = vmatmul.mubr.f32.gmra.mrb[0].mxu0 %v778
      %v1008 = vpop.f32.mrb[0].mxu0
      %v1009 = vadd.f32 %v682, %v1008
      %v1010 = vpop.f32.mrb[0].mxu0
      %1011 = vmatprep.mubr.f32.mxu0 0.0
      %1012 = vmatmul.mubr.f32.gmra.mrb[0].mxu0 %v781
      %v1013 = vpop.f32.mrb[0].mxu0
      %v1014 = vadd.f32 %v687, %v1013
      %v1015 = vpop.f32.mrb[0].mxu0
      %1016 = vmatprep.mubr.f32.mxu0 0.0
      %1017 = vmatmul.mubr.f32.gmra.mrb[0].mxu0 %v784
      %v1018 = vpop.f32.mrb[0].mxu0
      %v1019 = vadd.f32 %v692, %v1018
      %v1020 = vpop.f32.mrb[0].mxu0
      %1021 = vmatprep.mubr.f32.mxu0 0.0
      %1022 = vmatmul.mubr.f32.gmra.mrb[0].mxu0 %v787
      %v1023 = vpop.f32.mrb[0].mxu0
      %v1024 = vadd.f32 %v697, %v1023
      %v1025 = vpop.f32.mrb[0].mxu0
      %1026 = vmatprep.mubr.f32.mxu0 0.0
      %1027 = vmatmul.mubr.f32.gmra.mrb[0].mxu0 %v790
      %v1028 = vpop.f32.mrb[0].mxu0
      %v1029 = vadd.f32 %v702, %v1028
      %v1030 = vpop.f32.mrb[0].mxu0
      %1031 = vdwg.mxu0
      %s1032 = scalar_lea.vmem %s2, 160
      %v1033 = vld [vmem:[%s1032] sm:$0xff]
      %v1034 = vld [vmem:[%s1032 + $0x8] sm:$0xff]
      %v1035 = vld [vmem:[%s1032 + $0x10] sm:$0xff]
      %v1036 = vld [vmem:[%s1032 + $0x18] sm:$0xff]
      %v1037 = vld [vmem:[%s1032 + $0x20] sm:$0xff]
      %v1038 = vld [vmem:[%s1032 + $0x28] sm:$0xff]
      %v1039 = vld [vmem:[%s1032 + $0x30] sm:$0xff]
      %v1040 = vld [vmem:[%s1032 + $0x38] sm:$0xff]
      %v1041 = vld [vmem:[%s1032 + $0x40] sm:$0xff]
      %v1042 = vld [vmem:[%s1032 + $0x48] sm:$0x1]
      %1043 = vrot.lane.b32.xlu0 %v324, 17
      %v1044 = vpop.permute.xlu0 %1043
      %1045 = vrot.lane.b32.xlu0 %v325, 17
      %v1046 = vpop.permute.xlu0 %1045
      %1047 = vrot.lane.b32.xlu0 %v326, 17
      %v1048 = vpop.permute.xlu0 %1047
      %1049 = vrot.lane.b32.xlu0 %v327, 17
      %v1050 = vpop.permute.xlu0 %1049
      %1051 = vrot.lane.b32.xlu0 %v328, 17
      %v1052 = vpop.permute.xlu0 %1051
      %1053 = vrot.lane.b32.xlu0 %v329, 17
      %v1054 = vpop.permute.xlu0 %1053
      %1055 = vrot.lane.b32.xlu0 %v330, 17
      %v1056 = vpop.permute.xlu0 %1055
      %1057 = vrot.lane.b32.xlu0 %v331, 17
      %v1058 = vpop.permute.xlu0 %1057
      %1059 = vrot.lane.b32.xlu0 %v332, 17
      %v1060 = vpop.permute.xlu0 %1059
      %1061 = vrot.lane.b32.xlu0 %v333, 17
      %v1062 = vpop.permute.xlu0 %1061
      %1063 = vrot.lane.b32.xlu0 %v334, 17
      %v1064 = vpop.permute.xlu0 %1063
      %1065 = vrot.lane.b32.xlu0 %v335, 17
      %v1066 = vpop.permute.xlu0 %1065
      %1067 = vrot.lane.b32.xlu0 %v336, 17
      %v1068 = vpop.permute.xlu0 %1067
      %1069 = vrot.lane.b32.xlu0 %v337, 17
      %v1070 = vpop.permute.xlu0 %1069
      %1071 = vrot.lane.b32.xlu0 %v338, 17
      %v1072 = vpop.permute.xlu0 %1071
      %1073 = vrot.lane.b32.xlu0 %v339, 17
      %v1074 = vpop.permute.xlu0 %1073
      %vm1075 = vcmask 138240
      %v1076 = vsel %vm1075, %v1044, %v1046
      %v1077 = vsel %vm1075, %v1046, %v1048
      %v1078 = vsel %vm1075, %v1048, %v1050
      %v1079 = vsel %vm1075, %v1052, %v1054
      %v1080 = vsel %vm1075, %v1054, %v1056
      %v1081 = vsel %vm1075, %v1056, %v1058
      %v1082 = vsel %vm1075, %v1060, %v1062
      %v1083 = vsel %vm1075, %v1062, %v1064
      %v1084 = vsel %vm1075, %v1064, %v1066
      %v1085 = vsel %vm1075, %v1068, %v1070
      %v1086 = vsel %vm1075, %v1070, %v1072
      %v1087 = vsel %vm1075, %v1072, %v1074
      %v1101 = vsel %vm434, %v1033, 0
      %v1104 = vsel %vm434, %v1034, 0
      %v1107 = vsel %vm434, %v1035, 0
      %v1110 = vsel %vm434, %v1036, 0
      %v1113 = vsel %vm434, %v1037, 0
      %v1116 = vsel %vm434, %v1038, 0
      %v1119 = vsel %vm434, %v1039, 0
      %v1122 = vsel %vm434, %v1040, 0
      %v1125 = vsel %vm434, %v1041, 0
      %v1128 = vsel %vm434, %v1042, 0
      %1130 = vmatprep.subr.mxu0 %v1077
      %1131 = vmatpush1.msra.mxu0 %v1076
      %1132 = vmatprep.subr.mxu0 %v1080
      %1133 = vmatpush1.msra.mxu0 %v1079
      %1134 = vmatprep.subr.mxu0 %v1083
      %1135 = vmatpush1.msra.mxu0 %v1082
      %1136 = vmatprep.subr.mxu0 %v1086
      %1137 = vmatpush1.msra.mxu0 %v1085
      %1138 = vmatprep.subr.mxu0 0.0
      %1139 = vmatpush1.msra.mxu0 0.0
      %1140 = vmatprep.subr.mxu0 0.0
      %1141 = vmatpush1.msra.mxu0 0.0
      %1142 = vmatprep.subr.mxu0 0.0
      %1143 = vmatpush1.msra.mxu0 0.0
      %1144 = vmatprep.subr.mxu0 0.0
      %1145 = vmatpush1.msra.mxu0 0.0
      %1146 = vmatprep.subr.mxu0 0.0
      %1147 = vmatpush1.msra.mxu0 0.0
      %1148 = vmatprep.subr.mxu0 0.0
      %1149 = vmatpush1.msra.mxu0 0.0
      %1150 = vmatprep.subr.mxu0 0.0
      %1151 = vmatpush1.msra.mxu0 0.0
      %1152 = vmatprep.subr.mxu0 0.0
      %1153 = vmatpush1.msra.mxu0 0.0
      %1154 = vmatprep.subr.mxu0 0.0
      %1155 = vmatpush1.msra.mxu0 0.0
      %1156 = vmatprep.subr.mxu0 0.0
      %1157 = vmatpush1.msra.mxu0 0.0
      %1158 = vmatprep.subr.mxu0 0.0
      %1159 = vmatpush1.msra.mxu0 0.0
      %1160 = vmatprep.subr.mxu0 0.0
      %1161 = vmatpush1.msra.mxu0 0.0
      %1162 = vmatprep.subr.mxu0 0.0
      %1163 = vmatpush1.msra.mxu0 0.0
      %1164 = vmatprep.subr.mxu0 0.0
      %1165 = vmatpush1.msra.mxu0 0.0
      %1166 = vmatprep.subr.mxu0 0.0
      %1167 = vmatpush1.msra.mxu0 0.0
      %1168 = vmatprep.subr.mxu0 0.0
      %1169 = vmatpush1.msra.mxu0 0.0
      %1170 = vmatprep.subr.mxu0 0.0
      %1171 = vmatpush1.msra.mxu0 0.0
      %1172 = vmatprep.subr.mxu0 0.0
      %1173 = vmatpush1.msra.mxu0 0.0
      %1174 = vmatprep.subr.mxu0 0.0
      %1175 = vmatpush1.msra.mxu0 0.0
      %1176 = vmatprep.subr.mxu0 0.0
      %1177 = vmatpush1.msra.mxu0 0.0
      %1178 = vmatprep.subr.mxu0 0.0
      %1179 = vmatpush1.msra.mxu0 0.0
      %1180 = vmatprep.subr.mxu0 0.0
      %1181 = vmatpush1.msra.mxu0 0.0
      %1182 = vmatprep.subr.mxu0 0.0
      %1183 = vmatpush1.msra.mxu0 0.0
      %1184 = vmatprep.subr.mxu0 0.0
      %1185 = vmatpush1.msra.mxu0 0.0
      %1186 = vmatprep.subr.mxu0 0.0
      %1187 = vmatpush1.msra.mxu0 0.0
      %1188 = vmatprep.subr.mxu0 0.0
      %1189 = vmatpush1.msra.mxu0 0.0
      %1190 = vmatprep.subr.mxu0 0.0
      %1191 = vmatpush1.msra.mxu0 0.0
      %1192 = vmatprep.subr.mxu0 0.0
      %1193 = vmatpush1.msra.mxu0 0.0
      %1194 = vmatprep.mubr.f32.mxu0 0.0
      %1195 = vmatmul.mubr.f32.gmra.mrb[0].mxu0 %v1101
      %v1196 = vpop.f32.mrb[0].mxu0
      %v1197 = vadd.f32 0.0, %v1196
      %v1198 = vpop.f32.mrb[0].mxu0
      %v1199 = vadd.f32 0.0, %v1198
      %1200 = vmatprep.mubr.f32.mxu0 0.0
      %1201 = vmatmul.mubr.f32.gmra.mrb[0].mxu0 %v1104
      %v1202 = vpop.f32.mrb[0].mxu0
      %v1203 = vadd.f32 0.0, %v1202
      %v1204 = vpop.f32.mrb[0].mxu0
      %v1205 = vadd.f32 0.0, %v1204
      %1206 = vmatprep.mubr.f32.mxu0 0.0
      %1207 = vmatmul.mubr.f32.gmra.mrb[0].mxu0 %v1107
      %v1208 = vpop.f32.mrb[0].mxu0
      %v1209 = vadd.f32 0.0, %v1208
      %v1210 = vpop.f32.mrb[0].mxu0
      %v1211 = vadd.f32 0.0, %v1210
      %1212 = vmatprep.mubr.f32.mxu0 0.0
      %1213 = vmatmul.mubr.f32.gmra.mrb[0].mxu0 %v1110
      %v1214 = vpop.f32.mrb[0].mxu0
      %v1215 = vadd.f32 0.0, %v1214
      %v1216 = vpop.f32.mrb[0].mxu0
      %v1217 = vadd.f32 0.0, %v1216
      %1218 = vmatprep.mubr.f32.mxu0 0.0
      %1219 = vmatmul.mubr.f32.gmra.mrb[0].mxu0 %v1113
      %v1220 = vpop.f32.mrb[0].mxu0
      %v1221 = vadd.f32 0.0, %v1220
      %v1222 = vpop.f32.mrb[0].mxu0
      %v1223 = vadd.f32 0.0, %v1222
      %1224 = vmatprep.mubr.f32.mxu0 0.0
      %1225 = vmatmul.mubr.f32.gmra.mrb[0].mxu0 %v1116
      %v1226 = vpop.f32.mrb[0].mxu0
      %v1227 = vadd.f32 0.0, %v1226
      %v1228 = vpop.f32.mrb[0].mxu0
      %v1229 = vadd.f32 0.0, %v1228
      %1230 = vmatprep.mubr.f32.mxu0 0.0
      %1231 = vmatmul.mubr.f32.gmra.mrb[0].mxu0 %v1119
      %v1232 = vpop.f32.mrb[0].mxu0
      %v1233 = vadd.f32 0.0, %v1232
      %v1234 = vpop.f32.mrb[0].mxu0
      %v1235 = vadd.f32 0.0, %v1234
      %1236 = vmatprep.mubr.f32.mxu0 0.0
      %1237 = vmatmul.mubr.f32.gmra.mrb[0].mxu0 %v1122
      %v1238 = vpop.f32.mrb[0].mxu0
      %v1239 = vadd.f32 0.0, %v1238
      %v1240 = vpop.f32.mrb[0].mxu0
      %v1241 = vadd.f32 0.0, %v1240
      %1242 = vmatprep.mubr.f32.mxu0 0.0
      %1243 = vmatmul.mubr.f32.gmra.mrb[0].mxu0 %v1125
      %v1244 = vpop.f32.mrb[0].mxu0
      %v1245 = vadd.f32 0.0, %v1244
      %v1246 = vpop.f32.mrb[0].mxu0
      %v1247 = vadd.f32 0.0, %v1246
      %1248 = vmatprep.mubr.f32.mxu0 0.0
      %1249 = vmatmul.mubr.f32.gmra.mrb[0].mxu0 %v1128
      %v1250 = vpop.f32.mrb[0].mxu0
      %v1251 = vadd.f32 0.0, %v1250
      %v1252 = vpop.f32.mrb[0].mxu0
      %v1253 = vadd.f32 0.0, %v1252
      %1254 = vdwg.mxu0
      %1255 = vmatprep.subr.mxu0 0.0
      %1256 = vmatpush1.msra.mxu0 %v1078
      %1257 = vmatprep.subr.mxu0 0.0
      %1258 = vmatpush1.msra.mxu0 %v1081
      %1259 = vmatprep.subr.mxu0 0.0
      %1260 = vmatpush1.msra.mxu0 %v1084
      %1261 = vmatprep.subr.mxu0 0.0
      %1262 = vmatpush1.msra.mxu0 %v1087
      %1263 = vmatprep.subr.mxu0 0.0
      %1264 = vmatpush1.msra.mxu0 0.0
      %1265 = vmatprep.subr.mxu0 0.0
      %1266 = vmatpush1.msra.mxu0 0.0
      %1267 = vmatprep.subr.mxu0 0.0
      %1268 = vmatpush1.msra.mxu0 0.0
      %1269 = vmatprep.subr.mxu0 0.0
      %1270 = vmatpush1.msra.mxu0 0.0
      %1271 = vmatprep.subr.mxu0 0.0
      %1272 = vmatpush1.msra.mxu0 0.0
      %1273 = vmatprep.subr.mxu0 0.0
      %1274 = vmatpush1.msra.mxu0 0.0
      %1275 = vmatprep.subr.mxu0 0.0
      %1276 = vmatpush1.msra.mxu0 0.0
      %1277 = vmatprep.subr.mxu0 0.0
      %1278 = vmatpush1.msra.mxu0 0.0
      %1279 = vmatprep.subr.mxu0 0.0
      %1280 = vmatpush1.msra.mxu0 0.0
      %1281 = vmatprep.subr.mxu0 0.0
      %1282 = vmatpush1.msra.mxu0 0.0
      %1283 = vmatprep.subr.mxu0 0.0
      %1284 = vmatpush1.msra.mxu0 0.0
      %1285 = vmatprep.subr.mxu0 0.0
      %1286 = vmatpush1.msra.mxu0 0.0
      %1287 = vmatprep.subr.mxu0 0.0
      %1288 = vmatpush1.msra.mxu0 0.0
      %1289 = vmatprep.subr.mxu0 0.0
      %1290 = vmatpush1.msra.mxu0 0.0
      %1291 = vmatprep.subr.mxu0 0.0
      %1292 = vmatpush1.msra.mxu0 0.0
      %1293 = vmatprep.subr.mxu0 0.0
      %1294 = vmatpush1.msra.mxu0 0.0
      %1295 = vmatprep.subr.mxu0 0.0
      %1296 = vmatpush1.msra.mxu0 0.0
      %1297 = vmatprep.subr.mxu0 0.0
      %1298 = vmatpush1.msra.mxu0 0.0
      %1299 = vmatprep.subr.mxu0 0.0
      %1300 = vmatpush1.msra.mxu0 0.0
      %1301 = vmatprep.subr.mxu0 0.0
      %1302 = vmatpush1.msra.mxu0 0.0
      %1303 = vmatprep.subr.mxu0 0.0
      %1304 = vmatpush1.msra.mxu0 0.0
      %1305 = vmatprep.subr.mxu0 0.0
      %1306 = vmatpush1.msra.mxu0 0.0
      %1307 = vmatprep.subr.mxu0 0.0
      %1308 = vmatpush1.msra.mxu0 0.0
      %1309 = vmatprep.subr.mxu0 0.0
      %1310 = vmatpush1.msra.mxu0 0.0
      %1311 = vmatprep.subr.mxu0 0.0
      %1312 = vmatpush1.msra.mxu0 0.0
      %1313 = vmatprep.subr.mxu0 0.0
      %1314 = vmatpush1.msra.mxu0 0.0
      %1315 = vmatprep.subr.mxu0 0.0
      %1316 = vmatpush1.msra.mxu0 0.0
      %1317 = vmatprep.subr.mxu0 0.0
      %1318 = vmatpush1.msra.mxu0 0.0
      %1319 = vmatprep.mubr.f32.mxu0 0.0
      %1320 = vmatmul.mubr.f32.gmra.mrb[0].mxu0 %v1101
      %v1321 = vpop.f32.mrb[0].mxu0
      %v1322 = vadd.f32 0.0, %v1321
      %v1323 = vpop.f32.mrb[0].mxu0
      %1324 = vmatprep.mubr.f32.mxu0 0.0
      %1325 = vmatmul.mubr.f32.gmra.mrb[0].mxu0 %v1104
      %v1326 = vpop.f32.mrb[0].mxu0
      %v1327 = vadd.f32 0.0, %v1326
      %v1328 = vpop.f32.mrb[0].mxu0
      %1329 = vmatprep.mubr.f32.mxu0 0.0
      %1330 = vmatmul.mubr.f32.gmra.mrb[0].mxu0 %v1107
      %v1331 = vpop.f32.mrb[0].mxu0
      %v1332 = vadd.f32 0.0, %v1331
      %v1333 = vpop.f32.mrb[0].mxu0
      %1334 = vmatprep.mubr.f32.mxu0 0.0
      %1335 = vmatmul.mubr.f32.gmra.mrb[0].mxu0 %v1110
      %v1336 = vpop.f32.mrb[0].mxu0
      %v1337 = vadd.f32 0.0, %v1336
      %v1338 = vpop.f32.mrb[0].mxu0
      %1339 = vmatprep.mubr.f32.mxu0 0.0
      %1340 = vmatmul.mubr.f32.gmra.mrb[0].mxu0 %v1113
      %v1341 = vpop.f32.mrb[0].mxu0
      %v1342 = vadd.f32 0.0, %v1341
      %v1343 = vpop.f32.mrb[0].mxu0
      %1344 = vmatprep.mubr.f32.mxu0 0.0
      %1345 = vmatmul.mubr.f32.gmra.mrb[0].mxu0 %v1116
      %v1346 = vpop.f32.mrb[0].mxu0
      %v1347 = vadd.f32 0.0, %v1346
      %v1348 = vpop.f32.mrb[0].mxu0
      %1349 = vmatprep.mubr.f32.mxu0 0.0
      %1350 = vmatmul.mubr.f32.gmra.mrb[0].mxu0 %v1119
      %v1351 = vpop.f32.mrb[0].mxu0
      %v1352 = vadd.f32 0.0, %v1351
      %v1353 = vpop.f32.mrb[0].mxu0
      %1354 = vmatprep.mubr.f32.mxu0 0.0
      %1355 = vmatmul.mubr.f32.gmra.mrb[0].mxu0 %v1122
      %v1356 = vpop.f32.mrb[0].mxu0
      %v1357 = vadd.f32 0.0, %v1356
      %v1358 = vpop.f32.mrb[0].mxu0
      %1359 = vmatprep.mubr.f32.mxu0 0.0
      %1360 = vmatmul.mubr.f32.gmra.mrb[0].mxu0 %v1125
      %v1361 = vpop.f32.mrb[0].mxu0
      %v1362 = vadd.f32 0.0, %v1361
      %v1363 = vpop.f32.mrb[0].mxu0
      %1364 = vmatprep.mubr.f32.mxu0 0.0
      %1365 = vmatmul.mubr.f32.gmra.mrb[0].mxu0 %v1128
      %v1366 = vpop.f32.mrb[0].mxu0
      %v1367 = vadd.f32 0.0, %v1366
      %v1368 = vpop.f32.mrb[0].mxu0
      %1369 = vdwg.mxu0
      %v1370 = vadd.f32 %v859, %v1197
      %v1371 = vadd.f32 %v861, %v1199
      %v1372 = vadd.f32 %v984, %v1322
      %v1373 = vadd.f32 %v865, %v1203
      %v1374 = vadd.f32 %v867, %v1205
      %v1375 = vadd.f32 %v989, %v1327
      %v1376 = vadd.f32 %v871, %v1209
      %v1377 = vadd.f32 %v873, %v1211
      %v1378 = vadd.f32 %v994, %v1332
      %v1379 = vadd.f32 %v877, %v1215
      %v1380 = vadd.f32 %v879, %v1217
      %v1381 = vadd.f32 %v999, %v1337
      %v1382 = vadd.f32 %v883, %v1221
      %v1383 = vadd.f32 %v885, %v1223
      %v1384 = vadd.f32 %v1004, %v1342
      %v1385 = vadd.f32 %v889, %v1227
      %v1386 = vadd.f32 %v891, %v1229
      %v1387 = vadd.f32 %v1009, %v1347
      %v1388 = vadd.f32 %v895, %v1233
      %v1389 = vadd.f32 %v897, %v1235
      %v1390 = vadd.f32 %v1014, %v1352
      %v1391 = vadd.f32 %v901, %v1239
      %v1392 = vadd.f32 %v903, %v1241
      %v1393 = vadd.f32 %v1019, %v1357
      %v1394 = vadd.f32 %v907, %v1245
      %v1395 = vadd.f32 %v909, %v1247
      %v1396 = vadd.f32 %v1024, %v1362
      %v1397 = vadd.f32 %v913, %v1251
      %v1398 = vadd.f32 %v915, %v1253
      %v1399 = vadd.f32 %v1029, %v1367
      %s1400 = scalar_lea.vmem %s2, 240
      %v1401 = vld [vmem:[%s1400] sm:$0xff]
      %v1402 = vld [vmem:[%s1400 + $0x8] sm:$0xff]
      %v1403 = vld [vmem:[%s1400 + $0x10] sm:$0xff]
      %v1404 = vld [vmem:[%s1400 + $0x18] sm:$0xff]
      %v1405 = vld [vmem:[%s1400 + $0x20] sm:$0xff]
      %v1406 = vld [vmem:[%s1400 + $0x28] sm:$0xff]
      %v1407 = vld [vmem:[%s1400 + $0x30] sm:$0xff]
      %v1408 = vld [vmem:[%s1400 + $0x38] sm:$0xff]
      %v1409 = vld [vmem:[%s1400 + $0x40] sm:$0xff]
      %v1410 = vld [vmem:[%s1400 + $0x48] sm:$0x1]
      %1411 = vrot.lane.b32.xlu0 %v324, 1
      %v1412 = vpop.permute.xlu0 %1411
      %1413 = vrot.lane.b32.xlu0 %v325, 1
      %v1414 = vpop.permute.xlu0 %1413
      %1415 = vrot.lane.b32.xlu0 %v326, 1
      %v1416 = vpop.permute.xlu0 %1415
      %1417 = vrot.lane.b32.xlu0 %v327, 1
      %v1418 = vpop.permute.xlu0 %1417
      %1419 = vrot.lane.b32.xlu0 %v328, 1
      %v1420 = vpop.permute.xlu0 %1419
      %1421 = vrot.lane.b32.xlu0 %v329, 1
      %v1422 = vpop.permute.xlu0 %1421
      %1423 = vrot.lane.b32.xlu0 %v330, 1
      %v1424 = vpop.permute.xlu0 %1423
      %1425 = vrot.lane.b32.xlu0 %v331, 1
      %v1426 = vpop.permute.xlu0 %1425
      %1427 = vrot.lane.b32.xlu0 %v332, 1
      %v1428 = vpop.permute.xlu0 %1427
      %1429 = vrot.lane.b32.xlu0 %v333, 1
      %v1430 = vpop.permute.xlu0 %1429
      %1431 = vrot.lane.b32.xlu0 %v334, 1
      %v1432 = vpop.permute.xlu0 %1431
      %1433 = vrot.lane.b32.xlu0 %v335, 1
      %v1434 = vpop.permute.xlu0 %1433
      %1435 = vrot.lane.b32.xlu0 %v336, 1
      %v1436 = vpop.permute.xlu0 %1435
      %1437 = vrot.lane.b32.xlu0 %v337, 1
      %v1438 = vpop.permute.xlu0 %1437
      %1439 = vrot.lane.b32.xlu0 %v338, 1
      %v1440 = vpop.permute.xlu0 %1439
      %1441 = vrot.lane.b32.xlu0 %v339, 1
      %v1442 = vpop.permute.xlu0 %1441
      %vm1443 = vcmask 7168
      %v1444 = vsel %vm1443, %v1412, %v1414
      %v1445 = vsel %vm1443, %v1414, %v1416
      %v1446 = vsel %vm1443, %v1416, %v1418
      %v1447 = vsel %vm1443, %v1420, %v1422
      %v1448 = vsel %vm1443, %v1422, %v1424
      %v1449 = vsel %vm1443, %v1424, %v1426
      %v1450 = vsel %vm1443, %v1428, %v1430
      %v1451 = vsel %vm1443, %v1430, %v1432
      %v1452 = vsel %vm1443, %v1432, %v1434
      %v1453 = vsel %vm1443, %v1436, %v1438
      %v1454 = vsel %vm1443, %v1438, %v1440
      %v1455 = vsel %vm1443, %v1440, %v1442
      %v1469 = vsel %vm434, %v1401, 0
      %v1472 = vsel %vm434, %v1402, 0
      %v1475 = vsel %vm434, %v1403, 0
      %v1478 = vsel %vm434, %v1404, 0
      %v1481 = vsel %vm434, %v1405, 0
      %v1484 = vsel %vm434, %v1406, 0
      %v1487 = vsel %vm434, %v1407, 0
      %v1490 = vsel %vm434, %v1408, 0
      %v1493 = vsel %vm434, %v1409, 0
      %v1496 = vsel %vm434, %v1410, 0
      %1498 = vmatprep.subr.mxu0 %v1445
      %1499 = vmatpush1.msra.mxu0 %v1444
      %1500 = vmatprep.subr.mxu0 %v1448
      %1501 = vmatpush1.msra.mxu0 %v1447
      %1502 = vmatprep.subr.mxu0 %v1451
      %1503 = vmatpush1.msra.mxu0 %v1450
      %1504 = vmatprep.subr.mxu0 %v1454
      %1505 = vmatpush1.msra.mxu0 %v1453
      %1506 = vmatprep.subr.mxu0 0.0
      %1507 = vmatpush1.msra.mxu0 0.0
      %1508 = vmatprep.subr.mxu0 0.0
      %1509 = vmatpush1.msra.mxu0 0.0
      %1510 = vmatprep.subr.mxu0 0.0
      %1511 = vmatpush1.msra.mxu0 0.0
      %1512 = vmatprep.subr.mxu0 0.0
      %1513 = vmatpush1.msra.mxu0 0.0
      %1514 = vmatprep.subr.mxu0 0.0
      %1515 = vmatpush1.msra.mxu0 0.0
      %1516 = vmatprep.subr.mxu0 0.0
      %1517 = vmatpush1.msra.mxu0 0.0
      %1518 = vmatprep.subr.mxu0 0.0
      %1519 = vmatpush1.msra.mxu0 0.0
      %1520 = vmatprep.subr.mxu0 0.0
      %1521 = vmatpush1.msra.mxu0 0.0
      %1522 = vmatprep.subr.mxu0 0.0
      %1523 = vmatpush1.msra.mxu0 0.0
      %1524 = vmatprep.subr.mxu0 0.0
      %1525 = vmatpush1.msra.mxu0 0.0
      %1526 = vmatprep.subr.mxu0 0.0
      %1527 = vmatpush1.msra.mxu0 0.0
      %1528 = vmatprep.subr.mxu0 0.0
      %1529 = vmatpush1.msra.mxu0 0.0
      %1530 = vmatprep.subr.mxu0 0.0
      %1531 = vmatpush1.msra.mxu0 0.0
      %1532 = vmatprep.subr.mxu0 0.0
      %1533 = vmatpush1.msra.mxu0 0.0
      %1534 = vmatprep.subr.mxu0 0.0
      %1535 = vmatpush1.msra.mxu0 0.0
      %1536 = vmatprep.subr.mxu0 0.0
      %1537 = vmatpush1.msra.mxu0 0.0
      %1538 = vmatprep.subr.mxu0 0.0
      %1539 = vmatpush1.msra.mxu0 0.0
      %1540 = vmatprep.subr.mxu0 0.0
      %1541 = vmatpush1.msra.mxu0 0.0
      %1542 = vmatprep.subr.mxu0 0.0
      %1543 = vmatpush1.msra.mxu0 0.0
      %1544 = vmatprep.subr.mxu0 0.0
      %1545 = vmatpush1.msra.mxu0 0.0
      %1546 = vmatprep.subr.mxu0 0.0
      %1547 = vmatpush1.msra.mxu0 0.0
      %1548 = vmatprep.subr.mxu0 0.0
      %1549 = vmatpush1.msra.mxu0 0.0
      %1550 = vmatprep.subr.mxu0 0.0
      %1551 = vmatpush1.msra.mxu0 0.0
      %1552 = vmatprep.subr.mxu0 0.0
      %1553 = vmatpush1.msra.mxu0 0.0
      %1554 = vmatprep.subr.mxu0 0.0
      %1555 = vmatpush1.msra.mxu0 0.0
      %1556 = vmatprep.subr.mxu0 0.0
      %1557 = vmatpush1.msra.mxu0 0.0
      %1558 = vmatprep.subr.mxu0 0.0
      %1559 = vmatpush1.msra.mxu0 0.0
      %1560 = vmatprep.subr.mxu0 0.0
      %1561 = vmatpush1.msra.mxu0 0.0
      %1562 = vmatprep.mubr.f32.mxu0 0.0
      %1563 = vmatmul.mubr.f32.gmra.mrb[0].mxu0 %v1469
      %v1564 = vpop.f32.mrb[0].mxu0
      %v1565 = vadd.f32 0.0, %v1564
      %v1566 = vpop.f32.mrb[0].mxu0
      %v1567 = vadd.f32 0.0, %v1566
      %1568 = vmatprep.mubr.f32.mxu0 0.0
      %1569 = vmatmul.mubr.f32.gmra.mrb[0].mxu0 %v1472
      %v1570 = vpop.f32.mrb[0].mxu0
      %v1571 = vadd.f32 0.0, %v1570
      %v1572 = vpop.f32.mrb[0].mxu0
      %v1573 = vadd.f32 0.0, %v1572
      %1574 = vmatprep.mubr.f32.mxu0 0.0
      %1575 = vmatmul.mubr.f32.gmra.mrb[0].mxu0 %v1475
      %v1576 = vpop.f32.mrb[0].mxu0
      %v1577 = vadd.f32 0.0, %v1576
      %v1578 = vpop.f32.mrb[0].mxu0
      %v1579 = vadd.f32 0.0, %v1578
      %1580 = vmatprep.mubr.f32.mxu0 0.0
      %1581 = vmatmul.mubr.f32.gmra.mrb[0].mxu0 %v1478
      %v1582 = vpop.f32.mrb[0].mxu0
      %v1583 = vadd.f32 0.0, %v1582
      %v1584 = vpop.f32.mrb[0].mxu0
      %v1585 = vadd.f32 0.0, %v1584
      %1586 = vmatprep.mubr.f32.mxu0 0.0
      %1587 = vmatmul.mubr.f32.gmra.mrb[0].mxu0 %v1481
      %v1588 = vpop.f32.mrb[0].mxu0
      %v1589 = vadd.f32 0.0, %v1588
      %v1590 = vpop.f32.mrb[0].mxu0
      %v1591 = vadd.f32 0.0, %v1590
      %1592 = vmatprep.mubr.f32.mxu0 0.0
      %1593 = vmatmul.mubr.f32.gmra.mrb[0].mxu0 %v1484
      %v1594 = vpop.f32.mrb[0].mxu0
      %v1595 = vadd.f32 0.0, %v1594
      %v1596 = vpop.f32.mrb[0].mxu0
      %v1597 = vadd.f32 0.0, %v1596
      %1598 = vmatprep.mubr.f32.mxu0 0.0
      %1599 = vmatmul.mubr.f32.gmra.mrb[0].mxu0 %v1487
      %v1600 = vpop.f32.mrb[0].mxu0
      %v1601 = vadd.f32 0.0, %v1600
      %v1602 = vpop.f32.mrb[0].mxu0
      %v1603 = vadd.f32 0.0, %v1602
      %1604 = vmatprep.mubr.f32.mxu0 0.0
      %1605 = vmatmul.mubr.f32.gmra.mrb[0].mxu0 %v1490
      %v1606 = vpop.f32.mrb[0].mxu0
      %v1607 = vadd.f32 0.0, %v1606
      %v1608 = vpop.f32.mrb[0].mxu0
      %v1609 = vadd.f32 0.0, %v1608
      %1610 = vmatprep.mubr.f32.mxu0 0.0
      %1611 = vmatmul.mubr.f32.gmra.mrb[0].mxu0 %v1493
      %v1612 = vpop.f32.mrb[0].mxu0
      %v1613 = vadd.f32 0.0, %v1612
      %v1614 = vpop.f32.mrb[0].mxu0
      %v1615 = vadd.f32 0.0, %v1614
      %1616 = vmatprep.mubr.f32.mxu0 0.0
      %1617 = vmatmul.mubr.f32.gmra.mrb[0].mxu0 %v1496
      %v1618 = vpop.f32.mrb[0].mxu0
      %v1619 = vadd.f32 0.0, %v1618
      %v1620 = vpop.f32.mrb[0].mxu0
      %v1621 = vadd.f32 0.0, %v1620
      %1622 = vdwg.mxu0
      %1623 = vmatprep.subr.mxu0 0.0
      %1624 = vmatpush1.msra.mxu0 %v1446
      %1625 = vmatprep.subr.mxu0 0.0
      %1626 = vmatpush1.msra.mxu0 %v1449
      %1627 = vmatprep.subr.mxu0 0.0
      %1628 = vmatpush1.msra.mxu0 %v1452
      %1629 = vmatprep.subr.mxu0 0.0
      %1630 = vmatpush1.msra.mxu0 %v1455
      %1631 = vmatprep.subr.mxu0 0.0
      %1632 = vmatpush1.msra.mxu0 0.0
      %1633 = vmatprep.subr.mxu0 0.0
      %1634 = vmatpush1.msra.mxu0 0.0
      %1635 = vmatprep.subr.mxu0 0.0
      %1636 = vmatpush1.msra.mxu0 0.0
      %1637 = vmatprep.subr.mxu0 0.0
      %1638 = vmatpush1.msra.mxu0 0.0
      %1639 = vmatprep.subr.mxu0 0.0
      %1640 = vmatpush1.msra.mxu0 0.0
      %1641 = vmatprep.subr.mxu0 0.0
      %1642 = vmatpush1.msra.mxu0 0.0
      %1643 = vmatprep.subr.mxu0 0.0
      %1644 = vmatpush1.msra.mxu0 0.0
      %1645 = vmatprep.subr.mxu0 0.0
      %1646 = vmatpush1.msra.mxu0 0.0
      %1647 = vmatprep.subr.mxu0 0.0
      %1648 = vmatpush1.msra.mxu0 0.0
      %1649 = vmatprep.subr.mxu0 0.0
      %1650 = vmatpush1.msra.mxu0 0.0
      %1651 = vmatprep.subr.mxu0 0.0
      %1652 = vmatpush1.msra.mxu0 0.0
      %1653 = vmatprep.subr.mxu0 0.0
      %1654 = vmatpush1.msra.mxu0 0.0
      %1655 = vmatprep.subr.mxu0 0.0
      %1656 = vmatpush1.msra.mxu0 0.0
      %1657 = vmatprep.subr.mxu0 0.0
      %1658 = vmatpush1.msra.mxu0 0.0
      %1659 = vmatprep.subr.mxu0 0.0
      %1660 = vmatpush1.msra.mxu0 0.0
      %1661 = vmatprep.subr.mxu0 0.0
      %1662 = vmatpush1.msra.mxu0 0.0
      %1663 = vmatprep.subr.mxu0 0.0
      %1664 = vmatpush1.msra.mxu0 0.0
      %1665 = vmatprep.subr.mxu0 0.0
      %1666 = vmatpush1.msra.mxu0 0.0
      %1667 = vmatprep.subr.mxu0 0.0
      %1668 = vmatpush1.msra.mxu0 0.0
      %1669 = vmatprep.subr.mxu0 0.0
      %1670 = vmatpush1.msra.mxu0 0.0
      %1671 = vmatprep.subr.mxu0 0.0
      %1672 = vmatpush1.msra.mxu0 0.0
      %1673 = vmatprep.subr.mxu0 0.0
      %1674 = vmatpush1.msra.mxu0 0.0
      %1675 = vmatprep.subr.mxu0 0.0
      %1676 = vmatpush1.msra.mxu0 0.0
      %1677 = vmatprep.subr.mxu0 0.0
      %1678 = vmatpush1.msra.mxu0 0.0
      %1679 = vmatprep.subr.mxu0 0.0
      %1680 = vmatpush1.msra.mxu0 0.0
      %1681 = vmatprep.subr.mxu0 0.0
      %1682 = vmatpush1.msra.mxu0 0.0
      %1683 = vmatprep.subr.mxu0 0.0
      %1684 = vmatpush1.msra.mxu0 0.0
      %1685 = vmatprep.subr.mxu0 0.0
      %1686 = vmatpush1.msra.mxu0 0.0
      %1687 = vmatprep.mubr.f32.mxu0 0.0
      %1688 = vmatmul.mubr.f32.gmra.mrb[0].mxu0 %v1469
      %v1689 = vpop.f32.mrb[0].mxu0
      %v1690 = vadd.f32 0.0, %v1689
      %v1691 = vpop.f32.mrb[0].mxu0
      %1692 = vmatprep.mubr.f32.mxu0 0.0
      %1693 = vmatmul.mubr.f32.gmra.mrb[0].mxu0 %v1472
      %v1694 = vpop.f32.mrb[0].mxu0
      %v1695 = vadd.f32 0.0, %v1694
      %v1696 = vpop.f32.mrb[0].mxu0
      %1697 = vmatprep.mubr.f32.mxu0 0.0
      %1698 = vmatmul.mubr.f32.gmra.mrb[0].mxu0 %v1475
      %v1699 = vpop.f32.mrb[0].mxu0
      %v1700 = vadd.f32 0.0, %v1699
      %v1701 = vpop.f32.mrb[0].mxu0
      %1702 = vmatprep.mubr.f32.mxu0 0.0
      %1703 = vmatmul.mubr.f32.gmra.mrb[0].mxu0 %v1478
      %v1704 = vpop.f32.mrb[0].mxu0
      %v1705 = vadd.f32 0.0, %v1704
      %v1706 = vpop.f32.mrb[0].mxu0
      %1707 = vmatprep.mubr.f32.mxu0 0.0
      %1708 = vmatmul.mubr.f32.gmra.mrb[0].mxu0 %v1481
      %v1709 = vpop.f32.mrb[0].mxu0
      %v1710 = vadd.f32 0.0, %v1709
      %v1711 = vpop.f32.mrb[0].mxu0
      %1712 = vmatprep.mubr.f32.mxu0 0.0
      %1713 = vmatmul.mubr.f32.gmra.mrb[0].mxu0 %v1484
      %v1714 = vpop.f32.mrb[0].mxu0
      %v1715 = vadd.f32 0.0, %v1714
      %v1716 = vpop.f32.mrb[0].mxu0
      %1717 = vmatprep.mubr.f32.mxu0 0.0
      %1718 = vmatmul.mubr.f32.gmra.mrb[0].mxu0 %v1487
      %v1719 = vpop.f32.mrb[0].mxu0
      %v1720 = vadd.f32 0.0, %v1719
      %v1721 = vpop.f32.mrb[0].mxu0
      %1722 = vmatprep.mubr.f32.mxu0 0.0
      %1723 = vmatmul.mubr.f32.gmra.mrb[0].mxu0 %v1490
      %v1724 = vpop.f32.mrb[0].mxu0
      %v1725 = vadd.f32 0.0, %v1724
      %v1726 = vpop.f32.mrb[0].mxu0
      %1727 = vmatprep.mubr.f32.mxu0 0.0
      %1728 = vmatmul.mubr.f32.gmra.mrb[0].mxu0 %v1493
      %v1729 = vpop.f32.mrb[0].mxu0
      %v1730 = vadd.f32 0.0, %v1729
      %v1731 = vpop.f32.mrb[0].mxu0
      %1732 = vmatprep.mubr.f32.mxu0 0.0
      %1733 = vmatmul.mubr.f32.gmra.mrb[0].mxu0 %v1496
      %v1734 = vpop.f32.mrb[0].mxu0
      %v1735 = vadd.f32 0.0, %v1734
      %v1736 = vpop.f32.mrb[0].mxu0
      %1737 = vdwg.mxu0
      %v1738 = vadd.f32 %v1370, %v1565
      %v1739 = vadd.f32 %v1371, %v1567
      %v1740 = vadd.f32 %v1372, %v1690
      %v1741 = vadd.f32 %v1373, %v1571
      %v1742 = vadd.f32 %v1374, %v1573
      %v1743 = vadd.f32 %v1375, %v1695
      %v1744 = vadd.f32 %v1376, %v1577
      %v1745 = vadd.f32 %v1377, %v1579
      %v1746 = vadd.f32 %v1378, %v1700
      %v1747 = vadd.f32 %v1379, %v1583
      %v1748 = vadd.f32 %v1380, %v1585
      %v1749 = vadd.f32 %v1381, %v1705
      %v1750 = vadd.f32 %v1382, %v1589
      %v1751 = vadd.f32 %v1383, %v1591
      %v1752 = vadd.f32 %v1384, %v1710
      %v1753 = vadd.f32 %v1385, %v1595
      %v1754 = vadd.f32 %v1386, %v1597
      %v1755 = vadd.f32 %v1387, %v1715
      %v1756 = vadd.f32 %v1388, %v1601
      %v1757 = vadd.f32 %v1389, %v1603
      %v1758 = vadd.f32 %v1390, %v1720
      %v1759 = vadd.f32 %v1391, %v1607
      %v1760 = vadd.f32 %v1392, %v1609
      %v1761 = vadd.f32 %v1393, %v1725
      %v1762 = vadd.f32 %v1394, %v1613
      %v1763 = vadd.f32 %v1395, %v1615
      %v1764 = vadd.f32 %v1396, %v1730
      %v1765 = vadd.f32 %v1397, %v1619
      %v1766 = vadd.f32 %v1398, %v1621
      %v1767 = vadd.f32 %v1399, %v1735
      %s1768 = scalar_lea.vmem %s2, 320
      %v1769 = vld [vmem:[%s1768] sm:$0xff]
      %v1770 = vld [vmem:[%s1768 + $0x8] sm:$0xff]
      %v1771 = vld [vmem:[%s1768 + $0x10] sm:$0xff]
      %v1772 = vld [vmem:[%s1768 + $0x18] sm:$0xff]
      %v1773 = vld [vmem:[%s1768 + $0x20] sm:$0xff]
      %v1774 = vld [vmem:[%s1768 + $0x28] sm:$0xff]
      %v1775 = vld [vmem:[%s1768 + $0x30] sm:$0xff]
      %v1776 = vld [vmem:[%s1768 + $0x38] sm:$0xff]
      %v1777 = vld [vmem:[%s1768 + $0x40] sm:$0xff]
      %v1778 = vld [vmem:[%s1768 + $0x48] sm:$0x1]
      %v1780 = vsel %vm434, %v1769, 0
      %v1783 = vsel %vm434, %v1770, 0
      %v1786 = vsel %vm434, %v1771, 0
      %v1789 = vsel %vm434, %v1772, 0
      %v1792 = vsel %vm434, %v1773, 0
      %v1795 = vsel %vm434, %v1774, 0
      %v1798 = vsel %vm434, %v1775, 0
      %v1801 = vsel %vm434, %v1776, 0
      %v1804 = vsel %vm434, %v1777, 0
      %v1807 = vsel %vm434, %v1778, 0
      %1809 = vmatprep.subr.mxu0 %v326
      %1810 = vmatpush1.msra.mxu0 %v325
      %1811 = vmatprep.subr.mxu0 %v330
      %1812 = vmatpush1.msra.mxu0 %v329
      %1813 = vmatprep.subr.mxu0 %v334
      %1814 = vmatpush1.msra.mxu0 %v333
      %1815 = vmatprep.subr.mxu0 %v338
      %1816 = vmatpush1.msra.mxu0 %v337
      %1817 = vmatprep.subr.mxu0 0.0
      %1818 = vmatpush1.msra.mxu0 0.0
      %1819 = vmatprep.subr.mxu0 0.0
      %1820 = vmatpush1.msra.mxu0 0.0
      %1821 = vmatprep.subr.mxu0 0.0
      %1822 = vmatpush1.msra.mxu0 0.0
      %1823 = vmatprep.subr.mxu0 0.0
      %1824 = vmatpush1.msra.mxu0 0.0
      %1825 = vmatprep.subr.mxu0 0.0
      %1826 = vmatpush1.msra.mxu0 0.0
      %1827 = vmatprep.subr.mxu0 0.0
      %1828 = vmatpush1.msra.mxu0 0.0
      %1829 = vmatprep.subr.mxu0 0.0
      %1830 = vmatpush1.msra.mxu0 0.0
      %1831 = vmatprep.subr.mxu0 0.0
      %1832 = vmatpush1.msra.mxu0 0.0
      %1833 = vmatprep.subr.mxu0 0.0
      %1834 = vmatpush1.msra.mxu0 0.0
      %1835 = vmatprep.subr.mxu0 0.0
      %1836 = vmatpush1.msra.mxu0 0.0
      %1837 = vmatprep.subr.mxu0 0.0
      %1838 = vmatpush1.msra.mxu0 0.0
      %1839 = vmatprep.subr.mxu0 0.0
      %1840 = vmatpush1.msra.mxu0 0.0
      %1841 = vmatprep.subr.mxu0 0.0
      %1842 = vmatpush1.msra.mxu0 0.0
      %1843 = vmatprep.subr.mxu0 0.0
      %1844 = vmatpush1.msra.mxu0 0.0
      %1845 = vmatprep.subr.mxu0 0.0
      %1846 = vmatpush1.msra.mxu0 0.0
      %1847 = vmatprep.subr.mxu0 0.0
      %1848 = vmatpush1.msra.mxu0 0.0
      %1849 = vmatprep.subr.mxu0 0.0
      %1850 = vmatpush1.msra.mxu0 0.0
      %1851 = vmatprep.subr.mxu0 0.0
      %1852 = vmatpush1.msra.mxu0 0.0
      %1853 = vmatprep.subr.mxu0 0.0
      %1854 = vmatpush1.msra.mxu0 0.0
      %1855 = vmatprep.subr.mxu0 0.0
      %1856 = vmatpush1.msra.mxu0 0.0
      %1857 = vmatprep.subr.mxu0 0.0
      %1858 = vmatpush1.msra.mxu0 0.0
      %1859 = vmatprep.subr.mxu0 0.0
      %1860 = vmatpush1.msra.mxu0 0.0
      %1861 = vmatprep.subr.mxu0 0.0
      %1862 = vmatpush1.msra.mxu0 0.0
      %1863 = vmatprep.subr.mxu0 0.0
      %1864 = vmatpush1.msra.mxu0 0.0
      %1865 = vmatprep.subr.mxu0 0.0
      %1866 = vmatpush1.msra.mxu0 0.0
      %1867 = vmatprep.subr.mxu0 0.0
      %1868 = vmatpush1.msra.mxu0 0.0
      %1869 = vmatprep.subr.mxu0 0.0
      %1870 = vmatpush1.msra.mxu0 0.0
      %1871 = vmatprep.subr.mxu0 0.0
      %1872 = vmatpush1.msra.mxu0 0.0
      %1873 = vmatprep.mubr.f32.mxu0 0.0
      %1874 = vmatmul.mubr.f32.gmra.mrb[0].mxu0 %v1780
      %v1875 = vpop.f32.mrb[0].mxu0
      %v1876 = vadd.f32 0.0, %v1875
      %v1877 = vpop.f32.mrb[0].mxu0
      %v1878 = vadd.f32 0.0, %v1877
      %1879 = vmatprep.mubr.f32.mxu0 0.0
      %1880 = vmatmul.mubr.f32.gmra.mrb[0].mxu0 %v1783
      %v1881 = vpop.f32.mrb[0].mxu0
      %v1882 = vadd.f32 0.0, %v1881
      %v1883 = vpop.f32.mrb[0].mxu0
      %v1884 = vadd.f32 0.0, %v1883
      %1885 = vmatprep.mubr.f32.mxu0 0.0
      %1886 = vmatmul.mubr.f32.gmra.mrb[0].mxu0 %v1786
      %v1887 = vpop.f32.mrb[0].mxu0
      %v1888 = vadd.f32 0.0, %v1887
      %v1889 = vpop.f32.mrb[0].mxu0
      %v1890 = vadd.f32 0.0, %v1889
      %1891 = vmatprep.mubr.f32.mxu0 0.0
      %1892 = vmatmul.mubr.f32.gmra.mrb[0].mxu0 %v1789
      %v1893 = vpop.f32.mrb[0].mxu0
      %v1894 = vadd.f32 0.0, %v1893
      %v1895 = vpop.f32.mrb[0].mxu0
      %v1896 = vadd.f32 0.0, %v1895
      %1897 = vmatprep.mubr.f32.mxu0 0.0
      %1898 = vmatmul.mubr.f32.gmra.mrb[0].mxu0 %v1792
      %v1899 = vpop.f32.mrb[0].mxu0
      %v1900 = vadd.f32 0.0, %v1899
      %v1901 = vpop.f32.mrb[0].mxu0
      %v1902 = vadd.f32 0.0, %v1901
      %1903 = vmatprep.mubr.f32.mxu0 0.0
      %1904 = vmatmul.mubr.f32.gmra.mrb[0].mxu0 %v1795
      %v1905 = vpop.f32.mrb[0].mxu0
      %v1906 = vadd.f32 0.0, %v1905
      %v1907 = vpop.f32.mrb[0].mxu0
      %v1908 = vadd.f32 0.0, %v1907
      %1909 = vmatprep.mubr.f32.mxu0 0.0
      %1910 = vmatmul.mubr.f32.gmra.mrb[0].mxu0 %v1798
      %v1911 = vpop.f32.mrb[0].mxu0
      %v1912 = vadd.f32 0.0, %v1911
      %v1913 = vpop.f32.mrb[0].mxu0
      %v1914 = vadd.f32 0.0, %v1913
      %1915 = vmatprep.mubr.f32.mxu0 0.0
      %1916 = vmatmul.mubr.f32.gmra.mrb[0].mxu0 %v1801
      %v1917 = vpop.f32.mrb[0].mxu0
      %v1918 = vadd.f32 0.0, %v1917
      %v1919 = vpop.f32.mrb[0].mxu0
      %v1920 = vadd.f32 0.0, %v1919
      %1921 = vmatprep.mubr.f32.mxu0 0.0
      %1922 = vmatmul.mubr.f32.gmra.mrb[0].mxu0 %v1804
      %v1923 = vpop.f32.mrb[0].mxu0
      %v1924 = vadd.f32 0.0, %v1923
      %v1925 = vpop.f32.mrb[0].mxu0
      %v1926 = vadd.f32 0.0, %v1925
      %1927 = vmatprep.mubr.f32.mxu0 0.0
      %1928 = vmatmul.mubr.f32.gmra.mrb[0].mxu0 %v1807
      %v1929 = vpop.f32.mrb[0].mxu0
      %v1930 = vadd.f32 0.0, %v1929
      %v1931 = vpop.f32.mrb[0].mxu0
      %v1932 = vadd.f32 0.0, %v1931
      %1933 = vdwg.mxu0
      %1934 = vmatprep.subr.mxu0 0.0
      %1935 = vmatpush1.msra.mxu0 %v327
      %1936 = vmatprep.subr.mxu0 0.0
      %1937 = vmatpush1.msra.mxu0 %v331
      %1938 = vmatprep.subr.mxu0 0.0
      %1939 = vmatpush1.msra.mxu0 %v335
      %1940 = vmatprep.subr.mxu0 0.0
      %1941 = vmatpush1.msra.mxu0 %v339
      %1942 = vmatprep.subr.mxu0 0.0
      %1943 = vmatpush1.msra.mxu0 0.0
      %1944 = vmatprep.subr.mxu0 0.0
      %1945 = vmatpush1.msra.mxu0 0.0
      %1946 = vmatprep.subr.mxu0 0.0
      %1947 = vmatpush1.msra.mxu0 0.0
      %1948 = vmatprep.subr.mxu0 0.0
      %1949 = vmatpush1.msra.mxu0 0.0
      %1950 = vmatprep.subr.mxu0 0.0
      %1951 = vmatpush1.msra.mxu0 0.0
      %1952 = vmatprep.subr.mxu0 0.0
      %1953 = vmatpush1.msra.mxu0 0.0
      %1954 = vmatprep.subr.mxu0 0.0
      %1955 = vmatpush1.msra.mxu0 0.0
      %1956 = vmatprep.subr.mxu0 0.0
      %1957 = vmatpush1.msra.mxu0 0.0
      %1958 = vmatprep.subr.mxu0 0.0
      %1959 = vmatpush1.msra.mxu0 0.0
      %1960 = vmatprep.subr.mxu0 0.0
      %1961 = vmatpush1.msra.mxu0 0.0
      %1962 = vmatprep.subr.mxu0 0.0
      %1963 = vmatpush1.msra.mxu0 0.0
      %1964 = vmatprep.subr.mxu0 0.0
      %1965 = vmatpush1.msra.mxu0 0.0
      %1966 = vmatprep.subr.mxu0 0.0
      %1967 = vmatpush1.msra.mxu0 0.0
      %1968 = vmatprep.subr.mxu0 0.0
      %1969 = vmatpush1.msra.mxu0 0.0
      %1970 = vmatprep.subr.mxu0 0.0
      %1971 = vmatpush1.msra.mxu0 0.0
      %1972 = vmatprep.subr.mxu0 0.0
      %1973 = vmatpush1.msra.mxu0 0.0
      %1974 = vmatprep.subr.mxu0 0.0
      %1975 = vmatpush1.msra.mxu0 0.0
      %1976 = vmatprep.subr.mxu0 0.0
      %1977 = vmatpush1.msra.mxu0 0.0
      %1978 = vmatprep.subr.mxu0 0.0
      %1979 = vmatpush1.msra.mxu0 0.0
      %1980 = vmatprep.subr.mxu0 0.0
      %1981 = vmatpush1.msra.mxu0 0.0
      %1982 = vmatprep.subr.mxu0 0.0
      %1983 = vmatpush1.msra.mxu0 0.0
      %1984 = vmatprep.subr.mxu0 0.0
      %1985 = vmatpush1.msra.mxu0 0.0
      %1986 = vmatprep.subr.mxu0 0.0
      %1987 = vmatpush1.msra.mxu0 0.0
      %1988 = vmatprep.subr.mxu0 0.0
      %1989 = vmatpush1.msra.mxu0 0.0
      %1990 = vmatprep.subr.mxu0 0.0
      %1991 = vmatpush1.msra.mxu0 0.0
      %1992 = vmatprep.subr.mxu0 0.0
      %1993 = vmatpush1.msra.mxu0 0.0
      %1994 = vmatprep.subr.mxu0 0.0
      %1995 = vmatpush1.msra.mxu0 0.0
      %1996 = vmatprep.subr.mxu0 0.0
      %1997 = vmatpush1.msra.mxu0 0.0
      %1998 = vmatprep.mubr.f32.mxu0 0.0
      %1999 = vmatmul.mubr.f32.gmra.mrb[0].mxu0 %v1780
      %v2000 = vpop.f32.mrb[0].mxu0
      %v2001 = vadd.f32 0.0, %v2000
      %v2002 = vpop.f32.mrb[0].mxu0
      %2003 = vmatprep.mubr.f32.mxu0 0.0
      %2004 = vmatmul.mubr.f32.gmra.mrb[0].mxu0 %v1783
      %v2005 = vpop.f32.mrb[0].mxu0
      %v2006 = vadd.f32 0.0, %v2005
      %v2007 = vpop.f32.mrb[0].mxu0
      %2008 = vmatprep.mubr.f32.mxu0 0.0
      %2009 = vmatmul.mubr.f32.gmra.mrb[0].mxu0 %v1786
      %v2010 = vpop.f32.mrb[0].mxu0
      %v2011 = vadd.f32 0.0, %v2010
      %v2012 = vpop.f32.mrb[0].mxu0
      %2013 = vmatprep.mubr.f32.mxu0 0.0
      %2014 = vmatmul.mubr.f32.gmra.mrb[0].mxu0 %v1789
      %v2015 = vpop.f32.mrb[0].mxu0
      %v2016 = vadd.f32 0.0, %v2015
      %v2017 = vpop.f32.mrb[0].mxu0
      %2018 = vmatprep.mubr.f32.mxu0 0.0
      %2019 = vmatmul.mubr.f32.gmra.mrb[0].mxu0 %v1792
      %v2020 = vpop.f32.mrb[0].mxu0
      %v2021 = vadd.f32 0.0, %v2020
      %v2022 = vpop.f32.mrb[0].mxu0
      %2023 = vmatprep.mubr.f32.mxu0 0.0
      %2024 = vmatmul.mubr.f32.gmra.mrb[0].mxu0 %v1795
      %v2025 = vpop.f32.mrb[0].mxu0
      %v2026 = vadd.f32 0.0, %v2025
      %v2027 = vpop.f32.mrb[0].mxu0
      %2028 = vmatprep.mubr.f32.mxu0 0.0
      %2029 = vmatmul.mubr.f32.gmra.mrb[0].mxu0 %v1798
      %v2030 = vpop.f32.mrb[0].mxu0
      %v2031 = vadd.f32 0.0, %v2030
      %v2032 = vpop.f32.mrb[0].mxu0
      %2033 = vmatprep.mubr.f32.mxu0 0.0
      %2034 = vmatmul.mubr.f32.gmra.mrb[0].mxu0 %v1801
      %v2035 = vpop.f32.mrb[0].mxu0
      %v2036 = vadd.f32 0.0, %v2035
      %v2037 = vpop.f32.mrb[0].mxu0
      %2038 = vmatprep.mubr.f32.mxu0 0.0
      %2039 = vmatmul.mubr.f32.gmra.mrb[0].mxu0 %v1804
      %v2040 = vpop.f32.mrb[0].mxu0
      %v2041 = vadd.f32 0.0, %v2040
      %v2042 = vpop.f32.mrb[0].mxu0
      %2043 = vmatprep.mubr.f32.mxu0 0.0
      %2044 = vmatmul.mubr.f32.gmra.mrb[0].mxu0 %v1807
      %v2045 = vpop.f32.mrb[0].mxu0
      %v2046 = vadd.f32 0.0, %v2045
      %v2047 = vpop.f32.mrb[0].mxu0
      %2048 = vdwg.mxu0
      %v2049 = vadd.f32 %v1738, %v1876
      %v2050 = vadd.f32 %v1739, %v1878
      %v2051 = vadd.f32 %v1740, %v2001
      %v2052 = vadd.f32 %v1741, %v1882
      %v2053 = vadd.f32 %v1742, %v1884
      %v2054 = vadd.f32 %v1743, %v2006
      %v2055 = vadd.f32 %v1744, %v1888
      %v2056 = vadd.f32 %v1745, %v1890
      %v2057 = vadd.f32 %v1746, %v2011
      %v2058 = vadd.f32 %v1747, %v1894
      %v2059 = vadd.f32 %v1748, %v1896
      %v2060 = vadd.f32 %v1749, %v2016
      %v2061 = vadd.f32 %v1750, %v1900
      %v2062 = vadd.f32 %v1751, %v1902
      %v2063 = vadd.f32 %v1752, %v2021
      %v2064 = vadd.f32 %v1753, %v1906
      %v2065 = vadd.f32 %v1754, %v1908
      %v2066 = vadd.f32 %v1755, %v2026
      %v2067 = vadd.f32 %v1756, %v1912
      %v2068 = vadd.f32 %v1757, %v1914
      %v2069 = vadd.f32 %v1758, %v2031
      %v2070 = vadd.f32 %v1759, %v1918
      %v2071 = vadd.f32 %v1760, %v1920
      %v2072 = vadd.f32 %v1761, %v2036
      %v2073 = vadd.f32 %v1762, %v1924
      %v2074 = vadd.f32 %v1763, %v1926
      %v2075 = vadd.f32 %v1764, %v2041
      %v2076 = vadd.f32 %v1765, %v1930
      %v2077 = vadd.f32 %v1766, %v1932
      %v2078 = vadd.f32 %v1767, %v2046
      %v2079 = vld [vmem:[%s303 + $0x8] sm:$0xff]
      %v2080 = vld [vmem:[%s303 + $0x10] sm:$0xff]
      %v2081 = vld [vmem:[%s303 + $0x18] sm:$0xff]
      %v2082 = vld [vmem:[%s303 + $0x20] sm:$0xff]
      %v2083 = vld [vmem:[%s303 + $0x30] sm:$0xff]
      %v2084 = vld [vmem:[%s303 + $0x38] sm:$0xff]
      %v2085 = vld [vmem:[%s303 + $0x40] sm:$0xff]
      %v2086 = vld [vmem:[%s303 + $0x48] sm:$0xff]
      %v2087 = vld [vmem:[%s303 + $0x58] sm:$0xff]
      %v2088 = vld [vmem:[%s303 + $0x60] sm:$0xff]
      %v2089 = vld [vmem:[%s303 + $0x68] sm:$0xff]
      %v2090 = vld [vmem:[%s303 + $0x70] sm:$0xff]
      %v2091 = vld [vmem:[%s303 + $0x80] sm:$0xff]
      %v2092 = vld [vmem:[%s303 + $0x88] sm:$0xff]
      %v2093 = vld [vmem:[%s303 + $0x90] sm:$0xff]
      %v2094 = vld [vmem:[%s303 + $0x98] sm:$0xff]
      %s2095 = scalar_lea.vmem %s2, 400
      %v2096 = vld [vmem:[%s2095] sm:$0xff]
      %v2097 = vld [vmem:[%s2095 + $0x8] sm:$0xff]
      %v2098 = vld [vmem:[%s2095 + $0x10] sm:$0xff]
      %v2099 = vld [vmem:[%s2095 + $0x18] sm:$0xff]
      %v2100 = vld [vmem:[%s2095 + $0x20] sm:$0xff]
      %v2101 = vld [vmem:[%s2095 + $0x28] sm:$0xff]
      %v2102 = vld [vmem:[%s2095 + $0x30] sm:$0xff]
      %v2103 = vld [vmem:[%s2095 + $0x38] sm:$0xff]
      %v2104 = vld [vmem:[%s2095 + $0x40] sm:$0xff]
      %v2105 = vld [vmem:[%s2095 + $0x48] sm:$0x1]
      %2122 = vrot.lane.b32.xlu0 %v2079, 127
      %v2123 = vpop.permute.xlu0 %2122
      %2124 = vrot.lane.b32.xlu0 %v2080, 127
      %v2125 = vpop.permute.xlu0 %2124
      %2126 = vrot.lane.b32.xlu0 %v2081, 127
      %v2127 = vpop.permute.xlu0 %2126
      %2128 = vrot.lane.b32.xlu0 %v2082, 127
      %v2129 = vpop.permute.xlu0 %2128
      %2130 = vrot.lane.b32.xlu0 %v2083, 127
      %v2131 = vpop.permute.xlu0 %2130
      %2132 = vrot.lane.b32.xlu0 %v2084, 127
      %v2133 = vpop.permute.xlu0 %2132
      %2134 = vrot.lane.b32.xlu0 %v2085, 127
      %v2135 = vpop.permute.xlu0 %2134
      %2136 = vrot.lane.b32.xlu0 %v2086, 127
      %v2137 = vpop.permute.xlu0 %2136
      %2138 = vrot.lane.b32.xlu0 %v2087, 127
      %v2139 = vpop.permute.xlu0 %2138
      %2140 = vrot.lane.b32.xlu0 %v2088, 127
      %v2141 = vpop.permute.xlu0 %2140
      %2142 = vrot.lane.b32.xlu0 %v2089, 127
      %v2143 = vpop.permute.xlu0 %2142
      %2144 = vrot.lane.b32.xlu0 %v2090, 127
      %v2145 = vpop.permute.xlu0 %2144
      %2146 = vrot.lane.b32.xlu0 %v2091, 127
      %v2147 = vpop.permute.xlu0 %2146
      %2148 = vrot.lane.b32.xlu0 %v2092, 127
      %v2149 = vpop.permute.xlu0 %2148
      %2150 = vrot.lane.b32.xlu0 %v2093, 127
      %v2151 = vpop.permute.xlu0 %2150
      %2152 = vrot.lane.b32.xlu0 %v2094, 127
      %v2153 = vpop.permute.xlu0 %2152
      %vm2154 = vcmask 1039360
      %v2155 = vsel %vm2154, %v2123, %v2125
      %v2156 = vsel %vm2154, %v2125, %v2127
      %v2157 = vsel %vm2154, %v2127, %v2129
      %v2158 = vsel %vm2154, %v2131, %v2133
      %v2159 = vsel %vm2154, %v2133, %v2135
      %v2160 = vsel %vm2154, %v2135, %v2137
      %v2161 = vsel %vm2154, %v2139, %v2141
      %v2162 = vsel %vm2154, %v2141, %v2143
      %v2163 = vsel %vm2154, %v2143, %v2145
      %v2164 = vsel %vm2154, %v2147, %v2149
      %v2165 = vsel %vm2154, %v2149, %v2151
      %v2166 = vsel %vm2154, %v2151, %v2153
      %v2180 = vsel %vm434, %v2096, 0
      %v2183 = vsel %vm434, %v2097, 0
      %v2186 = vsel %vm434, %v2098, 0
      %v2189 = vsel %vm434, %v2099, 0
      %v2192 = vsel %vm434, %v2100, 0
      %v2195 = vsel %vm434, %v2101, 0
      %v2198 = vsel %vm434, %v2102, 0
      %v2201 = vsel %vm434, %v2103, 0
      %v2204 = vsel %vm434, %v2104, 0
      %v2207 = vsel %vm434, %v2105, 0
      %2209 = vmatprep.subr.mxu0 %v2156
      %2210 = vmatpush1.msra.mxu0 %v2155
      %2211 = vmatprep.subr.mxu0 %v2159
      %2212 = vmatpush1.msra.mxu0 %v2158
      %2213 = vmatprep.subr.mxu0 %v2162
      %2214 = vmatpush1.msra.mxu0 %v2161
      %2215 = vmatprep.subr.mxu0 %v2165
      %2216 = vmatpush1.msra.mxu0 %v2164
      %2217 = vmatprep.subr.mxu0 0.0
      %2218 = vmatpush1.msra.mxu0 0.0
      %2219 = vmatprep.subr.mxu0 0.0
      %2220 = vmatpush1.msra.mxu0 0.0
      %2221 = vmatprep.subr.mxu0 0.0
      %2222 = vmatpush1.msra.mxu0 0.0
      %2223 = vmatprep.subr.mxu0 0.0
      %2224 = vmatpush1.msra.mxu0 0.0
      %2225 = vmatprep.subr.mxu0 0.0
      %2226 = vmatpush1.msra.mxu0 0.0
      %2227 = vmatprep.subr.mxu0 0.0
      %2228 = vmatpush1.msra.mxu0 0.0
      %2229 = vmatprep.subr.mxu0 0.0
      %2230 = vmatpush1.msra.mxu0 0.0
      %2231 = vmatprep.subr.mxu0 0.0
      %2232 = vmatpush1.msra.mxu0 0.0
      %2233 = vmatprep.subr.mxu0 0.0
      %2234 = vmatpush1.msra.mxu0 0.0
      %2235 = vmatprep.subr.mxu0 0.0
      %2236 = vmatpush1.msra.mxu0 0.0
      %2237 = vmatprep.subr.mxu0 0.0
      %2238 = vmatpush1.msra.mxu0 0.0
      %2239 = vmatprep.subr.mxu0 0.0
      %2240 = vmatpush1.msra.mxu0 0.0
      %2241 = vmatprep.subr.mxu0 0.0
      %2242 = vmatpush1.msra.mxu0 0.0
      %2243 = vmatprep.subr.mxu0 0.0
      %2244 = vmatpush1.msra.mxu0 0.0
      %2245 = vmatprep.subr.mxu0 0.0
      %2246 = vmatpush1.msra.mxu0 0.0
      %2247 = vmatprep.subr.mxu0 0.0
      %2248 = vmatpush1.msra.mxu0 0.0
      %2249 = vmatprep.subr.mxu0 0.0
      %2250 = vmatpush1.msra.mxu0 0.0
      %2251 = vmatprep.subr.mxu0 0.0
      %2252 = vmatpush1.msra.mxu0 0.0
      %2253 = vmatprep.subr.mxu0 0.0
      %2254 = vmatpush1.msra.mxu0 0.0
      %2255 = vmatprep.subr.mxu0 0.0
      %2256 = vmatpush1.msra.mxu0 0.0
      %2257 = vmatprep.subr.mxu0 0.0
      %2258 = vmatpush1.msra.mxu0 0.0
      %2259 = vmatprep.subr.mxu0 0.0
      %2260 = vmatpush1.msra.mxu0 0.0
      %2261 = vmatprep.subr.mxu0 0.0
      %2262 = vmatpush1.msra.mxu0 0.0
      %2263 = vmatprep.subr.mxu0 0.0
      %2264 = vmatpush1.msra.mxu0 0.0
      %2265 = vmatprep.subr.mxu0 0.0
      %2266 = vmatpush1.msra.mxu0 0.0
      %2267 = vmatprep.subr.mxu0 0.0
      %2268 = vmatpush1.msra.mxu0 0.0
      %2269 = vmatprep.subr.mxu0 0.0
      %2270 = vmatpush1.msra.mxu0 0.0
      %2271 = vmatprep.subr.mxu0 0.0
      %2272 = vmatpush1.msra.mxu0 0.0
      %2273 = vmatprep.mubr.f32.mxu0 0.0
      %2274 = vmatmul.mubr.f32.gmra.mrb[0].mxu0 %v2180
      %v2275 = vpop.f32.mrb[0].mxu0
      %v2276 = vadd.f32 0.0, %v2275
      %v2277 = vpop.f32.mrb[0].mxu0
      %v2278 = vadd.f32 0.0, %v2277
      %2279 = vmatprep.mubr.f32.mxu0 0.0
      %2280 = vmatmul.mubr.f32.gmra.mrb[0].mxu0 %v2183
      %v2281 = vpop.f32.mrb[0].mxu0
      %v2282 = vadd.f32 0.0, %v2281
      %v2283 = vpop.f32.mrb[0].mxu0
      %v2284 = vadd.f32 0.0, %v2283
      %2285 = vmatprep.mubr.f32.mxu0 0.0
      %2286 = vmatmul.mubr.f32.gmra.mrb[0].mxu0 %v2186
      %v2287 = vpop.f32.mrb[0].mxu0
      %v2288 = vadd.f32 0.0, %v2287
      %v2289 = vpop.f32.mrb[0].mxu0
      %v2290 = vadd.f32 0.0, %v2289
      %2291 = vmatprep.mubr.f32.mxu0 0.0
      %2292 = vmatmul.mubr.f32.gmra.mrb[0].mxu0 %v2189
      %v2293 = vpop.f32.mrb[0].mxu0
      %v2294 = vadd.f32 0.0, %v2293
      %v2295 = vpop.f32.mrb[0].mxu0
      %v2296 = vadd.f32 0.0, %v2295
      %2297 = vmatprep.mubr.f32.mxu0 0.0
      %2298 = vmatmul.mubr.f32.gmra.mrb[0].mxu0 %v2192
      %v2299 = vpop.f32.mrb[0].mxu0
      %v2300 = vadd.f32 0.0, %v2299
      %v2301 = vpop.f32.mrb[0].mxu0
      %v2302 = vadd.f32 0.0, %v2301
      %2303 = vmatprep.mubr.f32.mxu0 0.0
      %2304 = vmatmul.mubr.f32.gmra.mrb[0].mxu0 %v2195
      %v2305 = vpop.f32.mrb[0].mxu0
      %v2306 = vadd.f32 0.0, %v2305
      %v2307 = vpop.f32.mrb[0].mxu0
      %v2308 = vadd.f32 0.0, %v2307
      %2309 = vmatprep.mubr.f32.mxu0 0.0
      %2310 = vmatmul.mubr.f32.gmra.mrb[0].mxu0 %v2198
      %v2311 = vpop.f32.mrb[0].mxu0
      %v2312 = vadd.f32 0.0, %v2311
      %v2313 = vpop.f32.mrb[0].mxu0
      %v2314 = vadd.f32 0.0, %v2313
      %2315 = vmatprep.mubr.f32.mxu0 0.0
      %2316 = vmatmul.mubr.f32.gmra.mrb[0].mxu0 %v2201
      %v2317 = vpop.f32.mrb[0].mxu0
      %v2318 = vadd.f32 0.0, %v2317
      %v2319 = vpop.f32.mrb[0].mxu0
      %v2320 = vadd.f32 0.0, %v2319
      %2321 = vmatprep.mubr.f32.mxu0 0.0
      %2322 = vmatmul.mubr.f32.gmra.mrb[0].mxu0 %v2204
      %v2323 = vpop.f32.mrb[0].mxu0
      %v2324 = vadd.f32 0.0, %v2323
      %v2325 = vpop.f32.mrb[0].mxu0
      %v2326 = vadd.f32 0.0, %v2325
      %2327 = vmatprep.mubr.f32.mxu0 0.0
      %2328 = vmatmul.mubr.f32.gmra.mrb[0].mxu0 %v2207
      %v2329 = vpop.f32.mrb[0].mxu0
      %v2330 = vadd.f32 0.0, %v2329
      %v2331 = vpop.f32.mrb[0].mxu0
      %v2332 = vadd.f32 0.0, %v2331
      %2333 = vdwg.mxu0
      %2334 = vmatprep.subr.mxu0 0.0
      %2335 = vmatpush1.msra.mxu0 %v2157
      %2336 = vmatprep.subr.mxu0 0.0
      %2337 = vmatpush1.msra.mxu0 %v2160
      %2338 = vmatprep.subr.mxu0 0.0
      %2339 = vmatpush1.msra.mxu0 %v2163
      %2340 = vmatprep.subr.mxu0 0.0
      %2341 = vmatpush1.msra.mxu0 %v2166
      %2342 = vmatprep.subr.mxu0 0.0
      %2343 = vmatpush1.msra.mxu0 0.0
      %2344 = vmatprep.subr.mxu0 0.0
      %2345 = vmatpush1.msra.mxu0 0.0
      %2346 = vmatprep.subr.mxu0 0.0
      %2347 = vmatpush1.msra.mxu0 0.0
      %2348 = vmatprep.subr.mxu0 0.0
      %2349 = vmatpush1.msra.mxu0 0.0
      %2350 = vmatprep.subr.mxu0 0.0
      %2351 = vmatpush1.msra.mxu0 0.0
      %2352 = vmatprep.subr.mxu0 0.0
      %2353 = vmatpush1.msra.mxu0 0.0
      %2354 = vmatprep.subr.mxu0 0.0
      %2355 = vmatpush1.msra.mxu0 0.0
      %2356 = vmatprep.subr.mxu0 0.0
      %2357 = vmatpush1.msra.mxu0 0.0
      %2358 = vmatprep.subr.mxu0 0.0
      %2359 = vmatpush1.msra.mxu0 0.0
      %2360 = vmatprep.subr.mxu0 0.0
      %2361 = vmatpush1.msra.mxu0 0.0
      %2362 = vmatprep.subr.mxu0 0.0
      %2363 = vmatpush1.msra.mxu0 0.0
      %2364 = vmatprep.subr.mxu0 0.0
      %2365 = vmatpush1.msra.mxu0 0.0
      %2366 = vmatprep.subr.mxu0 0.0
      %2367 = vmatpush1.msra.mxu0 0.0
      %2368 = vmatprep.subr.mxu0 0.0
      %2369 = vmatpush1.msra.mxu0 0.0
      %2370 = vmatprep.subr.mxu0 0.0
      %2371 = vmatpush1.msra.mxu0 0.0
      %2372 = vmatprep.subr.mxu0 0.0
      %2373 = vmatpush1.msra.mxu0 0.0
      %2374 = vmatprep.subr.mxu0 0.0
      %2375 = vmatpush1.msra.mxu0 0.0
      %2376 = vmatprep.subr.mxu0 0.0
      %2377 = vmatpush1.msra.mxu0 0.0
      %2378 = vmatprep.subr.mxu0 0.0
      %2379 = vmatpush1.msra.mxu0 0.0
      %2380 = vmatprep.subr.mxu0 0.0
      %2381 = vmatpush1.msra.mxu0 0.0
      %2382 = vmatprep.subr.mxu0 0.0
      %2383 = vmatpush1.msra.mxu0 0.0
      %2384 = vmatprep.subr.mxu0 0.0
      %2385 = vmatpush1.msra.mxu0 0.0
      %2386 = vmatprep.subr.mxu0 0.0
      %2387 = vmatpush1.msra.mxu0 0.0
      %2388 = vmatprep.subr.mxu0 0.0
      %2389 = vmatpush1.msra.mxu0 0.0
      %2390 = vmatprep.subr.mxu0 0.0
      %2391 = vmatpush1.msra.mxu0 0.0
      %2392 = vmatprep.subr.mxu0 0.0
      %2393 = vmatpush1.msra.mxu0 0.0
      %2394 = vmatprep.subr.mxu0 0.0
      %2395 = vmatpush1.msra.mxu0 0.0
      %2396 = vmatprep.subr.mxu0 0.0
      %2397 = vmatpush1.msra.mxu0 0.0
      %2398 = vmatprep.mubr.f32.mxu0 0.0
      %2399 = vmatmul.mubr.f32.gmra.mrb[0].mxu0 %v2180
      %v2400 = vpop.f32.mrb[0].mxu0
      %v2401 = vadd.f32 0.0, %v2400
      %v2402 = vpop.f32.mrb[0].mxu0
      %2403 = vmatprep.mubr.f32.mxu0 0.0
      %2404 = vmatmul.mubr.f32.gmra.mrb[0].mxu0 %v2183
      %v2405 = vpop.f32.mrb[0].mxu0
      %v2406 = vadd.f32 0.0, %v2405
      %v2407 = vpop.f32.mrb[0].mxu0
      %2408 = vmatprep.mubr.f32.mxu0 0.0
      %2409 = vmatmul.mubr.f32.gmra.mrb[0].mxu0 %v2186
      %v2410 = vpop.f32.mrb[0].mxu0
      %v2411 = vadd.f32 0.0, %v2410
      %v2412 = vpop.f32.mrb[0].mxu0
      %2413 = vmatprep.mubr.f32.mxu0 0.0
      %2414 = vmatmul.mubr.f32.gmra.mrb[0].mxu0 %v2189
      %v2415 = vpop.f32.mrb[0].mxu0
      %v2416 = vadd.f32 0.0, %v2415
      %v2417 = vpop.f32.mrb[0].mxu0
      %2418 = vmatprep.mubr.f32.mxu0 0.0
      %2419 = vmatmul.mubr.f32.gmra.mrb[0].mxu0 %v2192
      %v2420 = vpop.f32.mrb[0].mxu0
      %v2421 = vadd.f32 0.0, %v2420
      %v2422 = vpop.f32.mrb[0].mxu0
      %2423 = vmatprep.mubr.f32.mxu0 0.0
      %2424 = vmatmul.mubr.f32.gmra.mrb[0].mxu0 %v2195
      %v2425 = vpop.f32.mrb[0].mxu0
      %v2426 = vadd.f32 0.0, %v2425
      %v2427 = vpop.f32.mrb[0].mxu0
      %2428 = vmatprep.mubr.f32.mxu0 0.0
      %2429 = vmatmul.mubr.f32.gmra.mrb[0].mxu0 %v2198
      %v2430 = vpop.f32.mrb[0].mxu0
      %v2431 = vadd.f32 0.0, %v2430
      %v2432 = vpop.f32.mrb[0].mxu0
      %2433 = vmatprep.mubr.f32.mxu0 0.0
      %2434 = vmatmul.mubr.f32.gmra.mrb[0].mxu0 %v2201
      %v2435 = vpop.f32.mrb[0].mxu0
      %v2436 = vadd.f32 0.0, %v2435
      %v2437 = vpop.f32.mrb[0].mxu0
      %2438 = vmatprep.mubr.f32.mxu0 0.0
      %2439 = vmatmul.mubr.f32.gmra.mrb[0].mxu0 %v2204
      %v2440 = vpop.f32.mrb[0].mxu0
      %v2441 = vadd.f32 0.0, %v2440
      %v2442 = vpop.f32.mrb[0].mxu0
      %2443 = vmatprep.mubr.f32.mxu0 0.0
      %2444 = vmatmul.mubr.f32.gmra.mrb[0].mxu0 %v2207
      %v2445 = vpop.f32.mrb[0].mxu0
      %v2446 = vadd.f32 0.0, %v2445
      %v2447 = vpop.f32.mrb[0].mxu0
      %2448 = vdwg.mxu0
      %v2449 = vadd.f32 %v2049, %v2276
      %v2450 = vadd.f32 %v2050, %v2278
      %v2451 = vadd.f32 %v2051, %v2401
      %v2452 = vadd.f32 %v2052, %v2282
      %v2453 = vadd.f32 %v2053, %v2284
      %v2454 = vadd.f32 %v2054, %v2406
      %v2455 = vadd.f32 %v2055, %v2288
      %v2456 = vadd.f32 %v2056, %v2290
      %v2457 = vadd.f32 %v2057, %v2411
      %v2458 = vadd.f32 %v2058, %v2294
      %v2459 = vadd.f32 %v2059, %v2296
      %v2460 = vadd.f32 %v2060, %v2416
      %v2461 = vadd.f32 %v2061, %v2300
      %v2462 = vadd.f32 %v2062, %v2302
      %v2463 = vadd.f32 %v2063, %v2421
      %v2464 = vadd.f32 %v2064, %v2306
      %v2465 = vadd.f32 %v2065, %v2308
      %v2466 = vadd.f32 %v2066, %v2426
      %v2467 = vadd.f32 %v2067, %v2312
      %v2468 = vadd.f32 %v2068, %v2314
      %v2469 = vadd.f32 %v2069, %v2431
      %v2470 = vadd.f32 %v2070, %v2318
      %v2471 = vadd.f32 %v2071, %v2320
      %v2472 = vadd.f32 %v2072, %v2436
      %v2473 = vadd.f32 %v2073, %v2324
      %v2474 = vadd.f32 %v2074, %v2326
      %v2475 = vadd.f32 %v2075, %v2441
      %v2476 = vadd.f32 %v2076, %v2330
      %v2477 = vadd.f32 %v2077, %v2332
      %v2478 = vadd.f32 %v2078, %v2446
      %s2479 = scalar_lea.vmem %s2, 480
      %v2480 = vld [vmem:[%s2479] sm:$0xff]
      %v2481 = vld [vmem:[%s2479 + $0x8] sm:$0xff]
      %v2482 = vld [vmem:[%s2479 + $0x10] sm:$0xff]
      %v2483 = vld [vmem:[%s2479 + $0x18] sm:$0xff]
      %v2484 = vld [vmem:[%s2479 + $0x20] sm:$0xff]
      %v2485 = vld [vmem:[%s2479 + $0x28] sm:$0xff]
      %v2486 = vld [vmem:[%s2479 + $0x30] sm:$0xff]
      %v2487 = vld [vmem:[%s2479 + $0x38] sm:$0xff]
      %v2488 = vld [vmem:[%s2479 + $0x40] sm:$0xff]
      %v2489 = vld [vmem:[%s2479 + $0x48] sm:$0x1]
      %2490 = vrot.lane.b32.xlu0 %v2079, 111
      %v2491 = vpop.permute.xlu0 %2490
      %2492 = vrot.lane.b32.xlu0 %v2080, 111
      %v2493 = vpop.permute.xlu0 %2492
      %2494 = vrot.lane.b32.xlu0 %v2081, 111
      %v2495 = vpop.permute.xlu0 %2494
      %2496 = vrot.lane.b32.xlu0 %v2082, 111
      %v2497 = vpop.permute.xlu0 %2496
      %2498 = vrot.lane.b32.xlu0 %v2083, 111
      %v2499 = vpop.permute.xlu0 %2498
      %2500 = vrot.lane.b32.xlu0 %v2084, 111
      %v2501 = vpop.permute.xlu0 %2500
      %2502 = vrot.lane.b32.xlu0 %v2085, 111
      %v2503 = vpop.permute.xlu0 %2502
      %2504 = vrot.lane.b32.xlu0 %v2086, 111
      %v2505 = vpop.permute.xlu0 %2504
      %2506 = vrot.lane.b32.xlu0 %v2087, 111
      %v2507 = vpop.permute.xlu0 %2506
      %2508 = vrot.lane.b32.xlu0 %v2088, 111
      %v2509 = vpop.permute.xlu0 %2508
      %2510 = vrot.lane.b32.xlu0 %v2089, 111
      %v2511 = vpop.permute.xlu0 %2510
      %2512 = vrot.lane.b32.xlu0 %v2090, 111
      %v2513 = vpop.permute.xlu0 %2512
      %2514 = vrot.lane.b32.xlu0 %v2091, 111
      %v2515 = vpop.permute.xlu0 %2514
      %2516 = vrot.lane.b32.xlu0 %v2092, 111
      %v2517 = vpop.permute.xlu0 %2516
      %2518 = vrot.lane.b32.xlu0 %v2093, 111
      %v2519 = vpop.permute.xlu0 %2518
      %2520 = vrot.lane.b32.xlu0 %v2094, 111
      %v2521 = vpop.permute.xlu0 %2520
      %vm2522 = vcmask 908288
      %v2523 = vsel %vm2522, %v2491, %v2493
      %v2524 = vsel %vm2522, %v2493, %v2495
      %v2525 = vsel %vm2522, %v2495, %v2497
      %v2526 = vsel %vm2522, %v2499, %v2501
      %v2527 = vsel %vm2522, %v2501, %v2503
      %v2528 = vsel %vm2522, %v2503, %v2505
      %v2529 = vsel %vm2522, %v2507, %v2509
      %v2530 = vsel %vm2522, %v2509, %v2511
      %v2531 = vsel %vm2522, %v2511, %v2513
      %v2532 = vsel %vm2522, %v2515, %v2517
      %v2533 = vsel %vm2522, %v2517, %v2519
      %v2534 = vsel %vm2522, %v2519, %v2521
      %v2548 = vsel %vm434, %v2480, 0
      %v2551 = vsel %vm434, %v2481, 0
      %v2554 = vsel %vm434, %v2482, 0
      %v2557 = vsel %vm434, %v2483, 0
      %v2560 = vsel %vm434, %v2484, 0
      %v2563 = vsel %vm434, %v2485, 0
      %v2566 = vsel %vm434, %v2486, 0
      %v2569 = vsel %vm434, %v2487, 0
      %v2572 = vsel %vm434, %v2488, 0
      %v2575 = vsel %vm434, %v2489, 0
      %2577 = vmatprep.subr.mxu0 %v2524
      %2578 = vmatpush1.msra.mxu0 %v2523
      %2579 = vmatprep.subr.mxu0 %v2527
      %2580 = vmatpush1.msra.mxu0 %v2526
      %2581 = vmatprep.subr.mxu0 %v2530
      %2582 = vmatpush1.msra.mxu0 %v2529
      %2583 = vmatprep.subr.mxu0 %v2533
      %2584 = vmatpush1.msra.mxu0 %v2532
      %2585 = vmatprep.subr.mxu0 0.0
      %2586 = vmatpush1.msra.mxu0 0.0
      %2587 = vmatprep.subr.mxu0 0.0
      %2588 = vmatpush1.msra.mxu0 0.0
      %2589 = vmatprep.subr.mxu0 0.0
      %2590 = vmatpush1.msra.mxu0 0.0
      %2591 = vmatprep.subr.mxu0 0.0
      %2592 = vmatpush1.msra.mxu0 0.0
      %2593 = vmatprep.subr.mxu0 0.0
      %2594 = vmatpush1.msra.mxu0 0.0
      %2595 = vmatprep.subr.mxu0 0.0
      %2596 = vmatpush1.msra.mxu0 0.0
      %2597 = vmatprep.subr.mxu0 0.0
      %2598 = vmatpush1.msra.mxu0 0.0
      %2599 = vmatprep.subr.mxu0 0.0
      %2600 = vmatpush1.msra.mxu0 0.0
      %2601 = vmatprep.subr.mxu0 0.0
      %2602 = vmatpush1.msra.mxu0 0.0
      %2603 = vmatprep.subr.mxu0 0.0
      %2604 = vmatpush1.msra.mxu0 0.0
      %2605 = vmatprep.subr.mxu0 0.0
      %2606 = vmatpush1.msra.mxu0 0.0
      %2607 = vmatprep.subr.mxu0 0.0
      %2608 = vmatpush1.msra.mxu0 0.0
      %2609 = vmatprep.subr.mxu0 0.0
      %2610 = vmatpush1.msra.mxu0 0.0
      %2611 = vmatprep.subr.mxu0 0.0
      %2612 = vmatpush1.msra.mxu0 0.0
      %2613 = vmatprep.subr.mxu0 0.0
      %2614 = vmatpush1.msra.mxu0 0.0
      %2615 = vmatprep.subr.mxu0 0.0
      %2616 = vmatpush1.msra.mxu0 0.0
      %2617 = vmatprep.subr.mxu0 0.0
      %2618 = vmatpush1.msra.mxu0 0.0
      %2619 = vmatprep.subr.mxu0 0.0
      %2620 = vmatpush1.msra.mxu0 0.0
      %2621 = vmatprep.subr.mxu0 0.0
      %2622 = vmatpush1.msra.mxu0 0.0
      %2623 = vmatprep.subr.mxu0 0.0
      %2624 = vmatpush1.msra.mxu0 0.0
      %2625 = vmatprep.subr.mxu0 0.0
      %2626 = vmatpush1.msra.mxu0 0.0
      %2627 = vmatprep.subr.mxu0 0.0
      %2628 = vmatpush1.msra.mxu0 0.0
      %2629 = vmatprep.subr.mxu0 0.0
      %2630 = vmatpush1.msra.mxu0 0.0
      %2631 = vmatprep.subr.mxu0 0.0
      %2632 = vmatpush1.msra.mxu0 0.0
      %2633 = vmatprep.subr.mxu0 0.0
      %2634 = vmatpush1.msra.mxu0 0.0
      %2635 = vmatprep.subr.mxu0 0.0
      %2636 = vmatpush1.msra.mxu0 0.0
      %2637 = vmatprep.subr.mxu0 0.0
      %2638 = vmatpush1.msra.mxu0 0.0
      %2639 = vmatprep.subr.mxu0 0.0
      %2640 = vmatpush1.msra.mxu0 0.0
      %2641 = vmatprep.mubr.f32.mxu0 0.0
      %2642 = vmatmul.mubr.f32.gmra.mrb[0].mxu0 %v2548
      %v2643 = vpop.f32.mrb[0].mxu0
      %v2644 = vadd.f32 0.0, %v2643
      %v2645 = vpop.f32.mrb[0].mxu0
      %v2646 = vadd.f32 0.0, %v2645
      %2647 = vmatprep.mubr.f32.mxu0 0.0
      %2648 = vmatmul.mubr.f32.gmra.mrb[0].mxu0 %v2551
      %v2649 = vpop.f32.mrb[0].mxu0
      %v2650 = vadd.f32 0.0, %v2649
      %v2651 = vpop.f32.mrb[0].mxu0
      %v2652 = vadd.f32 0.0, %v2651
      %2653 = vmatprep.mubr.f32.mxu0 0.0
      %2654 = vmatmul.mubr.f32.gmra.mrb[0].mxu0 %v2554
      %v2655 = vpop.f32.mrb[0].mxu0
      %v2656 = vadd.f32 0.0, %v2655
      %v2657 = vpop.f32.mrb[0].mxu0
      %v2658 = vadd.f32 0.0, %v2657
      %2659 = vmatprep.mubr.f32.mxu0 0.0
      %2660 = vmatmul.mubr.f32.gmra.mrb[0].mxu0 %v2557
      %v2661 = vpop.f32.mrb[0].mxu0
      %v2662 = vadd.f32 0.0, %v2661
      %v2663 = vpop.f32.mrb[0].mxu0
      %v2664 = vadd.f32 0.0, %v2663
      %2665 = vmatprep.mubr.f32.mxu0 0.0
      %2666 = vmatmul.mubr.f32.gmra.mrb[0].mxu0 %v2560
      %v2667 = vpop.f32.mrb[0].mxu0
      %v2668 = vadd.f32 0.0, %v2667
      %v2669 = vpop.f32.mrb[0].mxu0
      %v2670 = vadd.f32 0.0, %v2669
      %2671 = vmatprep.mubr.f32.mxu0 0.0
      %2672 = vmatmul.mubr.f32.gmra.mrb[0].mxu0 %v2563
      %v2673 = vpop.f32.mrb[0].mxu0
      %v2674 = vadd.f32 0.0, %v2673
      %v2675 = vpop.f32.mrb[0].mxu0
      %v2676 = vadd.f32 0.0, %v2675
      %2677 = vmatprep.mubr.f32.mxu0 0.0
      %2678 = vmatmul.mubr.f32.gmra.mrb[0].mxu0 %v2566
      %v2679 = vpop.f32.mrb[0].mxu0
      %v2680 = vadd.f32 0.0, %v2679
      %v2681 = vpop.f32.mrb[0].mxu0
      %v2682 = vadd.f32 0.0, %v2681
      %2683 = vmatprep.mubr.f32.mxu0 0.0
      %2684 = vmatmul.mubr.f32.gmra.mrb[0].mxu0 %v2569
      %v2685 = vpop.f32.mrb[0].mxu0
      %v2686 = vadd.f32 0.0, %v2685
      %v2687 = vpop.f32.mrb[0].mxu0
      %v2688 = vadd.f32 0.0, %v2687
      %2689 = vmatprep.mubr.f32.mxu0 0.0
      %2690 = vmatmul.mubr.f32.gmra.mrb[0].mxu0 %v2572
      %v2691 = vpop.f32.mrb[0].mxu0
      %v2692 = vadd.f32 0.0, %v2691
      %v2693 = vpop.f32.mrb[0].mxu0
      %v2694 = vadd.f32 0.0, %v2693
      %2695 = vmatprep.mubr.f32.mxu0 0.0
      %2696 = vmatmul.mubr.f32.gmra.mrb[0].mxu0 %v2575
      %v2697 = vpop.f32.mrb[0].mxu0
      %v2698 = vadd.f32 0.0, %v2697
      %v2699 = vpop.f32.mrb[0].mxu0
      %v2700 = vadd.f32 0.0, %v2699
      %2701 = vdwg.mxu0
      %2702 = vmatprep.subr.mxu0 0.0
      %2703 = vmatpush1.msra.mxu0 %v2525
      %2704 = vmatprep.subr.mxu0 0.0
      %2705 = vmatpush1.msra.mxu0 %v2528
      %2706 = vmatprep.subr.mxu0 0.0
      %2707 = vmatpush1.msra.mxu0 %v2531
      %2708 = vmatprep.subr.mxu0 0.0
      %2709 = vmatpush1.msra.mxu0 %v2534
      %2710 = vmatprep.subr.mxu0 0.0
      %2711 = vmatpush1.msra.mxu0 0.0
      %2712 = vmatprep.subr.mxu0 0.0
      %2713 = vmatpush1.msra.mxu0 0.0
      %2714 = vmatprep.subr.mxu0 0.0
      %2715 = vmatpush1.msra.mxu0 0.0
      %2716 = vmatprep.subr.mxu0 0.0
      %2717 = vmatpush1.msra.mxu0 0.0
      %2718 = vmatprep.subr.mxu0 0.0
      %2719 = vmatpush1.msra.mxu0 0.0
      %2720 = vmatprep.subr.mxu0 0.0
      %2721 = vmatpush1.msra.mxu0 0.0
      %2722 = vmatprep.subr.mxu0 0.0
      %2723 = vmatpush1.msra.mxu0 0.0
      %2724 = vmatprep.subr.mxu0 0.0
      %2725 = vmatpush1.msra.mxu0 0.0
      %2726 = vmatprep.subr.mxu0 0.0
      %2727 = vmatpush1.msra.mxu0 0.0
      %2728 = vmatprep.subr.mxu0 0.0
      %2729 = vmatpush1.msra.mxu0 0.0
      %2730 = vmatprep.subr.mxu0 0.0
      %2731 = vmatpush1.msra.mxu0 0.0
      %2732 = vmatprep.subr.mxu0 0.0
      %2733 = vmatpush1.msra.mxu0 0.0
      %2734 = vmatprep.subr.mxu0 0.0
      %2735 = vmatpush1.msra.mxu0 0.0
      %2736 = vmatprep.subr.mxu0 0.0
      %2737 = vmatpush1.msra.mxu0 0.0
      %2738 = vmatprep.subr.mxu0 0.0
      %2739 = vmatpush1.msra.mxu0 0.0
      %2740 = vmatprep.subr.mxu0 0.0
      %2741 = vmatpush1.msra.mxu0 0.0
      %2742 = vmatprep.subr.mxu0 0.0
      %2743 = vmatpush1.msra.mxu0 0.0
      %2744 = vmatprep.subr.mxu0 0.0
      %2745 = vmatpush1.msra.mxu0 0.0
      %2746 = vmatprep.subr.mxu0 0.0
      %2747 = vmatpush1.msra.mxu0 0.0
      %2748 = vmatprep.subr.mxu0 0.0
      %2749 = vmatpush1.msra.mxu0 0.0
      %2750 = vmatprep.subr.mxu0 0.0
      %2751 = vmatpush1.msra.mxu0 0.0
      %2752 = vmatprep.subr.mxu0 0.0
      %2753 = vmatpush1.msra.mxu0 0.0
      %2754 = vmatprep.subr.mxu0 0.0
      %2755 = vmatpush1.msra.mxu0 0.0
      %2756 = vmatprep.subr.mxu0 0.0
      %2757 = vmatpush1.msra.mxu0 0.0
      %2758 = vmatprep.subr.mxu0 0.0
      %2759 = vmatpush1.msra.mxu0 0.0
      %2760 = vmatprep.subr.mxu0 0.0
      %2761 = vmatpush1.msra.mxu0 0.0
      %2762 = vmatprep.subr.mxu0 0.0
      %2763 = vmatpush1.msra.mxu0 0.0
      %2764 = vmatprep.subr.mxu0 0.0
      %2765 = vmatpush1.msra.mxu0 0.0
      %2766 = vmatprep.mubr.f32.mxu0 0.0
      %2767 = vmatmul.mubr.f32.gmra.mrb[0].mxu0 %v2548
      %v2768 = vpop.f32.mrb[0].mxu0
      %v2769 = vadd.f32 0.0, %v2768
      %v2770 = vpop.f32.mrb[0].mxu0
      %2771 = vmatprep.mubr.f32.mxu0 0.0
      %2772 = vmatmul.mubr.f32.gmra.mrb[0].mxu0 %v2551
      %v2773 = vpop.f32.mrb[0].mxu0
      %v2774 = vadd.f32 0.0, %v2773
      %v2775 = vpop.f32.mrb[0].mxu0
      %2776 = vmatprep.mubr.f32.mxu0 0.0
      %2777 = vmatmul.mubr.f32.gmra.mrb[0].mxu0 %v2554
      %v2778 = vpop.f32.mrb[0].mxu0
      %v2779 = vadd.f32 0.0, %v2778
      %v2780 = vpop.f32.mrb[0].mxu0
      %2781 = vmatprep.mubr.f32.mxu0 0.0
      %2782 = vmatmul.mubr.f32.gmra.mrb[0].mxu0 %v2557
      %v2783 = vpop.f32.mrb[0].mxu0
      %v2784 = vadd.f32 0.0, %v2783
      %v2785 = vpop.f32.mrb[0].mxu0
      %2786 = vmatprep.mubr.f32.mxu0 0.0
      %2787 = vmatmul.mubr.f32.gmra.mrb[0].mxu0 %v2560
      %v2788 = vpop.f32.mrb[0].mxu0
      %v2789 = vadd.f32 0.0, %v2788
      %v2790 = vpop.f32.mrb[0].mxu0
      %2791 = vmatprep.mubr.f32.mxu0 0.0
      %2792 = vmatmul.mubr.f32.gmra.mrb[0].mxu0 %v2563
      %v2793 = vpop.f32.mrb[0].mxu0
      %v2794 = vadd.f32 0.0, %v2793
      %v2795 = vpop.f32.mrb[0].mxu0
      %2796 = vmatprep.mubr.f32.mxu0 0.0
      %2797 = vmatmul.mubr.f32.gmra.mrb[0].mxu0 %v2566
      %v2798 = vpop.f32.mrb[0].mxu0
      %v2799 = vadd.f32 0.0, %v2798
      %v2800 = vpop.f32.mrb[0].mxu0
      %2801 = vmatprep.mubr.f32.mxu0 0.0
      %2802 = vmatmul.mubr.f32.gmra.mrb[0].mxu0 %v2569
      %v2803 = vpop.f32.mrb[0].mxu0
      %v2804 = vadd.f32 0.0, %v2803
      %v2805 = vpop.f32.mrb[0].mxu0
      %2806 = vmatprep.mubr.f32.mxu0 0.0
      %2807 = vmatmul.mubr.f32.gmra.mrb[0].mxu0 %v2572
      %v2808 = vpop.f32.mrb[0].mxu0
      %v2809 = vadd.f32 0.0, %v2808
      %v2810 = vpop.f32.mrb[0].mxu0
      %2811 = vmatprep.mubr.f32.mxu0 0.0
      %2812 = vmatmul.mubr.f32.gmra.mrb[0].mxu0 %v2575
      %v2813 = vpop.f32.mrb[0].mxu0
      %v2814 = vadd.f32 0.0, %v2813
      %v2815 = vpop.f32.mrb[0].mxu0
      %2816 = vdwg.mxu0
      %v2817 = vadd.f32 %v2449, %v2644
      %v2818 = vadd.f32 %v2450, %v2646
      %v2819 = vadd.f32 %v2451, %v2769
      %v2820 = vadd.f32 %v2452, %v2650
      %v2821 = vadd.f32 %v2453, %v2652
      %v2822 = vadd.f32 %v2454, %v2774
      %v2823 = vadd.f32 %v2455, %v2656
      %v2824 = vadd.f32 %v2456, %v2658
      %v2825 = vadd.f32 %v2457, %v2779
      %v2826 = vadd.f32 %v2458, %v2662
      %v2827 = vadd.f32 %v2459, %v2664
      %v2828 = vadd.f32 %v2460, %v2784
      %v2829 = vadd.f32 %v2461, %v2668
      %v2830 = vadd.f32 %v2462, %v2670
      %v2831 = vadd.f32 %v2463, %v2789
      %v2832 = vadd.f32 %v2464, %v2674
      %v2833 = vadd.f32 %v2465, %v2676
      %v2834 = vadd.f32 %v2466, %v2794
      %v2835 = vadd.f32 %v2467, %v2680
      %v2836 = vadd.f32 %v2468, %v2682
      %v2837 = vadd.f32 %v2469, %v2799
      %v2838 = vadd.f32 %v2470, %v2686
      %v2839 = vadd.f32 %v2471, %v2688
      %v2840 = vadd.f32 %v2472, %v2804
      %v2841 = vadd.f32 %v2473, %v2692
      %v2842 = vadd.f32 %v2474, %v2694
      %v2843 = vadd.f32 %v2475, %v2809
      %v2844 = vadd.f32 %v2476, %v2698
      %v2845 = vadd.f32 %v2477, %v2700
      %v2846 = vadd.f32 %v2478, %v2814
      %s2847 = scalar_lea.vmem %s2, 560
      %v2848 = vld [vmem:[%s2847] sm:$0xff]
      %v2849 = vld [vmem:[%s2847 + $0x8] sm:$0xff]
      %v2850 = vld [vmem:[%s2847 + $0x10] sm:$0xff]
      %v2851 = vld [vmem:[%s2847 + $0x18] sm:$0xff]
      %v2852 = vld [vmem:[%s2847 + $0x20] sm:$0xff]
      %v2853 = vld [vmem:[%s2847 + $0x28] sm:$0xff]
      %v2854 = vld [vmem:[%s2847 + $0x30] sm:$0xff]
      %v2855 = vld [vmem:[%s2847 + $0x38] sm:$0xff]
      %v2856 = vld [vmem:[%s2847 + $0x40] sm:$0xff]
      %v2857 = vld [vmem:[%s2847 + $0x48] sm:$0x1]
      %2858 = vrot.lane.b32.xlu0 %v2079, 110
      %v2859 = vpop.permute.xlu0 %2858
      %2860 = vrot.lane.b32.xlu0 %v2080, 110
      %v2861 = vpop.permute.xlu0 %2860
      %2862 = vrot.lane.b32.xlu0 %v2081, 110
      %v2863 = vpop.permute.xlu0 %2862
      %2864 = vrot.lane.b32.xlu0 %v2082, 110
      %v2865 = vpop.permute.xlu0 %2864
      %2866 = vrot.lane.b32.xlu0 %v2083, 110
      %v2867 = vpop.permute.xlu0 %2866
      %2868 = vrot.lane.b32.xlu0 %v2084, 110
      %v2869 = vpop.permute.xlu0 %2868
      %2870 = vrot.lane.b32.xlu0 %v2085, 110
      %v2871 = vpop.permute.xlu0 %2870
      %2872 = vrot.lane.b32.xlu0 %v2086, 110
      %v2873 = vpop.permute.xlu0 %2872
      %2874 = vrot.lane.b32.xlu0 %v2087, 110
      %v2875 = vpop.permute.xlu0 %2874
      %2876 = vrot.lane.b32.xlu0 %v2088, 110
      %v2877 = vpop.permute.xlu0 %2876
      %2878 = vrot.lane.b32.xlu0 %v2089, 110
      %v2879 = vpop.permute.xlu0 %2878
      %2880 = vrot.lane.b32.xlu0 %v2090, 110
      %v2881 = vpop.permute.xlu0 %2880
      %2882 = vrot.lane.b32.xlu0 %v2091, 110
      %v2883 = vpop.permute.xlu0 %2882
      %2884 = vrot.lane.b32.xlu0 %v2092, 110
      %v2885 = vpop.permute.xlu0 %2884
      %2886 = vrot.lane.b32.xlu0 %v2093, 110
      %v2887 = vpop.permute.xlu0 %2886
      %2888 = vrot.lane.b32.xlu0 %v2094, 110
      %v2889 = vpop.permute.xlu0 %2888
      %vm2890 = vcmask 900096
      %v2891 = vsel %vm2890, %v2859, %v2861
      %v2892 = vsel %vm2890, %v2861, %v2863
      %v2893 = vsel %vm2890, %v2863, %v2865
      %v2894 = vsel %vm2890, %v2867, %v2869
      %v2895 = vsel %vm2890, %v2869, %v2871
      %v2896 = vsel %vm2890, %v2871, %v2873
      %v2897 = vsel %vm2890, %v2875, %v2877
      %v2898 = vsel %vm2890, %v2877, %v2879
      %v2899 = vsel %vm2890, %v2879, %v2881
      %v2900 = vsel %vm2890, %v2883, %v2885
      %v2901 = vsel %vm2890, %v2885, %v2887
      %v2902 = vsel %vm2890, %v2887, %v2889
      %v2916 = vsel %vm434, %v2848, 0
      %v2919 = vsel %vm434, %v2849, 0
      %v2922 = vsel %vm434, %v2850, 0
      %v2925 = vsel %vm434, %v2851, 0
      %v2928 = vsel %vm434, %v2852, 0
      %v2931 = vsel %vm434, %v2853, 0
      %v2934 = vsel %vm434, %v2854, 0
      %v2937 = vsel %vm434, %v2855, 0
      %v2940 = vsel %vm434, %v2856, 0
      %v2943 = vsel %vm434, %v2857, 0
      %2945 = vmatprep.subr.mxu0 %v2892
      %2946 = vmatpush1.msra.mxu0 %v2891
      %2947 = vmatprep.subr.mxu0 %v2895
      %2948 = vmatpush1.msra.mxu0 %v2894
      %2949 = vmatprep.subr.mxu0 %v2898
      %2950 = vmatpush1.msra.mxu0 %v2897
      %2951 = vmatprep.subr.mxu0 %v2901
      %2952 = vmatpush1.msra.mxu0 %v2900
      %2953 = vmatprep.subr.mxu0 0.0
      %2954 = vmatpush1.msra.mxu0 0.0
      %2955 = vmatprep.subr.mxu0 0.0
      %2956 = vmatpush1.msra.mxu0 0.0
      %2957 = vmatprep.subr.mxu0 0.0
      %2958 = vmatpush1.msra.mxu0 0.0
      %2959 = vmatprep.subr.mxu0 0.0
      %2960 = vmatpush1.msra.mxu0 0.0
      %2961 = vmatprep.subr.mxu0 0.0
      %2962 = vmatpush1.msra.mxu0 0.0
      %2963 = vmatprep.subr.mxu0 0.0
      %2964 = vmatpush1.msra.mxu0 0.0
      %2965 = vmatprep.subr.mxu0 0.0
      %2966 = vmatpush1.msra.mxu0 0.0
      %2967 = vmatprep.subr.mxu0 0.0
      %2968 = vmatpush1.msra.mxu0 0.0
      %2969 = vmatprep.subr.mxu0 0.0
      %2970 = vmatpush1.msra.mxu0 0.0
      %2971 = vmatprep.subr.mxu0 0.0
      %2972 = vmatpush1.msra.mxu0 0.0
      %2973 = vmatprep.subr.mxu0 0.0
      %2974 = vmatpush1.msra.mxu0 0.0
      %2975 = vmatprep.subr.mxu0 0.0
      %2976 = vmatpush1.msra.mxu0 0.0
      %2977 = vmatprep.subr.mxu0 0.0
      %2978 = vmatpush1.msra.mxu0 0.0
      %2979 = vmatprep.subr.mxu0 0.0
      %2980 = vmatpush1.msra.mxu0 0.0
      %2981 = vmatprep.subr.mxu0 0.0
      %2982 = vmatpush1.msra.mxu0 0.0
      %2983 = vmatprep.subr.mxu0 0.0
      %2984 = vmatpush1.msra.mxu0 0.0
      %2985 = vmatprep.subr.mxu0 0.0
      %2986 = vmatpush1.msra.mxu0 0.0
      %2987 = vmatprep.subr.mxu0 0.0
      %2988 = vmatpush1.msra.mxu0 0.0
      %2989 = vmatprep.subr.mxu0 0.0
      %2990 = vmatpush1.msra.mxu0 0.0
      %2991 = vmatprep.subr.mxu0 0.0
      %2992 = vmatpush1.msra.mxu0 0.0
      %2993 = vmatprep.subr.mxu0 0.0
      %2994 = vmatpush1.msra.mxu0 0.0
      %2995 = vmatprep.subr.mxu0 0.0
      %2996 = vmatpush1.msra.mxu0 0.0
      %2997 = vmatprep.subr.mxu0 0.0
      %2998 = vmatpush1.msra.mxu0 0.0
      %2999 = vmatprep.subr.mxu0 0.0
      %3000 = vmatpush1.msra.mxu0 0.0
      %3001 = vmatprep.subr.mxu0 0.0
      %3002 = vmatpush1.msra.mxu0 0.0
      %3003 = vmatprep.subr.mxu0 0.0
      %3004 = vmatpush1.msra.mxu0 0.0
      %3005 = vmatprep.subr.mxu0 0.0
      %3006 = vmatpush1.msra.mxu0 0.0
      %3007 = vmatprep.subr.mxu0 0.0
      %3008 = vmatpush1.msra.mxu0 0.0
      %3009 = vmatprep.mubr.f32.mxu0 0.0
      %3010 = vmatmul.mubr.f32.gmra.mrb[0].mxu0 %v2916
      %v3011 = vpop.f32.mrb[0].mxu0
      %v3012 = vadd.f32 0.0, %v3011
      %v3013 = vpop.f32.mrb[0].mxu0
      %v3014 = vadd.f32 0.0, %v3013
      %3015 = vmatprep.mubr.f32.mxu0 0.0
      %3016 = vmatmul.mubr.f32.gmra.mrb[0].mxu0 %v2919
      %v3017 = vpop.f32.mrb[0].mxu0
      %v3018 = vadd.f32 0.0, %v3017
      %v3019 = vpop.f32.mrb[0].mxu0
      %v3020 = vadd.f32 0.0, %v3019
      %3021 = vmatprep.mubr.f32.mxu0 0.0
      %3022 = vmatmul.mubr.f32.gmra.mrb[0].mxu0 %v2922
      %v3023 = vpop.f32.mrb[0].mxu0
      %v3024 = vadd.f32 0.0, %v3023
      %v3025 = vpop.f32.mrb[0].mxu0
      %v3026 = vadd.f32 0.0, %v3025
      %3027 = vmatprep.mubr.f32.mxu0 0.0
      %3028 = vmatmul.mubr.f32.gmra.mrb[0].mxu0 %v2925
      %v3029 = vpop.f32.mrb[0].mxu0
      %v3030 = vadd.f32 0.0, %v3029
      %v3031 = vpop.f32.mrb[0].mxu0
      %v3032 = vadd.f32 0.0, %v3031
      %3033 = vmatprep.mubr.f32.mxu0 0.0
      %3034 = vmatmul.mubr.f32.gmra.mrb[0].mxu0 %v2928
      %v3035 = vpop.f32.mrb[0].mxu0
      %v3036 = vadd.f32 0.0, %v3035
      %v3037 = vpop.f32.mrb[0].mxu0
      %v3038 = vadd.f32 0.0, %v3037
      %3039 = vmatprep.mubr.f32.mxu0 0.0
      %3040 = vmatmul.mubr.f32.gmra.mrb[0].mxu0 %v2931
      %v3041 = vpop.f32.mrb[0].mxu0
      %v3042 = vadd.f32 0.0, %v3041
      %v3043 = vpop.f32.mrb[0].mxu0
      %v3044 = vadd.f32 0.0, %v3043
      %3045 = vmatprep.mubr.f32.mxu0 0.0
      %3046 = vmatmul.mubr.f32.gmra.mrb[0].mxu0 %v2934
      %v3047 = vpop.f32.mrb[0].mxu0
      %v3048 = vadd.f32 0.0, %v3047
      %v3049 = vpop.f32.mrb[0].mxu0
      %v3050 = vadd.f32 0.0, %v3049
      %3051 = vmatprep.mubr.f32.mxu0 0.0
      %3052 = vmatmul.mubr.f32.gmra.mrb[0].mxu0 %v2937
      %v3053 = vpop.f32.mrb[0].mxu0
      %v3054 = vadd.f32 0.0, %v3053
      %v3055 = vpop.f32.mrb[0].mxu0
      %v3056 = vadd.f32 0.0, %v3055
      %3057 = vmatprep.mubr.f32.mxu0 0.0
      %3058 = vmatmul.mubr.f32.gmra.mrb[0].mxu0 %v2940
      %v3059 = vpop.f32.mrb[0].mxu0
      %v3060 = vadd.f32 0.0, %v3059
      %v3061 = vpop.f32.mrb[0].mxu0
      %v3062 = vadd.f32 0.0, %v3061
      %3063 = vmatprep.mubr.f32.mxu0 0.0
      %3064 = vmatmul.mubr.f32.gmra.mrb[0].mxu0 %v2943
      %v3065 = vpop.f32.mrb[0].mxu0
      %v3066 = vadd.f32 0.0, %v3065
      %v3067 = vpop.f32.mrb[0].mxu0
      %v3068 = vadd.f32 0.0, %v3067
      %3069 = vdwg.mxu0
      %3070 = vmatprep.subr.mxu0 0.0
      %3071 = vmatpush1.msra.mxu0 %v2893
      %3072 = vmatprep.subr.mxu0 0.0
      %3073 = vmatpush1.msra.mxu0 %v2896
      %3074 = vmatprep.subr.mxu0 0.0
      %3075 = vmatpush1.msra.mxu0 %v2899
      %3076 = vmatprep.subr.mxu0 0.0
      %3077 = vmatpush1.msra.mxu0 %v2902
      %3078 = vmatprep.subr.mxu0 0.0
      %3079 = vmatpush1.msra.mxu0 0.0
      %3080 = vmatprep.subr.mxu0 0.0
      %3081 = vmatpush1.msra.mxu0 0.0
      %3082 = vmatprep.subr.mxu0 0.0
      %3083 = vmatpush1.msra.mxu0 0.0
      %3084 = vmatprep.subr.mxu0 0.0
      %3085 = vmatpush1.msra.mxu0 0.0
      %3086 = vmatprep.subr.mxu0 0.0
      %3087 = vmatpush1.msra.mxu0 0.0
      %3088 = vmatprep.subr.mxu0 0.0
      %3089 = vmatpush1.msra.mxu0 0.0
      %3090 = vmatprep.subr.mxu0 0.0
      %3091 = vmatpush1.msra.mxu0 0.0
      %3092 = vmatprep.subr.mxu0 0.0
      %3093 = vmatpush1.msra.mxu0 0.0
      %3094 = vmatprep.subr.mxu0 0.0
      %3095 = vmatpush1.msra.mxu0 0.0
      %3096 = vmatprep.subr.mxu0 0.0
      %3097 = vmatpush1.msra.mxu0 0.0
      %3098 = vmatprep.subr.mxu0 0.0
      %3099 = vmatpush1.msra.mxu0 0.0
      %3100 = vmatprep.subr.mxu0 0.0
      %3101 = vmatpush1.msra.mxu0 0.0
      %3102 = vmatprep.subr.mxu0 0.0
      %3103 = vmatpush1.msra.mxu0 0.0
      %3104 = vmatprep.subr.mxu0 0.0
      %3105 = vmatpush1.msra.mxu0 0.0
      %3106 = vmatprep.subr.mxu0 0.0
      %3107 = vmatpush1.msra.mxu0 0.0
      %3108 = vmatprep.subr.mxu0 0.0
      %3109 = vmatpush1.msra.mxu0 0.0
      %3110 = vmatprep.subr.mxu0 0.0
      %3111 = vmatpush1.msra.mxu0 0.0
      %3112 = vmatprep.subr.mxu0 0.0
      %3113 = vmatpush1.msra.mxu0 0.0
      %3114 = vmatprep.subr.mxu0 0.0
      %3115 = vmatpush1.msra.mxu0 0.0
      %3116 = vmatprep.subr.mxu0 0.0
      %3117 = vmatpush1.msra.mxu0 0.0
      %3118 = vmatprep.subr.mxu0 0.0
      %3119 = vmatpush1.msra.mxu0 0.0
      %3120 = vmatprep.subr.mxu0 0.0
      %3121 = vmatpush1.msra.mxu0 0.0
      %3122 = vmatprep.subr.mxu0 0.0
      %3123 = vmatpush1.msra.mxu0 0.0
      %3124 = vmatprep.subr.mxu0 0.0
      %3125 = vmatpush1.msra.mxu0 0.0
      %3126 = vmatprep.subr.mxu0 0.0
      %3127 = vmatpush1.msra.mxu0 0.0
      %3128 = vmatprep.subr.mxu0 0.0
      %3129 = vmatpush1.msra.mxu0 0.0
      %3130 = vmatprep.subr.mxu0 0.0
      %3131 = vmatpush1.msra.mxu0 0.0
      %3132 = vmatprep.subr.mxu0 0.0
      %3133 = vmatpush1.msra.mxu0 0.0
      %3134 = vmatprep.mubr.f32.mxu0 0.0
      %3135 = vmatmul.mubr.f32.gmra.mrb[0].mxu0 %v2916
      %v3136 = vpop.f32.mrb[0].mxu0
      %v3137 = vadd.f32 0.0, %v3136
      %v3138 = vpop.f32.mrb[0].mxu0
      %3139 = vmatprep.mubr.f32.mxu0 0.0
      %3140 = vmatmul.mubr.f32.gmra.mrb[0].mxu0 %v2919
      %v3141 = vpop.f32.mrb[0].mxu0
      %v3142 = vadd.f32 0.0, %v3141
      %v3143 = vpop.f32.mrb[0].mxu0
      %3144 = vmatprep.mubr.f32.mxu0 0.0
      %3145 = vmatmul.mubr.f32.gmra.mrb[0].mxu0 %v2922
      %v3146 = vpop.f32.mrb[0].mxu0
      %v3147 = vadd.f32 0.0, %v3146
      %v3148 = vpop.f32.mrb[0].mxu0
      %3149 = vmatprep.mubr.f32.mxu0 0.0
      %3150 = vmatmul.mubr.f32.gmra.mrb[0].mxu0 %v2925
      %v3151 = vpop.f32.mrb[0].mxu0
      %v3152 = vadd.f32 0.0, %v3151
      %v3153 = vpop.f32.mrb[0].mxu0
      %3154 = vmatprep.mubr.f32.mxu0 0.0
      %3155 = vmatmul.mubr.f32.gmra.mrb[0].mxu0 %v2928
      %v3156 = vpop.f32.mrb[0].mxu0
      %v3157 = vadd.f32 0.0, %v3156
      %v3158 = vpop.f32.mrb[0].mxu0
      %3159 = vmatprep.mubr.f32.mxu0 0.0
      %3160 = vmatmul.mubr.f32.gmra.mrb[0].mxu0 %v2931
      %v3161 = vpop.f32.mrb[0].mxu0
      %v3162 = vadd.f32 0.0, %v3161
      %v3163 = vpop.f32.mrb[0].mxu0
      %3164 = vmatprep.mubr.f32.mxu0 0.0
      %3165 = vmatmul.mubr.f32.gmra.mrb[0].mxu0 %v2934
      %v3166 = vpop.f32.mrb[0].mxu0
      %v3167 = vadd.f32 0.0, %v3166
      %v3168 = vpop.f32.mrb[0].mxu0
      %3169 = vmatprep.mubr.f32.mxu0 0.0
      %3170 = vmatmul.mubr.f32.gmra.mrb[0].mxu0 %v2937
      %v3171 = vpop.f32.mrb[0].mxu0
      %v3172 = vadd.f32 0.0, %v3171
      %v3173 = vpop.f32.mrb[0].mxu0
      %3174 = vmatprep.mubr.f32.mxu0 0.0
      %3175 = vmatmul.mubr.f32.gmra.mrb[0].mxu0 %v2940
      %v3176 = vpop.f32.mrb[0].mxu0
      %v3177 = vadd.f32 0.0, %v3176
      %v3178 = vpop.f32.mrb[0].mxu0
      %3179 = vmatprep.mubr.f32.mxu0 0.0
      %3180 = vmatmul.mubr.f32.gmra.mrb[0].mxu0 %v2943
      %v3181 = vpop.f32.mrb[0].mxu0
      %v3182 = vadd.f32 0.0, %v3181
      %v3183 = vpop.f32.mrb[0].mxu0
      %3184 = vdwg.mxu0
      %v3185 = vadd.f32 %v2817, %v3012
      %v3186 = vadd.f32 %v2818, %v3014
      %v3187 = vadd.f32 %v2819, %v3137
      %v3188 = vadd.f32 %v2820, %v3018
      %v3189 = vadd.f32 %v2821, %v3020
      %v3190 = vadd.f32 %v2822, %v3142
      %v3191 = vadd.f32 %v2823, %v3024
      %v3192 = vadd.f32 %v2824, %v3026
      %v3193 = vadd.f32 %v2825, %v3147
      %v3194 = vadd.f32 %v2826, %v3030
      %v3195 = vadd.f32 %v2827, %v3032
      %v3196 = vadd.f32 %v2828, %v3152
      %v3197 = vadd.f32 %v2829, %v3036
      %v3198 = vadd.f32 %v2830, %v3038
      %v3199 = vadd.f32 %v2831, %v3157
      %v3200 = vadd.f32 %v2832, %v3042
      %v3201 = vadd.f32 %v2833, %v3044
      %v3202 = vadd.f32 %v2834, %v3162
      %v3203 = vadd.f32 %v2835, %v3048
      %v3204 = vadd.f32 %v2836, %v3050
      %v3205 = vadd.f32 %v2837, %v3167
      %v3206 = vadd.f32 %v2838, %v3054
      %v3207 = vadd.f32 %v2839, %v3056
      %v3208 = vadd.f32 %v2840, %v3172
      %v3209 = vadd.f32 %v2841, %v3060
      %v3210 = vadd.f32 %v2842, %v3062
      %v3211 = vadd.f32 %v2843, %v3177
      %v3212 = vadd.f32 %v2844, %v3066
      %v3213 = vadd.f32 %v2845, %v3068
      %v3214 = vadd.f32 %v2846, %v3182
      %s3215 = scalar_lea.vmem %s2, 640
      %v3216 = vld [vmem:[%s3215] sm:$0xff]
      %v3217 = vld [vmem:[%s3215 + $0x8] sm:$0xff]
      %v3218 = vld [vmem:[%s3215 + $0x10] sm:$0xff]
      %v3219 = vld [vmem:[%s3215 + $0x18] sm:$0xff]
      %v3220 = vld [vmem:[%s3215 + $0x20] sm:$0xff]
      %v3221 = vld [vmem:[%s3215 + $0x28] sm:$0xff]
      %v3222 = vld [vmem:[%s3215 + $0x30] sm:$0xff]
      %v3223 = vld [vmem:[%s3215 + $0x38] sm:$0xff]
      %v3224 = vld [vmem:[%s3215 + $0x40] sm:$0xff]
      %v3225 = vld [vmem:[%s3215 + $0x48] sm:$0x1]
      %3226 = vrot.lane.b32.xlu0 %v2079, 109
      %v3227 = vpop.permute.xlu0 %3226
      %3228 = vrot.lane.b32.xlu0 %v2080, 109
      %v3229 = vpop.permute.xlu0 %3228
      %3230 = vrot.lane.b32.xlu0 %v2081, 109
      %v3231 = vpop.permute.xlu0 %3230
      %3232 = vrot.lane.b32.xlu0 %v2082, 109
      %v3233 = vpop.permute.xlu0 %3232
      %3234 = vrot.lane.b32.xlu0 %v2083, 109
      %v3235 = vpop.permute.xlu0 %3234
      %3236 = vrot.lane.b32.xlu0 %v2084, 109
      %v3237 = vpop.permute.xlu0 %3236
      %3238 = vrot.lane.b32.xlu0 %v2085, 109
      %v3239 = vpop.permute.xlu0 %3238
      %3240 = vrot.lane.b32.xlu0 %v2086, 109
      %v3241 = vpop.permute.xlu0 %3240
      %3242 = vrot.lane.b32.xlu0 %v2087, 109
      %v3243 = vpop.permute.xlu0 %3242
      %3244 = vrot.lane.b32.xlu0 %v2088, 109
      %v3245 = vpop.permute.xlu0 %3244
      %3246 = vrot.lane.b32.xlu0 %v2089, 109
      %v3247 = vpop.permute.xlu0 %3246
      %3248 = vrot.lane.b32.xlu0 %v2090, 109
      %v3249 = vpop.permute.xlu0 %3248
      %3250 = vrot.lane.b32.xlu0 %v2091, 109
      %v3251 = vpop.permute.xlu0 %3250
      %3252 = vrot.lane.b32.xlu0 %v2092, 109
      %v3253 = vpop.permute.xlu0 %3252
      %3254 = vrot.lane.b32.xlu0 %v2093, 109
      %v3255 = vpop.permute.xlu0 %3254
      %3256 = vrot.lane.b32.xlu0 %v2094, 109
      %v3257 = vpop.permute.xlu0 %3256
      %vm3258 = vcmask 891904
      %v3259 = vsel %vm3258, %v3227, %v3229
      %v3260 = vsel %vm3258, %v3229, %v3231
      %v3261 = vsel %vm3258, %v3231, %v3233
      %v3262 = vsel %vm3258, %v3235, %v3237
      %v3263 = vsel %vm3258, %v3237, %v3239
      %v3264 = vsel %vm3258, %v3239, %v3241
      %v3265 = vsel %vm3258, %v3243, %v3245
      %v3266 = vsel %vm3258, %v3245, %v3247
      %v3267 = vsel %vm3258, %v3247, %v3249
      %v3268 = vsel %vm3258, %v3251, %v3253
      %v3269 = vsel %vm3258, %v3253, %v3255
      %v3270 = vsel %vm3258, %v3255, %v3257
      %v3284 = vsel %vm434, %v3216, 0
      %v3287 = vsel %vm434, %v3217, 0
      %v3290 = vsel %vm434, %v3218, 0
      %v3293 = vsel %vm434, %v3219, 0
      %v3296 = vsel %vm434, %v3220, 0
      %v3299 = vsel %vm434, %v3221, 0
      %v3302 = vsel %vm434, %v3222, 0
      %v3305 = vsel %vm434, %v3223, 0
      %v3308 = vsel %vm434, %v3224, 0
      %v3311 = vsel %vm434, %v3225, 0
      %3313 = vmatprep.subr.mxu0 %v3260
      %3314 = vmatpush1.msra.mxu0 %v3259
      %3315 = vmatprep.subr.mxu0 %v3263
      %3316 = vmatpush1.msra.mxu0 %v3262
      %3317 = vmatprep.subr.mxu0 %v3266
      %3318 = vmatpush1.msra.mxu0 %v3265
      %3319 = vmatprep.subr.mxu0 %v3269
      %3320 = vmatpush1.msra.mxu0 %v3268
      %3321 = vmatprep.subr.mxu0 0.0
      %3322 = vmatpush1.msra.mxu0 0.0
      %3323 = vmatprep.subr.mxu0 0.0
      %3324 = vmatpush1.msra.mxu0 0.0
      %3325 = vmatprep.subr.mxu0 0.0
      %3326 = vmatpush1.msra.mxu0 0.0
      %3327 = vmatprep.subr.mxu0 0.0
      %3328 = vmatpush1.msra.mxu0 0.0
      %3329 = vmatprep.subr.mxu0 0.0
      %3330 = vmatpush1.msra.mxu0 0.0
      %3331 = vmatprep.subr.mxu0 0.0
      %3332 = vmatpush1.msra.mxu0 0.0
      %3333 = vmatprep.subr.mxu0 0.0
      %3334 = vmatpush1.msra.mxu0 0.0
      %3335 = vmatprep.subr.mxu0 0.0
      %3336 = vmatpush1.msra.mxu0 0.0
      %3337 = vmatprep.subr.mxu0 0.0
      %3338 = vmatpush1.msra.mxu0 0.0
      %3339 = vmatprep.subr.mxu0 0.0
      %3340 = vmatpush1.msra.mxu0 0.0
      %3341 = vmatprep.subr.mxu0 0.0
      %3342 = vmatpush1.msra.mxu0 0.0
      %3343 = vmatprep.subr.mxu0 0.0
      %3344 = vmatpush1.msra.mxu0 0.0
      %3345 = vmatprep.subr.mxu0 0.0
      %3346 = vmatpush1.msra.mxu0 0.0
      %3347 = vmatprep.subr.mxu0 0.0
      %3348 = vmatpush1.msra.mxu0 0.0
      %3349 = vmatprep.subr.mxu0 0.0
      %3350 = vmatpush1.msra.mxu0 0.0
      %3351 = vmatprep.subr.mxu0 0.0
      %3352 = vmatpush1.msra.mxu0 0.0
      %3353 = vmatprep.subr.mxu0 0.0
      %3354 = vmatpush1.msra.mxu0 0.0
      %3355 = vmatprep.subr.mxu0 0.0
      %3356 = vmatpush1.msra.mxu0 0.0
      %3357 = vmatprep.subr.mxu0 0.0
      %3358 = vmatpush1.msra.mxu0 0.0
      %3359 = vmatprep.subr.mxu0 0.0
      %3360 = vmatpush1.msra.mxu0 0.0
      %3361 = vmatprep.subr.mxu0 0.0
      %3362 = vmatpush1.msra.mxu0 0.0
      %3363 = vmatprep.subr.mxu0 0.0
      %3364 = vmatpush1.msra.mxu0 0.0
      %3365 = vmatprep.subr.mxu0 0.0
      %3366 = vmatpush1.msra.mxu0 0.0
      %3367 = vmatprep.subr.mxu0 0.0
      %3368 = vmatpush1.msra.mxu0 0.0
      %3369 = vmatprep.subr.mxu0 0.0
      %3370 = vmatpush1.msra.mxu0 0.0
      %3371 = vmatprep.subr.mxu0 0.0
      %3372 = vmatpush1.msra.mxu0 0.0
      %3373 = vmatprep.subr.mxu0 0.0
      %3374 = vmatpush1.msra.mxu0 0.0
      %3375 = vmatprep.subr.mxu0 0.0
      %3376 = vmatpush1.msra.mxu0 0.0
      %3377 = vmatprep.mubr.f32.mxu0 0.0
      %3378 = vmatmul.mubr.f32.gmra.mrb[0].mxu0 %v3284
      %v3379 = vpop.f32.mrb[0].mxu0
      %v3380 = vadd.f32 0.0, %v3379
      %v3381 = vpop.f32.mrb[0].mxu0
      %v3382 = vadd.f32 0.0, %v3381
      %3383 = vmatprep.mubr.f32.mxu0 0.0
      %3384 = vmatmul.mubr.f32.gmra.mrb[0].mxu0 %v3287
      %v3385 = vpop.f32.mrb[0].mxu0
      %v3386 = vadd.f32 0.0, %v3385
      %v3387 = vpop.f32.mrb[0].mxu0
      %v3388 = vadd.f32 0.0, %v3387
      %3389 = vmatprep.mubr.f32.mxu0 0.0
      %3390 = vmatmul.mubr.f32.gmra.mrb[0].mxu0 %v3290
      %v3391 = vpop.f32.mrb[0].mxu0
      %v3392 = vadd.f32 0.0, %v3391
      %v3393 = vpop.f32.mrb[0].mxu0
      %v3394 = vadd.f32 0.0, %v3393
      %3395 = vmatprep.mubr.f32.mxu0 0.0
      %3396 = vmatmul.mubr.f32.gmra.mrb[0].mxu0 %v3293
      %v3397 = vpop.f32.mrb[0].mxu0
      %v3398 = vadd.f32 0.0, %v3397
      %v3399 = vpop.f32.mrb[0].mxu0
      %v3400 = vadd.f32 0.0, %v3399
      %3401 = vmatprep.mubr.f32.mxu0 0.0
      %3402 = vmatmul.mubr.f32.gmra.mrb[0].mxu0 %v3296
      %v3403 = vpop.f32.mrb[0].mxu0
      %v3404 = vadd.f32 0.0, %v3403
      %v3405 = vpop.f32.mrb[0].mxu0
      %v3406 = vadd.f32 0.0, %v3405
      %3407 = vmatprep.mubr.f32.mxu0 0.0
      %3408 = vmatmul.mubr.f32.gmra.mrb[0].mxu0 %v3299
      %v3409 = vpop.f32.mrb[0].mxu0
      %v3410 = vadd.f32 0.0, %v3409
      %v3411 = vpop.f32.mrb[0].mxu0
      %v3412 = vadd.f32 0.0, %v3411
      %3413 = vmatprep.mubr.f32.mxu0 0.0
      %3414 = vmatmul.mubr.f32.gmra.mrb[0].mxu0 %v3302
      %v3415 = vpop.f32.mrb[0].mxu0
      %v3416 = vadd.f32 0.0, %v3415
      %v3417 = vpop.f32.mrb[0].mxu0
      %v3418 = vadd.f32 0.0, %v3417
      %3419 = vmatprep.mubr.f32.mxu0 0.0
      %3420 = vmatmul.mubr.f32.gmra.mrb[0].mxu0 %v3305
      %v3421 = vpop.f32.mrb[0].mxu0
      %v3422 = vadd.f32 0.0, %v3421
      %v3423 = vpop.f32.mrb[0].mxu0
      %v3424 = vadd.f32 0.0, %v3423
      %3425 = vmatprep.mubr.f32.mxu0 0.0
      %3426 = vmatmul.mubr.f32.gmra.mrb[0].mxu0 %v3308
      %v3427 = vpop.f32.mrb[0].mxu0
      %v3428 = vadd.f32 0.0, %v3427
      %v3429 = vpop.f32.mrb[0].mxu0
      %v3430 = vadd.f32 0.0, %v3429
      %3431 = vmatprep.mubr.f32.mxu0 0.0
      %3432 = vmatmul.mubr.f32.gmra.mrb[0].mxu0 %v3311
      %v3433 = vpop.f32.mrb[0].mxu0
      %v3434 = vadd.f32 0.0, %v3433
      %v3435 = vpop.f32.mrb[0].mxu0
      %v3436 = vadd.f32 0.0, %v3435
      %3437 = vdwg.mxu0
      %3438 = vmatprep.subr.mxu0 0.0
      %3439 = vmatpush1.msra.mxu0 %v3261
      %3440 = vmatprep.subr.mxu0 0.0
      %3441 = vmatpush1.msra.mxu0 %v3264
      %3442 = vmatprep.subr.mxu0 0.0
      %3443 = vmatpush1.msra.mxu0 %v3267
      %3444 = vmatprep.subr.mxu0 0.0
      %3445 = vmatpush1.msra.mxu0 %v3270
      %3446 = vmatprep.subr.mxu0 0.0
      %3447 = vmatpush1.msra.mxu0 0.0
      %3448 = vmatprep.subr.mxu0 0.0
      %3449 = vmatpush1.msra.mxu0 0.0
      %3450 = vmatprep.subr.mxu0 0.0
      %3451 = vmatpush1.msra.mxu0 0.0
      %3452 = vmatprep.subr.mxu0 0.0
      %3453 = vmatpush1.msra.mxu0 0.0
      %3454 = vmatprep.subr.mxu0 0.0
      %3455 = vmatpush1.msra.mxu0 0.0
      %3456 = vmatprep.subr.mxu0 0.0
      %3457 = vmatpush1.msra.mxu0 0.0
      %3458 = vmatprep.subr.mxu0 0.0
      %3459 = vmatpush1.msra.mxu0 0.0
      %3460 = vmatprep.subr.mxu0 0.0
      %3461 = vmatpush1.msra.mxu0 0.0
      %3462 = vmatprep.subr.mxu0 0.0
      %3463 = vmatpush1.msra.mxu0 0.0
      %3464 = vmatprep.subr.mxu0 0.0
      %3465 = vmatpush1.msra.mxu0 0.0
      %3466 = vmatprep.subr.mxu0 0.0
      %3467 = vmatpush1.msra.mxu0 0.0
      %3468 = vmatprep.subr.mxu0 0.0
      %3469 = vmatpush1.msra.mxu0 0.0
      %3470 = vmatprep.subr.mxu0 0.0
      %3471 = vmatpush1.msra.mxu0 0.0
      %3472 = vmatprep.subr.mxu0 0.0
      %3473 = vmatpush1.msra.mxu0 0.0
      %3474 = vmatprep.subr.mxu0 0.0
      %3475 = vmatpush1.msra.mxu0 0.0
      %3476 = vmatprep.subr.mxu0 0.0
      %3477 = vmatpush1.msra.mxu0 0.0
      %3478 = vmatprep.subr.mxu0 0.0
      %3479 = vmatpush1.msra.mxu0 0.0
      %3480 = vmatprep.subr.mxu0 0.0
      %3481 = vmatpush1.msra.mxu0 0.0
      %3482 = vmatprep.subr.mxu0 0.0
      %3483 = vmatpush1.msra.mxu0 0.0
      %3484 = vmatprep.subr.mxu0 0.0
      %3485 = vmatpush1.msra.mxu0 0.0
      %3486 = vmatprep.subr.mxu0 0.0
      %3487 = vmatpush1.msra.mxu0 0.0
      %3488 = vmatprep.subr.mxu0 0.0
      %3489 = vmatpush1.msra.mxu0 0.0
      %3490 = vmatprep.subr.mxu0 0.0
      %3491 = vmatpush1.msra.mxu0 0.0
      %3492 = vmatprep.subr.mxu0 0.0
      %3493 = vmatpush1.msra.mxu0 0.0
      %3494 = vmatprep.subr.mxu0 0.0
      %3495 = vmatpush1.msra.mxu0 0.0
      %3496 = vmatprep.subr.mxu0 0.0
      %3497 = vmatpush1.msra.mxu0 0.0
      %3498 = vmatprep.subr.mxu0 0.0
      %3499 = vmatpush1.msra.mxu0 0.0
      %3500 = vmatprep.subr.mxu0 0.0
      %3501 = vmatpush1.msra.mxu0 0.0
      %3502 = vmatprep.mubr.f32.mxu0 0.0
      %3503 = vmatmul.mubr.f32.gmra.mrb[0].mxu0 %v3284
      %v3504 = vpop.f32.mrb[0].mxu0
      %v3505 = vadd.f32 0.0, %v3504
      %v3506 = vpop.f32.mrb[0].mxu0
      %3507 = vmatprep.mubr.f32.mxu0 0.0
      %3508 = vmatmul.mubr.f32.gmra.mrb[0].mxu0 %v3287
      %v3509 = vpop.f32.mrb[0].mxu0
      %v3510 = vadd.f32 0.0, %v3509
      %v3511 = vpop.f32.mrb[0].mxu0
      %3512 = vmatprep.mubr.f32.mxu0 0.0
      %3513 = vmatmul.mubr.f32.gmra.mrb[0].mxu0 %v3290
      %v3514 = vpop.f32.mrb[0].mxu0
      %v3515 = vadd.f32 0.0, %v3514
      %v3516 = vpop.f32.mrb[0].mxu0
      %3517 = vmatprep.mubr.f32.mxu0 0.0
      %3518 = vmatmul.mubr.f32.gmra.mrb[0].mxu0 %v3293
      %v3519 = vpop.f32.mrb[0].mxu0
      %v3520 = vadd.f32 0.0, %v3519
      %v3521 = vpop.f32.mrb[0].mxu0
      %3522 = vmatprep.mubr.f32.mxu0 0.0
      %3523 = vmatmul.mubr.f32.gmra.mrb[0].mxu0 %v3296
      %v3524 = vpop.f32.mrb[0].mxu0
      %v3525 = vadd.f32 0.0, %v3524
      %v3526 = vpop.f32.mrb[0].mxu0
      %3527 = vmatprep.mubr.f32.mxu0 0.0
      %3528 = vmatmul.mubr.f32.gmra.mrb[0].mxu0 %v3299
      %v3529 = vpop.f32.mrb[0].mxu0
      %v3530 = vadd.f32 0.0, %v3529
      %v3531 = vpop.f32.mrb[0].mxu0
      %3532 = vmatprep.mubr.f32.mxu0 0.0
      %3533 = vmatmul.mubr.f32.gmra.mrb[0].mxu0 %v3302
      %v3534 = vpop.f32.mrb[0].mxu0
      %v3535 = vadd.f32 0.0, %v3534
      %v3536 = vpop.f32.mrb[0].mxu0
      %3537 = vmatprep.mubr.f32.mxu0 0.0
      %3538 = vmatmul.mubr.f32.gmra.mrb[0].mxu0 %v3305
      %v3539 = vpop.f32.mrb[0].mxu0
      %v3540 = vadd.f32 0.0, %v3539
      %v3541 = vpop.f32.mrb[0].mxu0
      %3542 = vmatprep.mubr.f32.mxu0 0.0
      %3543 = vmatmul.mubr.f32.gmra.mrb[0].mxu0 %v3308
      %v3544 = vpop.f32.mrb[0].mxu0
      %v3545 = vadd.f32 0.0, %v3544
      %v3546 = vpop.f32.mrb[0].mxu0
      %3547 = vmatprep.mubr.f32.mxu0 0.0
      %3548 = vmatmul.mubr.f32.gmra.mrb[0].mxu0 %v3311
      %v3549 = vpop.f32.mrb[0].mxu0
      %v3550 = vadd.f32 0.0, %v3549
      %v3551 = vpop.f32.mrb[0].mxu0
      %3552 = vdwg.mxu0
      %v3553 = vadd.f32 %v3185, %v3380
      %v3554 = vadd.f32 %v3186, %v3382
      %v3555 = vadd.f32 %v3187, %v3505
      %v3556 = vadd.f32 %v3188, %v3386
      %v3557 = vadd.f32 %v3189, %v3388
      %v3558 = vadd.f32 %v3190, %v3510
      %v3559 = vadd.f32 %v3191, %v3392
      %v3560 = vadd.f32 %v3192, %v3394
      %v3561 = vadd.f32 %v3193, %v3515
      %v3562 = vadd.f32 %v3194, %v3398
      %v3563 = vadd.f32 %v3195, %v3400
      %v3564 = vadd.f32 %v3196, %v3520
      %v3565 = vadd.f32 %v3197, %v3404
      %v3566 = vadd.f32 %v3198, %v3406
      %v3567 = vadd.f32 %v3199, %v3525
      %v3568 = vadd.f32 %v3200, %v3410
      %v3569 = vadd.f32 %v3201, %v3412
      %v3570 = vadd.f32 %v3202, %v3530
      %v3571 = vadd.f32 %v3203, %v3416
      %v3572 = vadd.f32 %v3204, %v3418
      %v3573 = vadd.f32 %v3205, %v3535
      %v3574 = vadd.f32 %v3206, %v3422
      %v3575 = vadd.f32 %v3207, %v3424
      %v3576 = vadd.f32 %v3208, %v3540
      %v3577 = vadd.f32 %v3209, %v3428
      %v3578 = vadd.f32 %v3210, %v3430
      %v3579 = vadd.f32 %v3211, %v3545
      %v3580 = vadd.f32 %v3212, %v3434
      %v3581 = vadd.f32 %v3213, %v3436
      %v3582 = vadd.f32 %v3214, %v3550
      %s3583 = scalar_lea.vmem %s303, 128
      %v3584 = vld [vmem:[%s3583] ss:$8 sm:$0x7]
      %v3585 = vld [vmem:[%s303 + $0x58] sm:$0xff]
      %v3586 = vld [vmem:[%s303 + $0x60] sm:$0xff]
      %v3587 = vld [vmem:[%s303 + $0x68] sm:$0xff]
      %v3588 = vld [vmem:[%s308] sm:$0xff]
      %v3589 = vld [vmem:[%s308 + $0x8] sm:$0xff]
      %v3590 = vld [vmem:[%s308 + $0x10] sm:$0xff]
      %v3591 = vxor.u32 %v3553, 2147483648
      %v3592 = vxor.u32 %v3554, 2147483648
      %v3593 = vxor.u32 %v3555, 2147483648
      %v3594 = vxor.u32 %v3556, 2147483648
      %v3595 = vxor.u32 %v3557, 2147483648
      %v3596 = vxor.u32 %v3558, 2147483648
      %v3597 = vxor.u32 %v3559, 2147483648
      %v3598 = vxor.u32 %v3560, 2147483648
      %v3599 = vxor.u32 %v3561, 2147483648
      %v3600 = vmul.f32 %v3591, 1.442695
      %v3601 = vpow.pop %v3600
      %v3602 = vmul.f32 %v3592, 1.442695
      %v3603 = vpow.pop %v3602
      %v3604 = vmul.f32 %v3593, 1.442695
      %v3605 = vpow.pop %v3604
      %v3606 = vmul.f32 %v3594, 1.442695
      %v3607 = vpow.pop %v3606
      %v3608 = vmul.f32 %v3595, 1.442695
      %v3609 = vpow.pop %v3608
      %v3610 = vmul.f32 %v3596, 1.442695
      %v3611 = vpow.pop %v3610
      %v3612 = vmul.f32 %v3597, 1.442695
      %v3613 = vpow.pop %v3612
      %v3614 = vmul.f32 %v3598, 1.442695
      %v3615 = vpow.pop %v3614
      %v3616 = vmul.f32 %v3599, 1.442695
      %v3617 = vpow.pop %v3616
      %v3618 = vadd.f32 %v3601, 1.0
      %v3619 = vadd.f32 %v3603, 1.0
      %v3620 = vadd.f32 %v3605, 1.0
      %v3621 = vadd.f32 %v3607, 1.0
      %v3622 = vadd.f32 %v3609, 1.0
      %v3623 = vadd.f32 %v3611, 1.0
      %v3624 = vadd.f32 %v3613, 1.0
      %v3625 = vadd.f32 %v3615, 1.0
      %v3626 = vadd.f32 %v3617, 1.0
      %v3627 = vrcp.pop %v3618
      %v3628 = vmul.f32 1.0, %v3627
      %v3629 = vrcp.pop %v3619
      %v3630 = vmul.f32 1.0, %v3629
      %v3631 = vrcp.pop %v3620
      %v3632 = vmul.f32 1.0, %v3631
      %v3633 = vrcp.pop %v3621
      %v3634 = vmul.f32 1.0, %v3633
      %v3635 = vrcp.pop %v3622
      %v3636 = vmul.f32 1.0, %v3635
      %v3637 = vrcp.pop %v3623
      %v3638 = vmul.f32 1.0, %v3637
      %v3639 = vrcp.pop %v3624
      %v3640 = vmul.f32 1.0, %v3639
      %v3641 = vrcp.pop %v3625
      %v3642 = vmul.f32 1.0, %v3641
      %v3643 = vrcp.pop %v3626
      %v3644 = vmul.f32 1.0, %v3643
      %v3645 = vmul.f32 %v3640, 1.442695
      %v3646 = vpow.pop %v3645
      %v3647 = vmul.f32 %v3642, 1.442695
      %v3648 = vpow.pop %v3647
      %v3649 = vmul.f32 %v3644, 1.442695
      %v3650 = vpow.pop %v3649
      %v3651 = vmul.f32 %v3646, %v3628
      %v3652 = vmul.f32 %v3648, %v3630
      %v3653 = vmul.f32 %v3650, %v3632
      %v3654 = vsub.f32 %v3634, %v3651
      %v3655 = vsub.f32 %v3636, %v3652
      %v3656 = vsub.f32 %v3638, %v3653
      %v3657 = vxor.u32 %v3654, 2147483648
      %v3658 = vxor.u32 %v3655, 2147483648
      %v3659 = vxor.u32 %v3656, 2147483648
      %v3660 = vmul.f32 %v3657, 1.442695
      %v3661 = vpow.pop %v3660
      %v3662 = vmul.f32 %v3658, 1.442695
      %v3663 = vpow.pop %v3662
      %v3664 = vmul.f32 %v3659, 1.442695
      %v3665 = vpow.pop %v3664
      %v3666 = vadd.f32 %v3661, 1.0
      %v3667 = vadd.f32 %v3663, 1.0
      %v3668 = vadd.f32 %v3665, 1.0
      %v3669 = vrcp.pop %v3666
      %v3670 = vmul.f32 1.0, %v3669
      %v3671 = vrcp.pop %v3667
      %v3672 = vmul.f32 1.0, %v3671
      %v3673 = vrcp.pop %v3668
      %v3674 = vmul.f32 1.0, %v3673
      %v3675 = vtanh.pop %v3562
      %v3676 = vtanh.pop %v3563
      %v3677 = vtanh.pop %v3564
      %v3678 = vmul.f32 %v3670, %v3588
      %v3679 = vmul.f32 %v3672, %v3589
      %v3680 = vmul.f32 %v3674, %v3590
      %v3681 = vmul.f32 %v3628, %v3675
      %v3682 = vmul.f32 %v3630, %v3676
      %v3683 = vmul.f32 %v3632, %v3677
      %v3684 = vadd.f32 %v3678, %v3681
      %v3685 = vadd.f32 %v3679, %v3682
      %v3686 = vadd.f32 %v3680, %v3683
      %v3688 = vlaneseq
      %v3689 = vshrl.u32 %v3688, 7
      %v3690 = vsub.s32 0, %v3689
      %v3691 = vrot.slane %v3584, %v3690
      %v3692 = vlaneseq
      %v3693 = vshrl.u32 %v3692, 7
      %v3694 = vsub.s32 1, %v3693
      %v3695 = vrot.slane %v3584, %v3694
      %v3696 = vlaneseq
      %v3697 = vshrl.u32 %v3696, 7
      %v3698 = vsub.s32 2, %v3697
      %v3699 = vrot.slane %v3584, %v3698
      %v3703 = vmul.f32 %v3684, %v3691
      %v3704 = vmul.f32 %v3685, %v3695
      %v3705 = vmul.f32 %v3686, %v3699
      %3706 = vst [vmem:[%s318] sm:$0xff] %v3703
      %3707 = vst [vmem:[%s318 + $0x8] sm:$0xff] %v3704
      %3708 = vst [vmem:[%s318 + $0x10] sm:$0xff] %v3705
      %v3709 = vsub.f32 %v3584, 1.0
      %v3710 = vmul.f32 %v3709, 1e+09
      %v3712 = vlaneseq
      %v3713 = vshrl.u32 %v3712, 7
      %v3714 = vsub.s32 0, %v3713
      %v3715 = vrot.slane %v3710, %v3714
      %v3716 = vlaneseq
      %v3717 = vshrl.u32 %v3716, 7
      %v3718 = vsub.s32 1, %v3717
      %v3719 = vrot.slane %v3710, %v3718
      %v3720 = vlaneseq
      %v3721 = vshrl.u32 %v3720, 7
      %v3722 = vsub.s32 2, %v3721
      %v3723 = vrot.slane %v3710, %v3722
      %v3727 = vadd.f32 %v3580, %v3715
      %v3728 = vadd.f32 %v3581, %v3719
      %v3729 = vadd.f32 %v3582, %v3723
      %vm3730 = vcmask 1040384
      %v3731 = vsel %vm3730, %v3727, -inf
      %v3732 = vsel %vm3730, %v3728, -inf
      %v3733 = vsel %vm3730, %v3729, -inf
      %v3734 = vmax.f32 %v3731, %v3732
      %v3735 = vmax.f32 %v3734, %v3733
      %3736 = vmax.xlane.f32.xlu0 %v3735
      %v3737 = vpop.xlane.xlu0 %3736
      %v3738 = vsub.f32 %v3727, %v3737
      %v3739 = vsub.f32 %v3728, %v3737
      %v3740 = vsub.f32 %v3729, %v3737
      %v3741 = vmul.f32 %v3738, 1.442695
      %v3742 = vpow.pop %v3741
      %v3743 = vmul.f32 %v3739, 1.442695
      %v3744 = vpow.pop %v3743
      %v3745 = vmul.f32 %v3740, 1.442695
      %v3746 = vpow.pop %v3745
      %v3747 = vsel %vm3730, %v3742, 0.0
      %v3748 = vsel %vm3730, %v3744, 0.0
      %v3749 = vadd.f32 %v3747, %v3748
      %v3750 = vsel %vm3730, %v3746, 0.0
      %v3751 = vadd.f32 %v3749, %v3750
      %3752 = vadd.xlane.f32.xlu0 %v3751
      %v3753 = vpop.xlane.xlu0 %3752
      %v3754 = vlaneseq
      %v3755 = vshrl.u32 %v3754, 7
      %v3756 = vsub.s32 0, %v3755
      %v3757 = vrot.slane %v3742, %v3756
      %v3758 = vlaneseq
      %v3759 = vshrl.u32 %v3758, 7
      %v3760 = vsub.s32 0, %v3759
      %v3761 = vrot.slane %v3744, %v3760
      %v3762 = vlaneseq
      %v3763 = vshrl.u32 %v3762, 7
      %v3764 = vsub.s32 0, %v3763
      %v3765 = vrot.slane %v3746, %v3764
      %v3766 = vmul.f32 %v3574, %v3757
      %v3767 = vmul.f32 %v3575, %v3761
      %v3768 = vmul.f32 %v3576, %v3765
      %v3769 = vmul.f32 %v3577, %v3757
      %v3770 = vmul.f32 %v3578, %v3761
      %v3771 = vmul.f32 %v3579, %v3765
      %v3772 = vadd.f32 %v3766, %v3767
      %v3773 = vadd.f32 %v3772, %v3768
      %3774 = vadd.xlane.f32.xlu0 %v3773
      %v3775 = vpop.xlane.xlu0 %3774
      %v3776 = vadd.f32 %v3769, %v3770
      %v3777 = vadd.f32 %v3776, %v3771
      %3778 = vadd.xlane.f32.xlu0 %v3777
      %v3779 = vpop.xlane.xlu0 %3778
      %v3780 = vrcp.pop %v3753
      %v3781 = vlaneseq
      %v3782 = vshrl.u32 %v3781, 7
      %v3783 = vsub.s32 0, %v3782
      %v3784 = vrot.slane %v3780, %v3783
      %v3785 = vmul.f32 %v3775, %v3784
      %v3786 = vmul.f32 %v3779, %v3784
      %v3787 = vld [vmem:[%s4] sm:$0xf]
      %v3788 = vld [vmem:[%s4 + $0x20] sm:$0xf]
      %vm3789 = vcmask 130048
      %v3791 = vsel %vm3789, %v3787, 0
      %3793 = vmatprep.subr.mxu0 0.0
      %3794 = vmatpush1.msra.mxu0 %v3785
      %3795 = vmatprep.subr.mxu0 0.0
      %3796 = vmatpush1.msra.mxu0 %v3786
      %3797 = vmatprep.subr.mxu0 0.0
      %3798 = vmatpush1.msra.mxu0 0.0
      %3799 = vmatprep.subr.mxu0 0.0
      %3800 = vmatpush1.msra.mxu0 0.0
      %3801 = vmatprep.subr.mxu0 0.0
      %3802 = vmatpush1.msra.mxu0 0.0
      %3803 = vmatprep.subr.mxu0 0.0
      %3804 = vmatpush1.msra.mxu0 0.0
      %3805 = vmatprep.subr.mxu0 0.0
      %3806 = vmatpush1.msra.mxu0 0.0
      %3807 = vmatprep.subr.mxu0 0.0
      %3808 = vmatpush1.msra.mxu0 0.0
      %3809 = vmatprep.subr.mxu0 0.0
      %3810 = vmatpush1.msra.mxu0 0.0
      %3811 = vmatprep.subr.mxu0 0.0
      %3812 = vmatpush1.msra.mxu0 0.0
      %3813 = vmatprep.subr.mxu0 0.0
      %3814 = vmatpush1.msra.mxu0 0.0
      %3815 = vmatprep.subr.mxu0 0.0
      %3816 = vmatpush1.msra.mxu0 0.0
      %3817 = vmatprep.subr.mxu0 0.0
      %3818 = vmatpush1.msra.mxu0 0.0
      %3819 = vmatprep.subr.mxu0 0.0
      %3820 = vmatpush1.msra.mxu0 0.0
      %3821 = vmatprep.subr.mxu0 0.0
      %3822 = vmatpush1.msra.mxu0 0.0
      %3823 = vmatprep.subr.mxu0 0.0
      %3824 = vmatpush1.msra.mxu0 0.0
      %3825 = vmatprep.subr.mxu0 0.0
      %3826 = vmatpush1.msra.mxu0 0.0
      %3827 = vmatprep.subr.mxu0 0.0
      %3828 = vmatpush1.msra.mxu0 0.0
      %3829 = vmatprep.subr.mxu0 0.0
      %3830 = vmatpush1.msra.mxu0 0.0
      %3831 = vmatprep.subr.mxu0 0.0
      %3832 = vmatpush1.msra.mxu0 0.0
      %3833 = vmatprep.subr.mxu0 0.0
      %3834 = vmatpush1.msra.mxu0 0.0
      %3835 = vmatprep.subr.mxu0 0.0
      %3836 = vmatpush1.msra.mxu0 0.0
      %3837 = vmatprep.subr.mxu0 0.0
      %3838 = vmatpush1.msra.mxu0 0.0
      %3839 = vmatprep.subr.mxu0 0.0
      %3840 = vmatpush1.msra.mxu0 0.0
      %3841 = vmatprep.subr.mxu0 0.0
      %3842 = vmatpush1.msra.mxu0 0.0
      %3843 = vmatprep.subr.mxu0 0.0
      %3844 = vmatpush1.msra.mxu0 0.0
      %3845 = vmatprep.subr.mxu0 0.0
      %3846 = vmatpush1.msra.mxu0 0.0
      %3847 = vmatprep.subr.mxu0 0.0
      %3848 = vmatpush1.msra.mxu0 0.0
      %3849 = vmatprep.subr.mxu0 0.0
      %3850 = vmatpush1.msra.mxu0 0.0
      %3851 = vmatprep.subr.mxu0 0.0
      %3852 = vmatpush1.msra.mxu0 0.0
      %3853 = vmatprep.subr.mxu0 0.0
      %3854 = vmatpush1.msra.mxu0 0.0
      %3855 = vmatprep.subr.mxu0 0.0
      %3856 = vmatpush1.msra.mxu0 0.0
      %3857 = vmatprep.mubr.f32.mxu0 0.0
      %3858 = vmatmul.mubr.f32.gmra.mrb[0].mxu0 %v3791
      %v3859 = vpop.f32.mrb[0].mxu0
      %v3860 = vadd.f32 %v3788, %v3859
      %v3861 = vpop.f32.mrb[0].mxu0
      %3862 = vdwg.mxu0
      %vm3863 = vcmask 3072
      %v3864 = vsel %vm3863, %v3860, 0.0
      %v3865 = vrot.slane %v3864, 4
      %v3866 = vadd.f32 %v3864, %v3865
      %v3867 = vrot.slane %v3866, 2
      %v3868 = vadd.f32 %v3866, %v3867
      %v3869 = vrot.slane %v3868, 1
      %v3870 = vadd.f32 %v3868, %v3869
      %v3871 = vrcp.pop 4.0
      %v3872 = vmul.f32 %v3870, %v3871
      %v3873 = vsub.f32 %v3860, %v3872
      %v3874 = vmul.f32 %v3873, %v3873
      %v3875 = vsel %vm3863, %v3874, 0.0
      %v3876 = vrot.slane %v3875, 4
      %v3877 = vadd.f32 %v3875, %v3876
      %v3878 = vrot.slane %v3877, 2
      %v3879 = vadd.f32 %v3877, %v3878
      %v3880 = vrot.slane %v3879, 1
      %v3881 = vadd.f32 %v3879, %v3880
      %v3882 = vmul.f32 %v3881, %v3871
      %v3883 = vadd.f32 %v3882, 1e-05
      %v3884 = vrsqrt.pop %v3883
      %v3885 = vmul.f32 %v3873, %v3884
      %3887 = vrot.lane.b32.xlu0 %v3788, 127
      %v3888 = vpop.permute.xlu0 %3887
      %v3890 = vmul.f32 %v3885, %v3888
      %3891 = vrot.lane.b32.xlu0 %v3788, 126
      %v3892 = vpop.permute.xlu0 %3891
      %v3894 = vadd.f32 %v3890, %v3892
      %v3895 = vld [vmem:[%s4 + $0x20] sm:$0x1]
      %v3896 = vmax.f32 %v3894, 0.0
      %v3897 = vmin.f32 %v3894, 0.0
      %v3898 = vlaneseq
      %v3899 = vshrl.u32 %v3898, 7
      %v3900 = vsub.s32 0, %v3899
      %v3901 = vrot.slane %v3895, %v3900
      %3903 = vrot.lane.b32.xlu0 %v3897, 3
      %v3904 = vpop.permute.xlu0 %3903
      %v3906 = vmul.f32 %v3901, %v3904
      %3908 = vrot.lane.b32.xlu0 %v3906, 125
      %v3909 = vpop.permute.xlu0 %3908
      %v3911 = vadd.f32 %v3896, %v3909
      %v3912 = vld [vmem:[%s4 + $0x8] sm:$0xff]
      %v3913 = vld [vmem:[%s4 + $0x10] sm:$0xff]
      %3916 = vrot.lane.b32.xlu0 %v3912, 124
      %v3917 = vpop.permute.xlu0 %3916
      %3918 = vrot.lane.b32.xlu0 %v3913, 124
      %v3919 = vpop.permute.xlu0 %3918
      %vm3922 = vcmask 31744
      %v3923 = vsel %vm3922, %v3912, 0
      %v3925 = vsel %vm3922, %v3913, 0
      %vm3927 = vcmask 1043456
      %v3929 = vsel %vm3927, %v3911, 0
      %3931 = vmatprep.subr.mxu0 0.0
      %3932 = vmatpush1.msra.mxu0 %v3929
      %3933 = vmatprep.subr.mxu0 0.0
      %3934 = vmatpush1.msra.mxu0 0.0
      %3935 = vmatprep.subr.mxu0 0.0
      %3936 = vmatpush1.msra.mxu0 0.0
      %3937 = vmatprep.subr.mxu0 0.0
      %3938 = vmatpush1.msra.mxu0 0.0
      %3939 = vmatprep.subr.mxu0 0.0
      %3940 = vmatpush1.msra.mxu0 0.0
      %3941 = vmatprep.subr.mxu0 0.0
      %3942 = vmatpush1.msra.mxu0 0.0
      %3943 = vmatprep.subr.mxu0 0.0
      %3944 = vmatpush1.msra.mxu0 0.0
      %3945 = vmatprep.subr.mxu0 0.0
      %3946 = vmatpush1.msra.mxu0 0.0
      %3947 = vmatprep.subr.mxu0 0.0
      %3948 = vmatpush1.msra.mxu0 0.0
      %3949 = vmatprep.subr.mxu0 0.0
      %3950 = vmatpush1.msra.mxu0 0.0
      %3951 = vmatprep.subr.mxu0 0.0
      %3952 = vmatpush1.msra.mxu0 0.0
      %3953 = vmatprep.subr.mxu0 0.0
      %3954 = vmatpush1.msra.mxu0 0.0
      %3955 = vmatprep.subr.mxu0 0.0
      %3956 = vmatpush1.msra.mxu0 0.0
      %3957 = vmatprep.subr.mxu0 0.0
      %3958 = vmatpush1.msra.mxu0 0.0
      %3959 = vmatprep.subr.mxu0 0.0
      %3960 = vmatpush1.msra.mxu0 0.0
      %3961 = vmatprep.subr.mxu0 0.0
      %3962 = vmatpush1.msra.mxu0 0.0
      %3963 = vmatprep.subr.mxu0 0.0
      %3964 = vmatpush1.msra.mxu0 0.0
      %3965 = vmatprep.subr.mxu0 0.0
      %3966 = vmatpush1.msra.mxu0 0.0
      %3967 = vmatprep.subr.mxu0 0.0
      %3968 = vmatpush1.msra.mxu0 0.0
      %3969 = vmatprep.subr.mxu0 0.0
      %3970 = vmatpush1.msra.mxu0 0.0
      %3971 = vmatprep.subr.mxu0 0.0
      %3972 = vmatpush1.msra.mxu0 0.0
      %3973 = vmatprep.subr.mxu0 0.0
      %3974 = vmatpush1.msra.mxu0 0.0
      %3975 = vmatprep.subr.mxu0 0.0
      %3976 = vmatpush1.msra.mxu0 0.0
      %3977 = vmatprep.subr.mxu0 0.0
      %3978 = vmatpush1.msra.mxu0 0.0
      %3979 = vmatprep.subr.mxu0 0.0
      %3980 = vmatpush1.msra.mxu0 0.0
      %3981 = vmatprep.subr.mxu0 0.0
      %3982 = vmatpush1.msra.mxu0 0.0
      %3983 = vmatprep.subr.mxu0 0.0
      %3984 = vmatpush1.msra.mxu0 0.0
      %3985 = vmatprep.subr.mxu0 0.0
      %3986 = vmatpush1.msra.mxu0 0.0
      %3987 = vmatprep.subr.mxu0 0.0
      %3988 = vmatpush1.msra.mxu0 0.0
      %3989 = vmatprep.subr.mxu0 0.0
      %3990 = vmatpush1.msra.mxu0 0.0
      %3991 = vmatprep.subr.mxu0 0.0
      %3992 = vmatpush1.msra.mxu0 0.0
      %3993 = vmatprep.subr.mxu0 0.0
      %3994 = vmatpush1.msra.mxu0 0.0
      %3995 = vmatprep.mubr.f32.mxu0 0.0
      %3996 = vmatmul.mubr.f32.gmra.mrb[0].mxu0 %v3923
      %v3997 = vpop.f32.mrb[0].mxu0
      %v3998 = vadd.f32 %v3917, %v3997
      %v3999 = vpop.f32.mrb[0].mxu0
      %4000 = vmatprep.mubr.f32.mxu0 0.0
      %4001 = vmatmul.mubr.f32.gmra.mrb[0].mxu0 %v3925
      %v4002 = vpop.f32.mrb[0].mxu0
      %v4003 = vadd.f32 %v3919, %v4002
      %v4004 = vpop.f32.mrb[0].mxu0
      %4005 = vdwg.mxu0
      %4007 = vset.pattern.permute.xlu0 0
      %4008 = vperm.xlu0 %4007, %v3998
      %v4009 = vpop.permute.xlu0 %4008
      %4012 = vset.pattern.permute.xlu0 0
      %4013 = vperm.xlu0 %4012, %v4003
      %v4014 = vpop.permute.xlu0 %4013
      %v4016 = vadd.f32 %v3574, %v4009
      %v4017 = vadd.f32 %v3575, %v4009
      %v4018 = vadd.f32 %v3576, %v4009
      %v4019 = vadd.f32 %v3577, %v4014
      %v4020 = vadd.f32 %v3578, %v4014
      %v4021 = vadd.f32 %v3579, %v4014
      %v4022 = vadd.f32 %v4016, %v3568
      %v4023 = vadd.f32 %v4017, %v3569
      %v4024 = vadd.f32 %v4018, %v3570
      %v4025 = vadd.f32 %v4019, %v3571
      %v4026 = vadd.f32 %v4020, %v3572
      %v4027 = vadd.f32 %v4021, %v3573
      %v4028 = vld [vmem:[%s4 + $0x18] sm:$0xff]
      %v4030 = vsel %vm3789, %v4028, 0
      %4032 = vmatprep.subr.mxu0 %v4023
      %4033 = vmatpush1.msra.mxu0 %v4022
      %4034 = vmatprep.subr.mxu0 %v4026
      %4035 = vmatpush1.msra.mxu0 %v4025
      %4036 = vmatprep.subr.mxu0 0.0
      %4037 = vmatpush1.msra.mxu0 0.0
      %4038 = vmatprep.subr.mxu0 0.0
      %4039 = vmatpush1.msra.mxu0 0.0
      %4040 = vmatprep.subr.mxu0 0.0
      %4041 = vmatpush1.msra.mxu0 0.0
      %4042 = vmatprep.subr.mxu0 0.0
      %4043 = vmatpush1.msra.mxu0 0.0
      %4044 = vmatprep.subr.mxu0 0.0
      %4045 = vmatpush1.msra.mxu0 0.0
      %4046 = vmatprep.subr.mxu0 0.0
      %4047 = vmatpush1.msra.mxu0 0.0
      %4048 = vmatprep.subr.mxu0 0.0
      %4049 = vmatpush1.msra.mxu0 0.0
      %4050 = vmatprep.subr.mxu0 0.0
      %4051 = vmatpush1.msra.mxu0 0.0
      %4052 = vmatprep.subr.mxu0 0.0
      %4053 = vmatpush1.msra.mxu0 0.0
      %4054 = vmatprep.subr.mxu0 0.0
      %4055 = vmatpush1.msra.mxu0 0.0
      %4056 = vmatprep.subr.mxu0 0.0
      %4057 = vmatpush1.msra.mxu0 0.0
      %4058 = vmatprep.subr.mxu0 0.0
      %4059 = vmatpush1.msra.mxu0 0.0
      %4060 = vmatprep.subr.mxu0 0.0
      %4061 = vmatpush1.msra.mxu0 0.0
      %4062 = vmatprep.subr.mxu0 0.0
      %4063 = vmatpush1.msra.mxu0 0.0
      %4064 = vmatprep.subr.mxu0 0.0
      %4065 = vmatpush1.msra.mxu0 0.0
      %4066 = vmatprep.subr.mxu0 0.0
      %4067 = vmatpush1.msra.mxu0 0.0
      %4068 = vmatprep.subr.mxu0 0.0
      %4069 = vmatpush1.msra.mxu0 0.0
      %4070 = vmatprep.subr.mxu0 0.0
      %4071 = vmatpush1.msra.mxu0 0.0
      %4072 = vmatprep.subr.mxu0 0.0
      %4073 = vmatpush1.msra.mxu0 0.0
      %4074 = vmatprep.subr.mxu0 0.0
      %4075 = vmatpush1.msra.mxu0 0.0
      %4076 = vmatprep.subr.mxu0 0.0
      %4077 = vmatpush1.msra.mxu0 0.0
      %4078 = vmatprep.subr.mxu0 0.0
      %4079 = vmatpush1.msra.mxu0 0.0
      %4080 = vmatprep.subr.mxu0 0.0
      %4081 = vmatpush1.msra.mxu0 0.0
      %4082 = vmatprep.subr.mxu0 0.0
      %4083 = vmatpush1.msra.mxu0 0.0
      %4084 = vmatprep.subr.mxu0 0.0
      %4085 = vmatpush1.msra.mxu0 0.0
      %4086 = vmatprep.subr.mxu0 0.0
      %4087 = vmatpush1.msra.mxu0 0.0
      %4088 = vmatprep.subr.mxu0 0.0
      %4089 = vmatpush1.msra.mxu0 0.0
      %4090 = vmatprep.subr.mxu0 0.0
      %4091 = vmatpush1.msra.mxu0 0.0
      %4092 = vmatprep.subr.mxu0 0.0
      %4093 = vmatpush1.msra.mxu0 0.0
      %4094 = vmatprep.subr.mxu0 0.0
      %4095 = vmatpush1.msra.mxu0 0.0
      %4096 = vmatprep.mubr.f32.mxu0 0.0
      %4097 = vmatmul.mubr.f32.gmra.mrb[0].mxu0 %v4030
      %v4098 = vpop.f32.mrb[0].mxu0
      %v4099 = vadd.f32 0.0, %v4098
      %v4100 = vpop.f32.mrb[0].mxu0
      %v4101 = vadd.f32 0.0, %v4100
      %4102 = vdwg.mxu0
      %4103 = vmatprep.subr.mxu0 0.0
      %4104 = vmatpush1.msra.mxu0 %v4024
      %4105 = vmatprep.subr.mxu0 0.0
      %4106 = vmatpush1.msra.mxu0 %v4027
      %4107 = vmatprep.subr.mxu0 0.0
      %4108 = vmatpush1.msra.mxu0 0.0
      %4109 = vmatprep.subr.mxu0 0.0
      %4110 = vmatpush1.msra.mxu0 0.0
      %4111 = vmatprep.subr.mxu0 0.0
      %4112 = vmatpush1.msra.mxu0 0.0
      %4113 = vmatprep.subr.mxu0 0.0
      %4114 = vmatpush1.msra.mxu0 0.0
      %4115 = vmatprep.subr.mxu0 0.0
      %4116 = vmatpush1.msra.mxu0 0.0
      %4117 = vmatprep.subr.mxu0 0.0
      %4118 = vmatpush1.msra.mxu0 0.0
      %4119 = vmatprep.subr.mxu0 0.0
      %4120 = vmatpush1.msra.mxu0 0.0
      %4121 = vmatprep.subr.mxu0 0.0
      %4122 = vmatpush1.msra.mxu0 0.0
      %4123 = vmatprep.subr.mxu0 0.0
      %4124 = vmatpush1.msra.mxu0 0.0
      %4125 = vmatprep.subr.mxu0 0.0
      %4126 = vmatpush1.msra.mxu0 0.0
      %4127 = vmatprep.subr.mxu0 0.0
      %4128 = vmatpush1.msra.mxu0 0.0
      %4129 = vmatprep.subr.mxu0 0.0
      %4130 = vmatpush1.msra.mxu0 0.0
      %4131 = vmatprep.subr.mxu0 0.0
      %4132 = vmatpush1.msra.mxu0 0.0
      %4133 = vmatprep.subr.mxu0 0.0
      %4134 = vmatpush1.msra.mxu0 0.0
      %4135 = vmatprep.subr.mxu0 0.0
      %4136 = vmatpush1.msra.mxu0 0.0
      %4137 = vmatprep.subr.mxu0 0.0
      %4138 = vmatpush1.msra.mxu0 0.0
      %4139 = vmatprep.subr.mxu0 0.0
      %4140 = vmatpush1.msra.mxu0 0.0
      %4141 = vmatprep.subr.mxu0 0.0
      %4142 = vmatpush1.msra.mxu0 0.0
      %4143 = vmatprep.subr.mxu0 0.0
      %4144 = vmatpush1.msra.mxu0 0.0
      %4145 = vmatprep.subr.mxu0 0.0
      %4146 = vmatpush1.msra.mxu0 0.0
      %4147 = vmatprep.subr.mxu0 0.0
      %4148 = vmatpush1.msra.mxu0 0.0
      %4149 = vmatprep.subr.mxu0 0.0
      %4150 = vmatpush1.msra.mxu0 0.0
      %4151 = vmatprep.subr.mxu0 0.0
      %4152 = vmatpush1.msra.mxu0 0.0
      %4153 = vmatprep.subr.mxu0 0.0
      %4154 = vmatpush1.msra.mxu0 0.0
      %4155 = vmatprep.subr.mxu0 0.0
      %4156 = vmatpush1.msra.mxu0 0.0
      %4157 = vmatprep.subr.mxu0 0.0
      %4158 = vmatpush1.msra.mxu0 0.0
      %4159 = vmatprep.subr.mxu0 0.0
      %4160 = vmatpush1.msra.mxu0 0.0
      %4161 = vmatprep.subr.mxu0 0.0
      %4162 = vmatpush1.msra.mxu0 0.0
      %4163 = vmatprep.subr.mxu0 0.0
      %4164 = vmatpush1.msra.mxu0 0.0
      %4165 = vmatprep.subr.mxu0 0.0
      %4166 = vmatpush1.msra.mxu0 0.0
      %4167 = vmatprep.mubr.f32.mxu0 0.0
      %4168 = vmatmul.mubr.f32.gmra.mrb[0].mxu0 %v4030
      %v4169 = vpop.f32.mrb[0].mxu0
      %v4170 = vadd.f32 0.0, %v4169
      %v4171 = vpop.f32.mrb[0].mxu0
      %4172 = vdwg.mxu0
      %v4173 = vxor.u32 %v4099, 2147483648
      %v4174 = vxor.u32 %v4101, 2147483648
      %v4175 = vxor.u32 %v4170, 2147483648
      %v4176 = vmul.f32 %v4173, 1.442695
      %v4177 = vpow.pop %v4176
      %v4178 = vmul.f32 %v4174, 1.442695
      %v4179 = vpow.pop %v4178
      %v4180 = vmul.f32 %v4175, 1.442695
      %v4181 = vpow.pop %v4180
      %v4182 = vadd.f32 %v4177, 1.0
      %v4183 = vadd.f32 %v4179, 1.0
      %v4184 = vadd.f32 %v4181, 1.0
      %v4185 = vrcp.pop %v4182
      %v4186 = vmul.f32 1.0, %v4185
      %v4187 = vrcp.pop %v4183
      %v4188 = vmul.f32 1.0, %v4187
      %v4189 = vrcp.pop %v4184
      %v4190 = vmul.f32 1.0, %v4189
      %v4191 = vtanh.pop %v4099
      %v4192 = vtanh.pop %v4101
      %v4193 = vtanh.pop %v4170
      %v4194 = vadd.f32 %v3585, %v4191
      %v4195 = vadd.f32 %v3586, %v4192
      %v4196 = vadd.f32 %v3587, %v4193
      %v4197 = vmul.f32 %v4186, %v4194
      %v4198 = vmul.f32 %v4188, %v4195
      %v4199 = vmul.f32 %v4190, %v4196
      %v4200 = vmul.f32 %v4197, %v3691
      %v4201 = vmul.f32 %v4198, %v3695
      %v4202 = vmul.f32 %v4199, %v3699
      %4203 = vst [vmem:[%s323] sm:$0xff] %v4200
      %4204 = vst [vmem:[%s323 + $0x8] sm:$0xff] %v4201
      %4205 = vst [vmem:[%s323 + $0x10] sm:$0xff] %v4202
      %4206 = vst [vmem:[#allocation2] sm:$0xff] 0.0
      %4207 = vst [vmem:[#allocation2 + $0x28] sm:$0xff] 0.0
      %4208 = vst [vmem:[#allocation2 + $0x20] sm:$0xff] 0.0
      %4209 = vst [vmem:[#allocation2 + $0x48] sm:$0xff] 0.0
      %4210 = vst [vmem:[#allocation2 + $0x8] sm:$0xff] %v3703
      %4211 = vst [vmem:[#allocation2 + $0x10] sm:$0xff] %v3704
      %4212 = vst [vmem:[#allocation2 + $0x18] sm:$0xff] %v3705
      %4213 = vst [vmem:[#allocation2 + $0x30] sm:$0xff] %v4200
      %4214 = vst [vmem:[#allocation2 + $0x38] sm:$0xff] %v4201
      %4215 = vst [vmem:[#allocation2 + $0x40] sm:$0xff] %v4202
      %v4216 = vld [vmem:[#allocation2] sm:$0xff]
      %v4217 = vld [vmem:[#allocation2 + $0x8] sm:$0xff]
      %v4218 = vld [vmem:[#allocation2 + $0x10] sm:$0xff]
      %v4219 = vld [vmem:[#allocation2 + $0x18] sm:$0xff]
      %v4220 = vld [vmem:[#allocation2 + $0x28] sm:$0xff]
      %v4221 = vld [vmem:[#allocation2 + $0x30] sm:$0xff]
      %v4222 = vld [vmem:[#allocation2 + $0x38] sm:$0xff]
      %v4223 = vld [vmem:[#allocation2 + $0x40] sm:$0xff]
      %v4224 = vld [vmem:[%s3] sm:$0xff]
      %v4225 = vld [vmem:[%s3 + $0x8] sm:$0xff]
      %s4226 = scalar_lea.vmem %s3, 16
      %v4227 = vld [vmem:[%s4226] sm:$0xff]
      %v4228 = vld [vmem:[%s4226 + $0x8] sm:$0xff]
      %4237 = vrot.lane.b32.xlu0 %v4216, 18
      %v4238 = vpop.permute.xlu0 %4237
      %4239 = vrot.lane.b32.xlu0 %v4217, 18
      %v4240 = vpop.permute.xlu0 %4239
      %4241 = vrot.lane.b32.xlu0 %v4218, 18
      %v4242 = vpop.permute.xlu0 %4241
      %4243 = vrot.lane.b32.xlu0 %v4219, 18
      %v4244 = vpop.permute.xlu0 %4243
      %4245 = vrot.lane.b32.xlu0 %v4220, 18
      %v4246 = vpop.permute.xlu0 %4245
      %4247 = vrot.lane.b32.xlu0 %v4221, 18
      %v4248 = vpop.permute.xlu0 %4247
      %4249 = vrot.lane.b32.xlu0 %v4222, 18
      %v4250 = vpop.permute.xlu0 %4249
      %4251 = vrot.lane.b32.xlu0 %v4223, 18
      %v4252 = vpop.permute.xlu0 %4251
      %v4253 = vsel %vm409, %v4238, %v4240
      %v4254 = vsel %vm409, %v4240, %v4242
      %v4255 = vsel %vm409, %v4242, %v4244
      %v4256 = vsel %vm409, %v4246, %v4248
      %v4257 = vsel %vm409, %v4248, %v4250
      %v4258 = vsel %vm409, %v4250, %v4252
      %v4266 = vsel %vm3789, %v4227, 0
      %v4269 = vsel %vm3789, %v4228, 0
      %4271 = vmatprep.subr.mxu0 %v4254
      %4272 = vmatpush1.msra.mxu0 %v4253
      %4273 = vmatprep.subr.mxu0 %v4257
      %4274 = vmatpush1.msra.mxu0 %v4256
      %4275 = vmatprep.subr.mxu0 0.0
      %4276 = vmatpush1.msra.mxu0 0.0
      %4277 = vmatprep.subr.mxu0 0.0
      %4278 = vmatpush1.msra.mxu0 0.0
      %4279 = vmatprep.subr.mxu0 0.0
      %4280 = vmatpush1.msra.mxu0 0.0
      %4281 = vmatprep.subr.mxu0 0.0
      %4282 = vmatpush1.msra.mxu0 0.0
      %4283 = vmatprep.subr.mxu0 0.0
      %4284 = vmatpush1.msra.mxu0 0.0
      %4285 = vmatprep.subr.mxu0 0.0
      %4286 = vmatpush1.msra.mxu0 0.0
      %4287 = vmatprep.subr.mxu0 0.0
      %4288 = vmatpush1.msra.mxu0 0.0
      %4289 = vmatprep.subr.mxu0 0.0
      %4290 = vmatpush1.msra.mxu0 0.0
      %4291 = vmatprep.subr.mxu0 0.0
      %4292 = vmatpush1.msra.mxu0 0.0
      %4293 = vmatprep.subr.mxu0 0.0
      %4294 = vmatpush1.msra.mxu0 0.0
      %4295 = vmatprep.subr.mxu0 0.0
      %4296 = vmatpush1.msra.mxu0 0.0
      %4297 = vmatprep.subr.mxu0 0.0
      %4298 = vmatpush1.msra.mxu0 0.0
      %4299 = vmatprep.subr.mxu0 0.0
      %4300 = vmatpush1.msra.mxu0 0.0
      %4301 = vmatprep.subr.mxu0 0.0
      %4302 = vmatpush1.msra.mxu0 0.0
      %4303 = vmatprep.subr.mxu0 0.0
      %4304 = vmatpush1.msra.mxu0 0.0
      %4305 = vmatprep.subr.mxu0 0.0
      %4306 = vmatpush1.msra.mxu0 0.0
      %4307 = vmatprep.subr.mxu0 0.0
      %4308 = vmatpush1.msra.mxu0 0.0
      %4309 = vmatprep.subr.mxu0 0.0
      %4310 = vmatpush1.msra.mxu0 0.0
      %4311 = vmatprep.subr.mxu0 0.0
      %4312 = vmatpush1.msra.mxu0 0.0
      %4313 = vmatprep.subr.mxu0 0.0
      %4314 = vmatpush1.msra.mxu0 0.0
      %4315 = vmatprep.subr.mxu0 0.0
      %4316 = vmatpush1.msra.mxu0 0.0
      %4317 = vmatprep.subr.mxu0 0.0
      %4318 = vmatpush1.msra.mxu0 0.0
      %4319 = vmatprep.subr.mxu0 0.0
      %4320 = vmatpush1.msra.mxu0 0.0
      %4321 = vmatprep.subr.mxu0 0.0
      %4322 = vmatpush1.msra.mxu0 0.0
      %4323 = vmatprep.subr.mxu0 0.0
      %4324 = vmatpush1.msra.mxu0 0.0
      %4325 = vmatprep.subr.mxu0 0.0
      %4326 = vmatpush1.msra.mxu0 0.0
      %4327 = vmatprep.subr.mxu0 0.0
      %4328 = vmatpush1.msra.mxu0 0.0
      %4329 = vmatprep.subr.mxu0 0.0
      %4330 = vmatpush1.msra.mxu0 0.0
      %4331 = vmatprep.subr.mxu0 0.0
      %4332 = vmatpush1.msra.mxu0 0.0
      %4333 = vmatprep.subr.mxu0 0.0
      %4334 = vmatpush1.msra.mxu0 0.0
      %4335 = vmatprep.mubr.f32.mxu0 0.0
      %4336 = vmatmul.mubr.f32.gmra.mrb[0].mxu0 %v4266
      %v4337 = vpop.f32.mrb[0].mxu0
      %v4338 = vadd.f32 0.0, %v4337
      %v4339 = vpop.f32.mrb[0].mxu0
      %v4340 = vadd.f32 0.0, %v4339
      %4341 = vmatprep.mubr.f32.mxu0 0.0
      %4342 = vmatmul.mubr.f32.gmra.mrb[0].mxu0 %v4269
      %v4343 = vpop.f32.mrb[0].mxu0
      %v4344 = vadd.f32 0.0, %v4343
      %v4345 = vpop.f32.mrb[0].mxu0
      %v4346 = vadd.f32 0.0, %v4345
      %4347 = vdwg.mxu0
      %4348 = vmatprep.subr.mxu0 0.0
      %4349 = vmatpush1.msra.mxu0 %v4255
      %4350 = vmatprep.subr.mxu0 0.0
      %4351 = vmatpush1.msra.mxu0 %v4258
      %4352 = vmatprep.subr.mxu0 0.0
      %4353 = vmatpush1.msra.mxu0 0.0
      %4354 = vmatprep.subr.mxu0 0.0
      %4355 = vmatpush1.msra.mxu0 0.0
      %4356 = vmatprep.subr.mxu0 0.0
      %4357 = vmatpush1.msra.mxu0 0.0
      %4358 = vmatprep.subr.mxu0 0.0
      %4359 = vmatpush1.msra.mxu0 0.0
      %4360 = vmatprep.subr.mxu0 0.0
      %4361 = vmatpush1.msra.mxu0 0.0
      %4362 = vmatprep.subr.mxu0 0.0
      %4363 = vmatpush1.msra.mxu0 0.0
      %4364 = vmatprep.subr.mxu0 0.0
      %4365 = vmatpush1.msra.mxu0 0.0
      %4366 = vmatprep.subr.mxu0 0.0
      %4367 = vmatpush1.msra.mxu0 0.0
      %4368 = vmatprep.subr.mxu0 0.0
      %4369 = vmatpush1.msra.mxu0 0.0
      %4370 = vmatprep.subr.mxu0 0.0
      %4371 = vmatpush1.msra.mxu0 0.0
      %4372 = vmatprep.subr.mxu0 0.0
      %4373 = vmatpush1.msra.mxu0 0.0
      %4374 = vmatprep.subr.mxu0 0.0
      %4375 = vmatpush1.msra.mxu0 0.0
      %4376 = vmatprep.subr.mxu0 0.0
      %4377 = vmatpush1.msra.mxu0 0.0
      %4378 = vmatprep.subr.mxu0 0.0
      %4379 = vmatpush1.msra.mxu0 0.0
      %4380 = vmatprep.subr.mxu0 0.0
      %4381 = vmatpush1.msra.mxu0 0.0
      %4382 = vmatprep.subr.mxu0 0.0
      %4383 = vmatpush1.msra.mxu0 0.0
      %4384 = vmatprep.subr.mxu0 0.0
      %4385 = vmatpush1.msra.mxu0 0.0
      %4386 = vmatprep.subr.mxu0 0.0
      %4387 = vmatpush1.msra.mxu0 0.0
      %4388 = vmatprep.subr.mxu0 0.0
      %4389 = vmatpush1.msra.mxu0 0.0
      %4390 = vmatprep.subr.mxu0 0.0
      %4391 = vmatpush1.msra.mxu0 0.0
      %4392 = vmatprep.subr.mxu0 0.0
      %4393 = vmatpush1.msra.mxu0 0.0
      %4394 = vmatprep.subr.mxu0 0.0
      %4395 = vmatpush1.msra.mxu0 0.0
      %4396 = vmatprep.subr.mxu0 0.0
      %4397 = vmatpush1.msra.mxu0 0.0
      %4398 = vmatprep.subr.mxu0 0.0
      %4399 = vmatpush1.msra.mxu0 0.0
      %4400 = vmatprep.subr.mxu0 0.0
      %4401 = vmatpush1.msra.mxu0 0.0
      %4402 = vmatprep.subr.mxu0 0.0
      %4403 = vmatpush1.msra.mxu0 0.0
      %4404 = vmatprep.subr.mxu0 0.0
      %4405 = vmatpush1.msra.mxu0 0.0
      %4406 = vmatprep.subr.mxu0 0.0
      %4407 = vmatpush1.msra.mxu0 0.0
      %4408 = vmatprep.subr.mxu0 0.0
      %4409 = vmatpush1.msra.mxu0 0.0
      %4410 = vmatprep.subr.mxu0 0.0
      %4411 = vmatpush1.msra.mxu0 0.0
      %4412 = vmatprep.mubr.f32.mxu0 0.0
      %4413 = vmatmul.mubr.f32.gmra.mrb[0].mxu0 %v4266
      %v4414 = vpop.f32.mrb[0].mxu0
      %v4415 = vadd.f32 0.0, %v4414
      %v4416 = vpop.f32.mrb[0].mxu0
      %4417 = vmatprep.mubr.f32.mxu0 0.0
      %4418 = vmatmul.mubr.f32.gmra.mrb[0].mxu0 %v4269
      %v4419 = vpop.f32.mrb[0].mxu0
      %v4420 = vadd.f32 0.0, %v4419
      %v4421 = vpop.f32.mrb[0].mxu0
      %4422 = vdwg.mxu0
      %4423 = vrot.lane.b32.xlu0 %v4216, 19
      %v4424 = vpop.permute.xlu0 %4423
      %4425 = vrot.lane.b32.xlu0 %v4217, 19
      %v4426 = vpop.permute.xlu0 %4425
      %4427 = vrot.lane.b32.xlu0 %v4218, 19
      %v4428 = vpop.permute.xlu0 %4427
      %4429 = vrot.lane.b32.xlu0 %v4219, 19
      %v4430 = vpop.permute.xlu0 %4429
      %4431 = vrot.lane.b32.xlu0 %v4220, 19
      %v4432 = vpop.permute.xlu0 %4431
      %4433 = vrot.lane.b32.xlu0 %v4221, 19
      %v4434 = vpop.permute.xlu0 %4433
      %4435 = vrot.lane.b32.xlu0 %v4222, 19
      %v4436 = vpop.permute.xlu0 %4435
      %4437 = vrot.lane.b32.xlu0 %v4223, 19
      %v4438 = vpop.permute.xlu0 %4437
      %v4439 = vsel %vm737, %v4424, %v4426
      %v4440 = vsel %vm737, %v4426, %v4428
      %v4441 = vsel %vm737, %v4428, %v4430
      %v4442 = vsel %vm737, %v4432, %v4434
      %v4443 = vsel %vm737, %v4434, %v4436
      %v4444 = vsel %vm737, %v4436, %v4438
      %v4452 = vsel %vm3789, %v4224, 0
      %v4455 = vsel %vm3789, %v4225, 0
      %4457 = vmatprep.subr.mxu0 %v4440
      %4458 = vmatpush1.msra.mxu0 %v4439
      %4459 = vmatprep.subr.mxu0 %v4443
      %4460 = vmatpush1.msra.mxu0 %v4442
      %4461 = vmatprep.subr.mxu0 0.0
      %4462 = vmatpush1.msra.mxu0 0.0
      %4463 = vmatprep.subr.mxu0 0.0
      %4464 = vmatpush1.msra.mxu0 0.0
      %4465 = vmatprep.subr.mxu0 0.0
      %4466 = vmatpush1.msra.mxu0 0.0
      %4467 = vmatprep.subr.mxu0 0.0
      %4468 = vmatpush1.msra.mxu0 0.0
      %4469 = vmatprep.subr.mxu0 0.0
      %4470 = vmatpush1.msra.mxu0 0.0
      %4471 = vmatprep.subr.mxu0 0.0
      %4472 = vmatpush1.msra.mxu0 0.0
      %4473 = vmatprep.subr.mxu0 0.0
      %4474 = vmatpush1.msra.mxu0 0.0
      %4475 = vmatprep.subr.mxu0 0.0
      %4476 = vmatpush1.msra.mxu0 0.0
      %4477 = vmatprep.subr.mxu0 0.0
      %4478 = vmatpush1.msra.mxu0 0.0
      %4479 = vmatprep.subr.mxu0 0.0
      %4480 = vmatpush1.msra.mxu0 0.0
      %4481 = vmatprep.subr.mxu0 0.0
      %4482 = vmatpush1.msra.mxu0 0.0
      %4483 = vmatprep.subr.mxu0 0.0
      %4484 = vmatpush1.msra.mxu0 0.0
      %4485 = vmatprep.subr.mxu0 0.0
      %4486 = vmatpush1.msra.mxu0 0.0
      %4487 = vmatprep.subr.mxu0 0.0
      %4488 = vmatpush1.msra.mxu0 0.0
      %4489 = vmatprep.subr.mxu0 0.0
      %4490 = vmatpush1.msra.mxu0 0.0
      %4491 = vmatprep.subr.mxu0 0.0
      %4492 = vmatpush1.msra.mxu0 0.0
      %4493 = vmatprep.subr.mxu0 0.0
      %4494 = vmatpush1.msra.mxu0 0.0
      %4495 = vmatprep.subr.mxu0 0.0
      %4496 = vmatpush1.msra.mxu0 0.0
      %4497 = vmatprep.subr.mxu0 0.0
      %4498 = vmatpush1.msra.mxu0 0.0
      %4499 = vmatprep.subr.mxu0 0.0
      %4500 = vmatpush1.msra.mxu0 0.0
      %4501 = vmatprep.subr.mxu0 0.0
      %4502 = vmatpush1.msra.mxu0 0.0
      %4503 = vmatprep.subr.mxu0 0.0
      %4504 = vmatpush1.msra.mxu0 0.0
      %4505 = vmatprep.subr.mxu0 0.0
      %4506 = vmatpush1.msra.mxu0 0.0
      %4507 = vmatprep.subr.mxu0 0.0
      %4508 = vmatpush1.msra.mxu0 0.0
      %4509 = vmatprep.subr.mxu0 0.0
      %4510 = vmatpush1.msra.mxu0 0.0
      %4511 = vmatprep.subr.mxu0 0.0
      %4512 = vmatpush1.msra.mxu0 0.0
      %4513 = vmatprep.subr.mxu0 0.0
      %4514 = vmatpush1.msra.mxu0 0.0
      %4515 = vmatprep.subr.mxu0 0.0
      %4516 = vmatpush1.msra.mxu0 0.0
      %4517 = vmatprep.subr.mxu0 0.0
      %4518 = vmatpush1.msra.mxu0 0.0
      %4519 = vmatprep.subr.mxu0 0.0
      %4520 = vmatpush1.msra.mxu0 0.0
      %4521 = vmatprep.mubr.f32.mxu0 0.0
      %4522 = vmatmul.mubr.f32.gmra.mrb[0].mxu0 %v4452
      %v4523 = vpop.f32.mrb[0].mxu0
      %v4524 = vadd.f32 %v4338, %v4523
      %v4525 = vpop.f32.mrb[0].mxu0
      %v4526 = vadd.f32 %v4340, %v4525
      %4527 = vmatprep.mubr.f32.mxu0 0.0
      %4528 = vmatmul.mubr.f32.gmra.mrb[0].mxu0 %v4455
      %v4529 = vpop.f32.mrb[0].mxu0
      %v4530 = vadd.f32 %v4344, %v4529
      %v4531 = vpop.f32.mrb[0].mxu0
      %v4532 = vadd.f32 %v4346, %v4531
      %4533 = vdwg.mxu0
      %4534 = vmatprep.subr.mxu0 0.0
      %4535 = vmatpush1.msra.mxu0 %v4441
      %4536 = vmatprep.subr.mxu0 0.0
      %4537 = vmatpush1.msra.mxu0 %v4444
      %4538 = vmatprep.subr.mxu0 0.0
      %4539 = vmatpush1.msra.mxu0 0.0
      %4540 = vmatprep.subr.mxu0 0.0
      %4541 = vmatpush1.msra.mxu0 0.0
      %4542 = vmatprep.subr.mxu0 0.0
      %4543 = vmatpush1.msra.mxu0 0.0
      %4544 = vmatprep.subr.mxu0 0.0
      %4545 = vmatpush1.msra.mxu0 0.0
      %4546 = vmatprep.subr.mxu0 0.0
      %4547 = vmatpush1.msra.mxu0 0.0
      %4548 = vmatprep.subr.mxu0 0.0
      %4549 = vmatpush1.msra.mxu0 0.0
      %4550 = vmatprep.subr.mxu0 0.0
      %4551 = vmatpush1.msra.mxu0 0.0
      %4552 = vmatprep.subr.mxu0 0.0
      %4553 = vmatpush1.msra.mxu0 0.0
      %4554 = vmatprep.subr.mxu0 0.0
      %4555 = vmatpush1.msra.mxu0 0.0
      %4556 = vmatprep.subr.mxu0 0.0
      %4557 = vmatpush1.msra.mxu0 0.0
      %4558 = vmatprep.subr.mxu0 0.0
      %4559 = vmatpush1.msra.mxu0 0.0
      %4560 = vmatprep.subr.mxu0 0.0
      %4561 = vmatpush1.msra.mxu0 0.0
      %4562 = vmatprep.subr.mxu0 0.0
      %4563 = vmatpush1.msra.mxu0 0.0
      %4564 = vmatprep.subr.mxu0 0.0
      %4565 = vmatpush1.msra.mxu0 0.0
      %4566 = vmatprep.subr.mxu0 0.0
      %4567 = vmatpush1.msra.mxu0 0.0
      %4568 = vmatprep.subr.mxu0 0.0
      %4569 = vmatpush1.msra.mxu0 0.0
      %4570 = vmatprep.subr.mxu0 0.0
      %4571 = vmatpush1.msra.mxu0 0.0
      %4572 = vmatprep.subr.mxu0 0.0
      %4573 = vmatpush1.msra.mxu0 0.0
      %4574 = vmatprep.subr.mxu0 0.0
      %4575 = vmatpush1.msra.mxu0 0.0
      %4576 = vmatprep.subr.mxu0 0.0
      %4577 = vmatpush1.msra.mxu0 0.0
      %4578 = vmatprep.subr.mxu0 0.0
      %4579 = vmatpush1.msra.mxu0 0.0
      %4580 = vmatprep.subr.mxu0 0.0
      %4581 = vmatpush1.msra.mxu0 0.0
      %4582 = vmatprep.subr.mxu0 0.0
      %4583 = vmatpush1.msra.mxu0 0.0
      %4584 = vmatprep.subr.mxu0 0.0
      %4585 = vmatpush1.msra.mxu0 0.0
      %4586 = vmatprep.subr.mxu0 0.0
      %4587 = vmatpush1.msra.mxu0 0.0
      %4588 = vmatprep.subr.mxu0 0.0
      %4589 = vmatpush1.msra.mxu0 0.0
      %4590 = vmatprep.subr.mxu0 0.0
      %4591 = vmatpush1.msra.mxu0 0.0
      %4592 = vmatprep.subr.mxu0 0.0
      %4593 = vmatpush1.msra.mxu0 0.0
      %4594 = vmatprep.subr.mxu0 0.0
      %4595 = vmatpush1.msra.mxu0 0.0
      %4596 = vmatprep.subr.mxu0 0.0
      %4597 = vmatpush1.msra.mxu0 0.0
      %4598 = vmatprep.mubr.f32.mxu0 0.0
      %4599 = vmatmul.mubr.f32.gmra.mrb[0].mxu0 %v4452
      %v4600 = vpop.f32.mrb[0].mxu0
      %v4601 = vadd.f32 %v4415, %v4600
      %v4602 = vpop.f32.mrb[0].mxu0
      %4603 = vmatprep.mubr.f32.mxu0 0.0
      %4604 = vmatmul.mubr.f32.gmra.mrb[0].mxu0 %v4455
      %v4605 = vpop.f32.mrb[0].mxu0
      %v4606 = vadd.f32 %v4420, %v4605
      %v4607 = vpop.f32.mrb[0].mxu0
      %4608 = vdwg.mxu0
      %s4609 = scalar_lea.vmem %s3, 32
      %v4610 = vld [vmem:[%s4609] sm:$0xff]
      %v4611 = vld [vmem:[%s4609 + $0x8] sm:$0xff]
      %4612 = vrot.lane.b32.xlu0 %v4216, 17
      %v4613 = vpop.permute.xlu0 %4612
      %4614 = vrot.lane.b32.xlu0 %v4217, 17
      %v4615 = vpop.permute.xlu0 %4614
      %4616 = vrot.lane.b32.xlu0 %v4218, 17
      %v4617 = vpop.permute.xlu0 %4616
      %4618 = vrot.lane.b32.xlu0 %v4219, 17
      %v4619 = vpop.permute.xlu0 %4618
      %4620 = vrot.lane.b32.xlu0 %v4220, 17
      %v4621 = vpop.permute.xlu0 %4620
      %4622 = vrot.lane.b32.xlu0 %v4221, 17
      %v4623 = vpop.permute.xlu0 %4622
      %4624 = vrot.lane.b32.xlu0 %v4222, 17
      %v4625 = vpop.permute.xlu0 %4624
      %4626 = vrot.lane.b32.xlu0 %v4223, 17
      %v4627 = vpop.permute.xlu0 %4626
      %v4628 = vsel %vm1075, %v4613, %v4615
      %v4629 = vsel %vm1075, %v4615, %v4617
      %v4630 = vsel %vm1075, %v4617, %v4619
      %v4631 = vsel %vm1075, %v4621, %v4623
      %v4632 = vsel %vm1075, %v4623, %v4625
      %v4633 = vsel %vm1075, %v4625, %v4627
      %v4641 = vsel %vm3789, %v4610, 0
      %v4644 = vsel %vm3789, %v4611, 0
      %4646 = vmatprep.subr.mxu0 %v4629
      %4647 = vmatpush1.msra.mxu0 %v4628
      %4648 = vmatprep.subr.mxu0 %v4632
      %4649 = vmatpush1.msra.mxu0 %v4631
      %4650 = vmatprep.subr.mxu0 0.0
      %4651 = vmatpush1.msra.mxu0 0.0
      %4652 = vmatprep.subr.mxu0 0.0
      %4653 = vmatpush1.msra.mxu0 0.0
      %4654 = vmatprep.subr.mxu0 0.0
      %4655 = vmatpush1.msra.mxu0 0.0
      %4656 = vmatprep.subr.mxu0 0.0
      %4657 = vmatpush1.msra.mxu0 0.0
      %4658 = vmatprep.subr.mxu0 0.0
      %4659 = vmatpush1.msra.mxu0 0.0
      %4660 = vmatprep.subr.mxu0 0.0
      %4661 = vmatpush1.msra.mxu0 0.0
      %4662 = vmatprep.subr.mxu0 0.0
      %4663 = vmatpush1.msra.mxu0 0.0
      %4664 = vmatprep.subr.mxu0 0.0
      %4665 = vmatpush1.msra.mxu0 0.0
      %4666 = vmatprep.subr.mxu0 0.0
      %4667 = vmatpush1.msra.mxu0 0.0
      %4668 = vmatprep.subr.mxu0 0.0
      %4669 = vmatpush1.msra.mxu0 0.0
      %4670 = vmatprep.subr.mxu0 0.0
      %4671 = vmatpush1.msra.mxu0 0.0
      %4672 = vmatprep.subr.mxu0 0.0
      %4673 = vmatpush1.msra.mxu0 0.0
      %4674 = vmatprep.subr.mxu0 0.0
      %4675 = vmatpush1.msra.mxu0 0.0
      %4676 = vmatprep.subr.mxu0 0.0
      %4677 = vmatpush1.msra.mxu0 0.0
      %4678 = vmatprep.subr.mxu0 0.0
      %4679 = vmatpush1.msra.mxu0 0.0
      %4680 = vmatprep.subr.mxu0 0.0
      %4681 = vmatpush1.msra.mxu0 0.0
      %4682 = vmatprep.subr.mxu0 0.0
      %4683 = vmatpush1.msra.mxu0 0.0
      %4684 = vmatprep.subr.mxu0 0.0
      %4685 = vmatpush1.msra.mxu0 0.0
      %4686 = vmatprep.subr.mxu0 0.0
      %4687 = vmatpush1.msra.mxu0 0.0
      %4688 = vmatprep.subr.mxu0 0.0
      %4689 = vmatpush1.msra.mxu0 0.0
      %4690 = vmatprep.subr.mxu0 0.0
      %4691 = vmatpush1.msra.mxu0 0.0
      %4692 = vmatprep.subr.mxu0 0.0
      %4693 = vmatpush1.msra.mxu0 0.0
      %4694 = vmatprep.subr.mxu0 0.0
      %4695 = vmatpush1.msra.mxu0 0.0
      %4696 = vmatprep.subr.mxu0 0.0
      %4697 = vmatpush1.msra.mxu0 0.0
      %4698 = vmatprep.subr.mxu0 0.0
      %4699 = vmatpush1.msra.mxu0 0.0
      %4700 = vmatprep.subr.mxu0 0.0
      %4701 = vmatpush1.msra.mxu0 0.0
      %4702 = vmatprep.subr.mxu0 0.0
      %4703 = vmatpush1.msra.mxu0 0.0
      %4704 = vmatprep.subr.mxu0 0.0
      %4705 = vmatpush1.msra.mxu0 0.0
      %4706 = vmatprep.subr.mxu0 0.0
      %4707 = vmatpush1.msra.mxu0 0.0
      %4708 = vmatprep.subr.mxu0 0.0
      %4709 = vmatpush1.msra.mxu0 0.0
      %4710 = vmatprep.mubr.f32.mxu0 0.0
      %4711 = vmatmul.mubr.f32.gmra.mrb[0].mxu0 %v4641
      %v4712 = vpop.f32.mrb[0].mxu0
      %v4713 = vadd.f32 0.0, %v4712
      %v4714 = vpop.f32.mrb[0].mxu0
      %v4715 = vadd.f32 0.0, %v4714
      %4716 = vmatprep.mubr.f32.mxu0 0.0
      %4717 = vmatmul.mubr.f32.gmra.mrb[0].mxu0 %v4644
      %v4718 = vpop.f32.mrb[0].mxu0
      %v4719 = vadd.f32 0.0, %v4718
      %v4720 = vpop.f32.mrb[0].mxu0
      %v4721 = vadd.f32 0.0, %v4720
      %4722 = vdwg.mxu0
      %4723 = vmatprep.subr.mxu0 0.0
      %4724 = vmatpush1.msra.mxu0 %v4630
      %4725 = vmatprep.subr.mxu0 0.0
      %4726 = vmatpush1.msra.mxu0 %v4633
      %4727 = vmatprep.subr.mxu0 0.0
      %4728 = vmatpush1.msra.mxu0 0.0
      %4729 = vmatprep.subr.mxu0 0.0
      %4730 = vmatpush1.msra.mxu0 0.0
      %4731 = vmatprep.subr.mxu0 0.0
      %4732 = vmatpush1.msra.mxu0 0.0
      %4733 = vmatprep.subr.mxu0 0.0
      %4734 = vmatpush1.msra.mxu0 0.0
      %4735 = vmatprep.subr.mxu0 0.0
      %4736 = vmatpush1.msra.mxu0 0.0
      %4737 = vmatprep.subr.mxu0 0.0
      %4738 = vmatpush1.msra.mxu0 0.0
      %4739 = vmatprep.subr.mxu0 0.0
      %4740 = vmatpush1.msra.mxu0 0.0
      %4741 = vmatprep.subr.mxu0 0.0
      %4742 = vmatpush1.msra.mxu0 0.0
      %4743 = vmatprep.subr.mxu0 0.0
      %4744 = vmatpush1.msra.mxu0 0.0
      %4745 = vmatprep.subr.mxu0 0.0
      %4746 = vmatpush1.msra.mxu0 0.0
      %4747 = vmatprep.subr.mxu0 0.0
      %4748 = vmatpush1.msra.mxu0 0.0
      %4749 = vmatprep.subr.mxu0 0.0
      %4750 = vmatpush1.msra.mxu0 0.0
      %4751 = vmatprep.subr.mxu0 0.0
      %4752 = vmatpush1.msra.mxu0 0.0
      %4753 = vmatprep.subr.mxu0 0.0
      %4754 = vmatpush1.msra.mxu0 0.0
      %4755 = vmatprep.subr.mxu0 0.0
      %4756 = vmatpush1.msra.mxu0 0.0
      %4757 = vmatprep.subr.mxu0 0.0
      %4758 = vmatpush1.msra.mxu0 0.0
      %4759 = vmatprep.subr.mxu0 0.0
      %4760 = vmatpush1.msra.mxu0 0.0
      %4761 = vmatprep.subr.mxu0 0.0
      %4762 = vmatpush1.msra.mxu0 0.0
      %4763 = vmatprep.subr.mxu0 0.0
      %4764 = vmatpush1.msra.mxu0 0.0
      %4765 = vmatprep.subr.mxu0 0.0
      %4766 = vmatpush1.msra.mxu0 0.0
      %4767 = vmatprep.subr.mxu0 0.0
      %4768 = vmatpush1.msra.mxu0 0.0
      %4769 = vmatprep.subr.mxu0 0.0
      %4770 = vmatpush1.msra.mxu0 0.0
      %4771 = vmatprep.subr.mxu0 0.0
      %4772 = vmatpush1.msra.mxu0 0.0
      %4773 = vmatprep.subr.mxu0 0.0
      %4774 = vmatpush1.msra.mxu0 0.0
      %4775 = vmatprep.subr.mxu0 0.0
      %4776 = vmatpush1.msra.mxu0 0.0
      %4777 = vmatprep.subr.mxu0 0.0
      %4778 = vmatpush1.msra.mxu0 0.0
      %4779 = vmatprep.subr.mxu0 0.0
      %4780 = vmatpush1.msra.mxu0 0.0
      %4781 = vmatprep.subr.mxu0 0.0
      %4782 = vmatpush1.msra.mxu0 0.0
      %4783 = vmatprep.subr.mxu0 0.0
      %4784 = vmatpush1.msra.mxu0 0.0
      %4785 = vmatprep.subr.mxu0 0.0
      %4786 = vmatpush1.msra.mxu0 0.0
      %4787 = vmatprep.mubr.f32.mxu0 0.0
      %4788 = vmatmul.mubr.f32.gmra.mrb[0].mxu0 %v4641
      %v4789 = vpop.f32.mrb[0].mxu0
      %v4790 = vadd.f32 0.0, %v4789
      %v4791 = vpop.f32.mrb[0].mxu0
      %4792 = vmatprep.mubr.f32.mxu0 0.0
      %4793 = vmatmul.mubr.f32.gmra.mrb[0].mxu0 %v4644
      %v4794 = vpop.f32.mrb[0].mxu0
      %v4795 = vadd.f32 0.0, %v4794
      %v4796 = vpop.f32.mrb[0].mxu0
      %4797 = vdwg.mxu0
      %v4798 = vadd.f32 %v4524, %v4713
      %v4799 = vadd.f32 %v4526, %v4715
      %v4800 = vadd.f32 %v4601, %v4790
      %v4801 = vadd.f32 %v4530, %v4719
      %v4802 = vadd.f32 %v4532, %v4721
      %v4803 = vadd.f32 %v4606, %v4795
      %s4804 = scalar_lea.vmem %s3, 48
      %v4805 = vld [vmem:[%s4804] sm:$0xff]
      %v4806 = vld [vmem:[%s4804 + $0x8] sm:$0xff]
      %4807 = vrot.lane.b32.xlu0 %v4216, 1
      %v4808 = vpop.permute.xlu0 %4807
      %4809 = vrot.lane.b32.xlu0 %v4217, 1
      %v4810 = vpop.permute.xlu0 %4809
      %4811 = vrot.lane.b32.xlu0 %v4218, 1
      %v4812 = vpop.permute.xlu0 %4811
      %4813 = vrot.lane.b32.xlu0 %v4219, 1
      %v4814 = vpop.permute.xlu0 %4813
      %4815 = vrot.lane.b32.xlu0 %v4220, 1
      %v4816 = vpop.permute.xlu0 %4815
      %4817 = vrot.lane.b32.xlu0 %v4221, 1
      %v4818 = vpop.permute.xlu0 %4817
      %4819 = vrot.lane.b32.xlu0 %v4222, 1
      %v4820 = vpop.permute.xlu0 %4819
      %4821 = vrot.lane.b32.xlu0 %v4223, 1
      %v4822 = vpop.permute.xlu0 %4821
      %v4823 = vsel %vm1443, %v4808, %v4810
      %v4824 = vsel %vm1443, %v4810, %v4812
      %v4825 = vsel %vm1443, %v4812, %v4814
      %v4826 = vsel %vm1443, %v4816, %v4818
      %v4827 = vsel %vm1443, %v4818, %v4820
      %v4828 = vsel %vm1443, %v4820, %v4822
      %v4836 = vsel %vm3789, %v4805, 0
      %v4839 = vsel %vm3789, %v4806, 0
      %4841 = vmatprep.subr.mxu0 %v4824
      %4842 = vmatpush1.msra.mxu0 %v4823
      %4843 = vmatprep.subr.mxu0 %v4827
      %4844 = vmatpush1.msra.mxu0 %v4826
      %4845 = vmatprep.subr.mxu0 0.0
      %4846 = vmatpush1.msra.mxu0 0.0
      %4847 = vmatprep.subr.mxu0 0.0
      %4848 = vmatpush1.msra.mxu0 0.0
      %4849 = vmatprep.subr.mxu0 0.0
      %4850 = vmatpush1.msra.mxu0 0.0
      %4851 = vmatprep.subr.mxu0 0.0
      %4852 = vmatpush1.msra.mxu0 0.0
      %4853 = vmatprep.subr.mxu0 0.0
      %4854 = vmatpush1.msra.mxu0 0.0
      %4855 = vmatprep.subr.mxu0 0.0
      %4856 = vmatpush1.msra.mxu0 0.0
      %4857 = vmatprep.subr.mxu0 0.0
      %4858 = vmatpush1.msra.mxu0 0.0
      %4859 = vmatprep.subr.mxu0 0.0
      %4860 = vmatpush1.msra.mxu0 0.0
      %4861 = vmatprep.subr.mxu0 0.0
      %4862 = vmatpush1.msra.mxu0 0.0
      %4863 = vmatprep.subr.mxu0 0.0
      %4864 = vmatpush1.msra.mxu0 0.0
      %4865 = vmatprep.subr.mxu0 0.0
      %4866 = vmatpush1.msra.mxu0 0.0
      %4867 = vmatprep.subr.mxu0 0.0
      %4868 = vmatpush1.msra.mxu0 0.0
      %4869 = vmatprep.subr.mxu0 0.0
      %4870 = vmatpush1.msra.mxu0 0.0
      %4871 = vmatprep.subr.mxu0 0.0
      %4872 = vmatpush1.msra.mxu0 0.0
      %4873 = vmatprep.subr.mxu0 0.0
      %4874 = vmatpush1.msra.mxu0 0.0
      %4875 = vmatprep.subr.mxu0 0.0
      %4876 = vmatpush1.msra.mxu0 0.0
      %4877 = vmatprep.subr.mxu0 0.0
      %4878 = vmatpush1.msra.mxu0 0.0
      %4879 = vmatprep.subr.mxu0 0.0
      %4880 = vmatpush1.msra.mxu0 0.0
      %4881 = vmatprep.subr.mxu0 0.0
      %4882 = vmatpush1.msra.mxu0 0.0
      %4883 = vmatprep.subr.mxu0 0.0
      %4884 = vmatpush1.msra.mxu0 0.0
      %4885 = vmatprep.subr.mxu0 0.0
      %4886 = vmatpush1.msra.mxu0 0.0
      %4887 = vmatprep.subr.mxu0 0.0
      %4888 = vmatpush1.msra.mxu0 0.0
      %4889 = vmatprep.subr.mxu0 0.0
      %4890 = vmatpush1.msra.mxu0 0.0
      %4891 = vmatprep.subr.mxu0 0.0
      %4892 = vmatpush1.msra.mxu0 0.0
      %4893 = vmatprep.subr.mxu0 0.0
      %4894 = vmatpush1.msra.mxu0 0.0
      %4895 = vmatprep.subr.mxu0 0.0
      %4896 = vmatpush1.msra.mxu0 0.0
      %4897 = vmatprep.subr.mxu0 0.0
      %4898 = vmatpush1.msra.mxu0 0.0
      %4899 = vmatprep.subr.mxu0 0.0
      %4900 = vmatpush1.msra.mxu0 0.0
      %4901 = vmatprep.subr.mxu0 0.0
      %4902 = vmatpush1.msra.mxu0 0.0
      %4903 = vmatprep.subr.mxu0 0.0
      %4904 = vmatpush1.msra.mxu0 0.0
      %4905 = vmatprep.mubr.f32.mxu0 0.0
      %4906 = vmatmul.mubr.f32.gmra.mrb[0].mxu0 %v4836
      %v4907 = vpop.f32.mrb[0].mxu0
      %v4908 = vadd.f32 0.0, %v4907
      %v4909 = vpop.f32.mrb[0].mxu0
      %v4910 = vadd.f32 0.0, %v4909
      %4911 = vmatprep.mubr.f32.mxu0 0.0
      %4912 = vmatmul.mubr.f32.gmra.mrb[0].mxu0 %v4839
      %v4913 = vpop.f32.mrb[0].mxu0
      %v4914 = vadd.f32 0.0, %v4913
      %v4915 = vpop.f32.mrb[0].mxu0
      %v4916 = vadd.f32 0.0, %v4915
      %4917 = vdwg.mxu0
      %4918 = vmatprep.subr.mxu0 0.0
      %4919 = vmatpush1.msra.mxu0 %v4825
      %4920 = vmatprep.subr.mxu0 0.0
      %4921 = vmatpush1.msra.mxu0 %v4828
      %4922 = vmatprep.subr.mxu0 0.0
      %4923 = vmatpush1.msra.mxu0 0.0
      %4924 = vmatprep.subr.mxu0 0.0
      %4925 = vmatpush1.msra.mxu0 0.0
      %4926 = vmatprep.subr.mxu0 0.0
      %4927 = vmatpush1.msra.mxu0 0.0
      %4928 = vmatprep.subr.mxu0 0.0
      %4929 = vmatpush1.msra.mxu0 0.0
      %4930 = vmatprep.subr.mxu0 0.0
      %4931 = vmatpush1.msra.mxu0 0.0
      %4932 = vmatprep.subr.mxu0 0.0
      %4933 = vmatpush1.msra.mxu0 0.0
      %4934 = vmatprep.subr.mxu0 0.0
      %4935 = vmatpush1.msra.mxu0 0.0
      %4936 = vmatprep.subr.mxu0 0.0
      %4937 = vmatpush1.msra.mxu0 0.0
      %4938 = vmatprep.subr.mxu0 0.0
      %4939 = vmatpush1.msra.mxu0 0.0
      %4940 = vmatprep.subr.mxu0 0.0
      %4941 = vmatpush1.msra.mxu0 0.0
      %4942 = vmatprep.subr.mxu0 0.0
      %4943 = vmatpush1.msra.mxu0 0.0
      %4944 = vmatprep.subr.mxu0 0.0
      %4945 = vmatpush1.msra.mxu0 0.0
      %4946 = vmatprep.subr.mxu0 0.0
      %4947 = vmatpush1.msra.mxu0 0.0
      %4948 = vmatprep.subr.mxu0 0.0
      %4949 = vmatpush1.msra.mxu0 0.0
      %4950 = vmatprep.subr.mxu0 0.0
      %4951 = vmatpush1.msra.mxu0 0.0
      %4952 = vmatprep.subr.mxu0 0.0
      %4953 = vmatpush1.msra.mxu0 0.0
      %4954 = vmatprep.subr.mxu0 0.0
      %4955 = vmatpush1.msra.mxu0 0.0
      %4956 = vmatprep.subr.mxu0 0.0
      %4957 = vmatpush1.msra.mxu0 0.0
      %4958 = vmatprep.subr.mxu0 0.0
      %4959 = vmatpush1.msra.mxu0 0.0
      %4960 = vmatprep.subr.mxu0 0.0
      %4961 = vmatpush1.msra.mxu0 0.0
      %4962 = vmatprep.subr.mxu0 0.0
      %4963 = vmatpush1.msra.mxu0 0.0
      %4964 = vmatprep.subr.mxu0 0.0
      %4965 = vmatpush1.msra.mxu0 0.0
      %4966 = vmatprep.subr.mxu0 0.0
      %4967 = vmatpush1.msra.mxu0 0.0
      %4968 = vmatprep.subr.mxu0 0.0
      %4969 = vmatpush1.msra.mxu0 0.0
      %4970 = vmatprep.subr.mxu0 0.0
      %4971 = vmatpush1.msra.mxu0 0.0
      %4972 = vmatprep.subr.mxu0 0.0
      %4973 = vmatpush1.msra.mxu0 0.0
      %4974 = vmatprep.subr.mxu0 0.0
      %4975 = vmatpush1.msra.mxu0 0.0
      %4976 = vmatprep.subr.mxu0 0.0
      %4977 = vmatpush1.msra.mxu0 0.0
      %4978 = vmatprep.subr.mxu0 0.0
      %4979 = vmatpush1.msra.mxu0 0.0
      %4980 = vmatprep.subr.mxu0 0.0
      %4981 = vmatpush1.msra.mxu0 0.0
      %4982 = vmatprep.mubr.f32.mxu0 0.0
      %4983 = vmatmul.mubr.f32.gmra.mrb[0].mxu0 %v4836
      %v4984 = vpop.f32.mrb[0].mxu0
      %v4985 = vadd.f32 0.0, %v4984
      %v4986 = vpop.f32.mrb[0].mxu0
      %4987 = vmatprep.mubr.f32.mxu0 0.0
      %4988 = vmatmul.mubr.f32.gmra.mrb[0].mxu0 %v4839
      %v4989 = vpop.f32.mrb[0].mxu0
      %v4990 = vadd.f32 0.0, %v4989
      %v4991 = vpop.f32.mrb[0].mxu0
      %4992 = vdwg.mxu0
      %v4993 = vadd.f32 %v4798, %v4908
      %v4994 = vadd.f32 %v4799, %v4910
      %v4995 = vadd.f32 %v4800, %v4985
      %v4996 = vadd.f32 %v4801, %v4914
      %v4997 = vadd.f32 %v4802, %v4916
      %v4998 = vadd.f32 %v4803, %v4990
      %s4999 = scalar_lea.vmem %s3, 64
      %v5000 = vld [vmem:[%s4999] sm:$0xff]
      %v5001 = vld [vmem:[%s4999 + $0x8] sm:$0xff]
      %v5003 = vsel %vm3789, %v5000, 0
      %v5006 = vsel %vm3789, %v5001, 0
      %5008 = vmatprep.subr.mxu0 %v4218
      %5009 = vmatpush1.msra.mxu0 %v4217
      %5010 = vmatprep.subr.mxu0 %v4222
      %5011 = vmatpush1.msra.mxu0 %v4221
      %5012 = vmatprep.subr.mxu0 0.0
      %5013 = vmatpush1.msra.mxu0 0.0
      %5014 = vmatprep.subr.mxu0 0.0
      %5015 = vmatpush1.msra.mxu0 0.0
      %5016 = vmatprep.subr.mxu0 0.0
      %5017 = vmatpush1.msra.mxu0 0.0
      %5018 = vmatprep.subr.mxu0 0.0
      %5019 = vmatpush1.msra.mxu0 0.0
      %5020 = vmatprep.subr.mxu0 0.0
      %5021 = vmatpush1.msra.mxu0 0.0
      %5022 = vmatprep.subr.mxu0 0.0
      %5023 = vmatpush1.msra.mxu0 0.0
      %5024 = vmatprep.subr.mxu0 0.0
      %5025 = vmatpush1.msra.mxu0 0.0
      %5026 = vmatprep.subr.mxu0 0.0
      %5027 = vmatpush1.msra.mxu0 0.0
      %5028 = vmatprep.subr.mxu0 0.0
      %5029 = vmatpush1.msra.mxu0 0.0
      %5030 = vmatprep.subr.mxu0 0.0
      %5031 = vmatpush1.msra.mxu0 0.0
      %5032 = vmatprep.subr.mxu0 0.0
      %5033 = vmatpush1.msra.mxu0 0.0
      %5034 = vmatprep.subr.mxu0 0.0
      %5035 = vmatpush1.msra.mxu0 0.0
      %5036 = vmatprep.subr.mxu0 0.0
      %5037 = vmatpush1.msra.mxu0 0.0
      %5038 = vmatprep.subr.mxu0 0.0
      %5039 = vmatpush1.msra.mxu0 0.0
      %5040 = vmatprep.subr.mxu0 0.0
      %5041 = vmatpush1.msra.mxu0 0.0
      %5042 = vmatprep.subr.mxu0 0.0
      %5043 = vmatpush1.msra.mxu0 0.0
      %5044 = vmatprep.subr.mxu0 0.0
      %5045 = vmatpush1.msra.mxu0 0.0
      %5046 = vmatprep.subr.mxu0 0.0
      %5047 = vmatpush1.msra.mxu0 0.0
      %5048 = vmatprep.subr.mxu0 0.0
      %5049 = vmatpush1.msra.mxu0 0.0
      %5050 = vmatprep.subr.mxu0 0.0
      %5051 = vmatpush1.msra.mxu0 0.0
      %5052 = vmatprep.subr.mxu0 0.0
      %5053 = vmatpush1.msra.mxu0 0.0
      %5054 = vmatprep.subr.mxu0 0.0
      %5055 = vmatpush1.msra.mxu0 0.0
      %5056 = vmatprep.subr.mxu0 0.0
      %5057 = vmatpush1.msra.mxu0 0.0
      %5058 = vmatprep.subr.mxu0 0.0
      %5059 = vmatpush1.msra.mxu0 0.0
      %5060 = vmatprep.subr.mxu0 0.0
      %5061 = vmatpush1.msra.mxu0 0.0
      %5062 = vmatprep.subr.mxu0 0.0
      %5063 = vmatpush1.msra.mxu0 0.0
      %5064 = vmatprep.subr.mxu0 0.0
      %5065 = vmatpush1.msra.mxu0 0.0
      %5066 = vmatprep.subr.mxu0 0.0
      %5067 = vmatpush1.msra.mxu0 0.0
      %5068 = vmatprep.subr.mxu0 0.0
      %5069 = vmatpush1.msra.mxu0 0.0
      %5070 = vmatprep.subr.mxu0 0.0
      %5071 = vmatpush1.msra.mxu0 0.0
      %5072 = vmatprep.mubr.f32.mxu0 0.0
      %5073 = vmatmul.mubr.f32.gmra.mrb[0].mxu0 %v5003
      %v5074 = vpop.f32.mrb[0].mxu0
      %v5075 = vadd.f32 0.0, %v5074
      %v5076 = vpop.f32.mrb[0].mxu0
      %v5077 = vadd.f32 0.0, %v5076
      %5078 = vmatprep.mubr.f32.mxu0 0.0
      %5079 = vmatmul.mubr.f32.gmra.mrb[0].mxu0 %v5006
      %v5080 = vpop.f32.mrb[0].mxu0
      %v5081 = vadd.f32 0.0, %v5080
      %v5082 = vpop.f32.mrb[0].mxu0
      %v5083 = vadd.f32 0.0, %v5082
      %5084 = vdwg.mxu0
      %5085 = vmatprep.subr.mxu0 0.0
      %5086 = vmatpush1.msra.mxu0 %v4219
      %5087 = vmatprep.subr.mxu0 0.0
      %5088 = vmatpush1.msra.mxu0 %v4223
      %5089 = vmatprep.subr.mxu0 0.0
      %5090 = vmatpush1.msra.mxu0 0.0
      %5091 = vmatprep.subr.mxu0 0.0
      %5092 = vmatpush1.msra.mxu0 0.0
      %5093 = vmatprep.subr.mxu0 0.0
      %5094 = vmatpush1.msra.mxu0 0.0
      %5095 = vmatprep.subr.mxu0 0.0
      %5096 = vmatpush1.msra.mxu0 0.0
      %5097 = vmatprep.subr.mxu0 0.0
      %5098 = vmatpush1.msra.mxu0 0.0
      %5099 = vmatprep.subr.mxu0 0.0
      %5100 = vmatpush1.msra.mxu0 0.0
      %5101 = vmatprep.subr.mxu0 0.0
      %5102 = vmatpush1.msra.mxu0 0.0
      %5103 = vmatprep.subr.mxu0 0.0
      %5104 = vmatpush1.msra.mxu0 0.0
      %5105 = vmatprep.subr.mxu0 0.0
      %5106 = vmatpush1.msra.mxu0 0.0
      %5107 = vmatprep.subr.mxu0 0.0
      %5108 = vmatpush1.msra.mxu0 0.0
      %5109 = vmatprep.subr.mxu0 0.0
      %5110 = vmatpush1.msra.mxu0 0.0
      %5111 = vmatprep.subr.mxu0 0.0
      %5112 = vmatpush1.msra.mxu0 0.0
      %5113 = vmatprep.subr.mxu0 0.0
      %5114 = vmatpush1.msra.mxu0 0.0
      %5115 = vmatprep.subr.mxu0 0.0
      %5116 = vmatpush1.msra.mxu0 0.0
      %5117 = vmatprep.subr.mxu0 0.0
      %5118 = vmatpush1.msra.mxu0 0.0
      %5119 = vmatprep.subr.mxu0 0.0
      %5120 = vmatpush1.msra.mxu0 0.0
      %5121 = vmatprep.subr.mxu0 0.0
      %5122 = vmatpush1.msra.mxu0 0.0
      %5123 = vmatprep.subr.mxu0 0.0
      %5124 = vmatpush1.msra.mxu0 0.0
      %5125 = vmatprep.subr.mxu0 0.0
      %5126 = vmatpush1.msra.mxu0 0.0
      %5127 = vmatprep.subr.mxu0 0.0
      %5128 = vmatpush1.msra.mxu0 0.0
      %5129 = vmatprep.subr.mxu0 0.0
      %5130 = vmatpush1.msra.mxu0 0.0
      %5131 = vmatprep.subr.mxu0 0.0
      %5132 = vmatpush1.msra.mxu0 0.0
      %5133 = vmatprep.subr.mxu0 0.0
      %5134 = vmatpush1.msra.mxu0 0.0
      %5135 = vmatprep.subr.mxu0 0.0
      %5136 = vmatpush1.msra.mxu0 0.0
      %5137 = vmatprep.subr.mxu0 0.0
      %5138 = vmatpush1.msra.mxu0 0.0
      %5139 = vmatprep.subr.mxu0 0.0
      %5140 = vmatpush1.msra.mxu0 0.0
      %5141 = vmatprep.subr.mxu0 0.0
      %5142 = vmatpush1.msra.mxu0 0.0
      %5143 = vmatprep.subr.mxu0 0.0
      %5144 = vmatpush1.msra.mxu0 0.0
      %5145 = vmatprep.subr.mxu0 0.0
      %5146 = vmatpush1.msra.mxu0 0.0
      %5147 = vmatprep.subr.mxu0 0.0
      %5148 = vmatpush1.msra.mxu0 0.0
      %5149 = vmatprep.mubr.f32.mxu0 0.0
      %5150 = vmatmul.mubr.f32.gmra.mrb[0].mxu0 %v5003
      %v5151 = vpop.f32.mrb[0].mxu0
      %v5152 = vadd.f32 0.0, %v5151
      %v5153 = vpop.f32.mrb[0].mxu0
      %5154 = vmatprep.mubr.f32.mxu0 0.0
      %5155 = vmatmul.mubr.f32.gmra.mrb[0].mxu0 %v5006
      %v5156 = vpop.f32.mrb[0].mxu0
      %v5157 = vadd.f32 0.0, %v5156
      %v5158 = vpop.f32.mrb[0].mxu0
      %5159 = vdwg.mxu0
      %v5160 = vadd.f32 %v4993, %v5075
      %v5161 = vadd.f32 %v4994, %v5077
      %v5162 = vadd.f32 %v4995, %v5152
      %v5163 = vadd.f32 %v4996, %v5081
      %v5164 = vadd.f32 %v4997, %v5083
      %v5165 = vadd.f32 %v4998, %v5157
      %v5166 = vld [vmem:[#allocation2 + $0x8] sm:$0xff]
      %v5167 = vld [vmem:[#allocation2 + $0x10] sm:$0xff]
      %v5168 = vld [vmem:[#allocation2 + $0x18] sm:$0xff]
      %v5169 = vld [vmem:[#allocation2 + $0x20] sm:$0xff]
      %v5170 = vld [vmem:[#allocation2 + $0x30] sm:$0xff]
      %v5171 = vld [vmem:[#allocation2 + $0x38] sm:$0xff]
      %v5172 = vld [vmem:[#allocation2 + $0x40] sm:$0xff]
      %v5173 = vld [vmem:[#allocation2 + $0x48] sm:$0xff]
      %s5174 = scalar_lea.vmem %s3, 80
      %v5175 = vld [vmem:[%s5174] sm:$0xff]
      %v5176 = vld [vmem:[%s5174 + $0x8] sm:$0xff]
      %5185 = vrot.lane.b32.xlu0 %v5166, 127
      %v5186 = vpop.permute.xlu0 %5185
      %5187 = vrot.lane.b32.xlu0 %v5167, 127
      %v5188 = vpop.permute.xlu0 %5187
      %5189 = vrot.lane.b32.xlu0 %v5168, 127
      %v5190 = vpop.permute.xlu0 %5189
      %5191 = vrot.lane.b32.xlu0 %v5169, 127
      %v5192 = vpop.permute.xlu0 %5191
      %5193 = vrot.lane.b32.xlu0 %v5170, 127
      %v5194 = vpop.permute.xlu0 %5193
      %5195 = vrot.lane.b32.xlu0 %v5171, 127
      %v5196 = vpop.permute.xlu0 %5195
      %5197 = vrot.lane.b32.xlu0 %v5172, 127
      %v5198 = vpop.permute.xlu0 %5197
      %5199 = vrot.lane.b32.xlu0 %v5173, 127
      %v5200 = vpop.permute.xlu0 %5199
      %v5201 = vsel %vm2154, %v5186, %v5188
      %v5202 = vsel %vm2154, %v5188, %v5190
      %v5203 = vsel %vm2154, %v5190, %v5192
      %v5204 = vsel %vm2154, %v5194, %v5196
      %v5205 = vsel %vm2154, %v5196, %v5198
      %v5206 = vsel %vm2154, %v5198, %v5200
      %v5214 = vsel %vm3789, %v5175, 0
      %v5217 = vsel %vm3789, %v5176, 0
      %5219 = vmatprep.subr.mxu0 %v5202
      %5220 = vmatpush1.msra.mxu0 %v5201
      %5221 = vmatprep.subr.mxu0 %v5205
      %5222 = vmatpush1.msra.mxu0 %v5204
      %5223 = vmatprep.subr.mxu0 0.0
      %5224 = vmatpush1.msra.mxu0 0.0
      %5225 = vmatprep.subr.mxu0 0.0
      %5226 = vmatpush1.msra.mxu0 0.0
      %5227 = vmatprep.subr.mxu0 0.0
      %5228 = vmatpush1.msra.mxu0 0.0
      %5229 = vmatprep.subr.mxu0 0.0
      %5230 = vmatpush1.msra.mxu0 0.0
      %5231 = vmatprep.subr.mxu0 0.0
      %5232 = vmatpush1.msra.mxu0 0.0
      %5233 = vmatprep.subr.mxu0 0.0
      %5234 = vmatpush1.msra.mxu0 0.0
      %5235 = vmatprep.subr.mxu0 0.0
      %5236 = vmatpush1.msra.mxu0 0.0
      %5237 = vmatprep.subr.mxu0 0.0
      %5238 = vmatpush1.msra.mxu0 0.0
      %5239 = vmatprep.subr.mxu0 0.0
      %5240 = vmatpush1.msra.mxu0 0.0
      %5241 = vmatprep.subr.mxu0 0.0
      %5242 = vmatpush1.msra.mxu0 0.0
      %5243 = vmatprep.subr.mxu0 0.0
      %5244 = vmatpush1.msra.mxu0 0.0
      %5245 = vmatprep.subr.mxu0 0.0
      %5246 = vmatpush1.msra.mxu0 0.0
      %5247 = vmatprep.subr.mxu0 0.0
      %5248 = vmatpush1.msra.mxu0 0.0
      %5249 = vmatprep.subr.mxu0 0.0
      %5250 = vmatpush1.msra.mxu0 0.0
      %5251 = vmatprep.subr.mxu0 0.0
      %5252 = vmatpush1.msra.mxu0 0.0
      %5253 = vmatprep.subr.mxu0 0.0
      %5254 = vmatpush1.msra.mxu0 0.0
      %5255 = vmatprep.subr.mxu0 0.0
      %5256 = vmatpush1.msra.mxu0 0.0
      %5257 = vmatprep.subr.mxu0 0.0
      %5258 = vmatpush1.msra.mxu0 0.0
      %5259 = vmatprep.subr.mxu0 0.0
      %5260 = vmatpush1.msra.mxu0 0.0
      %5261 = vmatprep.subr.mxu0 0.0
      %5262 = vmatpush1.msra.mxu0 0.0
      %5263 = vmatprep.subr.mxu0 0.0
      %5264 = vmatpush1.msra.mxu0 0.0
      %5265 = vmatprep.subr.mxu0 0.0
      %5266 = vmatpush1.msra.mxu0 0.0
      %5267 = vmatprep.subr.mxu0 0.0
      %5268 = vmatpush1.msra.mxu0 0.0
      %5269 = vmatprep.subr.mxu0 0.0
      %5270 = vmatpush1.msra.mxu0 0.0
      %5271 = vmatprep.subr.mxu0 0.0
      %5272 = vmatpush1.msra.mxu0 0.0
      %5273 = vmatprep.subr.mxu0 0.0
      %5274 = vmatpush1.msra.mxu0 0.0
      %5275 = vmatprep.subr.mxu0 0.0
      %5276 = vmatpush1.msra.mxu0 0.0
      %5277 = vmatprep.subr.mxu0 0.0
      %5278 = vmatpush1.msra.mxu0 0.0
      %5279 = vmatprep.subr.mxu0 0.0
      %5280 = vmatpush1.msra.mxu0 0.0
      %5281 = vmatprep.subr.mxu0 0.0
      %5282 = vmatpush1.msra.mxu0 0.0
      %5283 = vmatprep.mubr.f32.mxu0 0.0
      %5284 = vmatmul.mubr.f32.gmra.mrb[0].mxu0 %v5214
      %v5285 = vpop.f32.mrb[0].mxu0
      %v5286 = vadd.f32 0.0, %v5285
      %v5287 = vpop.f32.mrb[0].mxu0
      %v5288 = vadd.f32 0.0, %v5287
      %5289 = vmatprep.mubr.f32.mxu0 0.0
      %5290 = vmatmul.mubr.f32.gmra.mrb[0].mxu0 %v5217
      %v5291 = vpop.f32.mrb[0].mxu0
      %v5292 = vadd.f32 0.0, %v5291
      %v5293 = vpop.f32.mrb[0].mxu0
      %v5294 = vadd.f32 0.0, %v5293
      %5295 = vdwg.mxu0
      %5296 = vmatprep.subr.mxu0 0.0
      %5297 = vmatpush1.msra.mxu0 %v5203
      %5298 = vmatprep.subr.mxu0 0.0
      %5299 = vmatpush1.msra.mxu0 %v5206
      %5300 = vmatprep.subr.mxu0 0.0
      %5301 = vmatpush1.msra.mxu0 0.0
      %5302 = vmatprep.subr.mxu0 0.0
      %5303 = vmatpush1.msra.mxu0 0.0
      %5304 = vmatprep.subr.mxu0 0.0
      %5305 = vmatpush1.msra.mxu0 0.0
      %5306 = vmatprep.subr.mxu0 0.0
      %5307 = vmatpush1.msra.mxu0 0.0
      %5308 = vmatprep.subr.mxu0 0.0
      %5309 = vmatpush1.msra.mxu0 0.0
      %5310 = vmatprep.subr.mxu0 0.0
      %5311 = vmatpush1.msra.mxu0 0.0
      %5312 = vmatprep.subr.mxu0 0.0
      %5313 = vmatpush1.msra.mxu0 0.0
      %5314 = vmatprep.subr.mxu0 0.0
      %5315 = vmatpush1.msra.mxu0 0.0
      %5316 = vmatprep.subr.mxu0 0.0
      %5317 = vmatpush1.msra.mxu0 0.0
      %5318 = vmatprep.subr.mxu0 0.0
      %5319 = vmatpush1.msra.mxu0 0.0
      %5320 = vmatprep.subr.mxu0 0.0
      %5321 = vmatpush1.msra.mxu0 0.0
      %5322 = vmatprep.subr.mxu0 0.0
      %5323 = vmatpush1.msra.mxu0 0.0
      %5324 = vmatprep.subr.mxu0 0.0
      %5325 = vmatpush1.msra.mxu0 0.0
      %5326 = vmatprep.subr.mxu0 0.0
      %5327 = vmatpush1.msra.mxu0 0.0
      %5328 = vmatprep.subr.mxu0 0.0
      %5329 = vmatpush1.msra.mxu0 0.0
      %5330 = vmatprep.subr.mxu0 0.0
      %5331 = vmatpush1.msra.mxu0 0.0
      %5332 = vmatprep.subr.mxu0 0.0
      %5333 = vmatpush1.msra.mxu0 0.0
      %5334 = vmatprep.subr.mxu0 0.0
      %5335 = vmatpush1.msra.mxu0 0.0
      %5336 = vmatprep.subr.mxu0 0.0
      %5337 = vmatpush1.msra.mxu0 0.0
      %5338 = vmatprep.subr.mxu0 0.0
      %5339 = vmatpush1.msra.mxu0 0.0
      %5340 = vmatprep.subr.mxu0 0.0
      %5341 = vmatpush1.msra.mxu0 0.0
      %5342 = vmatprep.subr.mxu0 0.0
      %5343 = vmatpush1.msra.mxu0 0.0
      %5344 = vmatprep.subr.mxu0 0.0
      %5345 = vmatpush1.msra.mxu0 0.0
      %5346 = vmatprep.subr.mxu0 0.0
      %5347 = vmatpush1.msra.mxu0 0.0
      %5348 = vmatprep.subr.mxu0 0.0
      %5349 = vmatpush1.msra.mxu0 0.0
      %5350 = vmatprep.subr.mxu0 0.0
      %5351 = vmatpush1.msra.mxu0 0.0
      %5352 = vmatprep.subr.mxu0 0.0
      %5353 = vmatpush1.msra.mxu0 0.0
      %5354 = vmatprep.subr.mxu0 0.0
      %5355 = vmatpush1.msra.mxu0 0.0
      %5356 = vmatprep.subr.mxu0 0.0
      %5357 = vmatpush1.msra.mxu0 0.0
      %5358 = vmatprep.subr.mxu0 0.0
      %5359 = vmatpush1.msra.mxu0 0.0
      %5360 = vmatprep.mubr.f32.mxu0 0.0
      %5361 = vmatmul.mubr.f32.gmra.mrb[0].mxu0 %v5214
      %v5362 = vpop.f32.mrb[0].mxu0
      %v5363 = vadd.f32 0.0, %v5362
      %v5364 = vpop.f32.mrb[0].mxu0
      %5365 = vmatprep.mubr.f32.mxu0 0.0
      %5366 = vmatmul.mubr.f32.gmra.mrb[0].mxu0 %v5217
      %v5367 = vpop.f32.mrb[0].mxu0
      %v5368 = vadd.f32 0.0, %v5367
      %v5369 = vpop.f32.mrb[0].mxu0
      %5370 = vdwg.mxu0
      %v5371 = vadd.f32 %v5160, %v5286
      %v5372 = vadd.f32 %v5161, %v5288
      %v5373 = vadd.f32 %v5162, %v5363
      %v5374 = vadd.f32 %v5163, %v5292
      %v5375 = vadd.f32 %v5164, %v5294
      %v5376 = vadd.f32 %v5165, %v5368
      %s5377 = scalar_lea.vmem %s3, 96
      %v5378 = vld [vmem:[%s5377] sm:$0xff]
      %v5379 = vld [vmem:[%s5377 + $0x8] sm:$0xff]
      %5380 = vrot.lane.b32.xlu0 %v5166, 111
      %v5381 = vpop.permute.xlu0 %5380
      %5382 = vrot.lane.b32.xlu0 %v5167, 111
      %v5383 = vpop.permute.xlu0 %5382
      %5384 = vrot.lane.b32.xlu0 %v5168, 111
      %v5385 = vpop.permute.xlu0 %5384
      %5386 = vrot.lane.b32.xlu0 %v5169, 111
      %v5387 = vpop.permute.xlu0 %5386
      %5388 = vrot.lane.b32.xlu0 %v5170, 111
      %v5389 = vpop.permute.xlu0 %5388
      %5390 = vrot.lane.b32.xlu0 %v5171, 111
      %v5391 = vpop.permute.xlu0 %5390
      %5392 = vrot.lane.b32.xlu0 %v5172, 111
      %v5393 = vpop.permute.xlu0 %5392
      %5394 = vrot.lane.b32.xlu0 %v5173, 111
      %v5395 = vpop.permute.xlu0 %5394
      %v5396 = vsel %vm2522, %v5381, %v5383
      %v5397 = vsel %vm2522, %v5383, %v5385
      %v5398 = vsel %vm2522, %v5385, %v5387
      %v5399 = vsel %vm2522, %v5389, %v5391
      %v5400 = vsel %vm2522, %v5391, %v5393
      %v5401 = vsel %vm2522, %v5393, %v5395
      %v5409 = vsel %vm3789, %v5378, 0
      %v5412 = vsel %vm3789, %v5379, 0
      %5414 = vmatprep.subr.mxu0 %v5397
      %5415 = vmatpush1.msra.mxu0 %v5396
      %5416 = vmatprep.subr.mxu0 %v5400
      %5417 = vmatpush1.msra.mxu0 %v5399
      %5418 = vmatprep.subr.mxu0 0.0
      %5419 = vmatpush1.msra.mxu0 0.0
      %5420 = vmatprep.subr.mxu0 0.0
      %5421 = vmatpush1.msra.mxu0 0.0
      %5422 = vmatprep.subr.mxu0 0.0
      %5423 = vmatpush1.msra.mxu0 0.0
      %5424 = vmatprep.subr.mxu0 0.0
      %5425 = vmatpush1.msra.mxu0 0.0
      %5426 = vmatprep.subr.mxu0 0.0
      %5427 = vmatpush1.msra.mxu0 0.0
      %5428 = vmatprep.subr.mxu0 0.0
      %5429 = vmatpush1.msra.mxu0 0.0
      %5430 = vmatprep.subr.mxu0 0.0
      %5431 = vmatpush1.msra.mxu0 0.0
      %5432 = vmatprep.subr.mxu0 0.0
      %5433 = vmatpush1.msra.mxu0 0.0
      %5434 = vmatprep.subr.mxu0 0.0
      %5435 = vmatpush1.msra.mxu0 0.0
      %5436 = vmatprep.subr.mxu0 0.0
      %5437 = vmatpush1.msra.mxu0 0.0
      %5438 = vmatprep.subr.mxu0 0.0
      %5439 = vmatpush1.msra.mxu0 0.0
      %5440 = vmatprep.subr.mxu0 0.0
      %5441 = vmatpush1.msra.mxu0 0.0
      %5442 = vmatprep.subr.mxu0 0.0
      %5443 = vmatpush1.msra.mxu0 0.0
      %5444 = vmatprep.subr.mxu0 0.0
      %5445 = vmatpush1.msra.mxu0 0.0
      %5446 = vmatprep.subr.mxu0 0.0
      %5447 = vmatpush1.msra.mxu0 0.0
      %5448 = vmatprep.subr.mxu0 0.0
      %5449 = vmatpush1.msra.mxu0 0.0
      %5450 = vmatprep.subr.mxu0 0.0
      %5451 = vmatpush1.msra.mxu0 0.0
      %5452 = vmatprep.subr.mxu0 0.0
      %5453 = vmatpush1.msra.mxu0 0.0
      %5454 = vmatprep.subr.mxu0 0.0
      %5455 = vmatpush1.msra.mxu0 0.0
      %5456 = vmatprep.subr.mxu0 0.0
      %5457 = vmatpush1.msra.mxu0 0.0
      %5458 = vmatprep.subr.mxu0 0.0
      %5459 = vmatpush1.msra.mxu0 0.0
      %5460 = vmatprep.subr.mxu0 0.0
      %5461 = vmatpush1.msra.mxu0 0.0
      %5462 = vmatprep.subr.mxu0 0.0
      %5463 = vmatpush1.msra.mxu0 0.0
      %5464 = vmatprep.subr.mxu0 0.0
      %5465 = vmatpush1.msra.mxu0 0.0
      %5466 = vmatprep.subr.mxu0 0.0
      %5467 = vmatpush1.msra.mxu0 0.0
      %5468 = vmatprep.subr.mxu0 0.0
      %5469 = vmatpush1.msra.mxu0 0.0
      %5470 = vmatprep.subr.mxu0 0.0
      %5471 = vmatpush1.msra.mxu0 0.0
      %5472 = vmatprep.subr.mxu0 0.0
      %5473 = vmatpush1.msra.mxu0 0.0
      %5474 = vmatprep.subr.mxu0 0.0
      %5475 = vmatpush1.msra.mxu0 0.0
      %5476 = vmatprep.subr.mxu0 0.0
      %5477 = vmatpush1.msra.mxu0 0.0
      %5478 = vmatprep.mubr.f32.mxu0 0.0
      %5479 = vmatmul.mubr.f32.gmra.mrb[0].mxu0 %v5409
      %v5480 = vpop.f32.mrb[0].mxu0
      %v5481 = vadd.f32 0.0, %v5480
      %v5482 = vpop.f32.mrb[0].mxu0
      %v5483 = vadd.f32 0.0, %v5482
      %5484 = vmatprep.mubr.f32.mxu0 0.0
      %5485 = vmatmul.mubr.f32.gmra.mrb[0].mxu0 %v5412
      %v5486 = vpop.f32.mrb[0].mxu0
      %v5487 = vadd.f32 0.0, %v5486
      %v5488 = vpop.f32.mrb[0].mxu0
      %v5489 = vadd.f32 0.0, %v5488
      %5490 = vdwg.mxu0
      %5491 = vmatprep.subr.mxu0 0.0
      %5492 = vmatpush1.msra.mxu0 %v5398
      %5493 = vmatprep.subr.mxu0 0.0
      %5494 = vmatpush1.msra.mxu0 %v5401
      %5495 = vmatprep.subr.mxu0 0.0
      %5496 = vmatpush1.msra.mxu0 0.0
      %5497 = vmatprep.subr.mxu0 0.0
      %5498 = vmatpush1.msra.mxu0 0.0
      %5499 = vmatprep.subr.mxu0 0.0
      %5500 = vmatpush1.msra.mxu0 0.0
      %5501 = vmatprep.subr.mxu0 0.0
      %5502 = vmatpush1.msra.mxu0 0.0
      %5503 = vmatprep.subr.mxu0 0.0
      %5504 = vmatpush1.msra.mxu0 0.0
      %5505 = vmatprep.subr.mxu0 0.0
      %5506 = vmatpush1.msra.mxu0 0.0
      %5507 = vmatprep.subr.mxu0 0.0
      %5508 = vmatpush1.msra.mxu0 0.0
      %5509 = vmatprep.subr.mxu0 0.0
      %5510 = vmatpush1.msra.mxu0 0.0
      %5511 = vmatprep.subr.mxu0 0.0
      %5512 = vmatpush1.msra.mxu0 0.0
      %5513 = vmatprep.subr.mxu0 0.0
      %5514 = vmatpush1.msra.mxu0 0.0
      %5515 = vmatprep.subr.mxu0 0.0
      %5516 = vmatpush1.msra.mxu0 0.0
      %5517 = vmatprep.subr.mxu0 0.0
      %5518 = vmatpush1.msra.mxu0 0.0
      %5519 = vmatprep.subr.mxu0 0.0
      %5520 = vmatpush1.msra.mxu0 0.0
      %5521 = vmatprep.subr.mxu0 0.0
      %5522 = vmatpush1.msra.mxu0 0.0
      %5523 = vmatprep.subr.mxu0 0.0
      %5524 = vmatpush1.msra.mxu0 0.0
      %5525 = vmatprep.subr.mxu0 0.0
      %5526 = vmatpush1.msra.mxu0 0.0
      %5527 = vmatprep.subr.mxu0 0.0
      %5528 = vmatpush1.msra.mxu0 0.0
      %5529 = vmatprep.subr.mxu0 0.0
      %5530 = vmatpush1.msra.mxu0 0.0
      %5531 = vmatprep.subr.mxu0 0.0
      %5532 = vmatpush1.msra.mxu0 0.0
      %5533 = vmatprep.subr.mxu0 0.0
      %5534 = vmatpush1.msra.mxu0 0.0
      %5535 = vmatprep.subr.mxu0 0.0
      %5536 = vmatpush1.msra.mxu0 0.0
      %5537 = vmatprep.subr.mxu0 0.0
      %5538 = vmatpush1.msra.mxu0 0.0
      %5539 = vmatprep.subr.mxu0 0.0
      %5540 = vmatpush1.msra.mxu0 0.0
      %5541 = vmatprep.subr.mxu0 0.0
      %5542 = vmatpush1.msra.mxu0 0.0
      %5543 = vmatprep.subr.mxu0 0.0
      %5544 = vmatpush1.msra.mxu0 0.0
      %5545 = vmatprep.subr.mxu0 0.0
      %5546 = vmatpush1.msra.mxu0 0.0
      %5547 = vmatprep.subr.mxu0 0.0
      %5548 = vmatpush1.msra.mxu0 0.0
      %5549 = vmatprep.subr.mxu0 0.0
      %5550 = vmatpush1.msra.mxu0 0.0
      %5551 = vmatprep.subr.mxu0 0.0
      %5552 = vmatpush1.msra.mxu0 0.0
      %5553 = vmatprep.subr.mxu0 0.0
      %5554 = vmatpush1.msra.mxu0 0.0
      %5555 = vmatprep.mubr.f32.mxu0 0.0
      %5556 = vmatmul.mubr.f32.gmra.mrb[0].mxu0 %v5409
      %v5557 = vpop.f32.mrb[0].mxu0
      %v5558 = vadd.f32 0.0, %v5557
      %v5559 = vpop.f32.mrb[0].mxu0
      %5560 = vmatprep.mubr.f32.mxu0 0.0
      %5561 = vmatmul.mubr.f32.gmra.mrb[0].mxu0 %v5412
      %v5562 = vpop.f32.mrb[0].mxu0
      %v5563 = vadd.f32 0.0, %v5562
      %v5564 = vpop.f32.mrb[0].mxu0
      %5565 = vdwg.mxu0
      %v5566 = vadd.f32 %v5371, %v5481
      %v5567 = vadd.f32 %v5372, %v5483
      %v5568 = vadd.f32 %v5373, %v5558
      %v5569 = vadd.f32 %v5374, %v5487
      %v5570 = vadd.f32 %v5375, %v5489
      %v5571 = vadd.f32 %v5376, %v5563
      %s5572 = scalar_lea.vmem %s3, 112
      %v5573 = vld [vmem:[%s5572] sm:$0xff]
      %v5574 = vld [vmem:[%s5572 + $0x8] sm:$0xff]
      %5575 = vrot.lane.b32.xlu0 %v5166, 110
      %v5576 = vpop.permute.xlu0 %5575
      %5577 = vrot.lane.b32.xlu0 %v5167, 110
      %v5578 = vpop.permute.xlu0 %5577
      %5579 = vrot.lane.b32.xlu0 %v5168, 110
      %v5580 = vpop.permute.xlu0 %5579
      %5581 = vrot.lane.b32.xlu0 %v5169, 110
      %v5582 = vpop.permute.xlu0 %5581
      %5583 = vrot.lane.b32.xlu0 %v5170, 110
      %v5584 = vpop.permute.xlu0 %5583
      %5585 = vrot.lane.b32.xlu0 %v5171, 110
      %v5586 = vpop.permute.xlu0 %5585
      %5587 = vrot.lane.b32.xlu0 %v5172, 110
      %v5588 = vpop.permute.xlu0 %5587
      %5589 = vrot.lane.b32.xlu0 %v5173, 110
      %v5590 = vpop.permute.xlu0 %5589
      %v5591 = vsel %vm2890, %v5576, %v5578
      %v5592 = vsel %vm2890, %v5578, %v5580
      %v5593 = vsel %vm2890, %v5580, %v5582
      %v5594 = vsel %vm2890, %v5584, %v5586
      %v5595 = vsel %vm2890, %v5586, %v5588
      %v5596 = vsel %vm2890, %v5588, %v5590
      %v5604 = vsel %vm3789, %v5573, 0
      %v5607 = vsel %vm3789, %v5574, 0
      %5609 = vmatprep.subr.mxu0 %v5592
      %5610 = vmatpush1.msra.mxu0 %v5591
      %5611 = vmatprep.subr.mxu0 %v5595
      %5612 = vmatpush1.msra.mxu0 %v5594
      %5613 = vmatprep.subr.mxu0 0.0
      %5614 = vmatpush1.msra.mxu0 0.0
      %5615 = vmatprep.subr.mxu0 0.0
      %5616 = vmatpush1.msra.mxu0 0.0
      %5617 = vmatprep.subr.mxu0 0.0
      %5618 = vmatpush1.msra.mxu0 0.0
      %5619 = vmatprep.subr.mxu0 0.0
      %5620 = vmatpush1.msra.mxu0 0.0
      %5621 = vmatprep.subr.mxu0 0.0
      %5622 = vmatpush1.msra.mxu0 0.0
      %5623 = vmatprep.subr.mxu0 0.0
      %5624 = vmatpush1.msra.mxu0 0.0
      %5625 = vmatprep.subr.mxu0 0.0
      %5626 = vmatpush1.msra.mxu0 0.0
      %5627 = vmatprep.subr.mxu0 0.0
      %5628 = vmatpush1.msra.mxu0 0.0
      %5629 = vmatprep.subr.mxu0 0.0
      %5630 = vmatpush1.msra.mxu0 0.0
      %5631 = vmatprep.subr.mxu0 0.0
      %5632 = vmatpush1.msra.mxu0 0.0
      %5633 = vmatprep.subr.mxu0 0.0
      %5634 = vmatpush1.msra.mxu0 0.0
      %5635 = vmatprep.subr.mxu0 0.0
      %5636 = vmatpush1.msra.mxu0 0.0
      %5637 = vmatprep.subr.mxu0 0.0
      %5638 = vmatpush1.msra.mxu0 0.0
      %5639 = vmatprep.subr.mxu0 0.0
      %5640 = vmatpush1.msra.mxu0 0.0
      %5641 = vmatprep.subr.mxu0 0.0
      %5642 = vmatpush1.msra.mxu0 0.0
      %5643 = vmatprep.subr.mxu0 0.0
      %5644 = vmatpush1.msra.mxu0 0.0
      %5645 = vmatprep.subr.mxu0 0.0
      %5646 = vmatpush1.msra.mxu0 0.0
      %5647 = vmatprep.subr.mxu0 0.0
      %5648 = vmatpush1.msra.mxu0 0.0
      %5649 = vmatprep.subr.mxu0 0.0
      %5650 = vmatpush1.msra.mxu0 0.0
      %5651 = vmatprep.subr.mxu0 0.0
      %5652 = vmatpush1.msra.mxu0 0.0
      %5653 = vmatprep.subr.mxu0 0.0
      %5654 = vmatpush1.msra.mxu0 0.0
      %5655 = vmatprep.subr.mxu0 0.0
      %5656 = vmatpush1.msra.mxu0 0.0
      %5657 = vmatprep.subr.mxu0 0.0
      %5658 = vmatpush1.msra.mxu0 0.0
      %5659 = vmatprep.subr.mxu0 0.0
      %5660 = vmatpush1.msra.mxu0 0.0
      %5661 = vmatprep.subr.mxu0 0.0
      %5662 = vmatpush1.msra.mxu0 0.0
      %5663 = vmatprep.subr.mxu0 0.0
      %5664 = vmatpush1.msra.mxu0 0.0
      %5665 = vmatprep.subr.mxu0 0.0
      %5666 = vmatpush1.msra.mxu0 0.0
      %5667 = vmatprep.subr.mxu0 0.0
      %5668 = vmatpush1.msra.mxu0 0.0
      %5669 = vmatprep.subr.mxu0 0.0
      %5670 = vmatpush1.msra.mxu0 0.0
      %5671 = vmatprep.subr.mxu0 0.0
      %5672 = vmatpush1.msra.mxu0 0.0
      %5673 = vmatprep.mubr.f32.mxu0 0.0
      %5674 = vmatmul.mubr.f32.gmra.mrb[0].mxu0 %v5604
      %v5675 = vpop.f32.mrb[0].mxu0
      %v5676 = vadd.f32 0.0, %v5675
      %v5677 = vpop.f32.mrb[0].mxu0
      %v5678 = vadd.f32 0.0, %v5677
      %5679 = vmatprep.mubr.f32.mxu0 0.0
      %5680 = vmatmul.mubr.f32.gmra.mrb[0].mxu0 %v5607
      %v5681 = vpop.f32.mrb[0].mxu0
      %v5682 = vadd.f32 0.0, %v5681
      %v5683 = vpop.f32.mrb[0].mxu0
      %v5684 = vadd.f32 0.0, %v5683
      %5685 = vdwg.mxu0
      %5686 = vmatprep.subr.mxu0 0.0
      %5687 = vmatpush1.msra.mxu0 %v5593
      %5688 = vmatprep.subr.mxu0 0.0
      %5689 = vmatpush1.msra.mxu0 %v5596
      %5690 = vmatprep.subr.mxu0 0.0
      %5691 = vmatpush1.msra.mxu0 0.0
      %5692 = vmatprep.subr.mxu0 0.0
      %5693 = vmatpush1.msra.mxu0 0.0
      %5694 = vmatprep.subr.mxu0 0.0
      %5695 = vmatpush1.msra.mxu0 0.0
      %5696 = vmatprep.subr.mxu0 0.0
      %5697 = vmatpush1.msra.mxu0 0.0
      %5698 = vmatprep.subr.mxu0 0.0
      %5699 = vmatpush1.msra.mxu0 0.0
      %5700 = vmatprep.subr.mxu0 0.0
      %5701 = vmatpush1.msra.mxu0 0.0
      %5702 = vmatprep.subr.mxu0 0.0
      %5703 = vmatpush1.msra.mxu0 0.0
      %5704 = vmatprep.subr.mxu0 0.0
      %5705 = vmatpush1.msra.mxu0 0.0
      %5706 = vmatprep.subr.mxu0 0.0
      %5707 = vmatpush1.msra.mxu0 0.0
      %5708 = vmatprep.subr.mxu0 0.0
      %5709 = vmatpush1.msra.mxu0 0.0
      %5710 = vmatprep.subr.mxu0 0.0
      %5711 = vmatpush1.msra.mxu0 0.0
      %5712 = vmatprep.subr.mxu0 0.0
      %5713 = vmatpush1.msra.mxu0 0.0
      %5714 = vmatprep.subr.mxu0 0.0
      %5715 = vmatpush1.msra.mxu0 0.0
      %5716 = vmatprep.subr.mxu0 0.0
      %5717 = vmatpush1.msra.mxu0 0.0
      %5718 = vmatprep.subr.mxu0 0.0
      %5719 = vmatpush1.msra.mxu0 0.0
      %5720 = vmatprep.subr.mxu0 0.0
      %5721 = vmatpush1.msra.mxu0 0.0
      %5722 = vmatprep.subr.mxu0 0.0
      %5723 = vmatpush1.msra.mxu0 0.0
      %5724 = vmatprep.subr.mxu0 0.0
      %5725 = vmatpush1.msra.mxu0 0.0
      %5726 = vmatprep.subr.mxu0 0.0
      %5727 = vmatpush1.msra.mxu0 0.0
      %5728 = vmatprep.subr.mxu0 0.0
      %5729 = vmatpush1.msra.mxu0 0.0
      %5730 = vmatprep.subr.mxu0 0.0
      %5731 = vmatpush1.msra.mxu0 0.0
      %5732 = vmatprep.subr.mxu0 0.0
      %5733 = vmatpush1.msra.mxu0 0.0
      %5734 = vmatprep.subr.mxu0 0.0
      %5735 = vmatpush1.msra.mxu0 0.0
      %5736 = vmatprep.subr.mxu0 0.0
      %5737 = vmatpush1.msra.mxu0 0.0
      %5738 = vmatprep.subr.mxu0 0.0
      %5739 = vmatpush1.msra.mxu0 0.0
      %5740 = vmatprep.subr.mxu0 0.0
      %5741 = vmatpush1.msra.mxu0 0.0
      %5742 = vmatprep.subr.mxu0 0.0
      %5743 = vmatpush1.msra.mxu0 0.0
      %5744 = vmatprep.subr.mxu0 0.0
      %5745 = vmatpush1.msra.mxu0 0.0
      %5746 = vmatprep.subr.mxu0 0.0
      %5747 = vmatpush1.msra.mxu0 0.0
      %5748 = vmatprep.subr.mxu0 0.0
      %5749 = vmatpush1.msra.mxu0 0.0
      %5750 = vmatprep.mubr.f32.mxu0 0.0
      %5751 = vmatmul.mubr.f32.gmra.mrb[0].mxu0 %v5604
      %v5752 = vpop.f32.mrb[0].mxu0
      %v5753 = vadd.f32 0.0, %v5752
      %v5754 = vpop.f32.mrb[0].mxu0
      %5755 = vmatprep.mubr.f32.mxu0 0.0
      %5756 = vmatmul.mubr.f32.gmra.mrb[0].mxu0 %v5607
      %v5757 = vpop.f32.mrb[0].mxu0
      %v5758 = vadd.f32 0.0, %v5757
      %v5759 = vpop.f32.mrb[0].mxu0
      %5760 = vdwg.mxu0
      %v5761 = vadd.f32 %v5566, %v5676
      %v5762 = vadd.f32 %v5567, %v5678
      %v5763 = vadd.f32 %v5568, %v5753
      %v5764 = vadd.f32 %v5569, %v5682
      %v5765 = vadd.f32 %v5570, %v5684
      %v5766 = vadd.f32 %v5571, %v5758
      %s5767 = scalar_lea.vmem %s3, 128
      %v5768 = vld [vmem:[%s5767] sm:$0xff]
      %v5769 = vld [vmem:[%s5767 + $0x8] sm:$0xff]
      %5770 = vrot.lane.b32.xlu0 %v5166, 109
      %v5771 = vpop.permute.xlu0 %5770
      %5772 = vrot.lane.b32.xlu0 %v5167, 109
      %v5773 = vpop.permute.xlu0 %5772
      %5774 = vrot.lane.b32.xlu0 %v5168, 109
      %v5775 = vpop.permute.xlu0 %5774
      %5776 = vrot.lane.b32.xlu0 %v5169, 109
      %v5777 = vpop.permute.xlu0 %5776
      %5778 = vrot.lane.b32.xlu0 %v5170, 109
      %v5779 = vpop.permute.xlu0 %5778
      %5780 = vrot.lane.b32.xlu0 %v5171, 109
      %v5781 = vpop.permute.xlu0 %5780
      %5782 = vrot.lane.b32.xlu0 %v5172, 109
      %v5783 = vpop.permute.xlu0 %5782
      %5784 = vrot.lane.b32.xlu0 %v5173, 109
      %v5785 = vpop.permute.xlu0 %5784
      %v5786 = vsel %vm3258, %v5771, %v5773
      %v5787 = vsel %vm3258, %v5773, %v5775
      %v5788 = vsel %vm3258, %v5775, %v5777
      %v5789 = vsel %vm3258, %v5779, %v5781
      %v5790 = vsel %vm3258, %v5781, %v5783
      %v5791 = vsel %vm3258, %v5783, %v5785
      %v5799 = vsel %vm3789, %v5768, 0
      %v5802 = vsel %vm3789, %v5769, 0
      %5804 = vmatprep.subr.mxu0 %v5787
      %5805 = vmatpush1.msra.mxu0 %v5786
      %5806 = vmatprep.subr.mxu0 %v5790
      %5807 = vmatpush1.msra.mxu0 %v5789
      %5808 = vmatprep.subr.mxu0 0.0
      %5809 = vmatpush1.msra.mxu0 0.0
      %5810 = vmatprep.subr.mxu0 0.0
      %5811 = vmatpush1.msra.mxu0 0.0
      %5812 = vmatprep.subr.mxu0 0.0
      %5813 = vmatpush1.msra.mxu0 0.0
      %5814 = vmatprep.subr.mxu0 0.0
      %5815 = vmatpush1.msra.mxu0 0.0
      %5816 = vmatprep.subr.mxu0 0.0
      %5817 = vmatpush1.msra.mxu0 0.0
      %5818 = vmatprep.subr.mxu0 0.0
      %5819 = vmatpush1.msra.mxu0 0.0
      %5820 = vmatprep.subr.mxu0 0.0
      %5821 = vmatpush1.msra.mxu0 0.0
      %5822 = vmatprep.subr.mxu0 0.0
      %5823 = vmatpush1.msra.mxu0 0.0
      %5824 = vmatprep.subr.mxu0 0.0
      %5825 = vmatpush1.msra.mxu0 0.0
      %5826 = vmatprep.subr.mxu0 0.0
      %5827 = vmatpush1.msra.mxu0 0.0
      %5828 = vmatprep.subr.mxu0 0.0
      %5829 = vmatpush1.msra.mxu0 0.0
      %5830 = vmatprep.subr.mxu0 0.0
      %5831 = vmatpush1.msra.mxu0 0.0
      %5832 = vmatprep.subr.mxu0 0.0
      %5833 = vmatpush1.msra.mxu0 0.0
      %5834 = vmatprep.subr.mxu0 0.0
      %5835 = vmatpush1.msra.mxu0 0.0
      %5836 = vmatprep.subr.mxu0 0.0
      %5837 = vmatpush1.msra.mxu0 0.0
      %5838 = vmatprep.subr.mxu0 0.0
      %5839 = vmatpush1.msra.mxu0 0.0
      %5840 = vmatprep.subr.mxu0 0.0
      %5841 = vmatpush1.msra.mxu0 0.0
      %5842 = vmatprep.subr.mxu0 0.0
      %5843 = vmatpush1.msra.mxu0 0.0
      %5844 = vmatprep.subr.mxu0 0.0
      %5845 = vmatpush1.msra.mxu0 0.0
      %5846 = vmatprep.subr.mxu0 0.0
      %5847 = vmatpush1.msra.mxu0 0.0
      %5848 = vmatprep.subr.mxu0 0.0
      %5849 = vmatpush1.msra.mxu0 0.0
      %5850 = vmatprep.subr.mxu0 0.0
      %5851 = vmatpush1.msra.mxu0 0.0
      %5852 = vmatprep.subr.mxu0 0.0
      %5853 = vmatpush1.msra.mxu0 0.0
      %5854 = vmatprep.subr.mxu0 0.0
      %5855 = vmatpush1.msra.mxu0 0.0
      %5856 = vmatprep.subr.mxu0 0.0
      %5857 = vmatpush1.msra.mxu0 0.0
      %5858 = vmatprep.subr.mxu0 0.0
      %5859 = vmatpush1.msra.mxu0 0.0
      %5860 = vmatprep.subr.mxu0 0.0
      %5861 = vmatpush1.msra.mxu0 0.0
      %5862 = vmatprep.subr.mxu0 0.0
      %5863 = vmatpush1.msra.mxu0 0.0
      %5864 = vmatprep.subr.mxu0 0.0
      %5865 = vmatpush1.msra.mxu0 0.0
      %5866 = vmatprep.subr.mxu0 0.0
      %5867 = vmatpush1.msra.mxu0 0.0
      %5868 = vmatprep.mubr.f32.mxu0 0.0
      %5869 = vmatmul.mubr.f32.gmra.mrb[0].mxu0 %v5799
      %v5870 = vpop.f32.mrb[0].mxu0
      %v5871 = vadd.f32 0.0, %v5870
      %v5872 = vpop.f32.mrb[0].mxu0
      %v5873 = vadd.f32 0.0, %v5872
      %5874 = vmatprep.mubr.f32.mxu0 0.0
      %5875 = vmatmul.mubr.f32.gmra.mrb[0].mxu0 %v5802
      %v5876 = vpop.f32.mrb[0].mxu0
      %v5877 = vadd.f32 0.0, %v5876
      %v5878 = vpop.f32.mrb[0].mxu0
      %v5879 = vadd.f32 0.0, %v5878
      %5880 = vdwg.mxu0
      %5881 = vmatprep.subr.mxu0 0.0
      %5882 = vmatpush1.msra.mxu0 %v5788
      %5883 = vmatprep.subr.mxu0 0.0
      %5884 = vmatpush1.msra.mxu0 %v5791
      %5885 = vmatprep.subr.mxu0 0.0
      %5886 = vmatpush1.msra.mxu0 0.0
      %5887 = vmatprep.subr.mxu0 0.0
      %5888 = vmatpush1.msra.mxu0 0.0
      %5889 = vmatprep.subr.mxu0 0.0
      %5890 = vmatpush1.msra.mxu0 0.0
      %5891 = vmatprep.subr.mxu0 0.0
      %5892 = vmatpush1.msra.mxu0 0.0
      %5893 = vmatprep.subr.mxu0 0.0
      %5894 = vmatpush1.msra.mxu0 0.0
      %5895 = vmatprep.subr.mxu0 0.0
      %5896 = vmatpush1.msra.mxu0 0.0
      %5897 = vmatprep.subr.mxu0 0.0
      %5898 = vmatpush1.msra.mxu0 0.0
      %5899 = vmatprep.subr.mxu0 0.0
      %5900 = vmatpush1.msra.mxu0 0.0
      %5901 = vmatprep.subr.mxu0 0.0
      %5902 = vmatpush1.msra.mxu0 0.0
      %5903 = vmatprep.subr.mxu0 0.0
      %5904 = vmatpush1.msra.mxu0 0.0
      %5905 = vmatprep.subr.mxu0 0.0
      %5906 = vmatpush1.msra.mxu0 0.0
      %5907 = vmatprep.subr.mxu0 0.0
      %5908 = vmatpush1.msra.mxu0 0.0
      %5909 = vmatprep.subr.mxu0 0.0
      %5910 = vmatpush1.msra.mxu0 0.0
      %5911 = vmatprep.subr.mxu0 0.0
      %5912 = vmatpush1.msra.mxu0 0.0
      %5913 = vmatprep.subr.mxu0 0.0
      %5914 = vmatpush1.msra.mxu0 0.0
      %5915 = vmatprep.subr.mxu0 0.0
      %5916 = vmatpush1.msra.mxu0 0.0
      %5917 = vmatprep.subr.mxu0 0.0
      %5918 = vmatpush1.msra.mxu0 0.0
      %5919 = vmatprep.subr.mxu0 0.0
      %5920 = vmatpush1.msra.mxu0 0.0
      %5921 = vmatprep.subr.mxu0 0.0
      %5922 = vmatpush1.msra.mxu0 0.0
      %5923 = vmatprep.subr.mxu0 0.0
      %5924 = vmatpush1.msra.mxu0 0.0
      %5925 = vmatprep.subr.mxu0 0.0
      %5926 = vmatpush1.msra.mxu0 0.0
      %5927 = vmatprep.subr.mxu0 0.0
      %5928 = vmatpush1.msra.mxu0 0.0
      %5929 = vmatprep.subr.mxu0 0.0
      %5930 = vmatpush1.msra.mxu0 0.0
      %5931 = vmatprep.subr.mxu0 0.0
      %5932 = vmatpush1.msra.mxu0 0.0
      %5933 = vmatprep.subr.mxu0 0.0
      %5934 = vmatpush1.msra.mxu0 0.0
      %5935 = vmatprep.subr.mxu0 0.0
      %5936 = vmatpush1.msra.mxu0 0.0
      %5937 = vmatprep.subr.mxu0 0.0
      %5938 = vmatpush1.msra.mxu0 0.0
      %5939 = vmatprep.subr.mxu0 0.0
      %5940 = vmatpush1.msra.mxu0 0.0
      %5941 = vmatprep.subr.mxu0 0.0
      %5942 = vmatpush1.msra.mxu0 0.0
      %5943 = vmatprep.subr.mxu0 0.0
      %5944 = vmatpush1.msra.mxu0 0.0
      %5945 = vmatprep.mubr.f32.mxu0 0.0
      %5946 = vmatmul.mubr.f32.gmra.mrb[0].mxu0 %v5799
      %v5947 = vpop.f32.mrb[0].mxu0
      %v5948 = vadd.f32 0.0, %v5947
      %v5949 = vpop.f32.mrb[0].mxu0
      %5950 = vmatprep.mubr.f32.mxu0 0.0
      %5951 = vmatmul.mubr.f32.gmra.mrb[0].mxu0 %v5802
      %v5952 = vpop.f32.mrb[0].mxu0
      %v5953 = vadd.f32 0.0, %v5952
      %v5954 = vpop.f32.mrb[0].mxu0
      %5955 = vdwg.mxu0
      %v5956 = vadd.f32 %v5761, %v5871
      %v5957 = vadd.f32 %v5762, %v5873
      %v5958 = vadd.f32 %v5763, %v5948
      %v5959 = vadd.f32 %v5764, %v5877
      %v5960 = vadd.f32 %v5765, %v5879
      %v5961 = vadd.f32 %v5766, %v5953
      %v5962 = vadd.f32 %v3565, %v5956
      %v5963 = vadd.f32 %v3566, %v5957
      %v5964 = vadd.f32 %v3567, %v5958
      %v5965 = vxor.u32 %v5962, 2147483648
      %v5966 = vxor.u32 %v5963, 2147483648
      %v5967 = vxor.u32 %v5964, 2147483648
      %v5968 = vmul.f32 %v5965, 1.442695
      %v5969 = vpow.pop %v5968
      %v5970 = vmul.f32 %v5966, 1.442695
      %v5971 = vpow.pop %v5970
      %v5972 = vmul.f32 %v5967, 1.442695
      %v5973 = vpow.pop %v5972
      %v5974 = vadd.f32 %v5969, 1.0
      %v5975 = vadd.f32 %v5971, 1.0
      %v5976 = vadd.f32 %v5973, 1.0
      %v5977 = vrcp.pop %v5974
      %v5978 = vmul.f32 1.0, %v5977
      %v5979 = vrcp.pop %v5975
      %v5980 = vmul.f32 1.0, %v5979
      %v5981 = vrcp.pop %v5976
      %v5982 = vmul.f32 1.0, %v5981
      %v5983 = vtanh.pop %v5959
      %v5984 = vtanh.pop %v5960
      %v5985 = vtanh.pop %v5961
      %v5986 = vmul.f32 %v5978, %v5983
      %v5987 = vmul.f32 %v5980, %v5984
      %v5988 = vmul.f32 %v5982, %v5985
      %5989 = vst [vmem:[%s313] sm:$0xff] %v5986
      %5990 = vst [vmem:[%s313 + $0x8] sm:$0xff] %v5987
      %5991 = vst [vmem:[%s313 + $0x10] sm:$0xff] %v5988
      %p5992 = scmp.lt.s32.totalorder %s19, 1
      %s5993 = scalar_select %p5992, %s19, 1
      %s5994 = smul.addr %s5993, 3
      %s5995 = smul.addr %s5994, 8
      %s5996 = scalar_lea.vmem %s5, %s5995
      %p5997 = scmp.lt.s32.totalorder %s19, 1
      %s5998 = scalar_select %p5997, %s19, 1
      %s5999 = smul.addr %s5998, 3
      %s6000 = smul.addr %s5999, 8
      %s6001 = scalar_lea.vmem %s6, %s6000
      %p6002 = scmp.lt.s32.totalorder %s19, 1
      %s6003 = scalar_select %p6002, %s19, 1
      %s6004 = smul.addr %s6003, 3
      %s6005 = smul.addr %s6004, 8
      %s6006 = scalar_lea.vmem %s7, %s6005
      // Predicated region
      $region41: #{nam_forward.1} parent=39 // pred_check
        %p6007 = pneg %p152
      $region42: #{nam_forward.1} parent=39 // pred_check_branch
        %6009 = sbr.rel (%p6007) target = $region44
      $region43: #{nam_forward.1} parent=39 // pred_region
        _
      $region44: #{nam_forward.1} parent=39 // pred_fallthru
        _
      // Predicated region
      $region45: #{nam_forward.1} parent=39 // pred_check
        %p6010 = pneg %p178
      $region46: #{nam_forward.1} parent=39 // pred_check_branch
        %6012 = sbr.rel (%p6010) target = $region48
      $region47: #{nam_forward.1} parent=39 // pred_region
        _
      $region48: #{nam_forward.1} parent=39 // pred_fallthru
        _
      // Predicated region
      $region49: #{nam_forward.1} parent=39 // pred_check
        %p6013 = pneg %p204
      $region50: #{nam_forward.1} parent=39 // pred_check_branch
        %6015 = sbr.rel (%p6013) target = $region52
      $region51: #{nam_forward.1} parent=39 // pred_region
        _
      $region52: #{nam_forward.1} parent=39 // pred_fallthru
        _
    $region40: #{nam_forward.1} parent=5 // pred_fallthru
      _
    %p6016 = scmp.le.s32.totalorder 2, %s14
    // Predicated region
    $region53: #{nam_forward.1} parent=5 // pred_check
      %p6017 = pneg %p6016
    $region54: #{nam_forward.1} parent=5 // pred_check_branch
      %6019 = sbr.rel (%p6017) target = $region56
    $region55: #{nam_forward.1} parent=5 // pred_region
      %s6020 = ssub.s32 %s14, 2
      // Predicated region
      $region57: #{nam_forward.1} parent=55 // pred_check
        %p6021 = pneg %p158
      $region58: #{nam_forward.1} parent=55 // pred_check_branch
        %6023 = sbr.rel (%p6021) target = $region60
      $region59: #{nam_forward.1} parent=55 // pred_region
        %p6024 = scmp.lt.s32.totalorder %s20, 1
        %s6025 = scalar_select %p6024, %s20, 1
        %s6026 = smul.addr %s6025, 3
        %s6027 = smul.addr %s6026, 8
        %s6028 = scalar_lea.vmem %s5, %s6027
      $region60: #{nam_forward.1} parent=55 // pred_fallthru
        _
      // Predicated region
      $region61: #{nam_forward.1} parent=55 // pred_check
        %p6029 = pneg %p184
      $region62: #{nam_forward.1} parent=55 // pred_check_branch
        %6031 = sbr.rel (%p6029) target = $region64
      $region63: #{nam_forward.1} parent=55 // pred_region
        %p6032 = scmp.lt.s32.totalorder %s20, 1
        %s6033 = scalar_select %p6032, %s20, 1
        %s6034 = smul.addr %s6033, 3
        %s6035 = smul.addr %s6034, 8
        %s6036 = scalar_lea.vmem %s6, %s6035
      $region64: #{nam_forward.1} parent=55 // pred_fallthru
        _
      // Predicated region
      $region65: #{nam_forward.1} parent=55 // pred_check
        %p6037 = pneg %p210
      $region66: #{nam_forward.1} parent=55 // pred_check_branch
        %6039 = sbr.rel (%p6037) target = $region68
      $region67: #{nam_forward.1} parent=55 // pred_region
        %p6040 = scmp.lt.s32.totalorder %s20, 1
        %s6041 = scalar_select %p6040, %s20, 1
        %s6042 = smul.addr %s6041, 3
        %s6043 = smul.addr %s6042, 8
        %s6044 = scalar_lea.vmem %s7, %s6043
      $region68: #{nam_forward.1} parent=55 // pred_fallthru
        _
    $region56: #{nam_forward.1} parent=5 // pred_fallthru
      _
  $region6: #{nam_forward.1} parent=0 // loop_footer
    %s18 = sadd.s32 1, %s14
  $region7: #{nam_forward.1} parent=0 // loop_footer_branch
    %13 = sbr.rel target = $region3
  $region8: #{nam_forward.1} parent=0 // loop_exit
    _

</llo_original>
